<compile_context>
chip_gen: v6e
topology: v6e:2x2x1
jax: 0.10.0
libtpu: 0.0.40
codegen_flags: <defaults>
</compile_context>

<pallas_src>
import functools
import math

import jax
import jax.numpy as jnp
from jax.experimental import pallas as pl
from jax.experimental.pallas import tpu as pltpu

LANE = 128
ACT_DTYPE = jnp.bfloat16        # activations / folded weights fed to the MXU
ACT_BYTES = 2


# --------------------------------------------------------------------------- helpers
def _round_up(x, m):
    return (x + m - 1) // m * m


def _vmem_step_budget():
    # Per-grid-step VMEM budget; our footprint estimates already include the
    # 2x double-buffering, so stay well under the default scoped limits
    # (16 MiB v5e / 32 MiB v6e,v7x).  Physical VMEM query makes tiles shrink
    # automatically on v7x (64 MiB) vs v5e/v6e (128 MiB).
    try:
        cap = pltpu.get_tpu_info().vmem_capacity_bytes
    except Exception:
        cap = 64 * 2 ** 20
    return min(cap // 6, 12 * 2 ** 20)


# --------------------------------------------------------------------------- kernels
def _mm_kernel(x_ref, w_ref, b_ref, o_ref, *, relu):
    # y = act(x @ w + b)    (BN scale folded into w; bf16 operands, f32 acc)
    y = jnp.dot(x_ref[...], w_ref[...], preferred_element_type=jnp.float32) + b_ref[...]
    if relu:
        y = jnp.maximum(y, 0.0)
    o_ref[...] = y.astype(o_ref.dtype)


def _mm_res_add_kernel(x_ref, w_ref, b_ref, s_ref, o_ref, *, relu):
    # fused residual join, identity skip: y = act(x @ w + b + skip)
    y = jnp.dot(x_ref[...], w_ref[...], preferred_element_type=jnp.float32) + b_ref[...]
    y = y + s_ref[...].astype(jnp.float32)
    if relu:
        y = jnp.maximum(y, 0.0)
    o_ref[...] = y.astype(o_ref.dtype)


def _mm_res_conv_kernel(x_ref, w_ref, b_ref, s_ref, ws_ref, bs_ref, o_ref, *, relu):
    # fused residual join, projection skip:
    #   y = act(x @ w + b + skip @ w_skip + b_skip)
    y = jnp.dot(x_ref[...], w_ref[...], preferred_element_type=jnp.float32) + b_ref[...]
    y = y + jnp.dot(s_ref[...], ws_ref[...], preferred_element_type=jnp.float32) + bs_ref[...]
    if relu:
        y = jnp.maximum(y, 0.0)
    o_ref[...] = y.astype(o_ref.dtype)


def _conv3x3_kernel(x_ref, w_ref, b_ref, o_ref, acc_ref, *, stride, Tr, Wo, relu):
    # x_ref : (s*s, TrI, Ws, Cin_p)  phase-decomposed, spatially padded row tile
    # w_ref : (9, Cin_p, Cout_p)     BN scale folded in (bf16)
    # b_ref : (1, Cout_p)            f32
    # o_ref : (Tr, Wo, Cout_p)       bf16
    # acc_ref: (Tr*Wo, Cout_p)       f32 VMEM scratch accumulator
    s = stride
    acc_ref[...] = jnp.zeros_like(acc_ref)
    for dy in range(3):
        for dx in range(3):
            ph = (dy % s) * s + (dx % s)          # stride phase of this tap
            oy, ox = dy // s, dx // s             # static window offset in the phase
            patch = x_ref[ph, oy:oy + Tr, ox:ox + Wo, :]          # (Tr, Wo, Cin_p) bf16
            # TODO(synk): folding the 9 taps into the contraction dim (K=9*Cin)
            # would cut the zero-padding waste for small-channel layers.
            acc_ref[...] += jnp.dot(patch.reshape(Tr * Wo, patch.shape[-1]),
                                    w_ref[dy * 3 + dx],
                                    preferred_element_type=jnp.float32)
    y = acc_ref[...] + b_ref[...]
    if relu:
        y = jnp.maximum(y, 0.0)
    o_ref[...] = y.reshape(Tr, Wo, y.shape[-1]).astype(o_ref.dtype)


def _conv3x3_skip_kernel(x_ref, w_ref, b_ref, o_ref, skip_ref, acc_ref,
                         *, stride, Tr, Wo, relu):
    # Same conv, plus emit the stride-subsampled input (one phase plane already
    # resident in VMEM) for the downstream projection skip -> no extra HBM read.
    _conv3x3_kernel(x_ref, w_ref, b_ref, o_ref, acc_ref,
                    stride=stride, Tr=Tr, Wo=Wo, relu=relu)
    s = stride
    ph = (1 % s) * s + (1 % s)
    off = 1 // s
    skip_ref[...] = x_ref[ph, off:off + Tr, off:off + Wo, :].astype(skip_ref.dtype)


def _head_kernel(x_ref, w_ref, b_ref, o_ref, *, inv_hw):
    # fused global average pool + linear head (pool & dot in f32)
    pooled = jnp.sum(x_ref[...].astype(jnp.float32), axis=1) * inv_hw    # (B, C_p)
    y = jnp.dot(pooled, w_ref[...], preferred_element_type=jnp.float32) + b_ref[...]
    o_ref[...] = y.astype(o_ref.dtype)


# --------------------------------------------------------------------------- pallas wrappers
def matmul_bias_act(x, w, b, *, relu, skip=None, skip_w=None, skip_b=None,
                    out_dtype=ACT_DTYPE):
    """y = act(x @ w + b [+ skip | + skip @ skip_w + skip_b]).

    x / w / skip / skip_w are bf16 (channels pre-padded to 128), biases f32.
    Grid is (M_tiles, N_tiles); weight blocks are (K, N_tile).
    """
    M, K = x.shape
    N = w.shape[1]

    # Row tile: largest tile (capped) -> minimal per-step overhead on the
    # single-TC chips, still multiple steps for very large M.
    Mp = _round_up(M, 8)
    tm = min(Mp, 1024)
    if tm < Mp:
        Mp = _round_up(M, tm)
    if Mp != M:
        x = jnp.pad(x, ((0, Mp - M), (0, 0)))
        if skip is not None:
            skip = jnp.pad(skip, ((0, Mp - M), (0, 0)))

    # Output-channel tile: 256-wide where possible (v6e/v7x 256x256 MXU).
    tn = 256 if N % 256 == 0 else 128 if N % 128 == 0 else N
    grid = (Mp // tm, N // tn)

    in_specs = [
        pl.BlockSpec((tm, K), lambda i, j: (i, 0)),
        pl.BlockSpec((K, tn), lambda i, j: (0, j)),
        pl.BlockSpec((1, tn), lambda i, j: (0, j)),
    ]
    args = [x, w, b]
    if skip is None:
        kern = functools.partial(_mm_kernel, relu=relu)
    elif skip_w is None:
        # identity skip adds directly to the output tile -> tile it over N too
        in_specs.append(pl.BlockSpec((tm, tn), lambda i, j: (i, j)))
        args.append(skip)
        kern = functools.partial(_mm_res_add_kernel, relu=relu)
    else:
        Ks = skip.shape[1]
        in_specs.append(pl.BlockSpec((tm, Ks), lambda i, j: (i, 0)))
        in_specs.append(pl.BlockSpec((Ks, tn), lambda i, j: (0, j)))
        in_specs.append(pl.BlockSpec((1, tn), lambda i, j: (0, j)))
        args.extend([skip, skip_w, skip_b])
        kern = functools.partial(_mm_res_conv_kernel, relu=relu)

    # TODO(synk): add a K grid axis (with an f32 scratch accumulator) for
    # channel counts > 512 so the resident weight block stays bounded.
    out = pl.pallas_call(
        kern,
        out_shape=jax.ShapeDtypeStruct((Mp, N), out_dtype),
        grid_spec=pltpu.PrefetchScalarGridSpec(
            num_scalar_prefetch=0,
            grid=grid,
            in_specs=in_specs,
            out_specs=pl.BlockSpec((tm, tn), lambda i, j: (i, j)),
        ),
        compiler_params=pltpu.CompilerParams(
            dimension_semantics=("parallel", "parallel")),
    )(*args)
    return out[:M] if Mp != M else out


def conv3x3_bn_act(x, w9, b, *, stride, relu, emit_skip=False):
    """3x3 conv (pad=1) + folded BN (+ReLU).

    x: (B, H, W, Cin_p) bf16 NHWC;  w9: (9, Cin_p, Cout_p) bf16;  b: (1, Cout_p) f32.
    If emit_skip (stride>1 projection block), also returns the stride-subsampled
    input (B, Ho, Wo, Cin_p) produced by the same kernel.
    """
    B, H, W, Cp = x.shape
    Op = w9.shape[-1]
    s = stride
    s2 = s * s
    halo = 2 // s
    Ho = (H + 2 - 3) // s + 1
    Wo = (W + 2 - 3) // s + 1
    # TODO(synk): padding formula validated for stride in {1, 2} only (the only
    # strides this module produces).
    Hp = _round_up(max(H + 2, s * (halo + Ho)), s)
    Wp = _round_up(max(W + 2, s * (halo + Wo)), s)
    xp = jnp.pad(x, ((0, 0), (1, Hp - H - 1), (1, Wp - W - 1), (0, 0)))
    Hs, Ws = Hp // s, Wp // s

    if s == 1:
        xph = xp[:, None]                                           # (B, 1, Hs, Ws, Cp)
    else:
        # phase decomposition: xph[b, p*s+q, y, x, c] == xp[b, y*s+p, x*s+q, c]
        # TODO(synk): this relayout is an extra HBM pass; emitting the producer's
        # output already phase-decomposed (via its out_specs) would remove it.
        xph = jnp.transpose(xp.reshape(B, Hs, s, Ws, s, Cp),
                            (0, 2, 4, 1, 3, 5)).reshape(B, s2, Hs, Ws, Cp)

    # ---- output-row tiling so the per-step VMEM footprint stays bounded -----
    budget = _vmem_step_budget()
    fixed = 2 * (9 * Cp * Op * ACT_BYTES + Op * 4)                   # weights + bias (x2 buf)
    Tr = None
    smallest = Ho
    for cand in range(Ho, 0, -1):
        if Ho % cand:
            continue
        smallest = cand
        foot = (fixed
                + 2 * s2 * (cand + halo) * Ws * Cp * ACT_BYTES       # input tile  (x2 buf)
                + 2 * cand * Wo * Op * ACT_BYTES                     # output tile (x2 buf)
                + (2 * cand * Wo * Cp * ACT_BYTES if emit_skip else 0)
                + cand * Wo * Op * 4)                                # f32 scratch accumulator
        if foot <= budget:
            Tr = cand
            break
    if Tr is None:
        Tr = smallest
    nrt = Ho // Tr

    if nrt == 1:
        TrI = Hs
        xph_t = xph                                                  # (B, s2, Hs, Ws, Cp)
    else:
        TrI = Tr + halo
        # TODO(synk): halo rows are duplicated in HBM here; an element-indexed
        # BlockSpec window would carry the halo without duplication.
        xph_t = jnp.stack([xph[:, :, i * Tr:i * Tr + TrI] for i in range(nrt)],
                          axis=1).reshape(B * nrt, s2, TrI, Ws, Cp)

    kern_kw = dict(stride=s, Tr=Tr, Wo=Wo, relu=relu)
    in_specs = [
        pl.BlockSpec((None, s2, TrI, Ws, Cp), lambda bi, i: (bi * nrt + i, 0, 0, 0, 0)),
        pl.BlockSpec((9, Cp, Op), lambda bi, i: (0, 0, 0)),
        pl.BlockSpec((1, Op), lambda bi, i: (0, 0)),
    ]
    if emit_skip:
        out_shape = (jax.ShapeDtypeStruct((B, Ho, Wo, Op), ACT_DTYPE),
                     jax.ShapeDtypeStruct((B, Ho, Wo, Cp), ACT_DTYPE))
        out_specs = (pl.BlockSpec((None, Tr, Wo, Op), lambda bi, i: (bi, i, 0, 0)),
                     pl.BlockSpec((None, Tr, Wo, Cp), lambda bi, i: (bi, i, 0, 0)))
        kern = functools.partial(_conv3x3_skip_kernel, **kern_kw)
    else:
        out_shape = jax.ShapeDtypeStruct((B, Ho, Wo, Op), ACT_DTYPE)
        out_specs = pl.BlockSpec((None, Tr, Wo, Op), lambda bi, i: (bi, i, 0, 0))
        kern = functools.partial(_conv3x3_kernel, **kern_kw)

    return pl.pallas_call(
        kern,
        out_shape=out_shape,
        grid_spec=pltpu.PrefetchScalarGridSpec(
            num_scalar_prefetch=0,
            grid=(B, nrt),
            in_specs=in_specs,
            out_specs=out_specs,
            scratch_shapes=[pltpu.VMEM((Tr * Wo, Op), jnp.float32)],
        ),
        compiler_params=pltpu.CompilerParams(
            dimension_semantics=("parallel", "parallel")),
    )(xph_t, w9, b)


def head_pool_linear(x, w, b):
    """Fused global average pool + linear head.  x: (B, H, W, C_p) bf16."""
    B, H, W, Cp = x.shape
    Np = w.shape[1]
    x3 = x.reshape(B, H * W, Cp)
    kern = functools.partial(_head_kernel, inv_hw=1.0 / float(H * W))
    # TODO(synk): tile over batch / spatial with a running-sum accumulator for
    # large B*H*W; a single grid step is fine at these sizes.
    return pl.pallas_call(
        kern,
        out_shape=jax.ShapeDtypeStruct((B, Np), jnp.float32),
        grid_spec=pltpu.PrefetchScalarGridSpec(
            num_scalar_prefetch=0,
            grid=(1,),
            in_specs=[
                pl.BlockSpec((B, H * W, Cp), lambda i: (0, 0, 0)),
                pl.BlockSpec((Cp, Np), lambda i: (0, 0)),
                pl.BlockSpec((1, Np), lambda i: (0, 0)),
            ],
            out_specs=pl.BlockSpec((B, Np), lambda i: (0, 0)),
        ),
    )(x3, w, b)


# --------------------------------------------------------------------------- params
def init_resnet(key, in_channels, block_features, num_classes):
    # TODO(synk): BatchNorm is realised in inference form (running stats folded
    # into per-channel scale/bias baked into the conv weights); training-mode
    # batch statistics are not computed.
    feats = [block_features[0]] + list(block_features)
    keys = iter(jax.random.split(key, 64))

    def conv_w(k, cout, cin, kh, kw):
        return jax.random.normal(k, (cout, cin, kh, kw), jnp.float32) / math.sqrt(cin * kh * kw)

    def bn(k, c, eps=1e-5):
        k1, k2, k3, k4 = jax.random.split(k, 4)
        gamma = jax.random.uniform(k1, (c,), jnp.float32, 0.5, 1.5)
        beta = jax.random.normal(k2, (c,), jnp.float32) * 0.1
        mean = jax.random.normal(k3, (c,), jnp.float32) * 0.1
        var = jax.random.uniform(k4, (c,), jnp.float32, 0.5, 1.5)
        scale = gamma / jnp.sqrt(var + eps)
        return scale, beta - mean * scale

    def pad_mat(wm, rp, cp, dtype=ACT_DTYPE):
        return jnp.pad(wm, ((0, rp - wm.shape[0]), (0, cp - wm.shape[1]))).astype(dtype)

    def pad_vec(v, cp):
        return jnp.pad(v, (0, cp - v.shape[0])).reshape(1, cp).astype(jnp.float32)

    cin_p = _round_up(in_channels, LANE)
    params = {}

    # expand: 1x1 conv (no bias) + BN
    c0 = feats[0]
    c0p = _round_up(c0, LANE)
    w = conv_w(next(keys), c0, in_channels, 1, 1)[:, :, 0, 0].T              # (Cin, Cout)
    sc, bi = bn(next(keys), c0)
    params["expand_w"] = pad_mat(w * sc[None, :], cin_p, c0p)
    params["expand_b"] = pad_vec(bi, c0p)

    strides = []
    blocks = []
    for i in range(len(feats) - 1):
        cin, cout = feats[i], feats[i + 1]
        cinp, coutp = _round_up(cin, LANE), _round_up(cout, LANE)
        s = 1 if cin >= cout else 2
        strides.append(s)
        bp = {}
        # conv1: 3x3 + BN (+ReLU)
        w1 = conv_w(next(keys), cout, cin, 3, 3)                             # (cout,cin,3,3)
        sc1, bi1 = bn(next(keys), cout)
        w9 = jnp.transpose(w1, (2, 3, 1, 0)).reshape(9, cin, cout) * sc1[None, None, :]
        bp["w1"] = jnp.pad(w9, ((0, 0), (0, cinp - cin), (0, coutp - cout))).astype(ACT_DTYPE)
        bp["b1"] = pad_vec(bi1, coutp)
        # conv2: 1x1 + BN
        w2 = conv_w(next(keys), cout, cout, 1, 1)[:, :, 0, 0].T
        sc2, bi2 = bn(next(keys), cout)
        bp["w2"] = pad_mat(w2 * sc2[None, :], coutp, coutp)
        bp["b2"] = pad_vec(bi2, coutp)
        if not (s == 1 and cin == cout):
            wsk = conv_w(next(keys), cout, cin, 1, 1)[:, :, 0, 0].T
            scs, bis = bn(next(keys), cout)
            bp["skip_w"] = pad_mat(wsk * scs[None, :], cinp, coutp)
            bp["skip_b"] = pad_vec(bis, coutp)
        blocks.append(bp)
    params["blocks"] = blocks

    # linear head (linear_head=True branch of the PyTorch module)
    clast = feats[-1]
    clastp = _round_up(clast, LANE)
    ncp = _round_up(num_classes, LANE)
    k_w, k_b = jax.random.split(next(keys))
    wh = jax.random.normal(k_w, (clast, num_classes), jnp.float32) / math.sqrt(clast)
    bh = jax.random.normal(k_b, (num_classes,), jnp.float32) * 0.1
    params["head_w"] = pad_mat(wh, clastp, ncp, dtype=jnp.float32)
    params["head_b"] = pad_vec(bh, ncp)

    cfg = {"strides": strides, "num_classes": num_classes}
    return params, cfg


# --------------------------------------------------------------------------- forward (Pallas)
def resnet_forward(params, x_nchw, *, cfg):
    x = jnp.transpose(x_nchw, (0, 2, 3, 1)).astype(ACT_DTYPE)                # NCHW -> NHWC bf16
    cin_p = params["expand_w"].shape[0]
    x = jnp.pad(x, ((0, 0), (0, 0), (0, 0), (0, cin_p - x.shape[-1])))       # lane-pad channels
    B, H, W, _ = x.shape
    c0p = params["expand_w"].shape[1]

    # expand: 1x1 conv + BN (no ReLU)
    x = matmul_bias_act(x.reshape(-1, cin_p), params["expand_w"], params["expand_b"],
                        relu=False).reshape(B, H, W, c0p)

    # residual blocks
    for bp, s in zip(params["blocks"], cfg["strides"]):
        has_proj = "skip_w" in bp
        if s > 1:
            y, skip = conv3x3_bn_act(x, bp["w1"], bp["b1"], stride=s, relu=True,
                                     emit_skip=True)
            skip2d = skip.reshape(-1, skip.shape[-1])
        else:
            y = conv3x3_bn_act(x, bp["w1"], bp["b1"], stride=s, relu=True)
            skip2d = x.reshape(-1, x.shape[-1])
        Bo, Ho, Wo, Cop = y.shape
        if has_proj:
            out = matmul_bias_act(y.reshape(-1, Cop), bp["w2"], bp["b2"], relu=True,
                                  skip=skip2d, skip_w=bp["skip_w"], skip_b=bp["skip_b"])
        else:
            out = matmul_bias_act(y.reshape(-1, Cop), bp["w2"], bp["b2"], relu=True,
                                  skip=skip2d)
        x = out.reshape(Bo, Ho, Wo, Cop)

    # fused global average pool + linear head
    logits = head_pool_linear(x, params["head_w"], params["head_b"])
    return logits[:, :cfg["num_classes"]]


# --------------------------------------------------------------------------- reference (pure JAX / XLA)
def resnet_forward_ref(params, x_nchw, cfg):
    x = jnp.transpose(x_nchw, (0, 2, 3, 1)).astype(ACT_DTYPE)
    cin_p = params["expand_w"].shape[0]
    x = jnp.pad(x, ((0, 0), (0, 0), (0, 0), (0, cin_p - x.shape[-1])))
    y = jnp.einsum("nhwc,cd->nhwd", x, params["expand_w"],
                   preferred_element_type=jnp.float32) + params["expand_b"].reshape(1, 1, 1, -1)
    x = y.astype(ACT_DTYPE)
    for bp, s in zip(params["blocks"], cfg["strides"]):
        cinp, coutp = bp["w1"].shape[1], bp["w1"].shape[2]
        w3 = bp["w1"].reshape(3, 3, cinp, coutp)
        y = jax.lax.conv_general_dilated(x, w3, (s, s), ((1, 1), (1, 1)),
                                         dimension_numbers=("NHWC", "HWIO", "NHWC"),
                                         preferred_element_type=jnp.float32)
        y = jnp.maximum(y + bp["b1"].reshape(1, 1, 1, -1), 0.0).astype(ACT_DTYPE)
        y2 = jnp.einsum("nhwc,cd->nhwd", y, bp["w2"],
                        preferred_element_type=jnp.float32) + bp["b2"].reshape(1, 1, 1, -1)
        if "skip_w" in bp:
            xs = x if s == 1 else x[:, ::s, ::s, :]
            skip = (jnp.einsum("nhwc,cd->nhwd", xs, bp["skip_w"],
                               preferred_element_type=jnp.float32)
                    + bp["skip_b"].reshape(1, 1, 1, -1))
        else:
            skip = x.astype(jnp.float32)
        x = jnp.maximum(y2 + skip, 0.0).astype(ACT_DTYPE)
    pooled = jnp.mean(x.astype(jnp.float32), axis=(1, 2))
    logits = pooled @ params["head_w"] + params["head_b"].reshape(1, -1)
    return logits[:, :cfg["num_classes"]]


# --------------------------------------------------------------------------- main
if __name__ == "__main__":
    key = jax.random.PRNGKey(0)
    k_param, k_x = jax.random.split(key)

    in_channels = 4
    block_features = [8, 16]          # internal channel list [8, 8, 16]
    num_classes = 10
    x = jax.random.normal(k_x, (2, in_channels, 16, 16), jnp.float32)        # NCHW, as PyTorch

    params, cfg = init_resnet(k_param, in_channels, block_features, num_classes)

    fwd = jax.jit(functools.partial(resnet_forward, cfg=cfg))
    out = jax.block_until_ready(fwd(params, x))

    ref = jax.block_until_ready(resnet_forward_ref(params, x, cfg))
    assert out.shape == (2, num_classes)
    max_diff = float(jnp.max(jnp.abs(out - ref)))
    assert jnp.allclose(out, ref, atol=5e-2, rtol=5e-2), (
        "Pallas / JAX mismatch, max abs diff = %f" % max_diff)

    print("KERNEL_OK")
</pallas_src>

<mosaic_0001>
module attributes {stable_mosaic.version = 11 : i64} {
  func.func @_mm_kernel(%arg0: i32, %arg1: i32, %arg2: memref<512x128xbf16, #tpu.memory_space<vmem>>, %arg3: memref<128x128xbf16, #tpu.memory_space<vmem>>, %arg4: memref<1x128xf32, #tpu.memory_space<vmem>>, %arg5: memref<512x128xbf16, #tpu.memory_space<vmem>>) attributes {dimension_semantics = [#tpu.dimension_semantics<parallel>, #tpu.dimension_semantics<parallel>], iteration_bounds = array<i64: 1, 1>, scalar_prefetch = 0 : i64, scratch_operands = 0 : i64, tpu.core_type = #tpu.core_type<tc>, window_params = [{transform_indices = @transform_0, window_bounds = array<i64: 512, 128>}, {transform_indices = @transform_1, window_bounds = array<i64: 128, 128>}, {transform_indices = @transform_2, window_bounds = array<i64: 1, 128>}, {transform_indices = @transform_3, window_bounds = array<i64: 512, 128>}]} {
    %c0 = arith.constant 0 : index
    %c0_0 = arith.constant 0 : index
    %0 = vector.load %arg2[%c0, %c0_0] : memref<512x128xbf16, #tpu.memory_space<vmem>>, vector<512x128xbf16>
    %c0_1 = arith.constant 0 : index
    %c0_2 = arith.constant 0 : index
    %1 = vector.load %arg3[%c0_1, %c0_2] : memref<128x128xbf16, #tpu.memory_space<vmem>>, vector<128x128xbf16>
    %cst = arith.constant dense<0.000000e+00> : vector<512x128xf32>
    %2 = tpu.matmul %0, %1, %cst {dimension_numbers = #tpu.dot_dimension_numbers<[1], [0], [0], [1], [0, 0, 1, 1], [], []>} : vector<512x128xbf16>, vector<128x128xbf16>, vector<512x128xf32> -> vector<512x128xf32>
    %c0_3 = arith.constant 0 : index
    %c0_4 = arith.constant 0 : index
    %3 = vector.load %arg4[%c0_3, %c0_4] : memref<1x128xf32, #tpu.memory_space<vmem>>, vector<1x128xf32>
    %4 = vector.broadcast %3 : vector<1x128xf32> to vector<512x128xf32>
    %5 = arith.addf %2, %4 : vector<512x128xf32>
    %6 = arith.truncf %5 : vector<512x128xf32> to vector<512x128xbf16>
    %c0_5 = arith.constant 0 : index
    %c0_6 = arith.constant 0 : index
    %7 = vector.load %arg5[%c0_5, %c0_6] : memref<512x128xbf16, #tpu.memory_space<vmem>>, vector<512x128xbf16>
    tpu.vector_store %arg5[%c0_5, %c0_6], %6 {strides = array<i32>} : memref<512x128xbf16, #tpu.memory_space<vmem>>, vector<512x128xbf16>,
    return
  }
  func.func @transform_0(%arg0: i32, %arg1: i32) -> (i32, i32) {
    %c0_i32 = arith.constant 0 : i32
    %c0_i32_0 = arith.constant 0 : i32
    return %arg0, %c0_i32 : i32, i32
  }
  func.func @transform_1(%arg0: i32, %arg1: i32) -> (i32, i32) {
    %c0_i32 = arith.constant 0 : i32
    %c0_i32_0 = arith.constant 0 : i32
    return %c0_i32, %arg1 : i32, i32
  }
  func.func @transform_2(%arg0: i32, %arg1: i32) -> (i32, i32) {
    %c0_i32 = arith.constant 0 : i32
    %c0_i32_0 = arith.constant 0 : i32
    return %c0_i32, %arg1 : i32, i32
  }
  func.func @transform_3(%arg0: i32, %arg1: i32) -> (i32, i32) {
    %c0_i32 = arith.constant 0 : i32
    return %arg0, %arg1 : i32, i32
  }
}

module attributes {stable_mosaic.version = 11 : i64} {
  func.func @_mm_res_add_kernel(%arg0: i32, %arg1: i32, %arg2: memref<512x128xbf16, #tpu.memory_space<vmem>>, %arg3: memref<128x128xbf16, #tpu.memory_space<vmem>>, %arg4: memref<1x128xf32, #tpu.memory_space<vmem>>, %arg5: memref<512x128xbf16, #tpu.memory_space<vmem>>, %arg6: memref<512x128xbf16, #tpu.memory_space<vmem>>) attributes {dimension_semantics = [#tpu.dimension_semantics<parallel>, #tpu.dimension_semantics<parallel>], iteration_bounds = array<i64: 1, 1>, scalar_prefetch = 0 : i64, scratch_operands = 0 : i64, tpu.core_type = #tpu.core_type<tc>, window_params = [{transform_indices = @transform_0, window_bounds = array<i64: 512, 128>}, {transform_indices = @transform_1, window_bounds = array<i64: 128, 128>}, {transform_indices = @transform_2, window_bounds = array<i64: 1, 128>}, {transform_indices = @transform_3, window_bounds = array<i64: 512, 128>}, {transform_indices = @transform_4, window_bounds = array<i64: 512, 128>}]} {
    %c0 = arith.constant 0 : index
    %c0_0 = arith.constant 0 : index
    %0 = vector.load %arg2[%c0, %c0_0] : memref<512x128xbf16, #tpu.memory_space<vmem>>, vector<512x128xbf16>
    %c0_1 = arith.constant 0 : index
    %c0_2 = arith.constant 0 : index
    %1 = vector.load %arg3[%c0_1, %c0_2] : memref<128x128xbf16, #tpu.memory_space<vmem>>, vector<128x128xbf16>
    %cst = arith.constant dense<0.000000e+00> : vector<512x128xf32>
    %2 = tpu.matmul %0, %1, %cst {dimension_numbers = #tpu.dot_dimension_numbers<[1], [0], [0], [1], [0, 0, 1, 1], [], []>} : vector<512x128xbf16>, vector<128x128xbf16>, vector<512x128xf32> -> vector<512x128xf32>
    %c0_3 = arith.constant 0 : index
    %c0_4 = arith.constant 0 : index
    %3 = vector.load %arg4[%c0_3, %c0_4] : memref<1x128xf32, #tpu.memory_space<vmem>>, vector<1x128xf32>
    %4 = vector.broadcast %3 : vector<1x128xf32> to vector<512x128xf32>
    %5 = arith.addf %2, %4 : vector<512x128xf32>
    %c0_5 = arith.constant 0 : index
    %c0_6 = arith.constant 0 : index
    %6 = vector.load %arg5[%c0_5, %c0_6] : memref<512x128xbf16, #tpu.memory_space<vmem>>, vector<512x128xbf16>
    %7 = arith.extf %6 : vector<512x128xbf16> to vector<512x128xf32>
    %8 = arith.addf %5, %7 : vector<512x128xf32>
    %cst_7 = arith.constant 0.000000e+00 : f32
    %9 = vector.broadcast %cst_7 : f32 to vector<512x128xf32>
    %10 = arith.maximumf %8, %9 : vector<512x128xf32>
    %11 = arith.truncf %10 : vector<512x128xf32> to vector<512x128xbf16>
    %c0_8 = arith.constant 0 : index
    %c0_9 = arith.constant 0 : index
    %12 = vector.load %arg6[%c0_8, %c0_9] : memref<512x128xbf16, #tpu.memory_space<vmem>>, vector<512x128xbf16>
    tpu.vector_store %arg6[%c0_8, %c0_9], %11 {strides = array<i32>} : memref<512x128xbf16, #tpu.memory_space<vmem>>, vector<512x128xbf16>,
    return
  }
  func.func @transform_0(%arg0: i32, %arg1: i32) -> (i32, i32) {
    %c0_i32 = arith.constant 0 : i32
    %c0_i32_0 = arith.constant 0 : i32
    return %arg0, %c0_i32 : i32, i32
  }
  func.func @transform_1(%arg0: i32, %arg1: i32) -> (i32, i32) {
    %c0_i32 = arith.constant 0 : i32
    %c0_i32_0 = arith.constant 0 : i32
    return %c0_i32, %arg1 : i32, i32
  }
  func.func @transform_2(%arg0: i32, %arg1: i32) -> (i32, i32) {
    %c0_i32 = arith.constant 0 : i32
    %c0_i32_0 = arith.constant 0 : i32
    return %c0_i32, %arg1 : i32, i32
  }
  func.func @transform_3(%arg0: i32, %arg1: i32) -> (i32, i32) {
    %c0_i32 = arith.constant 0 : i32
    return %arg0, %arg1 : i32, i32
  }
  func.func @transform_4(%arg0: i32, %arg1: i32) -> (i32, i32) {
    %c0_i32 = arith.constant 0 : i32
    return %arg0, %arg1 : i32, i32
  }
}

module attributes {stable_mosaic.version = 11 : i64} {
  func.func @_conv3x3_kernel(%arg0: i32, %arg1: i32, %arg2: memref<1x1x18x18x128xbf16, #tpu.memory_space<vmem>>, %arg3: memref<9x128x128xbf16, #tpu.memory_space<vmem>>, %arg4: memref<1x128xf32, #tpu.memory_space<vmem>>, %arg5: memref<1x16x16x128xbf16, #tpu.memory_space<vmem>>, %arg6: memref<256x128xf32, #tpu.memory_space<vmem>>) attributes {dimension_semantics = [#tpu.dimension_semantics<parallel>, #tpu.dimension_semantics<parallel>], iteration_bounds = array<i64: 2, 1>, scalar_prefetch = 0 : i64, scratch_operands = 1 : i64, tpu.core_type = #tpu.core_type<tc>, window_params = [{transform_indices = @transform_0, window_bounds = array<i64: 1, 1, 18, 18, 128>}, {pipeline_mode = #tpu.pipeline_mode<synchronous>, transform_indices = @transform_1, window_bounds = array<i64: 9, 128, 128>}, {pipeline_mode = #tpu.pipeline_mode<synchronous>, transform_indices = @transform_2, window_bounds = array<i64: 1, 128>}, {transform_indices = @transform_3, window_bounds = array<i64: 1, 16, 16, 128>}]} {
    %cst = arith.constant 0.000000e+00 : f32
    %0 = vector.broadcast %cst : f32 to vector<256x128xf32>
    %c0 = arith.constant 0 : index
    %c0_0 = arith.constant 0 : index
    %1 = vector.load %arg6[%c0, %c0_0] : memref<256x128xf32, #tpu.memory_space<vmem>>, vector<256x128xf32>
    tpu.vector_store %arg6[%c0, %c0_0], %0 {strides = array<i32>} : memref<256x128xf32, #tpu.memory_space<vmem>>, vector<256x128xf32>,
    %c0_1 = arith.constant 0 : index
    %c0_2 = arith.constant 0 : index
    %c0_3 = arith.constant 0 : index
    %c0_4 = arith.constant 0 : index
    %c0_5 = arith.constant 0 : index
    %2 = vector.load %arg2[%c0_1, %c0_2, %c0_3, %c0_4, %c0_5] : memref<1x1x18x18x128xbf16, #tpu.memory_space<vmem>>, vector<1x1x16x16x128xbf16>
    %3 = vector.shape_cast %2 : vector<1x1x16x16x128xbf16> to vector<16x16x128xbf16>
    %c0_6 = arith.constant 0 : index
    %c0_7 = arith.constant 0 : index
    %4 = vector.load %arg6[%c0_6, %c0_7] : memref<256x128xf32, #tpu.memory_space<vmem>>, vector<256x128xf32>
    %5 = vector.shape_cast %3 : vector<16x16x128xbf16> to vector<256x128xbf16>
    %c0_8 = arith.constant 0 : index
    %c0_9 = arith.constant 0 : index
    %c0_10 = arith.constant 0 : index
    %6 = vector.load %arg3[%c0_8, %c0_9, %c0_10] : memref<9x128x128xbf16, #tpu.memory_space<vmem>>, vector<1x128x128xbf16>
    %7 = vector.shape_cast %6 : vector<1x128x128xbf16> to vector<128x128xbf16>
    %cst_11 = arith.constant dense<0.000000e+00> : vector<256x128xf32>
    %8 = tpu.matmul %5, %7, %cst_11 {dimension_numbers = #tpu.dot_dimension_numbers<[1], [0], [0], [1], [0, 0, 1, 1], [], []>} : vector<256x128xbf16>, vector<128x128xbf16>, vector<256x128xf32> -> vector<256x128xf32>
    %9 = arith.addf %4, %8 : vector<256x128xf32>
    %c0_12 = arith.constant 0 : index
    %c0_13 = arith.constant 0 : index
    %10 = vector.load %arg6[%c0_12, %c0_13] : memref<256x128xf32, #tpu.memory_space<vmem>>, vector<256x128xf32>
    tpu.vector_store %arg6[%c0_12, %c0_13], %9 {strides = array<i32>} : memref<256x128xf32, #tpu.memory_space<vmem>>, vector<256x128xf32>,
    %c0_14 = arith.constant 0 : index
    %c0_15 = arith.constant 0 : index
    %c0_16 = arith.constant 0 : index
    %c1 = arith.constant 1 : index
    %c0_17 = arith.constant 0 : index
    %11 = vector.load %arg2[%c0_14, %c0_15, %c0_16, %c1, %c0_17] : memref<1x1x18x18x128xbf16, #tpu.memory_space<vmem>>, vector<1x1x16x16x128xbf16>
    %12 = vector.shape_cast %11 : vector<1x1x16x16x128xbf16> to vector<16x16x128xbf16>
    %c0_18 = arith.constant 0 : index
    %c0_19 = arith.constant 0 : index
    %13 = vector.load %arg6[%c0_18, %c0_19] : memref<256x128xf32, #tpu.memory_space<vmem>>, vector<256x128xf32>
    %14 = vector.shape_cast %12 : vector<16x16x128xbf16> to vector<256x128xbf16>
    %c1_20 = arith.constant 1 : index
    %c0_21 = arith.constant 0 : index
    %c0_22 = arith.constant 0 : index
    %15 = vector.load %arg3[%c1_20, %c0_21, %c0_22] : memref<9x128x128xbf16, #tpu.memory_space<vmem>>, vector<1x128x128xbf16>
    %16 = vector.shape_cast %15 : vector<1x128x128xbf16> to vector<128x128xbf16>
    %cst_23 = arith.constant dense<0.000000e+00> : vector<256x128xf32>
    %17 = tpu.matmul %14, %16, %cst_23 {dimension_numbers = #tpu.dot_dimension_numbers<[1], [0], [0], [1], [0, 0, 1, 1], [], []>} : vector<256x128xbf16>, vector<128x128xbf16>, vector<256x128xf32> -> vector<256x128xf32>
    %18 = arith.addf %13, %17 : vector<256x128xf32>
    %c0_24 = arith.constant 0 : index
    %c0_25 = arith.constant 0 : index
    %19 = vector.load %arg6[%c0_24, %c0_25] : memref<256x128xf32, #tpu.memory_space<vmem>>, vector<256x128xf32>
    tpu.vector_store %arg6[%c0_24, %c0_25], %18 {strides = array<i32>} : memref<256x128xf32, #tpu.memory_space<vmem>>, vector<256x128xf32>,
    %c0_26 = arith.constant 0 : index
    %c0_27 = arith.constant 0 : index
    %c0_28 = arith.constant 0 : index
    %c2 = arith.constant 2 : index
    %c0_29 = arith.constant 0 : index
    %20 = vector.load %arg2[%c0_26, %c0_27, %c0_28, %c2, %c0_29] : memref<1x1x18x18x128xbf16, #tpu.memory_space<vmem>>, vector<1x1x16x16x128xbf16>
    %21 = vector.shape_cast %20 : vector<1x1x16x16x128xbf16> to vector<16x16x128xbf16>
    %c0_30 = arith.constant 0 : index
    %c0_31 = arith.constant 0 : index
    %22 = vector.load %arg6[%c0_30, %c0_31] : memref<256x128xf32, #tpu.memory_space<vmem>>, vector<256x128xf32>
    %23 = vector.shape_cast %21 : vector<16x16x128xbf16> to vector<256x128xbf16>
    %c2_32 = arith.constant 2 : index
    %c0_33 = arith.constant 0 : index
    %c0_34 = arith.constant 0 : index
    %24 = vector.load %arg3[%c2_32, %c0_33, %c0_34] : memref<9x128x128xbf16, #tpu.memory_space<vmem>>, vector<1x128x128xbf16>
    %25 = vector.shape_cast %24 : vector<1x128x128xbf16> to vector<128x128xbf16>
    %cst_35 = arith.constant dense<0.000000e+00> : vector<256x128xf32>
    %26 = tpu.matmul %23, %25, %cst_35 {dimension_numbers = #tpu.dot_dimension_numbers<[1], [0], [0], [1], [0, 0, 1, 1], [], []>} : vector<256x128xbf16>, vector<128x128xbf16>, vector<256x128xf32> -> vector<256x128xf32>
    %27 = arith.addf %22, %26 : vector<256x128xf32>
    %c0_36 = arith.constant 0 : index
    %c0_37 = arith.constant 0 : index
    %28 = vector.load %arg6[%c0_36, %c0_37] : memref<256x128xf32, #tpu.memory_space<vmem>>, vector<256x128xf32>
    tpu.vector_store %arg6[%c0_36, %c0_37], %27 {strides = array<i32>} : memref<256x128xf32, #tpu.memory_space<vmem>>, vector<256x128xf32>,
    %c0_38 = arith.constant 0 : index
    %c0_39 = arith.constant 0 : index
    %c1_40 = arith.constant 1 : index
    %c0_41 = arith.constant 0 : index
    %c0_42 = arith.constant 0 : index
    %29 = vector.load %arg2[%c0_38, %c0_39, %c1_40, %c0_41, %c0_42] : memref<1x1x18x18x128xbf16, #tpu.memory_space<vmem>>, vector<1x1x16x16x128xbf16>
    %30 = vector.shape_cast %29 : vector<1x1x16x16x128xbf16> to vector<16x16x128xbf16>
    %c0_43 = arith.constant 0 : index
    %c0_44 = arith.constant 0 : index
    %31 = vector.load %arg6[%c0_43, %c0_44] : memref<256x128xf32, #tpu.memory_space<vmem>>, vector<256x128xf32>
    %32 = vector.shape_cast %30 : vector<16x16x128xbf16> to vector<256x128xbf16>
    %c3 = arith.constant 3 : index
    %c0_45 = arith.constant 0 : index
    %c0_46 = arith.constant 0 : index
    %33 = vector.load %arg3[%c3, %c0_45, %c0_46] : memref<9x128x128xbf16, #tpu.memory_space<vmem>>, vector<1x128x128xbf16>
    %34 = vector.shape_cast %33 : vector<1x128x128xbf16> to vector<128x128xbf16>
    %cst_47 = arith.constant dense<0.000000e+00> : vector<256x128xf32>
    %35 = tpu.matmul %32, %34, %cst_47 {dimension_numbers = #tpu.dot_dimension_numbers<[1], [0], [0], [1], [0, 0, 1, 1], [], []>} : vector<256x128xbf16>, vector<128x128xbf16>, vector<256x128xf32> -> vector<256x128xf32>
    %36 = arith.addf %31, %35 : vector<256x128xf32>
    %c0_48 = arith.constant 0 : index
    %c0_49 = arith.constant 0 : index
    %37 = vector.load %arg6[%c0_48, %c0_49] : memref<256x128xf32, #tpu.memory_space<vmem>>, vector<256x128xf32>
    tpu.vector_store %arg6[%c0_48, %c0_49], %36 {strides = array<i32>} : memref<256x128xf32, #tpu.memory_space<vmem>>, vector<256x128xf32>,
    %c0_50 = arith.constant 0 : index
    %c0_51 = arith.constant 0 : index
    %c1_52 = arith.constant 1 : index
    %c1_53 = arith.constant 1 : index
    %c0_54 = arith.constant 0 : index
    %38 = vector.load %arg2[%c0_50, %c0_51, %c1_52, %c1_53, %c0_54] : memref<1x1x18x18x128xbf16, #tpu.memory_space<vmem>>, vector<1x1x16x16x128xbf16>
    %39 = vector.shape_cast %38 : vector<1x1x16x16x128xbf16> to vector<16x16x128xbf16>
    %c0_55 = arith.constant 0 : index
    %c0_56 = arith.constant 0 : index
    %40 = vector.load %arg6[%c0_55, %c0_56] : memref<256x128xf32, #tpu.memory_space<vmem>>, vector<256x128xf32>
    %41 = vector.shape_cast %39 : vector<16x16x128xbf16> to vector<256x128xbf16>
    %c4 = arith.constant 4 : index
    %c0_57 = arith.constant 0 : index
    %c0_58 = arith.constant 0 : index
    %42 = vector.load %arg3[%c4, %c0_57, %c0_58] : memref<9x128x128xbf16, #tpu.memory_space<vmem>>, vector<1x128x128xbf16>
    %43 = vector.shape_cast %42 : vector<1x128x128xbf16> to vector<128x128xbf16>
    %cst_59 = arith.constant dense<0.000000e+00> : vector<256x128xf32>
    %44 = tpu.matmul %41, %43, %cst_59 {dimension_numbers = #tpu.dot_dimension_numbers<[1], [0], [0], [1], [0, 0, 1, 1], [], []>} : vector<256x128xbf16>, vector<128x128xbf16>, vector<256x128xf32> -> vector<256x128xf32>
    %45 = arith.addf %40, %44 : vector<256x128xf32>
    %c0_60 = arith.constant 0 : index
    %c0_61 = arith.constant 0 : index
    %46 = vector.load %arg6[%c0_60, %c0_61] : memref<256x128xf32, #tpu.memory_space<vmem>>, vector<256x128xf32>
    tpu.vector_store %arg6[%c0_60, %c0_61], %45 {strides = array<i32>} : memref<256x128xf32, #tpu.memory_space<vmem>>, vector<256x128xf32>,
    %c0_62 = arith.constant 0 : index
    %c0_63 = arith.constant 0 : index
    %c1_64 = arith.constant 1 : index
    %c2_65 = arith.constant 2 : index
    %c0_66 = arith.constant 0 : index
    %47 = vector.load %arg2[%c0_62, %c0_63, %c1_64, %c2_65, %c0_66] : memref<1x1x18x18x128xbf16, #tpu.memory_space<vmem>>, vector<1x1x16x16x128xbf16>
    %48 = vector.shape_cast %47 : vector<1x1x16x16x128xbf16> to vector<16x16x128xbf16>
    %c0_67 = arith.constant 0 : index
    %c0_68 = arith.constant 0 : index
    %49 = vector.load %arg6[%c0_67, %c0_68] : memref<256x128xf32, #tpu.memory_space<vmem>>, vector<256x128xf32>
    %50 = vector.shape_cast %48 : vector<16x16x128xbf16> to vector<256x128xbf16>
    %c5 = arith.constant 5 : index
    %c0_69 = arith.constant 0 : index
    %c0_70 = arith.constant 0 : index
    %51 = vector.load %arg3[%c5, %c0_69, %c0_70] : memref<9x128x128xbf16, #tpu.memory_space<vmem>>, vector<1x128x128xbf16>
    %52 = vector.shape_cast %51 : vector<1x128x128xbf16> to vector<128x128xbf16>
    %cst_71 = arith.constant dense<0.000000e+00> : vector<256x128xf32>
    %53 = tpu.matmul %50, %52, %cst_71 {dimension_numbers = #tpu.dot_dimension_numbers<[1], [0], [0], [1], [0, 0, 1, 1], [], []>} : vector<256x128xbf16>, vector<128x128xbf16>, vector<256x128xf32> -> vector<256x128xf32>
    %54 = arith.addf %49, %53 : vector<256x128xf32>
    %c0_72 = arith.constant 0 : index
    %c0_73 = arith.constant 0 : index
    %55 = vector.load %arg6[%c0_72, %c0_73] : memref<256x128xf32, #tpu.memory_space<vmem>>, vector<256x128xf32>
    tpu.vector_store %arg6[%c0_72, %c0_73], %54 {strides = array<i32>} : memref<256x128xf32, #tpu.memory_space<vmem>>, vector<256x128xf32>,
    %c0_74 = arith.constant 0 : index
    %c0_75 = arith.constant 0 : index
    %c2_76 = arith.constant 2 : index
    %c0_77 = arith.constant 0 : index
    %c0_78 = arith.constant 0 : index
    %56 = vector.load %arg2[%c0_74, %c0_75, %c2_76, %c0_77, %c0_78] : memref<1x1x18x18x128xbf16, #tpu.memory_space<vmem>>, vector<1x1x16x16x128xbf16>
    %57 = vector.shape_cast %56 : vector<1x1x16x16x128xbf16> to vector<16x16x128xbf16>
    %c0_79 = arith.constant 0 : index
    %c0_80 = arith.constant 0 : index
    %58 = vector.load %arg6[%c0_79, %c0_80] : memref<256x128xf32, #tpu.memory_space<vmem>>, vector<256x128xf32>
    %59 = vector.shape_cast %57 : vector<16x16x128xbf16> to vector<256x128xbf16>
    %c6 = arith.constant 6 : index
    %c0_81 = arith.constant 0 : index
    %c0_82 = arith.constant 0 : index
    %60 = vector.load %arg3[%c6, %c0_81, %c0_82] : memref<9x128x128xbf16, #tpu.memory_space<vmem>>, vector<1x128x128xbf16>
    %61 = vector.shape_cast %60 : vector<1x128x128xbf16> to vector<128x128xbf16>
    %cst_83 = arith.constant dense<0.000000e+00> : vector<256x128xf32>
    %62 = tpu.matmul %59, %61, %cst_83 {dimension_numbers = #tpu.dot_dimension_numbers<[1], [0], [0], [1], [0, 0, 1, 1], [], []>} : vector<256x128xbf16>, vector<128x128xbf16>, vector<256x128xf32> -> vector<256x128xf32>
    %63 = arith.addf %58, %62 : vector<256x128xf32>
    %c0_84 = arith.constant 0 : index
    %c0_85 = arith.constant 0 : index
    %64 = vector.load %arg6[%c0_84, %c0_85] : memref<256x128xf32, #tpu.memory_space<vmem>>, vector<256x128xf32>
    tpu.vector_store %arg6[%c0_84, %c0_85], %63 {strides = array<i32>} : memref<256x128xf32, #tpu.memory_space<vmem>>, vector<256x128xf32>,
    %c0_86 = arith.constant 0 : index
    %c0_87 = arith.constant 0 : index
    %c2_88 = arith.constant 2 : index
    %c1_89 = arith.constant 1 : index
    %c0_90 = arith.constant 0 : index
    %65 = vector.load %arg2[%c0_86, %c0_87, %c2_88, %c1_89, %c0_90] : memref<1x1x18x18x128xbf16, #tpu.memory_space<vmem>>, vector<1x1x16x16x128xbf16>
    %66 = vector.shape_cast %65 : vector<1x1x16x16x128xbf16> to vector<16x16x128xbf16>
    %c0_91 = arith.constant 0 : index
    %c0_92 = arith.constant 0 : index
    %67 = vector.load %arg6[%c0_91, %c0_92] : memref<256x128xf32, #tpu.memory_space<vmem>>, vector<256x128xf32>
    %68 = vector.shape_cast %66 : vector<16x16x128xbf16> to vector<256x128xbf16>
    %c7 = arith.constant 7 : index
    %c0_93 = arith.constant 0 : index
    %c0_94 = arith.constant 0 : index
    %69 = vector.load %arg3[%c7, %c0_93, %c0_94] : memref<9x128x128xbf16, #tpu.memory_space<vmem>>, vector<1x128x128xbf16>
    %70 = vector.shape_cast %69 : vector<1x128x128xbf16> to vector<128x128xbf16>
    %cst_95 = arith.constant dense<0.000000e+00> : vector<256x128xf32>
    %71 = tpu.matmul %68, %70, %cst_95 {dimension_numbers = #tpu.dot_dimension_numbers<[1], [0], [0], [1], [0, 0, 1, 1], [], []>} : vector<256x128xbf16>, vector<128x128xbf16>, vector<256x128xf32> -> vector<256x128xf32>
    %72 = arith.addf %67, %71 : vector<256x128xf32>
    %c0_96 = arith.constant 0 : index
    %c0_97 = arith.constant 0 : index
    %73 = vector.load %arg6[%c0_96, %c0_97] : memref<256x128xf32, #tpu.memory_space<vmem>>, vector<256x128xf32>
    tpu.vector_store %arg6[%c0_96, %c0_97], %72 {strides = array<i32>} : memref<256x128xf32, #tpu.memory_space<vmem>>, vector<256x128xf32>,
    %c0_98 = arith.constant 0 : index
    %c0_99 = arith.constant 0 : index
    %c2_100 = arith.constant 2 : index
    %c2_101 = arith.constant 2 : index
    %c0_102 = arith.constant 0 : index
    %74 = vector.load %arg2[%c0_98, %c0_99, %c2_100, %c2_101, %c0_102] : memref<1x1x18x18x128xbf16, #tpu.memory_space<vmem>>, vector<1x1x16x16x128xbf16>
    %75 = vector.shape_cast %74 : vector<1x1x16x16x128xbf16> to vector<16x16x128xbf16>
    %c0_103 = arith.constant 0 : index
    %c0_104 = arith.constant 0 : index
    %76 = vector.load %arg6[%c0_103, %c0_104] : memref<256x128xf32, #tpu.memory_space<vmem>>, vector<256x128xf32>
    %77 = vector.shape_cast %75 : vector<16x16x128xbf16> to vector<256x128xbf16>
    %c8 = arith.constant 8 : index
    %c0_105 = arith.constant 0 : index
    %c0_106 = arith.constant 0 : index
    %78 = vector.load %arg3[%c8, %c0_105, %c0_106] : memref<9x128x128xbf16, #tpu.memory_space<vmem>>, vector<1x128x128xbf16>
    %79 = vector.shape_cast %78 : vector<1x128x128xbf16> to vector<128x128xbf16>
    %cst_107 = arith.constant dense<0.000000e+00> : vector<256x128xf32>
    %80 = tpu.matmul %77, %79, %cst_107 {dimension_numbers = #tpu.dot_dimension_numbers<[1], [0], [0], [1], [0, 0, 1, 1], [], []>} : vector<256x128xbf16>, vector<128x128xbf16>, vector<256x128xf32> -> vector<256x128xf32>
    %81 = arith.addf %76, %80 : vector<256x128xf32>
    %c0_108 = arith.constant 0 : index
    %c0_109 = arith.constant 0 : index
    %82 = vector.load %arg6[%c0_108, %c0_109] : memref<256x128xf32, #tpu.memory_space<vmem>>, vector<256x128xf32>
    tpu.vector_store %arg6[%c0_108, %c0_109], %81 {strides = array<i32>} : memref<256x128xf32, #tpu.memory_space<vmem>>, vector<256x128xf32>,
    %c0_110 = arith.constant 0 : index
    %c0_111 = arith.constant 0 : index
    %83 = vector.load %arg6[%c0_110, %c0_111] : memref<256x128xf32, #tpu.memory_space<vmem>>, vector<256x128xf32>
    %c0_112 = arith.constant 0 : index
    %c0_113 = arith.constant 0 : index
    %84 = vector.load %arg4[%c0_112, %c0_113] : memref<1x128xf32, #tpu.memory_space<vmem>>, vector<1x128xf32>
    %85 = vector.broadcast %84 : vector<1x128xf32> to vector<256x128xf32>
    %86 = arith.addf %83, %85 : vector<256x128xf32>
    %cst_114 = arith.constant 0.000000e+00 : f32
    %87 = vector.broadcast %cst_114 : f32 to vector<256x128xf32>
    %88 = arith.maximumf %86, %87 : vector<256x128xf32>
    %89 = vector.shape_cast %88 : vector<256x128xf32> to vector<16x16x128xf32>
    %90 = arith.truncf %89 : vector<16x16x128xf32> to vector<16x16x128xbf16>
    %c0_115 = arith.constant 0 : index
    %c0_116 = arith.constant 0 : index
    %c0_117 = arith.constant 0 : index
    %c0_118 = arith.constant 0 : index
    %91 = vector.load %arg5[%c0_115, %c0_116, %c0_117, %c0_118] : memref<1x16x16x128xbf16, #tpu.memory_space<vmem>>, vector<1x16x16x128xbf16>
    %92 = vector.shape_cast %91 : vector<1x16x16x128xbf16> to vector<16x16x128xbf16>
    %93 = vector.shape_cast %90 : vector<16x16x128xbf16> to vector<1x16x16x128xbf16>
    tpu.vector_store %arg5[%c0_115, %c0_116, %c0_117, %c0_118], %93 {strides = array<i32>} : memref<1x16x16x128xbf16, #tpu.memory_space<vmem>>, vector<1x16x16x128xbf16>,
    return
  }
  func.func @transform_0(%arg0: i32, %arg1: i32) -> (i32, i32, i32, i32, i32) {
    %c1_i32 = arith.constant 1 : i32
    %0 = arith.muli %arg0, %c1_i32 : i32
    %1 = arith.addi %0, %arg1 : i32
    %c0_i32 = arith.constant 0 : i32
    %c0_i32_0 = arith.constant 0 : i32
    %c0_i32_1 = arith.constant 0 : i32
    %c0_i32_2 = arith.constant 0 : i32
    %c0_i32_3 = arith.constant 0 : i32
    return %1, %c0_i32, %c0_i32_0, %c0_i32_1, %c0_i32_2 : i32, i32, i32, i32, i32
  }
  func.func @transform_1(%arg0: i32, %arg1: i32) -> (i32, i32, i32) {
    %c0_i32 = arith.constant 0 : i32
    %c0_i32_0 = arith.constant 0 : i32
    %c0_i32_1 = arith.constant 0 : i32
    %c0_i32_2 = arith.constant 0 : i32
    return %c0_i32, %c0_i32_0, %c0_i32_1 : i32, i32, i32
  }
  func.func @transform_2(%arg0: i32, %arg1: i32) -> (i32, i32) {
    %c0_i32 = arith.constant 0 : i32
    %c0_i32_0 = arith.constant 0 : i32
    %c0_i32_1 = arith.constant 0 : i32
    return %c0_i32, %c0_i32_0 : i32, i32
  }
  func.func @transform_3(%arg0: i32, %arg1: i32) -> (i32, i32, i32, i32) {
    %c0_i32 = arith.constant 0 : i32
    %c0_i32_0 = arith.constant 0 : i32
    %c0_i32_1 = arith.constant 0 : i32
    return %arg0, %arg1, %c0_i32, %c0_i32_0 : i32, i32, i32, i32
  }
}

module attributes {stable_mosaic.version = 11 : i64} {
  func.func @_conv3x3_skip_kernel(%arg0: i32, %arg1: i32, %arg2: memref<1x4x9x9x128xbf16, #tpu.memory_space<vmem>>, %arg3: memref<9x128x128xbf16, #tpu.memory_space<vmem>>, %arg4: memref<1x128xf32, #tpu.memory_space<vmem>>, %arg5: memref<1x8x8x128xbf16, #tpu.memory_space<vmem>>, %arg6: memref<1x8x8x128xbf16, #tpu.memory_space<vmem>>, %arg7: memref<64x128xf32, #tpu.memory_space<vmem>>) attributes {dimension_semantics = [#tpu.dimension_semantics<parallel>, #tpu.dimension_semantics<parallel>], iteration_bounds = array<i64: 2, 1>, scalar_prefetch = 0 : i64, scratch_operands = 1 : i64, tpu.core_type = #tpu.core_type<tc>, window_params = [{transform_indices = @transform_0, window_bounds = array<i64: 1, 4, 9, 9, 128>}, {pipeline_mode = #tpu.pipeline_mode<synchronous>, transform_indices = @transform_1, window_bounds = array<i64: 9, 128, 128>}, {pipeline_mode = #tpu.pipeline_mode<synchronous>, transform_indices = @transform_2, window_bounds = array<i64: 1, 128>}, {transform_indices = @transform_3, window_bounds = array<i64: 1, 8, 8, 128>}, {transform_indices = @transform_4, window_bounds = array<i64: 1, 8, 8, 128>}]} {
    %cst = arith.constant 0.000000e+00 : f32
    %0 = vector.broadcast %cst : f32 to vector<64x128xf32>
    %c0 = arith.constant 0 : index
    %c0_0 = arith.constant 0 : index
    %1 = vector.load %arg7[%c0, %c0_0] : memref<64x128xf32, #tpu.memory_space<vmem>>, vector<64x128xf32>
    tpu.vector_store %arg7[%c0, %c0_0], %0 {strides = array<i32>} : memref<64x128xf32, #tpu.memory_space<vmem>>, vector<64x128xf32>,
    %c0_1 = arith.constant 0 : index
    %c0_2 = arith.constant 0 : index
    %c0_3 = arith.constant 0 : index
    %c0_4 = arith.constant 0 : index
    %c0_5 = arith.constant 0 : index
    %2 = vector.load %arg2[%c0_1, %c0_2, %c0_3, %c0_4, %c0_5] : memref<1x4x9x9x128xbf16, #tpu.memory_space<vmem>>, vector<1x1x8x8x128xbf16>
    %3 = vector.shape_cast %2 : vector<1x1x8x8x128xbf16> to vector<8x8x128xbf16>
    %c0_6 = arith.constant 0 : index
    %c0_7 = arith.constant 0 : index
    %4 = vector.load %arg7[%c0_6, %c0_7] : memref<64x128xf32, #tpu.memory_space<vmem>>, vector<64x128xf32>
    %5 = vector.shape_cast %3 : vector<8x8x128xbf16> to vector<64x128xbf16>
    %c0_8 = arith.constant 0 : index
    %c0_9 = arith.constant 0 : index
    %c0_10 = arith.constant 0 : index
    %6 = vector.load %arg3[%c0_8, %c0_9, %c0_10] : memref<9x128x128xbf16, #tpu.memory_space<vmem>>, vector<1x128x128xbf16>
    %7 = vector.shape_cast %6 : vector<1x128x128xbf16> to vector<128x128xbf16>
    %cst_11 = arith.constant dense<0.000000e+00> : vector<64x128xf32>
    %8 = tpu.matmul %5, %7, %cst_11 {dimension_numbers = #tpu.dot_dimension_numbers<[1], [0], [0], [1], [0, 0, 1, 1], [], []>} : vector<64x128xbf16>, vector<128x128xbf16>, vector<64x128xf32> -> vector<64x128xf32>
    %9 = arith.addf %4, %8 : vector<64x128xf32>
    %c0_12 = arith.constant 0 : index
    %c0_13 = arith.constant 0 : index
    %10 = vector.load %arg7[%c0_12, %c0_13] : memref<64x128xf32, #tpu.memory_space<vmem>>, vector<64x128xf32>
    tpu.vector_store %arg7[%c0_12, %c0_13], %9 {strides = array<i32>} : memref<64x128xf32, #tpu.memory_space<vmem>>, vector<64x128xf32>,
    %c0_14 = arith.constant 0 : index
    %c1 = arith.constant 1 : index
    %c0_15 = arith.constant 0 : index
    %c0_16 = arith.constant 0 : index
    %c0_17 = arith.constant 0 : index
    %11 = vector.load %arg2[%c0_14, %c1, %c0_15, %c0_16, %c0_17] : memref<1x4x9x9x128xbf16, #tpu.memory_space<vmem>>, vector<1x1x8x8x128xbf16>
    %12 = vector.shape_cast %11 : vector<1x1x8x8x128xbf16> to vector<8x8x128xbf16>
    %c0_18 = arith.constant 0 : index
    %c0_19 = arith.constant 0 : index
    %13 = vector.load %arg7[%c0_18, %c0_19] : memref<64x128xf32, #tpu.memory_space<vmem>>, vector<64x128xf32>
    %14 = vector.shape_cast %12 : vector<8x8x128xbf16> to vector<64x128xbf16>
    %c1_20 = arith.constant 1 : index
    %c0_21 = arith.constant 0 : index
    %c0_22 = arith.constant 0 : index
    %15 = vector.load %arg3[%c1_20, %c0_21, %c0_22] : memref<9x128x128xbf16, #tpu.memory_space<vmem>>, vector<1x128x128xbf16>
    %16 = vector.shape_cast %15 : vector<1x128x128xbf16> to vector<128x128xbf16>
    %cst_23 = arith.constant dense<0.000000e+00> : vector<64x128xf32>
    %17 = tpu.matmul %14, %16, %cst_23 {dimension_numbers = #tpu.dot_dimension_numbers<[1], [0], [0], [1], [0, 0, 1, 1], [], []>} : vector<64x128xbf16>, vector<128x128xbf16>, vector<64x128xf32> -> vector<64x128xf32>
    %18 = arith.addf %13, %17 : vector<64x128xf32>
    %c0_24 = arith.constant 0 : index
    %c0_25 = arith.constant 0 : index
    %19 = vector.load %arg7[%c0_24, %c0_25] : memref<64x128xf32, #tpu.memory_space<vmem>>, vector<64x128xf32>
    tpu.vector_store %arg7[%c0_24, %c0_25], %18 {strides = array<i32>} : memref<64x128xf32, #tpu.memory_space<vmem>>, vector<64x128xf32>,
    %c0_26 = arith.constant 0 : index
    %c0_27 = arith.constant 0 : index
    %c0_28 = arith.constant 0 : index
    %c1_29 = arith.constant 1 : index
    %c0_30 = arith.constant 0 : index
    %20 = vector.load %arg2[%c0_26, %c0_27, %c0_28, %c1_29, %c0_30] : memref<1x4x9x9x128xbf16, #tpu.memory_space<vmem>>, vector<1x1x8x8x128xbf16>
    %21 = vector.shape_cast %20 : vector<1x1x8x8x128xbf16> to vector<8x8x128xbf16>
    %c0_31 = arith.constant 0 : index
    %c0_32 = arith.constant 0 : index
    %22 = vector.load %arg7[%c0_31, %c0_32] : memref<64x128xf32, #tpu.memory_space<vmem>>, vector<64x128xf32>
    %23 = vector.shape_cast %21 : vector<8x8x128xbf16> to vector<64x128xbf16>
    %c2 = arith.constant 2 : index
    %c0_33 = arith.constant 0 : index
    %c0_34 = arith.constant 0 : index
    %24 = vector.load %arg3[%c2, %c0_33, %c0_34] : memref<9x128x128xbf16, #tpu.memory_space<vmem>>, vector<1x128x128xbf16>
    %25 = vector.shape_cast %24 : vector<1x128x128xbf16> to vector<128x128xbf16>
    %cst_35 = arith.constant dense<0.000000e+00> : vector<64x128xf32>
    %26 = tpu.matmul %23, %25, %cst_35 {dimension_numbers = #tpu.dot_dimension_numbers<[1], [0], [0], [1], [0, 0, 1, 1], [], []>} : vector<64x128xbf16>, vector<128x128xbf16>, vector<64x128xf32> -> vector<64x128xf32>
    %27 = arith.addf %22, %26 : vector<64x128xf32>
    %c0_36 = arith.constant 0 : index
    %c0_37 = arith.constant 0 : index
    %28 = vector.load %arg7[%c0_36, %c0_37] : memref<64x128xf32, #tpu.memory_space<vmem>>, vector<64x128xf32>
    tpu.vector_store %arg7[%c0_36, %c0_37], %27 {strides = array<i32>} : memref<64x128xf32, #tpu.memory_space<vmem>>, vector<64x128xf32>,
    %c0_38 = arith.constant 0 : index
    %c2_39 = arith.constant 2 : index
    %c0_40 = arith.constant 0 : index
    %c0_41 = arith.constant 0 : index
    %c0_42 = arith.constant 0 : index
    %29 = vector.load %arg2[%c0_38, %c2_39, %c0_40, %c0_41, %c0_42] : memref<1x4x9x9x128xbf16, #tpu.memory_space<vmem>>, vector<1x1x8x8x128xbf16>
    %30 = vector.shape_cast %29 : vector<1x1x8x8x128xbf16> to vector<8x8x128xbf16>
    %c0_43 = arith.constant 0 : index
    %c0_44 = arith.constant 0 : index
    %31 = vector.load %arg7[%c0_43, %c0_44] : memref<64x128xf32, #tpu.memory_space<vmem>>, vector<64x128xf32>
    %32 = vector.shape_cast %30 : vector<8x8x128xbf16> to vector<64x128xbf16>
    %c3 = arith.constant 3 : index
    %c0_45 = arith.constant 0 : index
    %c0_46 = arith.constant 0 : index
    %33 = vector.load %arg3[%c3, %c0_45, %c0_46] : memref<9x128x128xbf16, #tpu.memory_space<vmem>>, vector<1x128x128xbf16>
    %34 = vector.shape_cast %33 : vector<1x128x128xbf16> to vector<128x128xbf16>
    %cst_47 = arith.constant dense<0.000000e+00> : vector<64x128xf32>
    %35 = tpu.matmul %32, %34, %cst_47 {dimension_numbers = #tpu.dot_dimension_numbers<[1], [0], [0], [1], [0, 0, 1, 1], [], []>} : vector<64x128xbf16>, vector<128x128xbf16>, vector<64x128xf32> -> vector<64x128xf32>
    %36 = arith.addf %31, %35 : vector<64x128xf32>
    %c0_48 = arith.constant 0 : index
    %c0_49 = arith.constant 0 : index
    %37 = vector.load %arg7[%c0_48, %c0_49] : memref<64x128xf32, #tpu.memory_space<vmem>>, vector<64x128xf32>
    tpu.vector_store %arg7[%c0_48, %c0_49], %36 {strides = array<i32>} : memref<64x128xf32, #tpu.memory_space<vmem>>, vector<64x128xf32>,
    %c0_50 = arith.constant 0 : index
    %c3_51 = arith.constant 3 : index
    %c0_52 = arith.constant 0 : index
    %c0_53 = arith.constant 0 : index
    %c0_54 = arith.constant 0 : index
    %38 = vector.load %arg2[%c0_50, %c3_51, %c0_52, %c0_53, %c0_54] : memref<1x4x9x9x128xbf16, #tpu.memory_space<vmem>>, vector<1x1x8x8x128xbf16>
    %39 = vector.shape_cast %38 : vector<1x1x8x8x128xbf16> to vector<8x8x128xbf16>
    %c0_55 = arith.constant 0 : index
    %c0_56 = arith.constant 0 : index
    %40 = vector.load %arg7[%c0_55, %c0_56] : memref<64x128xf32, #tpu.memory_space<vmem>>, vector<64x128xf32>
    %41 = vector.shape_cast %39 : vector<8x8x128xbf16> to vector<64x128xbf16>
    %c4 = arith.constant 4 : index
    %c0_57 = arith.constant 0 : index
    %c0_58 = arith.constant 0 : index
    %42 = vector.load %arg3[%c4, %c0_57, %c0_58] : memref<9x128x128xbf16, #tpu.memory_space<vmem>>, vector<1x128x128xbf16>
    %43 = vector.shape_cast %42 : vector<1x128x128xbf16> to vector<128x128xbf16>
    %cst_59 = arith.constant dense<0.000000e+00> : vector<64x128xf32>
    %44 = tpu.matmul %41, %43, %cst_59 {dimension_numbers = #tpu.dot_dimension_numbers<[1], [0], [0], [1], [0, 0, 1, 1], [], []>} : vector<64x128xbf16>, vector<128x128xbf16>, vector<64x128xf32> -> vector<64x128xf32>
    %45 = arith.addf %40, %44 : vector<64x128xf32>
    %c0_60 = arith.constant 0 : index
    %c0_61 = arith.constant 0 : index
    %46 = vector.load %arg7[%c0_60, %c0_61] : memref<64x128xf32, #tpu.memory_space<vmem>>, vector<64x128xf32>
    tpu.vector_store %arg7[%c0_60, %c0_61], %45 {strides = array<i32>} : memref<64x128xf32, #tpu.memory_space<vmem>>, vector<64x128xf32>,
    %c0_62 = arith.constant 0 : index
    %c2_63 = arith.constant 2 : index
    %c0_64 = arith.constant 0 : index
    %c1_65 = arith.constant 1 : index
    %c0_66 = arith.constant 0 : index
    %47 = vector.load %arg2[%c0_62, %c2_63, %c0_64, %c1_65, %c0_66] : memref<1x4x9x9x128xbf16, #tpu.memory_space<vmem>>, vector<1x1x8x8x128xbf16>
    %48 = vector.shape_cast %47 : vector<1x1x8x8x128xbf16> to vector<8x8x128xbf16>
    %c0_67 = arith.constant 0 : index
    %c0_68 = arith.constant 0 : index
    %49 = vector.load %arg7[%c0_67, %c0_68] : memref<64x128xf32, #tpu.memory_space<vmem>>, vector<64x128xf32>
    %50 = vector.shape_cast %48 : vector<8x8x128xbf16> to vector<64x128xbf16>
    %c5 = arith.constant 5 : index
    %c0_69 = arith.constant 0 : index
    %c0_70 = arith.constant 0 : index
    %51 = vector.load %arg3[%c5, %c0_69, %c0_70] : memref<9x128x128xbf16, #tpu.memory_space<vmem>>, vector<1x128x128xbf16>
    %52 = vector.shape_cast %51 : vector<1x128x128xbf16> to vector<128x128xbf16>
    %cst_71 = arith.constant dense<0.000000e+00> : vector<64x128xf32>
    %53 = tpu.matmul %50, %52, %cst_71 {dimension_numbers = #tpu.dot_dimension_numbers<[1], [0], [0], [1], [0, 0, 1, 1], [], []>} : vector<64x128xbf16>, vector<128x128xbf16>, vector<64x128xf32> -> vector<64x128xf32>
    %54 = arith.addf %49, %53 : vector<64x128xf32>
    %c0_72 = arith.constant 0 : index
    %c0_73 = arith.constant 0 : index
    %55 = vector.load %arg7[%c0_72, %c0_73] : memref<64x128xf32, #tpu.memory_space<vmem>>, vector<64x128xf32>
    tpu.vector_store %arg7[%c0_72, %c0_73], %54 {strides = array<i32>} : memref<64x128xf32, #tpu.memory_space<vmem>>, vector<64x128xf32>,
    %c0_74 = arith.constant 0 : index
    %c0_75 = arith.constant 0 : index
    %c1_76 = arith.constant 1 : index
    %c0_77 = arith.constant 0 : index
    %c0_78 = arith.constant 0 : index
    %56 = vector.load %arg2[%c0_74, %c0_75, %c1_76, %c0_77, %c0_78] : memref<1x4x9x9x128xbf16, #tpu.memory_space<vmem>>, vector<1x1x8x8x128xbf16>
    %57 = vector.shape_cast %56 : vector<1x1x8x8x128xbf16> to vector<8x8x128xbf16>
    %c0_79 = arith.constant 0 : index
    %c0_80 = arith.constant 0 : index
    %58 = vector.load %arg7[%c0_79, %c0_80] : memref<64x128xf32, #tpu.memory_space<vmem>>, vector<64x128xf32>
    %59 = vector.shape_cast %57 : vector<8x8x128xbf16> to vector<64x128xbf16>
    %c6 = arith.constant 6 : index
    %c0_81 = arith.constant 0 : index
    %c0_82 = arith.constant 0 : index
    %60 = vector.load %arg3[%c6, %c0_81, %c0_82] : memref<9x128x128xbf16, #tpu.memory_space<vmem>>, vector<1x128x128xbf16>
    %61 = vector.shape_cast %60 : vector<1x128x128xbf16> to vector<128x128xbf16>
    %cst_83 = arith.constant dense<0.000000e+00> : vector<64x128xf32>
    %62 = tpu.matmul %59, %61, %cst_83 {dimension_numbers = #tpu.dot_dimension_numbers<[1], [0], [0], [1], [0, 0, 1, 1], [], []>} : vector<64x128xbf16>, vector<128x128xbf16>, vector<64x128xf32> -> vector<64x128xf32>
    %63 = arith.addf %58, %62 : vector<64x128xf32>
    %c0_84 = arith.constant 0 : index
    %c0_85 = arith.constant 0 : index
    %64 = vector.load %arg7[%c0_84, %c0_85] : memref<64x128xf32, #tpu.memory_space<vmem>>, vector<64x128xf32>
    tpu.vector_store %arg7[%c0_84, %c0_85], %63 {strides = array<i32>} : memref<64x128xf32, #tpu.memory_space<vmem>>, vector<64x128xf32>,
    %c0_86 = arith.constant 0 : index
    %c1_87 = arith.constant 1 : index
    %c1_88 = arith.constant 1 : index
    %c0_89 = arith.constant 0 : index
    %c0_90 = arith.constant 0 : index
    %65 = vector.load %arg2[%c0_86, %c1_87, %c1_88, %c0_89, %c0_90] : memref<1x4x9x9x128xbf16, #tpu.memory_space<vmem>>, vector<1x1x8x8x128xbf16>
    %66 = vector.shape_cast %65 : vector<1x1x8x8x128xbf16> to vector<8x8x128xbf16>
    %c0_91 = arith.constant 0 : index
    %c0_92 = arith.constant 0 : index
    %67 = vector.load %arg7[%c0_91, %c0_92] : memref<64x128xf32, #tpu.memory_space<vmem>>, vector<64x128xf32>
    %68 = vector.shape_cast %66 : vector<8x8x128xbf16> to vector<64x128xbf16>
    %c7 = arith.constant 7 : index
    %c0_93 = arith.constant 0 : index
    %c0_94 = arith.constant 0 : index
    %69 = vector.load %arg3[%c7, %c0_93, %c0_94] : memref<9x128x128xbf16, #tpu.memory_space<vmem>>, vector<1x128x128xbf16>
    %70 = vector.shape_cast %69 : vector<1x128x128xbf16> to vector<128x128xbf16>
    %cst_95 = arith.constant dense<0.000000e+00> : vector<64x128xf32>
    %71 = tpu.matmul %68, %70, %cst_95 {dimension_numbers = #tpu.dot_dimension_numbers<[1], [0], [0], [1], [0, 0, 1, 1], [], []>} : vector<64x128xbf16>, vector<128x128xbf16>, vector<64x128xf32> -> vector<64x128xf32>
    %72 = arith.addf %67, %71 : vector<64x128xf32>
    %c0_96 = arith.constant 0 : index
    %c0_97 = arith.constant 0 : index
    %73 = vector.load %arg7[%c0_96, %c0_97] : memref<64x128xf32, #tpu.memory_space<vmem>>, vector<64x128xf32>
    tpu.vector_store %arg7[%c0_96, %c0_97], %72 {strides = array<i32>} : memref<64x128xf32, #tpu.memory_space<vmem>>, vector<64x128xf32>,
    %c0_98 = arith.constant 0 : index
    %c0_99 = arith.constant 0 : index
    %c1_100 = arith.constant 1 : index
    %c1_101 = arith.constant 1 : index
    %c0_102 = arith.constant 0 : index
    %74 = vector.load %arg2[%c0_98, %c0_99, %c1_100, %c1_101, %c0_102] : memref<1x4x9x9x128xbf16, #tpu.memory_space<vmem>>, vector<1x1x8x8x128xbf16>
    %75 = vector.shape_cast %74 : vector<1x1x8x8x128xbf16> to vector<8x8x128xbf16>
    %c0_103 = arith.constant 0 : index
    %c0_104 = arith.constant 0 : index
    %76 = vector.load %arg7[%c0_103, %c0_104] : memref<64x128xf32, #tpu.memory_space<vmem>>, vector<64x128xf32>
    %77 = vector.shape_cast %75 : vector<8x8x128xbf16> to vector<64x128xbf16>
    %c8 = arith.constant 8 : index
    %c0_105 = arith.constant 0 : index
    %c0_106 = arith.constant 0 : index
    %78 = vector.load %arg3[%c8, %c0_105, %c0_106] : memref<9x128x128xbf16, #tpu.memory_space<vmem>>, vector<1x128x128xbf16>
    %79 = vector.shape_cast %78 : vector<1x128x128xbf16> to vector<128x128xbf16>
    %cst_107 = arith.constant dense<0.000000e+00> : vector<64x128xf32>
    %80 = tpu.matmul %77, %79, %cst_107 {dimension_numbers = #tpu.dot_dimension_numbers<[1], [0], [0], [1], [0, 0, 1, 1], [], []>} : vector<64x128xbf16>, vector<128x128xbf16>, vector<64x128xf32> -> vector<64x128xf32>
    %81 = arith.addf %76, %80 : vector<64x128xf32>
    %c0_108 = arith.constant 0 : index
    %c0_109 = arith.constant 0 : index
    %82 = vector.load %arg7[%c0_108, %c0_109] : memref<64x128xf32, #tpu.memory_space<vmem>>, vector<64x128xf32>
    tpu.vector_store %arg7[%c0_108, %c0_109], %81 {strides = array<i32>} : memref<64x128xf32, #tpu.memory_space<vmem>>, vector<64x128xf32>,
    %c0_110 = arith.constant 0 : index
    %c0_111 = arith.constant 0 : index
    %83 = vector.load %arg7[%c0_110, %c0_111] : memref<64x128xf32, #tpu.memory_space<vmem>>, vector<64x128xf32>
    %c0_112 = arith.constant 0 : index
    %c0_113 = arith.constant 0 : index
    %84 = vector.load %arg4[%c0_112, %c0_113] : memref<1x128xf32, #tpu.memory_space<vmem>>, vector<1x128xf32>
    %85 = vector.broadcast %84 : vector<1x128xf32> to vector<64x128xf32>
    %86 = arith.addf %83, %85 : vector<64x128xf32>
    %cst_114 = arith.constant 0.000000e+00 : f32
    %87 = vector.broadcast %cst_114 : f32 to vector<64x128xf32>
    %88 = arith.maximumf %86, %87 : vector<64x128xf32>
    %89 = vector.shape_cast %88 : vector<64x128xf32> to vector<8x8x128xf32>
    %90 = arith.truncf %89 : vector<8x8x128xf32> to vector<8x8x128xbf16>
    %c0_115 = arith.constant 0 : index
    %c0_116 = arith.constant 0 : index
    %c0_117 = arith.constant 0 : index
    %c0_118 = arith.constant 0 : index
    %91 = vector.load %arg5[%c0_115, %c0_116, %c0_117, %c0_118] : memref<1x8x8x128xbf16, #tpu.memory_space<vmem>>, vector<1x8x8x128xbf16>
    %92 = vector.shape_cast %91 : vector<1x8x8x128xbf16> to vector<8x8x128xbf16>
    %93 = vector.shape_cast %90 : vector<8x8x128xbf16> to vector<1x8x8x128xbf16>
    tpu.vector_store %arg5[%c0_115, %c0_116, %c0_117, %c0_118], %93 {strides = array<i32>} : memref<1x8x8x128xbf16, #tpu.memory_space<vmem>>, vector<1x8x8x128xbf16>,
    %c0_119 = arith.constant 0 : index
    %c3_120 = arith.constant 3 : index
    %c0_121 = arith.constant 0 : index
    %c0_122 = arith.constant 0 : index
    %c0_123 = arith.constant 0 : index
    %94 = vector.load %arg2[%c0_119, %c3_120, %c0_121, %c0_122, %c0_123] : memref<1x4x9x9x128xbf16, #tpu.memory_space<vmem>>, vector<1x1x8x8x128xbf16>
    %95 = vector.shape_cast %94 : vector<1x1x8x8x128xbf16> to vector<8x8x128xbf16>
    %c0_124 = arith.constant 0 : index
    %c0_125 = arith.constant 0 : index
    %c0_126 = arith.constant 0 : index
    %c0_127 = arith.constant 0 : index
    %96 = vector.load %arg6[%c0_124, %c0_125, %c0_126, %c0_127] : memref<1x8x8x128xbf16, #tpu.memory_space<vmem>>, vector<1x8x8x128xbf16>
    %97 = vector.shape_cast %96 : vector<1x8x8x128xbf16> to vector<8x8x128xbf16>
    %98 = vector.shape_cast %95 : vector<8x8x128xbf16> to vector<1x8x8x128xbf16>
    tpu.vector_store %arg6[%c0_124, %c0_125, %c0_126, %c0_127], %98 {strides = array<i32>} : memref<1x8x8x128xbf16, #tpu.memory_space<vmem>>, vector<1x8x8x128xbf16>,
    return
  }
  func.func @transform_0(%arg0: i32, %arg1: i32) -> (i32, i32, i32, i32, i32) {
    %c1_i32 = arith.constant 1 : i32
    %0 = arith.muli %arg0, %c1_i32 : i32
    %1 = arith.addi %0, %arg1 : i32
    %c0_i32 = arith.constant 0 : i32
    %c0_i32_0 = arith.constant 0 : i32
    %c0_i32_1 = arith.constant 0 : i32
    %c0_i32_2 = arith.constant 0 : i32
    %c0_i32_3 = arith.constant 0 : i32
    return %1, %c0_i32, %c0_i32_0, %c0_i32_1, %c0_i32_2 : i32, i32, i32, i32, i32
  }
  func.func @transform_1(%arg0: i32, %arg1: i32) -> (i32, i32, i32) {
    %c0_i32 = arith.constant 0 : i32
    %c0_i32_0 = arith.constant 0 : i32
    %c0_i32_1 = arith.constant 0 : i32
    %c0_i32_2 = arith.constant 0 : i32
    return %c0_i32, %c0_i32_0, %c0_i32_1 : i32, i32, i32
  }
  func.func @transform_2(%arg0: i32, %arg1: i32) -> (i32, i32) {
    %c0_i32 = arith.constant 0 : i32
    %c0_i32_0 = arith.constant 0 : i32
    %c0_i32_1 = arith.constant 0 : i32
    return %c0_i32, %c0_i32_0 : i32, i32
  }
  func.func @transform_3(%arg0: i32, %arg1: i32) -> (i32, i32, i32, i32) {
    %c0_i32 = arith.constant 0 : i32
    %c0_i32_0 = arith.constant 0 : i32
    %c0_i32_1 = arith.constant 0 : i32
    return %arg0, %arg1, %c0_i32, %c0_i32_0 : i32, i32, i32, i32
  }
  func.func @transform_4(%arg0: i32, %arg1: i32) -> (i32, i32, i32, i32) {
    %c0_i32 = arith.constant 0 : i32
    %c0_i32_0 = arith.constant 0 : i32
    %c0_i32_1 = arith.constant 0 : i32
    return %arg0, %arg1, %c0_i32, %c0_i32_0 : i32, i32, i32, i32
  }
}

module attributes {stable_mosaic.version = 11 : i64} {
  func.func @_mm_res_conv_kernel(%arg0: i32, %arg1: i32, %arg2: memref<128x128xbf16, #tpu.memory_space<vmem>>, %arg3: memref<128x128xbf16, #tpu.memory_space<vmem>>, %arg4: memref<1x128xf32, #tpu.memory_space<vmem>>, %arg5: memref<128x128xbf16, #tpu.memory_space<vmem>>, %arg6: memref<128x128xbf16, #tpu.memory_space<vmem>>, %arg7: memref<1x128xf32, #tpu.memory_space<vmem>>, %arg8: memref<128x128xbf16, #tpu.memory_space<vmem>>) attributes {dimension_semantics = [#tpu.dimension_semantics<parallel>, #tpu.dimension_semantics<parallel>], iteration_bounds = array<i64: 1, 1>, scalar_prefetch = 0 : i64, scratch_operands = 0 : i64, tpu.core_type = #tpu.core_type<tc>, window_params = [{transform_indices = @transform_0, window_bounds = array<i64: 128, 128>}, {transform_indices = @transform_1, window_bounds = array<i64: 128, 128>}, {transform_indices = @transform_2, window_bounds = array<i64: 1, 128>}, {transform_indices = @transform_3, window_bounds = array<i64: 128, 128>}, {transform_indices = @transform_4, window_bounds = array<i64: 128, 128>}, {transform_indices = @transform_5, window_bounds = array<i64: 1, 128>}, {transform_indices = @transform_6, window_bounds = array<i64: 128, 128>}]} {
    %c0 = arith.constant 0 : index
    %c0_0 = arith.constant 0 : index
    %0 = vector.load %arg2[%c0, %c0_0] : memref<128x128xbf16, #tpu.memory_space<vmem>>, vector<128x128xbf16>
    %c0_1 = arith.constant 0 : index
    %c0_2 = arith.constant 0 : index
    %1 = vector.load %arg3[%c0_1, %c0_2] : memref<128x128xbf16, #tpu.memory_space<vmem>>, vector<128x128xbf16>
    %cst = arith.constant dense<0.000000e+00> : vector<128x128xf32>
    %2 = tpu.matmul %0, %1, %cst {dimension_numbers = #tpu.dot_dimension_numbers<[1], [0], [0], [1], [0, 0, 1, 1], [], []>} : vector<128x128xbf16>, vector<128x128xbf16>, vector<128x128xf32> -> vector<128x128xf32>
    %c0_3 = arith.constant 0 : index
    %c0_4 = arith.constant 0 : index
    %3 = vector.load %arg4[%c0_3, %c0_4] : memref<1x128xf32, #tpu.memory_space<vmem>>, vector<1x128xf32>
    %4 = vector.broadcast %3 : vector<1x128xf32> to vector<128x128xf32>
    %5 = arith.addf %2, %4 : vector<128x128xf32>
    %c0_5 = arith.constant 0 : index
    %c0_6 = arith.constant 0 : index
    %6 = vector.load %arg5[%c0_5, %c0_6] : memref<128x128xbf16, #tpu.memory_space<vmem>>, vector<128x128xbf16>
    %c0_7 = arith.constant 0 : index
    %c0_8 = arith.constant 0 : index
    %7 = vector.load %arg6[%c0_7, %c0_8] : memref<128x128xbf16, #tpu.memory_space<vmem>>, vector<128x128xbf16>
    %cst_9 = arith.constant dense<0.000000e+00> : vector<128x128xf32>
    %8 = tpu.matmul %6, %7, %cst_9 {dimension_numbers = #tpu.dot_dimension_numbers<[1], [0], [0], [1], [0, 0, 1, 1], [], []>} : vector<128x128xbf16>, vector<128x128xbf16>, vector<128x128xf32> -> vector<128x128xf32>
    %9 = arith.addf %5, %8 : vector<128x128xf32>
    %c0_10 = arith.constant 0 : index
    %c0_11 = arith.constant 0 : index
    %10 = vector.load %arg7[%c0_10, %c0_11] : memref<1x128xf32, #tpu.memory_space<vmem>>, vector<1x128xf32>
    %11 = vector.broadcast %10 : vector<1x128xf32> to vector<128x128xf32>
    %12 = arith.addf %9, %11 : vector<128x128xf32>
    %cst_12 = arith.constant 0.000000e+00 : f32
    %13 = vector.broadcast %cst_12 : f32 to vector<128x128xf32>
    %14 = arith.maximumf %12, %13 : vector<128x128xf32>
    %15 = arith.truncf %14 : vector<128x128xf32> to vector<128x128xbf16>
    %c0_13 = arith.constant 0 : index
    %c0_14 = arith.constant 0 : index
    %16 = vector.load %arg8[%c0_13, %c0_14] : memref<128x128xbf16, #tpu.memory_space<vmem>>, vector<128x128xbf16>
    tpu.vector_store %arg8[%c0_13, %c0_14], %15 {strides = array<i32>} : memref<128x128xbf16, #tpu.memory_space<vmem>>, vector<128x128xbf16>,
    return
  }
  func.func @transform_0(%arg0: i32, %arg1: i32) -> (i32, i32) {
    %c0_i32 = arith.constant 0 : i32
    %c0_i32_0 = arith.constant 0 : i32
    return %arg0, %c0_i32 : i32, i32
  }
  func.func @transform_1(%arg0: i32, %arg1: i32) -> (i32, i32) {
    %c0_i32 = arith.constant 0 : i32
    %c0_i32_0 = arith.constant 0 : i32
    return %c0_i32, %arg1 : i32, i32
  }
  func.func @transform_2(%arg0: i32, %arg1: i32) -> (i32, i32) {
    %c0_i32 = arith.constant 0 : i32
    %c0_i32_0 = arith.constant 0 : i32
    return %c0_i32, %arg1 : i32, i32
  }
  func.func @transform_3(%arg0: i32, %arg1: i32) -> (i32, i32) {
    %c0_i32 = arith.constant 0 : i32
    %c0_i32_0 = arith.constant 0 : i32
    return %arg0, %c0_i32 : i32, i32
  }
  func.func @transform_4(%arg0: i32, %arg1: i32) -> (i32, i32) {
    %c0_i32 = arith.constant 0 : i32
    %c0_i32_0 = arith.constant 0 : i32
    return %c0_i32, %arg1 : i32, i32
  }
  func.func @transform_5(%arg0: i32, %arg1: i32) -> (i32, i32) {
    %c0_i32 = arith.constant 0 : i32
    %c0_i32_0 = arith.constant 0 : i32
    return %c0_i32, %arg1 : i32, i32
  }
  func.func @transform_6(%arg0: i32, %arg1: i32) -> (i32, i32) {
    %c0_i32 = arith.constant 0 : i32
    return %arg0, %arg1 : i32, i32
  }
}

module attributes {stable_mosaic.version = 11 : i64} {
  func.func @_head_kernel(%arg0: i32, %arg1: memref<2x64x128xbf16, #tpu.memory_space<vmem>>, %arg2: memref<128x128xf32, #tpu.memory_space<vmem>>, %arg3: memref<1x128xf32, #tpu.memory_space<vmem>>, %arg4: memref<2x128xf32, #tpu.memory_space<vmem>>) attributes {dimension_semantics = [#tpu.dimension_semantics<arbitrary>], iteration_bounds = array<i64: 1>, scalar_prefetch = 0 : i64, scratch_operands = 0 : i64, tpu.core_type = #tpu.core_type<tc>, window_params = [{pipeline_mode = #tpu.pipeline_mode<synchronous>, transform_indices = @transform_0, window_bounds = array<i64: 2, 64, 128>}, {pipeline_mode = #tpu.pipeline_mode<synchronous>, transform_indices = @transform_1, window_bounds = array<i64: 128, 128>}, {pipeline_mode = #tpu.pipeline_mode<synchronous>, transform_indices = @transform_2, window_bounds = array<i64: 1, 128>}, {pipeline_mode = #tpu.pipeline_mode<synchronous>, transform_indices = @transform_3, window_bounds = array<i64: 2, 128>}]} {
    %c0 = arith.constant 0 : index
    %c0_0 = arith.constant 0 : index
    %c0_1 = arith.constant 0 : index
    %0 = vector.load %arg1[%c0, %c0_0, %c0_1] : memref<2x64x128xbf16, #tpu.memory_space<vmem>>, vector<2x64x128xbf16>
    %1 = arith.extf %0 : vector<2x64x128xbf16> to vector<2x64x128xf32>
    %cst = arith.constant dense<0.000000e+00> : vector<2x128xf32>
    %2 = vector.multi_reduction <add>, %1, %cst [1] : vector<2x64x128xf32> to vector<2x128xf32>
    %cst_2 = arith.constant 1.562500e-02 : f32
    %3 = vector.broadcast %cst_2 : f32 to vector<2x128xf32>
    %4 = arith.mulf %2, %3 : vector<2x128xf32>
    %c0_3 = arith.constant 0 : index
    %c0_4 = arith.constant 0 : index
    %5 = vector.load %arg2[%c0_3, %c0_4] : memref<128x128xf32, #tpu.memory_space<vmem>>, vector<128x128xf32>
    %cst_5 = arith.constant dense<0.000000e+00> : vector<2x128xf32>
    %6 = tpu.matmul %4, %5, %cst_5 {dimension_numbers = #tpu.dot_dimension_numbers<[1], [0], [0], [1], [0, 0, 1, 1], [], []>} : vector<2x128xf32>, vector<128x128xf32>, vector<2x128xf32> -> vector<2x128xf32>
    %c0_6 = arith.constant 0 : index
    %c0_7 = arith.constant 0 : index
    %7 = vector.load %arg3[%c0_6, %c0_7] : memref<1x128xf32, #tpu.memory_space<vmem>>, vector<1x128xf32>
    %8 = vector.broadcast %7 : vector<1x128xf32> to vector<2x128xf32>
    %9 = arith.addf %6, %8 : vector<2x128xf32>
    %c0_8 = arith.constant 0 : index
    %c0_9 = arith.constant 0 : index
    %10 = vector.load %arg4[%c0_8, %c0_9] : memref<2x128xf32, #tpu.memory_space<vmem>>, vector<2x128xf32>
    tpu.vector_store %arg4[%c0_8, %c0_9], %9 {strides = array<i32>} : memref<2x128xf32, #tpu.memory_space<vmem>>, vector<2x128xf32>,
    return
  }
  func.func @transform_0(%arg0: i32) -> (i32, i32, i32) {
    %c0_i32 = arith.constant 0 : i32
    %c0_i32_0 = arith.constant 0 : i32
    %c0_i32_1 = arith.constant 0 : i32
    %c0_i32_2 = arith.constant 0 : i32
    return %c0_i32, %c0_i32_0, %c0_i32_1 : i32, i32, i32
  }
  func.func @transform_1(%arg0: i32) -> (i32, i32) {
    %c0_i32 = arith.constant 0 : i32
    %c0_i32_0 = arith.constant 0 : i32
    %c0_i32_1 = arith.constant 0 : i32
    return %c0_i32, %c0_i32_0 : i32, i32
  }
  func.func @transform_2(%arg0: i32) -> (i32, i32) {
    %c0_i32 = arith.constant 0 : i32
    %c0_i32_0 = arith.constant 0 : i32
    %c0_i32_1 = arith.constant 0 : i32
    return %c0_i32, %c0_i32_0 : i32, i32
  }
  func.func @transform_3(%arg0: i32) -> (i32, i32) {
    %c0_i32 = arith.constant 0 : i32
    %c0_i32_0 = arith.constant 0 : i32
    %c0_i32_1 = arith.constant 0 : i32
    return %c0_i32, %c0_i32_0 : i32, i32
  }
}

</mosaic_0001>

<llo_original>
// kernel: resnet_forward.6
$region0: #{resnet_forward.6}
  #allocation0 [shape = 'u32[]', space=smem, size = 0x4, offset = 0x4, fixed_abs, tag = 'smem constant byte address 0x4 - core index']
  #allocation1 [shape = 'u32[144,128]{1,0:T(1,128)}', space=vmem, size = 0x12000, scoped, tag = 'internal scratch']
  %s0 = inlined_call_operand.vmem [shape: bf16[512,128], index: 0, kind: input, shape index: {}]
  %s1 = inlined_call_operand.vmem [shape: bf16[128,128], index: 1, kind: input, shape index: {}]
  %s2 = inlined_call_operand.vmem [shape: f32[1,128], index: 2, kind: input, shape index: {}]
  %s3 = inlined_call_operand.vmem [shape: bf16[512,128], index: 3, kind: output, shape index: {}]
  %s4 = sld [smem:[#allocation0]]
  $region22: #{resnet_forward.6} parent=0
    _
  %s6 = ssub.s32 1, %s4
  %s7 = scalar_select 0, %s6, %s4
  // Predicated region
  $region2: #{resnet_forward.6} parent=0 // pred_check
    _
  $region3: #{resnet_forward.6} parent=0 // pred_check_branch
    %9 = sbr.rel (0) target = $region5
  $region4: #{resnet_forward.6} parent=0 // pred_region
    _
  $region5: #{resnet_forward.6} parent=0 // pred_fallthru
    _
  // Predicated region
  $region6: #{resnet_forward.6} parent=0 // pred_check
    _
  $region7: #{resnet_forward.6} parent=0 // pred_check_branch
    %11 = sbr.rel (0) target = $region9
  $region8: #{resnet_forward.6} parent=0 // pred_region
    _
  $region9: #{resnet_forward.6} parent=0 // pred_fallthru
    _
  // Predicated region
  $region10: #{resnet_forward.6} parent=0 // pred_check
    _
  $region11: #{resnet_forward.6} parent=0 // pred_check_branch
    %13 = sbr.rel (0) target = $region13
  $region12: #{resnet_forward.6} parent=0 // pred_region
    _
  $region13: #{resnet_forward.6} parent=0 // pred_fallthru
    _
  %v15 = vld [vmem:[%s0] sm:$0xf]
  %v16 = vld [vmem:[%s0 + $0x4] sm:$0xf]
  %v17 = vld [vmem:[%s0 + $0x8] sm:$0xf]
  %v18 = vld [vmem:[%s0 + $0xc] sm:$0xf]
  %v19 = vld [vmem:[%s0 + $0x10] sm:$0xf]
  %v20 = vld [vmem:[%s0 + $0x14] sm:$0xf]
  %v21 = vld [vmem:[%s0 + $0x18] sm:$0xf]
  %v22 = vld [vmem:[%s0 + $0x1c] sm:$0xf]
  %v23 = vld [vmem:[%s0 + $0x20] sm:$0xf]
  %v24 = vld [vmem:[%s0 + $0x24] sm:$0xf]
  %v25 = vld [vmem:[%s0 + $0x28] sm:$0xf]
  %v26 = vld [vmem:[%s0 + $0x2c] sm:$0xf]
  %v27 = vld [vmem:[%s0 + $0x30] sm:$0xf]
  %v28 = vld [vmem:[%s0 + $0x34] sm:$0xf]
  %v29 = vld [vmem:[%s0 + $0x38] sm:$0xf]
  %v30 = vld [vmem:[%s0 + $0x3c] sm:$0xf]
  %v31 = vld [vmem:[%s0 + $0x40] sm:$0xf]
  %v32 = vld [vmem:[%s0 + $0x44] sm:$0xf]
  %v33 = vld [vmem:[%s0 + $0x48] sm:$0xf]
  %v34 = vld [vmem:[%s0 + $0x4c] sm:$0xf]
  %v35 = vld [vmem:[%s0 + $0x50] sm:$0xf]
  %v36 = vld [vmem:[%s0 + $0x54] sm:$0xf]
  %v37 = vld [vmem:[%s0 + $0x58] sm:$0xf]
  %v38 = vld [vmem:[%s0 + $0x5c] sm:$0xf]
  %v39 = vld [vmem:[%s0 + $0x60] sm:$0xf]
  %v40 = vld [vmem:[%s0 + $0x64] sm:$0xf]
  %v41 = vld [vmem:[%s0 + $0x68] sm:$0xf]
  %v42 = vld [vmem:[%s0 + $0x6c] sm:$0xf]
  %v43 = vld [vmem:[%s0 + $0x70] sm:$0xf]
  %v44 = vld [vmem:[%s0 + $0x74] sm:$0xf]
  %v45 = vld [vmem:[%s0 + $0x78] sm:$0xf]
  %v46 = vld [vmem:[%s0 + $0x7c] sm:$0xf]
  %v47 = vld [vmem:[%s0 + $0x80] sm:$0xf]
  %v48 = vld [vmem:[%s0 + $0x84] sm:$0xf]
  %v49 = vld [vmem:[%s0 + $0x88] sm:$0xf]
  %v50 = vld [vmem:[%s0 + $0x8c] sm:$0xf]
  %v51 = vld [vmem:[%s0 + $0x90] sm:$0xf]
  %v52 = vld [vmem:[%s0 + $0x94] sm:$0xf]
  %v53 = vld [vmem:[%s0 + $0x98] sm:$0xf]
  %v54 = vld [vmem:[%s0 + $0x9c] sm:$0xf]
  %v55 = vld [vmem:[%s0 + $0xa0] sm:$0xf]
  %v56 = vld [vmem:[%s0 + $0xa4] sm:$0xf]
  %v57 = vld [vmem:[%s0 + $0xa8] sm:$0xf]
  %v58 = vld [vmem:[%s0 + $0xac] sm:$0xf]
  %v59 = vld [vmem:[%s0 + $0xb0] sm:$0xf]
  %v60 = vld [vmem:[%s0 + $0xb4] sm:$0xf]
  %v61 = vld [vmem:[%s0 + $0xb8] sm:$0xf]
  %v62 = vld [vmem:[%s0 + $0xbc] sm:$0xf]
  %v63 = vld [vmem:[%s0 + $0xc0] sm:$0xf]
  %v64 = vld [vmem:[%s0 + $0xc4] sm:$0xf]
  %v65 = vld [vmem:[%s0 + $0xc8] sm:$0xf]
  %v66 = vld [vmem:[%s0 + $0xcc] sm:$0xf]
  %v67 = vld [vmem:[%s0 + $0xd0] sm:$0xf]
  %v68 = vld [vmem:[%s0 + $0xd4] sm:$0xf]
  %v69 = vld [vmem:[%s0 + $0xd8] sm:$0xf]
  %v70 = vld [vmem:[%s0 + $0xdc] sm:$0xf]
  %v71 = vld [vmem:[%s0 + $0xe0] sm:$0xf]
  %v72 = vld [vmem:[%s0 + $0xe4] sm:$0xf]
  %v73 = vld [vmem:[%s0 + $0xe8] sm:$0xf]
  %v74 = vld [vmem:[%s0 + $0xec] sm:$0xf]
  %v75 = vld [vmem:[%s0 + $0xf0] sm:$0xf]
  %v76 = vld [vmem:[%s0 + $0xf4] sm:$0xf]
  %v77 = vld [vmem:[%s0 + $0xf8] sm:$0xf]
  %v78 = vld [vmem:[%s0 + $0xfc] sm:$0xf]
  %v79 = vld [vmem:[%s1] sm:$0xf]
  %v80 = vld [vmem:[%s1 + $0x4] sm:$0xf]
  %v81 = vld [vmem:[%s1 + $0x8] sm:$0xf]
  %v82 = vld [vmem:[%s1 + $0xc] sm:$0xf]
  %v83 = vld [vmem:[%s1 + $0x10] sm:$0xf]
  %v84 = vld [vmem:[%s1 + $0x14] sm:$0xf]
  %v85 = vld [vmem:[%s1 + $0x18] sm:$0xf]
  %v86 = vld [vmem:[%s1 + $0x1c] sm:$0xf]
  %v87 = vld [vmem:[%s1 + $0x20] sm:$0xf]
  %v88 = vld [vmem:[%s1 + $0x24] sm:$0xf]
  %v89 = vld [vmem:[%s1 + $0x28] sm:$0xf]
  %v90 = vld [vmem:[%s1 + $0x2c] sm:$0xf]
  %v91 = vld [vmem:[%s1 + $0x30] sm:$0xf]
  %v92 = vld [vmem:[%s1 + $0x34] sm:$0xf]
  %v93 = vld [vmem:[%s1 + $0x38] sm:$0xf]
  %v94 = vld [vmem:[%s1 + $0x3c] sm:$0xf]
  %v95 = vld [vmem:[%s2] sm:$0x1]
  %v97 = vlaneseq
  %v98 = vshrl.u32 %v97, 7
  %v99 = vsub.s32 0, %v98
  %v100 = vrot.slane %v95, %v99
  %v166 = vunpack.c.l.b16 %v15
  %v167 = vunpack.c.l.b16 %v16
  %v168 = vunpack.c.l.b16 %v17
  %v169 = vunpack.c.l.b16 %v18
  %v170 = vunpack.c.l.b16 %v19
  %v171 = vunpack.c.l.b16 %v20
  %v172 = vunpack.c.l.b16 %v21
  %v173 = vunpack.c.l.b16 %v22
  %v174 = vunpack.c.l.b16 %v23
  %v175 = vunpack.c.l.b16 %v24
  %v176 = vunpack.c.l.b16 %v25
  %v177 = vunpack.c.l.b16 %v26
  %v178 = vunpack.c.l.b16 %v27
  %v179 = vunpack.c.l.b16 %v28
  %v180 = vunpack.c.l.b16 %v29
  %v181 = vunpack.c.l.b16 %v30
  %v182 = vunpack.c.l.b16 %v31
  %v183 = vunpack.c.l.b16 %v32
  %v184 = vunpack.c.l.b16 %v33
  %v185 = vunpack.c.l.b16 %v34
  %v186 = vunpack.c.l.b16 %v35
  %v187 = vunpack.c.l.b16 %v36
  %v188 = vunpack.c.l.b16 %v37
  %v189 = vunpack.c.l.b16 %v38
  %v190 = vunpack.c.l.b16 %v39
  %v191 = vunpack.c.l.b16 %v40
  %v192 = vunpack.c.l.b16 %v41
  %v193 = vunpack.c.l.b16 %v42
  %v194 = vunpack.c.l.b16 %v43
  %v195 = vunpack.c.l.b16 %v44
  %v196 = vunpack.c.l.b16 %v45
  %v197 = vunpack.c.l.b16 %v46
  %v198 = vunpack.c.l.b16 %v47
  %v199 = vunpack.c.l.b16 %v48
  %v200 = vunpack.c.l.b16 %v49
  %v201 = vunpack.c.l.b16 %v50
  %v202 = vunpack.c.l.b16 %v51
  %v203 = vunpack.c.l.b16 %v52
  %v204 = vunpack.c.l.b16 %v53
  %v205 = vunpack.c.l.b16 %v54
  %v206 = vunpack.c.l.b16 %v55
  %v207 = vunpack.c.l.b16 %v56
  %v208 = vunpack.c.l.b16 %v57
  %v209 = vunpack.c.l.b16 %v58
  %v210 = vunpack.c.l.b16 %v59
  %v211 = vunpack.c.l.b16 %v60
  %v212 = vunpack.c.l.b16 %v61
  %v213 = vunpack.c.l.b16 %v62
  %v214 = vunpack.c.l.b16 %v63
  %v215 = vunpack.c.l.b16 %v64
  %v216 = vunpack.c.l.b16 %v65
  %v217 = vunpack.c.l.b16 %v66
  %v218 = vunpack.c.l.b16 %v67
  %v219 = vunpack.c.l.b16 %v68
  %v220 = vunpack.c.l.b16 %v69
  %v221 = vunpack.c.l.b16 %v70
  %v222 = vunpack.c.l.b16 %v71
  %v223 = vunpack.c.l.b16 %v72
  %v224 = vunpack.c.l.b16 %v73
  %v225 = vunpack.c.l.b16 %v74
  %v226 = vunpack.c.l.b16 %v75
  %v227 = vunpack.c.l.b16 %v76
  %v228 = vunpack.c.l.b16 %v77
  %v229 = vunpack.c.l.b16 %v78
  %v230 = vpack.c.b16 %v167, %v166
  %v231 = vpack.c.b16 %v169, %v168
  %v232 = vpack.c.b16 %v171, %v170
  %v233 = vpack.c.b16 %v173, %v172
  %v234 = vpack.c.b16 %v175, %v174
  %v235 = vpack.c.b16 %v177, %v176
  %v236 = vpack.c.b16 %v179, %v178
  %v237 = vpack.c.b16 %v181, %v180
  %v238 = vpack.c.b16 %v183, %v182
  %v239 = vpack.c.b16 %v185, %v184
  %v240 = vpack.c.b16 %v187, %v186
  %v241 = vpack.c.b16 %v189, %v188
  %v242 = vpack.c.b16 %v191, %v190
  %v243 = vpack.c.b16 %v193, %v192
  %v244 = vpack.c.b16 %v195, %v194
  %v245 = vpack.c.b16 %v197, %v196
  %v246 = vpack.c.b16 %v199, %v198
  %v247 = vpack.c.b16 %v201, %v200
  %v248 = vpack.c.b16 %v203, %v202
  %v249 = vpack.c.b16 %v205, %v204
  %v250 = vpack.c.b16 %v207, %v206
  %v251 = vpack.c.b16 %v209, %v208
  %v252 = vpack.c.b16 %v211, %v210
  %v253 = vpack.c.b16 %v213, %v212
  %v254 = vpack.c.b16 %v215, %v214
  %v255 = vpack.c.b16 %v217, %v216
  %v256 = vpack.c.b16 %v219, %v218
  %v257 = vpack.c.b16 %v221, %v220
  %v258 = vpack.c.b16 %v223, %v222
  %v259 = vpack.c.b16 %v225, %v224
  %v260 = vpack.c.b16 %v227, %v226
  %v261 = vpack.c.b16 %v229, %v228
  %v310 = vunpack.c.l.b16 %v79
  %v311 = vunpack.c.l.b16 %v80
  %v312 = vunpack.c.l.b16 %v81
  %v313 = vunpack.c.l.b16 %v82
  %v314 = vunpack.c.l.b16 %v83
  %v315 = vunpack.c.l.b16 %v84
  %v316 = vunpack.c.l.b16 %v85
  %v317 = vunpack.c.l.b16 %v86
  %v318 = vunpack.c.l.b16 %v87
  %v319 = vunpack.c.l.b16 %v88
  %v320 = vunpack.c.l.b16 %v89
  %v321 = vunpack.c.l.b16 %v90
  %v322 = vunpack.c.l.b16 %v91
  %v323 = vunpack.c.l.b16 %v92
  %v324 = vunpack.c.l.b16 %v93
  %v325 = vunpack.c.l.b16 %v94
  %v326 = vpack.c.b16 %v311, %v310
  %v327 = vpack.c.b16 %v313, %v312
  %v328 = vpack.c.b16 %v315, %v314
  %v329 = vpack.c.b16 %v317, %v316
  %v330 = vpack.c.b16 %v319, %v318
  %v331 = vpack.c.b16 %v321, %v320
  %v332 = vpack.c.b16 %v323, %v322
  %v333 = vpack.c.b16 %v325, %v324
  %342 = vmatprep.subr.bf16.mxu0 0
  %343 = vmatpush1.bf16.msra.mxu0 %v333
  %344 = vmatprep.subr.bf16.mxu0 0
  %345 = vmatpush1.bf16.msra.mxu0 %v332
  %346 = vmatprep.subr.bf16.mxu0 0
  %347 = vmatpush1.bf16.msra.mxu0 %v331
  %348 = vmatprep.subr.bf16.mxu0 0
  %349 = vmatpush1.bf16.msra.mxu0 %v330
  %350 = vmatprep.subr.bf16.mxu0 0
  %351 = vmatpush1.bf16.msra.mxu0 %v329
  %352 = vmatprep.subr.bf16.mxu0 0
  %353 = vmatpush1.bf16.msra.mxu0 %v328
  %354 = vmatprep.subr.bf16.mxu0 0
  %355 = vmatpush1.bf16.msra.mxu0 %v327
  %356 = vmatprep.subr.bf16.mxu0 0
  %357 = vmatpush1.bf16.msra.mxu0 %v326
  %358 = vmatprep.subr.bf16.mxu0 0
  %359 = vmatpush2.bf16.msra.mxu0 0
  %360 = vmatprep.subr.bf16.mxu0 0
  %361 = vmatpush2.bf16.msra.mxu0 0
  %362 = vmatprep.subr.bf16.mxu0 0
  %363 = vmatpush2.bf16.msra.mxu0 0
  %364 = vmatprep.subr.bf16.mxu0 0
  %365 = vmatpush2.bf16.msra.mxu0 0
  %366 = vmatprep.subr.bf16.mxu0 0
  %367 = vmatpush2.bf16.msra.mxu0 0
  %368 = vmatprep.subr.bf16.mxu0 0
  %369 = vmatpush2.bf16.msra.mxu0 0
  %370 = vmatprep.subr.bf16.mxu0 0
  %371 = vmatpush2.bf16.msra.mxu0 0
  %372 = vmatprep.subr.bf16.mxu0 0
  %373 = vmatpush2.bf16.msra.mxu0 0
  %374 = vmatprep.mubr.bf16.mxu0 0
  %375 = vmatmul.mubr.bf16.gmra.mxu0 %v230
  %v376 = vpop.f32.mrf.mxu0
  %v377 = vadd.f32 %v100, %v376
  %v378 = vpop.f32.mrf.mxu0
  %v379 = vpop.f32.mrf.mxu0
  %v380 = vadd.f32 %v100, %v379
  %v381 = vpop.f32.mrf.mxu0
  %382 = vmatprep.mubr.bf16.mxu0 0
  %383 = vmatmul.mubr.bf16.gmra.mxu0 %v231
  %v384 = vpop.f32.mrf.mxu0
  %v385 = vadd.f32 %v100, %v384
  %v386 = vpop.f32.mrf.mxu0
  %v387 = vpop.f32.mrf.mxu0
  %v388 = vadd.f32 %v100, %v387
  %v389 = vpop.f32.mrf.mxu0
  %390 = vmatprep.mubr.bf16.mxu0 0
  %391 = vmatmul.mubr.bf16.gmra.mxu0 %v232
  %v392 = vpop.f32.mrf.mxu0
  %v393 = vadd.f32 %v100, %v392
  %v394 = vpop.f32.mrf.mxu0
  %v395 = vpop.f32.mrf.mxu0
  %v396 = vadd.f32 %v100, %v395
  %v397 = vpop.f32.mrf.mxu0
  %398 = vmatprep.mubr.bf16.mxu0 0
  %399 = vmatmul.mubr.bf16.gmra.mxu0 %v233
  %v400 = vpop.f32.mrf.mxu0
  %v401 = vadd.f32 %v100, %v400
  %v402 = vpop.f32.mrf.mxu0
  %v403 = vpop.f32.mrf.mxu0
  %v404 = vadd.f32 %v100, %v403
  %v405 = vpop.f32.mrf.mxu0
  %406 = vmatprep.mubr.bf16.mxu0 0
  %407 = vmatmul.mubr.bf16.gmra.mxu0 %v234
  %v408 = vpop.f32.mrf.mxu0
  %v409 = vadd.f32 %v100, %v408
  %v410 = vpop.f32.mrf.mxu0
  %v411 = vpop.f32.mrf.mxu0
  %v412 = vadd.f32 %v100, %v411
  %v413 = vpop.f32.mrf.mxu0
  %414 = vmatprep.mubr.bf16.mxu0 0
  %415 = vmatmul.mubr.bf16.gmra.mxu0 %v235
  %v416 = vpop.f32.mrf.mxu0
  %v417 = vadd.f32 %v100, %v416
  %v418 = vpop.f32.mrf.mxu0
  %v419 = vpop.f32.mrf.mxu0
  %v420 = vadd.f32 %v100, %v419
  %v421 = vpop.f32.mrf.mxu0
  %422 = vmatprep.mubr.bf16.mxu0 0
  %423 = vmatmul.mubr.bf16.gmra.mxu0 %v236
  %v424 = vpop.f32.mrf.mxu0
  %v425 = vadd.f32 %v100, %v424
  %v426 = vpop.f32.mrf.mxu0
  %v427 = vpop.f32.mrf.mxu0
  %v428 = vadd.f32 %v100, %v427
  %v429 = vpop.f32.mrf.mxu0
  %430 = vmatprep.mubr.bf16.mxu0 0
  %431 = vmatmul.mubr.bf16.gmra.mxu0 %v237
  %v432 = vpop.f32.mrf.mxu0
  %v433 = vadd.f32 %v100, %v432
  %v434 = vpop.f32.mrf.mxu0
  %v435 = vpop.f32.mrf.mxu0
  %v436 = vadd.f32 %v100, %v435
  %v437 = vpop.f32.mrf.mxu0
  %438 = vmatprep.mubr.bf16.mxu0 0
  %439 = vmatmul.mubr.bf16.gmra.mxu0 %v238
  %v440 = vpop.f32.mrf.mxu0
  %v441 = vadd.f32 %v100, %v440
  %v442 = vpop.f32.mrf.mxu0
  %v443 = vpop.f32.mrf.mxu0
  %v444 = vadd.f32 %v100, %v443
  %v445 = vpop.f32.mrf.mxu0
  %446 = vmatprep.mubr.bf16.mxu0 0
  %447 = vmatmul.mubr.bf16.gmra.mxu0 %v239
  %v448 = vpop.f32.mrf.mxu0
  %v449 = vadd.f32 %v100, %v448
  %v450 = vpop.f32.mrf.mxu0
  %v451 = vpop.f32.mrf.mxu0
  %v452 = vadd.f32 %v100, %v451
  %v453 = vpop.f32.mrf.mxu0
  %454 = vmatprep.mubr.bf16.mxu0 0
  %455 = vmatmul.mubr.bf16.gmra.mxu0 %v240
  %v456 = vpop.f32.mrf.mxu0
  %v457 = vadd.f32 %v100, %v456
  %v458 = vpop.f32.mrf.mxu0
  %v459 = vpop.f32.mrf.mxu0
  %v460 = vadd.f32 %v100, %v459
  %v461 = vpop.f32.mrf.mxu0
  %462 = vmatprep.mubr.bf16.mxu0 0
  %463 = vmatmul.mubr.bf16.gmra.mxu0 %v241
  %v464 = vpop.f32.mrf.mxu0
  %v465 = vadd.f32 %v100, %v464
  %v466 = vpop.f32.mrf.mxu0
  %v467 = vpop.f32.mrf.mxu0
  %v468 = vadd.f32 %v100, %v467
  %v469 = vpop.f32.mrf.mxu0
  %470 = vmatprep.mubr.bf16.mxu0 0
  %471 = vmatmul.mubr.bf16.gmra.mxu0 %v242
  %v472 = vpop.f32.mrf.mxu0
  %v473 = vadd.f32 %v100, %v472
  %v474 = vpop.f32.mrf.mxu0
  %v475 = vpop.f32.mrf.mxu0
  %v476 = vadd.f32 %v100, %v475
  %v477 = vpop.f32.mrf.mxu0
  %478 = vmatprep.mubr.bf16.mxu0 0
  %479 = vmatmul.mubr.bf16.gmra.mxu0 %v243
  %v480 = vpop.f32.mrf.mxu0
  %v481 = vadd.f32 %v100, %v480
  %v482 = vpop.f32.mrf.mxu0
  %v483 = vpop.f32.mrf.mxu0
  %v484 = vadd.f32 %v100, %v483
  %v485 = vpop.f32.mrf.mxu0
  %486 = vmatprep.mubr.bf16.mxu0 0
  %487 = vmatmul.mubr.bf16.gmra.mxu0 %v244
  %v488 = vpop.f32.mrf.mxu0
  %v489 = vadd.f32 %v100, %v488
  %v490 = vpop.f32.mrf.mxu0
  %v491 = vpop.f32.mrf.mxu0
  %v492 = vadd.f32 %v100, %v491
  %v493 = vpop.f32.mrf.mxu0
  %494 = vmatprep.mubr.bf16.mxu0 0
  %495 = vmatmul.mubr.bf16.gmra.mxu0 %v245
  %v496 = vpop.f32.mrf.mxu0
  %v497 = vadd.f32 %v100, %v496
  %v498 = vpop.f32.mrf.mxu0
  %v499 = vpop.f32.mrf.mxu0
  %v500 = vadd.f32 %v100, %v499
  %v501 = vpop.f32.mrf.mxu0
  %502 = vmatprep.mubr.bf16.mxu0 0
  %503 = vmatmul.mubr.bf16.gmra.mxu0 %v246
  %v504 = vpop.f32.mrf.mxu0
  %v505 = vadd.f32 %v100, %v504
  %v506 = vpop.f32.mrf.mxu0
  %v507 = vpop.f32.mrf.mxu0
  %v508 = vadd.f32 %v100, %v507
  %v509 = vpop.f32.mrf.mxu0
  %510 = vmatprep.mubr.bf16.mxu0 0
  %511 = vmatmul.mubr.bf16.gmra.mxu0 %v247
  %v512 = vpop.f32.mrf.mxu0
  %v513 = vadd.f32 %v100, %v512
  %v514 = vpop.f32.mrf.mxu0
  %v515 = vpop.f32.mrf.mxu0
  %v516 = vadd.f32 %v100, %v515
  %v517 = vpop.f32.mrf.mxu0
  %518 = vmatprep.mubr.bf16.mxu0 0
  %519 = vmatmul.mubr.bf16.gmra.mxu0 %v248
  %v520 = vpop.f32.mrf.mxu0
  %v521 = vadd.f32 %v100, %v520
  %v522 = vpop.f32.mrf.mxu0
  %v523 = vpop.f32.mrf.mxu0
  %v524 = vadd.f32 %v100, %v523
  %v525 = vpop.f32.mrf.mxu0
  %526 = vmatprep.mubr.bf16.mxu0 0
  %527 = vmatmul.mubr.bf16.gmra.mxu0 %v249
  %v528 = vpop.f32.mrf.mxu0
  %v529 = vadd.f32 %v100, %v528
  %v530 = vpop.f32.mrf.mxu0
  %v531 = vpop.f32.mrf.mxu0
  %v532 = vadd.f32 %v100, %v531
  %v533 = vpop.f32.mrf.mxu0
  %534 = vmatprep.mubr.bf16.mxu0 0
  %535 = vmatmul.mubr.bf16.gmra.mxu0 %v250
  %v536 = vpop.f32.mrf.mxu0
  %v537 = vadd.f32 %v100, %v536
  %v538 = vpop.f32.mrf.mxu0
  %v539 = vpop.f32.mrf.mxu0
  %v540 = vadd.f32 %v100, %v539
  %v541 = vpop.f32.mrf.mxu0
  %542 = vmatprep.mubr.bf16.mxu0 0
  %543 = vmatmul.mubr.bf16.gmra.mxu0 %v251
  %v544 = vpop.f32.mrf.mxu0
  %v545 = vadd.f32 %v100, %v544
  %v546 = vpop.f32.mrf.mxu0
  %v547 = vpop.f32.mrf.mxu0
  %v548 = vadd.f32 %v100, %v547
  %v549 = vpop.f32.mrf.mxu0
  %550 = vmatprep.mubr.bf16.mxu0 0
  %551 = vmatmul.mubr.bf16.gmra.mxu0 %v252
  %v552 = vpop.f32.mrf.mxu0
  %v553 = vadd.f32 %v100, %v552
  %v554 = vpop.f32.mrf.mxu0
  %v555 = vpop.f32.mrf.mxu0
  %v556 = vadd.f32 %v100, %v555
  %v557 = vpop.f32.mrf.mxu0
  %558 = vmatprep.mubr.bf16.mxu0 0
  %559 = vmatmul.mubr.bf16.gmra.mxu0 %v253
  %v560 = vpop.f32.mrf.mxu0
  %v561 = vadd.f32 %v100, %v560
  %v562 = vpop.f32.mrf.mxu0
  %v563 = vpop.f32.mrf.mxu0
  %v564 = vadd.f32 %v100, %v563
  %v565 = vpop.f32.mrf.mxu0
  %566 = vmatprep.mubr.bf16.mxu0 0
  %567 = vmatmul.mubr.bf16.gmra.mxu0 %v254
  %v568 = vpop.f32.mrf.mxu0
  %v569 = vadd.f32 %v100, %v568
  %v570 = vpop.f32.mrf.mxu0
  %v571 = vpop.f32.mrf.mxu0
  %v572 = vadd.f32 %v100, %v571
  %v573 = vpop.f32.mrf.mxu0
  %574 = vmatprep.mubr.bf16.mxu0 0
  %575 = vmatmul.mubr.bf16.gmra.mxu0 %v255
  %v576 = vpop.f32.mrf.mxu0
  %v577 = vadd.f32 %v100, %v576
  %v578 = vpop.f32.mrf.mxu0
  %v579 = vpop.f32.mrf.mxu0
  %v580 = vadd.f32 %v100, %v579
  %v581 = vpop.f32.mrf.mxu0
  %582 = vmatprep.mubr.bf16.mxu0 0
  %583 = vmatmul.mubr.bf16.gmra.mxu0 %v256
  %v584 = vpop.f32.mrf.mxu0
  %v585 = vadd.f32 %v100, %v584
  %v586 = vpop.f32.mrf.mxu0
  %v587 = vpop.f32.mrf.mxu0
  %v588 = vadd.f32 %v100, %v587
  %v589 = vpop.f32.mrf.mxu0
  %590 = vmatprep.mubr.bf16.mxu0 0
  %591 = vmatmul.mubr.bf16.gmra.mxu0 %v257
  %v592 = vpop.f32.mrf.mxu0
  %v593 = vadd.f32 %v100, %v592
  %v594 = vpop.f32.mrf.mxu0
  %v595 = vpop.f32.mrf.mxu0
  %v596 = vadd.f32 %v100, %v595
  %v597 = vpop.f32.mrf.mxu0
  %598 = vmatprep.mubr.bf16.mxu0 0
  %599 = vmatmul.mubr.bf16.gmra.mxu0 %v258
  %v600 = vpop.f32.mrf.mxu0
  %v601 = vadd.f32 %v100, %v600
  %v602 = vpop.f32.mrf.mxu0
  %v603 = vpop.f32.mrf.mxu0
  %v604 = vadd.f32 %v100, %v603
  %v605 = vpop.f32.mrf.mxu0
  %606 = vmatprep.mubr.bf16.mxu0 0
  %607 = vmatmul.mubr.bf16.gmra.mxu0 %v259
  %v608 = vpop.f32.mrf.mxu0
  %v609 = vadd.f32 %v100, %v608
  %v610 = vpop.f32.mrf.mxu0
  %v611 = vpop.f32.mrf.mxu0
  %v612 = vadd.f32 %v100, %v611
  %v613 = vpop.f32.mrf.mxu0
  %614 = vmatprep.mubr.bf16.mxu0 0
  %615 = vmatmul.mubr.bf16.gmra.mxu0 %v260
  %v616 = vpop.f32.mrf.mxu0
  %v617 = vadd.f32 %v100, %v616
  %v618 = vpop.f32.mrf.mxu0
  %v619 = vpop.f32.mrf.mxu0
  %v620 = vadd.f32 %v100, %v619
  %v621 = vpop.f32.mrf.mxu0
  %622 = vmatprep.mubr.bf16.mxu0 0
  %623 = vmatmul.mubr.bf16.gmra.mxu0 %v261
  %v624 = vpop.f32.mrf.mxu0
  %v625 = vadd.f32 %v100, %v624
  %v626 = vpop.f32.mrf.mxu0
  %v627 = vpop.f32.mrf.mxu0
  %v628 = vadd.f32 %v100, %v627
  %v629 = vpop.f32.mrf.mxu0
  %630 = vdwg.mxu0
  %v631 = vpack.c.bf16 %v380, %v377
  %v632 = vpack.c.bf16 %v388, %v385
  %v633 = vpack.c.bf16 %v396, %v393
  %v634 = vpack.c.bf16 %v404, %v401
  %v635 = vpack.c.bf16 %v412, %v409
  %v636 = vpack.c.bf16 %v420, %v417
  %v637 = vpack.c.bf16 %v428, %v425
  %v638 = vpack.c.bf16 %v436, %v433
  %v639 = vpack.c.bf16 %v444, %v441
  %v640 = vpack.c.bf16 %v452, %v449
  %v641 = vpack.c.bf16 %v460, %v457
  %v642 = vpack.c.bf16 %v468, %v465
  %v643 = vpack.c.bf16 %v476, %v473
  %v644 = vpack.c.bf16 %v484, %v481
  %v645 = vpack.c.bf16 %v492, %v489
  %v646 = vpack.c.bf16 %v500, %v497
  %v647 = vpack.c.bf16 %v508, %v505
  %v648 = vpack.c.bf16 %v516, %v513
  %v649 = vpack.c.bf16 %v524, %v521
  %v650 = vpack.c.bf16 %v532, %v529
  %v651 = vpack.c.bf16 %v540, %v537
  %v652 = vpack.c.bf16 %v548, %v545
  %v653 = vpack.c.bf16 %v556, %v553
  %v654 = vpack.c.bf16 %v564, %v561
  %v655 = vpack.c.bf16 %v572, %v569
  %v656 = vpack.c.bf16 %v580, %v577
  %v657 = vpack.c.bf16 %v588, %v585
  %v658 = vpack.c.bf16 %v596, %v593
  %v659 = vpack.c.bf16 %v604, %v601
  %v660 = vpack.c.bf16 %v612, %v609
  %v661 = vpack.c.bf16 %v620, %v617
  %v662 = vpack.c.bf16 %v628, %v625
  %v695 = vunpack.c.l.b16 %v631
  %v696 = vunpack.c.h.b16 %v631
  %v697 = vunpack.c.l.b16 %v632
  %v698 = vunpack.c.h.b16 %v632
  %v699 = vunpack.c.l.b16 %v633
  %v700 = vunpack.c.h.b16 %v633
  %v701 = vunpack.c.l.b16 %v634
  %v702 = vunpack.c.h.b16 %v634
  %v703 = vunpack.c.l.b16 %v635
  %v704 = vunpack.c.h.b16 %v635
  %v705 = vunpack.c.l.b16 %v636
  %v706 = vunpack.c.h.b16 %v636
  %v707 = vunpack.c.l.b16 %v637
  %v708 = vunpack.c.h.b16 %v637
  %v709 = vunpack.c.l.b16 %v638
  %v710 = vunpack.c.h.b16 %v638
  %v711 = vunpack.c.l.b16 %v639
  %v712 = vunpack.c.h.b16 %v639
  %v713 = vunpack.c.l.b16 %v640
  %v714 = vunpack.c.h.b16 %v640
  %v715 = vunpack.c.l.b16 %v641
  %v716 = vunpack.c.h.b16 %v641
  %v717 = vunpack.c.l.b16 %v642
  %v718 = vunpack.c.h.b16 %v642
  %v719 = vunpack.c.l.b16 %v643
  %v720 = vunpack.c.h.b16 %v643
  %v721 = vunpack.c.l.b16 %v644
  %v722 = vunpack.c.h.b16 %v644
  %v723 = vunpack.c.l.b16 %v645
  %v724 = vunpack.c.h.b16 %v645
  %v725 = vunpack.c.l.b16 %v646
  %v726 = vunpack.c.h.b16 %v646
  %v727 = vunpack.c.l.b16 %v647
  %v728 = vunpack.c.h.b16 %v647
  %v729 = vunpack.c.l.b16 %v648
  %v730 = vunpack.c.h.b16 %v648
  %v731 = vunpack.c.l.b16 %v649
  %v732 = vunpack.c.h.b16 %v649
  %v733 = vunpack.c.l.b16 %v650
  %v734 = vunpack.c.h.b16 %v650
  %v735 = vunpack.c.l.b16 %v651
  %v736 = vunpack.c.h.b16 %v651
  %v737 = vunpack.c.l.b16 %v652
  %v738 = vunpack.c.h.b16 %v652
  %v739 = vunpack.c.l.b16 %v653
  %v740 = vunpack.c.h.b16 %v653
  %v741 = vunpack.c.l.b16 %v654
  %v742 = vunpack.c.h.b16 %v654
  %v743 = vunpack.c.l.b16 %v655
  %v744 = vunpack.c.h.b16 %v655
  %v745 = vunpack.c.l.b16 %v656
  %v746 = vunpack.c.h.b16 %v656
  %v747 = vunpack.c.l.b16 %v657
  %v748 = vunpack.c.h.b16 %v657
  %v749 = vunpack.c.l.b16 %v658
  %v750 = vunpack.c.h.b16 %v658
  %v751 = vunpack.c.l.b16 %v659
  %v752 = vunpack.c.h.b16 %v659
  %v753 = vunpack.c.l.b16 %v660
  %v754 = vunpack.c.h.b16 %v660
  %v755 = vunpack.c.l.b16 %v661
  %v756 = vunpack.c.h.b16 %v661
  %v757 = vunpack.c.l.b16 %v662
  %v758 = vunpack.c.h.b16 %v662
  %v759 = vpack.c.b16 %v695, %v695
  %v760 = vpack.c.b16 %v696, %v696
  %v761 = vpack.c.b16 %v697, %v697
  %v762 = vpack.c.b16 %v698, %v698
  %v763 = vpack.c.b16 %v699, %v699
  %v764 = vpack.c.b16 %v700, %v700
  %v765 = vpack.c.b16 %v701, %v701
  %v766 = vpack.c.b16 %v702, %v702
  %v767 = vpack.c.b16 %v703, %v703
  %v768 = vpack.c.b16 %v704, %v704
  %v769 = vpack.c.b16 %v705, %v705
  %v770 = vpack.c.b16 %v706, %v706
  %v771 = vpack.c.b16 %v707, %v707
  %v772 = vpack.c.b16 %v708, %v708
  %v773 = vpack.c.b16 %v709, %v709
  %v774 = vpack.c.b16 %v710, %v710
  %v775 = vpack.c.b16 %v711, %v711
  %v776 = vpack.c.b16 %v712, %v712
  %v777 = vpack.c.b16 %v713, %v713
  %v778 = vpack.c.b16 %v714, %v714
  %v779 = vpack.c.b16 %v715, %v715
  %v780 = vpack.c.b16 %v716, %v716
  %v781 = vpack.c.b16 %v717, %v717
  %v782 = vpack.c.b16 %v718, %v718
  %v783 = vpack.c.b16 %v719, %v719
  %v784 = vpack.c.b16 %v720, %v720
  %v785 = vpack.c.b16 %v721, %v721
  %v786 = vpack.c.b16 %v722, %v722
  %v787 = vpack.c.b16 %v723, %v723
  %v788 = vpack.c.b16 %v724, %v724
  %v789 = vpack.c.b16 %v725, %v725
  %v790 = vpack.c.b16 %v726, %v726
  %v791 = vpack.c.b16 %v727, %v727
  %v792 = vpack.c.b16 %v728, %v728
  %v793 = vpack.c.b16 %v729, %v729
  %v794 = vpack.c.b16 %v730, %v730
  %v795 = vpack.c.b16 %v731, %v731
  %v796 = vpack.c.b16 %v732, %v732
  %v797 = vpack.c.b16 %v733, %v733
  %v798 = vpack.c.b16 %v734, %v734
  %v799 = vpack.c.b16 %v735, %v735
  %v800 = vpack.c.b16 %v736, %v736
  %v801 = vpack.c.b16 %v737, %v737
  %v802 = vpack.c.b16 %v738, %v738
  %v803 = vpack.c.b16 %v739, %v739
  %v804 = vpack.c.b16 %v740, %v740
  %v805 = vpack.c.b16 %v741, %v741
  %v806 = vpack.c.b16 %v742, %v742
  %v807 = vpack.c.b16 %v743, %v743
  %v808 = vpack.c.b16 %v744, %v744
  %v809 = vpack.c.b16 %v745, %v745
  %v810 = vpack.c.b16 %v746, %v746
  %v811 = vpack.c.b16 %v747, %v747
  %v812 = vpack.c.b16 %v748, %v748
  %v813 = vpack.c.b16 %v749, %v749
  %v814 = vpack.c.b16 %v750, %v750
  %v815 = vpack.c.b16 %v751, %v751
  %v816 = vpack.c.b16 %v752, %v752
  %v817 = vpack.c.b16 %v753, %v753
  %v818 = vpack.c.b16 %v754, %v754
  %v819 = vpack.c.b16 %v755, %v755
  %v820 = vpack.c.b16 %v756, %v756
  %v821 = vpack.c.b16 %v757, %v757
  %v822 = vpack.c.b16 %v758, %v758
  %887 = vst [vmem:[%s3] sm:$0xf] %v759
  %888 = vst [vmem:[%s3 + $0x4] sm:$0xf] %v760
  %889 = vst [vmem:[%s3 + $0x8] sm:$0xf] %v761
  %890 = vst [vmem:[%s3 + $0xc] sm:$0xf] %v762
  %891 = vst [vmem:[%s3 + $0x10] sm:$0xf] %v763
  %892 = vst [vmem:[%s3 + $0x14] sm:$0xf] %v764
  %893 = vst [vmem:[%s3 + $0x18] sm:$0xf] %v765
  %894 = vst [vmem:[%s3 + $0x1c] sm:$0xf] %v766
  %895 = vst [vmem:[%s3 + $0x20] sm:$0xf] %v767
  %896 = vst [vmem:[%s3 + $0x24] sm:$0xf] %v768
  %897 = vst [vmem:[%s3 + $0x28] sm:$0xf] %v769
  %898 = vst [vmem:[%s3 + $0x2c] sm:$0xf] %v770
  %899 = vst [vmem:[%s3 + $0x30] sm:$0xf] %v771
  %900 = vst [vmem:[%s3 + $0x34] sm:$0xf] %v772
  %901 = vst [vmem:[%s3 + $0x38] sm:$0xf] %v773
  %902 = vst [vmem:[%s3 + $0x3c] sm:$0xf] %v774
  %903 = vst [vmem:[%s3 + $0x40] sm:$0xf] %v775
  %904 = vst [vmem:[%s3 + $0x44] sm:$0xf] %v776
  %905 = vst [vmem:[%s3 + $0x48] sm:$0xf] %v777
  %906 = vst [vmem:[%s3 + $0x4c] sm:$0xf] %v778
  %907 = vst [vmem:[%s3 + $0x50] sm:$0xf] %v779
  %908 = vst [vmem:[%s3 + $0x54] sm:$0xf] %v780
  %909 = vst [vmem:[%s3 + $0x58] sm:$0xf] %v781
  %910 = vst [vmem:[%s3 + $0x5c] sm:$0xf] %v782
  %911 = vst [vmem:[%s3 + $0x60] sm:$0xf] %v783
  %912 = vst [vmem:[%s3 + $0x64] sm:$0xf] %v784
  %913 = vst [vmem:[%s3 + $0x68] sm:$0xf] %v785
  %914 = vst [vmem:[%s3 + $0x6c] sm:$0xf] %v786
  %915 = vst [vmem:[%s3 + $0x70] sm:$0xf] %v787
  %916 = vst [vmem:[%s3 + $0x74] sm:$0xf] %v788
  %917 = vst [vmem:[%s3 + $0x78] sm:$0xf] %v789
  %918 = vst [vmem:[%s3 + $0x7c] sm:$0xf] %v790
  %919 = vst [vmem:[%s3 + $0x80] sm:$0xf] %v791
  %920 = vst [vmem:[%s3 + $0x84] sm:$0xf] %v792
  %921 = vst [vmem:[%s3 + $0x88] sm:$0xf] %v793
  %922 = vst [vmem:[%s3 + $0x8c] sm:$0xf] %v794
  %923 = vst [vmem:[%s3 + $0x90] sm:$0xf] %v795
  %924 = vst [vmem:[%s3 + $0x94] sm:$0xf] %v796
  %925 = vst [vmem:[%s3 + $0x98] sm:$0xf] %v797
  %926 = vst [vmem:[%s3 + $0x9c] sm:$0xf] %v798
  %927 = vst [vmem:[%s3 + $0xa0] sm:$0xf] %v799
  %928 = vst [vmem:[%s3 + $0xa4] sm:$0xf] %v800
  %929 = vst [vmem:[%s3 + $0xa8] sm:$0xf] %v801
  %930 = vst [vmem:[%s3 + $0xac] sm:$0xf] %v802
  %931 = vst [vmem:[%s3 + $0xb0] sm:$0xf] %v803
  %932 = vst [vmem:[%s3 + $0xb4] sm:$0xf] %v804
  %933 = vst [vmem:[%s3 + $0xb8] sm:$0xf] %v805
  %934 = vst [vmem:[%s3 + $0xbc] sm:$0xf] %v806
  %935 = vst [vmem:[%s3 + $0xc0] sm:$0xf] %v807
  %936 = vst [vmem:[%s3 + $0xc4] sm:$0xf] %v808
  %937 = vst [vmem:[%s3 + $0xc8] sm:$0xf] %v809
  %938 = vst [vmem:[%s3 + $0xcc] sm:$0xf] %v810
  %939 = vst [vmem:[%s3 + $0xd0] sm:$0xf] %v811
  %940 = vst [vmem:[%s3 + $0xd4] sm:$0xf] %v812
  %941 = vst [vmem:[%s3 + $0xd8] sm:$0xf] %v813
  %942 = vst [vmem:[%s3 + $0xdc] sm:$0xf] %v814
  %943 = vst [vmem:[%s3 + $0xe0] sm:$0xf] %v815
  %944 = vst [vmem:[%s3 + $0xe4] sm:$0xf] %v816
  %945 = vst [vmem:[%s3 + $0xe8] sm:$0xf] %v817
  %946 = vst [vmem:[%s3 + $0xec] sm:$0xf] %v818
  %947 = vst [vmem:[%s3 + $0xf0] sm:$0xf] %v819
  %948 = vst [vmem:[%s3 + $0xf4] sm:$0xf] %v820
  %949 = vst [vmem:[%s3 + $0xf8] sm:$0xf] %v821
  %950 = vst [vmem:[%s3 + $0xfc] sm:$0xf] %v822
  // Predicated region
  $region14: #{resnet_forward.6} parent=0 // pred_check
    _
  $region15: #{resnet_forward.6} parent=0 // pred_check_branch
    %952 = sbr.rel (0) target = $region17
  $region16: #{resnet_forward.6} parent=0 // pred_region
    _
  $region17: #{resnet_forward.6} parent=0 // pred_fallthru
    _
  // Predicated region
  $region18: #{resnet_forward.6} parent=0 // pred_check
    _
  $region19: #{resnet_forward.6} parent=0 // pred_check_branch
    %954 = sbr.rel (0) target = $region21
  $region20: #{resnet_forward.6} parent=0 // pred_region
    _
  $region21: #{resnet_forward.6} parent=0 // pred_fallthru
    _

// kernel: resnet_forward.8
$region0: #{resnet_forward.8}
  #allocation0 [shape = 'u32[]', space=smem, size = 0x4, offset = 0x4, fixed_abs, tag = 'smem constant byte address 0x4 - core index']
  #allocation1 [shape = 'u32[144,128]{1,0:T(1,128)}', space=vmem, size = 0x12000, scoped, tag = 'internal scratch']
  %s0 = inlined_call_operand.vmem [shape: bf16[512,128], index: 0, kind: input, shape index: {}]
  %s1 = inlined_call_operand.vmem [shape: bf16[128,128], index: 1, kind: input, shape index: {}]
  %s2 = inlined_call_operand.vmem [shape: f32[1,128], index: 2, kind: input, shape index: {}]
  %s3 = inlined_call_operand.vmem [shape: bf16[512,128], index: 3, kind: input, shape index: {}]
  %s4 = inlined_call_operand.vmem [shape: bf16[512,128], index: 4, kind: output, shape index: {}]
  %s5 = sld [smem:[#allocation0]]
  $region26: #{resnet_forward.8} parent=0
    _
  %s7 = ssub.s32 1, %s5
  %s8 = scalar_select 0, %s7, %s5
  // Predicated region
  $region2: #{resnet_forward.8} parent=0 // pred_check
    _
  $region3: #{resnet_forward.8} parent=0 // pred_check_branch
    %10 = sbr.rel (0) target = $region5
  $region4: #{resnet_forward.8} parent=0 // pred_region
    _
  $region5: #{resnet_forward.8} parent=0 // pred_fallthru
    _
  // Predicated region
  $region6: #{resnet_forward.8} parent=0 // pred_check
    _
  $region7: #{resnet_forward.8} parent=0 // pred_check_branch
    %12 = sbr.rel (0) target = $region9
  $region8: #{resnet_forward.8} parent=0 // pred_region
    _
  $region9: #{resnet_forward.8} parent=0 // pred_fallthru
    _
  // Predicated region
  $region10: #{resnet_forward.8} parent=0 // pred_check
    _
  $region11: #{resnet_forward.8} parent=0 // pred_check_branch
    %14 = sbr.rel (0) target = $region13
  $region12: #{resnet_forward.8} parent=0 // pred_region
    _
  $region13: #{resnet_forward.8} parent=0 // pred_fallthru
    _
  // Predicated region
  $region14: #{resnet_forward.8} parent=0 // pred_check
    _
  $region15: #{resnet_forward.8} parent=0 // pred_check_branch
    %16 = sbr.rel (0) target = $region17
  $region16: #{resnet_forward.8} parent=0 // pred_region
    _
  $region17: #{resnet_forward.8} parent=0 // pred_fallthru
    _
  %v18 = vld [vmem:[%s0] sm:$0xf]
  %v19 = vld [vmem:[%s0 + $0x4] sm:$0xf]
  %v20 = vld [vmem:[%s0 + $0x8] sm:$0xf]
  %v21 = vld [vmem:[%s0 + $0xc] sm:$0xf]
  %v22 = vld [vmem:[%s0 + $0x10] sm:$0xf]
  %v23 = vld [vmem:[%s0 + $0x14] sm:$0xf]
  %v24 = vld [vmem:[%s0 + $0x18] sm:$0xf]
  %v25 = vld [vmem:[%s0 + $0x1c] sm:$0xf]
  %v26 = vld [vmem:[%s0 + $0x20] sm:$0xf]
  %v27 = vld [vmem:[%s0 + $0x24] sm:$0xf]
  %v28 = vld [vmem:[%s0 + $0x28] sm:$0xf]
  %v29 = vld [vmem:[%s0 + $0x2c] sm:$0xf]
  %v30 = vld [vmem:[%s0 + $0x30] sm:$0xf]
  %v31 = vld [vmem:[%s0 + $0x34] sm:$0xf]
  %v32 = vld [vmem:[%s0 + $0x38] sm:$0xf]
  %v33 = vld [vmem:[%s0 + $0x3c] sm:$0xf]
  %v34 = vld [vmem:[%s0 + $0x40] sm:$0xf]
  %v35 = vld [vmem:[%s0 + $0x44] sm:$0xf]
  %v36 = vld [vmem:[%s0 + $0x48] sm:$0xf]
  %v37 = vld [vmem:[%s0 + $0x4c] sm:$0xf]
  %v38 = vld [vmem:[%s0 + $0x50] sm:$0xf]
  %v39 = vld [vmem:[%s0 + $0x54] sm:$0xf]
  %v40 = vld [vmem:[%s0 + $0x58] sm:$0xf]
  %v41 = vld [vmem:[%s0 + $0x5c] sm:$0xf]
  %v42 = vld [vmem:[%s0 + $0x60] sm:$0xf]
  %v43 = vld [vmem:[%s0 + $0x64] sm:$0xf]
  %v44 = vld [vmem:[%s0 + $0x68] sm:$0xf]
  %v45 = vld [vmem:[%s0 + $0x6c] sm:$0xf]
  %v46 = vld [vmem:[%s0 + $0x70] sm:$0xf]
  %v47 = vld [vmem:[%s0 + $0x74] sm:$0xf]
  %v48 = vld [vmem:[%s0 + $0x78] sm:$0xf]
  %v49 = vld [vmem:[%s0 + $0x7c] sm:$0xf]
  %v50 = vld [vmem:[%s0 + $0x80] sm:$0xf]
  %v51 = vld [vmem:[%s0 + $0x84] sm:$0xf]
  %v52 = vld [vmem:[%s0 + $0x88] sm:$0xf]
  %v53 = vld [vmem:[%s0 + $0x8c] sm:$0xf]
  %v54 = vld [vmem:[%s0 + $0x90] sm:$0xf]
  %v55 = vld [vmem:[%s0 + $0x94] sm:$0xf]
  %v56 = vld [vmem:[%s0 + $0x98] sm:$0xf]
  %v57 = vld [vmem:[%s0 + $0x9c] sm:$0xf]
  %v58 = vld [vmem:[%s0 + $0xa0] sm:$0xf]
  %v59 = vld [vmem:[%s0 + $0xa4] sm:$0xf]
  %v60 = vld [vmem:[%s0 + $0xa8] sm:$0xf]
  %v61 = vld [vmem:[%s0 + $0xac] sm:$0xf]
  %v62 = vld [vmem:[%s0 + $0xb0] sm:$0xf]
  %v63 = vld [vmem:[%s0 + $0xb4] sm:$0xf]
  %v64 = vld [vmem:[%s0 + $0xb8] sm:$0xf]
  %v65 = vld [vmem:[%s0 + $0xbc] sm:$0xf]
  %v66 = vld [vmem:[%s0 + $0xc0] sm:$0xf]
  %v67 = vld [vmem:[%s0 + $0xc4] sm:$0xf]
  %v68 = vld [vmem:[%s0 + $0xc8] sm:$0xf]
  %v69 = vld [vmem:[%s0 + $0xcc] sm:$0xf]
  %v70 = vld [vmem:[%s0 + $0xd0] sm:$0xf]
  %v71 = vld [vmem:[%s0 + $0xd4] sm:$0xf]
  %v72 = vld [vmem:[%s0 + $0xd8] sm:$0xf]
  %v73 = vld [vmem:[%s0 + $0xdc] sm:$0xf]
  %v74 = vld [vmem:[%s0 + $0xe0] sm:$0xf]
  %v75 = vld [vmem:[%s0 + $0xe4] sm:$0xf]
  %v76 = vld [vmem:[%s0 + $0xe8] sm:$0xf]
  %v77 = vld [vmem:[%s0 + $0xec] sm:$0xf]
  %v78 = vld [vmem:[%s0 + $0xf0] sm:$0xf]
  %v79 = vld [vmem:[%s0 + $0xf4] sm:$0xf]
  %v80 = vld [vmem:[%s0 + $0xf8] sm:$0xf]
  %v81 = vld [vmem:[%s0 + $0xfc] sm:$0xf]
  %v82 = vld [vmem:[%s1] sm:$0xf]
  %v83 = vld [vmem:[%s1 + $0x4] sm:$0xf]
  %v84 = vld [vmem:[%s1 + $0x8] sm:$0xf]
  %v85 = vld [vmem:[%s1 + $0xc] sm:$0xf]
  %v86 = vld [vmem:[%s1 + $0x10] sm:$0xf]
  %v87 = vld [vmem:[%s1 + $0x14] sm:$0xf]
  %v88 = vld [vmem:[%s1 + $0x18] sm:$0xf]
  %v89 = vld [vmem:[%s1 + $0x1c] sm:$0xf]
  %v90 = vld [vmem:[%s1 + $0x20] sm:$0xf]
  %v91 = vld [vmem:[%s1 + $0x24] sm:$0xf]
  %v92 = vld [vmem:[%s1 + $0x28] sm:$0xf]
  %v93 = vld [vmem:[%s1 + $0x2c] sm:$0xf]
  %v94 = vld [vmem:[%s1 + $0x30] sm:$0xf]
  %v95 = vld [vmem:[%s1 + $0x34] sm:$0xf]
  %v96 = vld [vmem:[%s1 + $0x38] sm:$0xf]
  %v97 = vld [vmem:[%s1 + $0x3c] sm:$0xf]
  %v98 = vld [vmem:[%s2] sm:$0x1]
  %v100 = vlaneseq
  %v101 = vshrl.u32 %v100, 7
  %v102 = vsub.s32 0, %v101
  %v103 = vrot.slane %v98, %v102
  %v169 = vunpack.c.l.b16 %v18
  %v170 = vunpack.c.l.b16 %v19
  %v171 = vunpack.c.l.b16 %v20
  %v172 = vunpack.c.l.b16 %v21
  %v173 = vunpack.c.l.b16 %v22
  %v174 = vunpack.c.l.b16 %v23
  %v175 = vunpack.c.l.b16 %v24
  %v176 = vunpack.c.l.b16 %v25
  %v177 = vunpack.c.l.b16 %v26
  %v178 = vunpack.c.l.b16 %v27
  %v179 = vunpack.c.l.b16 %v28
  %v180 = vunpack.c.l.b16 %v29
  %v181 = vunpack.c.l.b16 %v30
  %v182 = vunpack.c.l.b16 %v31
  %v183 = vunpack.c.l.b16 %v32
  %v184 = vunpack.c.l.b16 %v33
  %v185 = vunpack.c.l.b16 %v34
  %v186 = vunpack.c.l.b16 %v35
  %v187 = vunpack.c.l.b16 %v36
  %v188 = vunpack.c.l.b16 %v37
  %v189 = vunpack.c.l.b16 %v38
  %v190 = vunpack.c.l.b16 %v39
  %v191 = vunpack.c.l.b16 %v40
  %v192 = vunpack.c.l.b16 %v41
  %v193 = vunpack.c.l.b16 %v42
  %v194 = vunpack.c.l.b16 %v43
  %v195 = vunpack.c.l.b16 %v44
  %v196 = vunpack.c.l.b16 %v45
  %v197 = vunpack.c.l.b16 %v46
  %v198 = vunpack.c.l.b16 %v47
  %v199 = vunpack.c.l.b16 %v48
  %v200 = vunpack.c.l.b16 %v49
  %v201 = vunpack.c.l.b16 %v50
  %v202 = vunpack.c.l.b16 %v51
  %v203 = vunpack.c.l.b16 %v52
  %v204 = vunpack.c.l.b16 %v53
  %v205 = vunpack.c.l.b16 %v54
  %v206 = vunpack.c.l.b16 %v55
  %v207 = vunpack.c.l.b16 %v56
  %v208 = vunpack.c.l.b16 %v57
  %v209 = vunpack.c.l.b16 %v58
  %v210 = vunpack.c.l.b16 %v59
  %v211 = vunpack.c.l.b16 %v60
  %v212 = vunpack.c.l.b16 %v61
  %v213 = vunpack.c.l.b16 %v62
  %v214 = vunpack.c.l.b16 %v63
  %v215 = vunpack.c.l.b16 %v64
  %v216 = vunpack.c.l.b16 %v65
  %v217 = vunpack.c.l.b16 %v66
  %v218 = vunpack.c.l.b16 %v67
  %v219 = vunpack.c.l.b16 %v68
  %v220 = vunpack.c.l.b16 %v69
  %v221 = vunpack.c.l.b16 %v70
  %v222 = vunpack.c.l.b16 %v71
  %v223 = vunpack.c.l.b16 %v72
  %v224 = vunpack.c.l.b16 %v73
  %v225 = vunpack.c.l.b16 %v74
  %v226 = vunpack.c.l.b16 %v75
  %v227 = vunpack.c.l.b16 %v76
  %v228 = vunpack.c.l.b16 %v77
  %v229 = vunpack.c.l.b16 %v78
  %v230 = vunpack.c.l.b16 %v79
  %v231 = vunpack.c.l.b16 %v80
  %v232 = vunpack.c.l.b16 %v81
  %v233 = vpack.c.b16 %v170, %v169
  %v234 = vpack.c.b16 %v172, %v171
  %v235 = vpack.c.b16 %v174, %v173
  %v236 = vpack.c.b16 %v176, %v175
  %v237 = vpack.c.b16 %v178, %v177
  %v238 = vpack.c.b16 %v180, %v179
  %v239 = vpack.c.b16 %v182, %v181
  %v240 = vpack.c.b16 %v184, %v183
  %v241 = vpack.c.b16 %v186, %v185
  %v242 = vpack.c.b16 %v188, %v187
  %v243 = vpack.c.b16 %v190, %v189
  %v244 = vpack.c.b16 %v192, %v191
  %v245 = vpack.c.b16 %v194, %v193
  %v246 = vpack.c.b16 %v196, %v195
  %v247 = vpack.c.b16 %v198, %v197
  %v248 = vpack.c.b16 %v200, %v199
  %v249 = vpack.c.b16 %v202, %v201
  %v250 = vpack.c.b16 %v204, %v203
  %v251 = vpack.c.b16 %v206, %v205
  %v252 = vpack.c.b16 %v208, %v207
  %v253 = vpack.c.b16 %v210, %v209
  %v254 = vpack.c.b16 %v212, %v211
  %v255 = vpack.c.b16 %v214, %v213
  %v256 = vpack.c.b16 %v216, %v215
  %v257 = vpack.c.b16 %v218, %v217
  %v258 = vpack.c.b16 %v220, %v219
  %v259 = vpack.c.b16 %v222, %v221
  %v260 = vpack.c.b16 %v224, %v223
  %v261 = vpack.c.b16 %v226, %v225
  %v262 = vpack.c.b16 %v228, %v227
  %v263 = vpack.c.b16 %v230, %v229
  %v264 = vpack.c.b16 %v232, %v231
  %v313 = vunpack.c.l.b16 %v82
  %v314 = vunpack.c.l.b16 %v83
  %v315 = vunpack.c.l.b16 %v84
  %v316 = vunpack.c.l.b16 %v85
  %v317 = vunpack.c.l.b16 %v86
  %v318 = vunpack.c.l.b16 %v87
  %v319 = vunpack.c.l.b16 %v88
  %v320 = vunpack.c.l.b16 %v89
  %v321 = vunpack.c.l.b16 %v90
  %v322 = vunpack.c.l.b16 %v91
  %v323 = vunpack.c.l.b16 %v92
  %v324 = vunpack.c.l.b16 %v93
  %v325 = vunpack.c.l.b16 %v94
  %v326 = vunpack.c.l.b16 %v95
  %v327 = vunpack.c.l.b16 %v96
  %v328 = vunpack.c.l.b16 %v97
  %v329 = vpack.c.b16 %v314, %v313
  %v330 = vpack.c.b16 %v316, %v315
  %v331 = vpack.c.b16 %v318, %v317
  %v332 = vpack.c.b16 %v320, %v319
  %v333 = vpack.c.b16 %v322, %v321
  %v334 = vpack.c.b16 %v324, %v323
  %v335 = vpack.c.b16 %v326, %v325
  %v336 = vpack.c.b16 %v328, %v327
  %345 = vmatprep.subr.bf16.mxu0 0
  %346 = vmatpush1.bf16.msra.mxu0 %v336
  %347 = vmatprep.subr.bf16.mxu0 0
  %348 = vmatpush1.bf16.msra.mxu0 %v335
  %349 = vmatprep.subr.bf16.mxu0 0
  %350 = vmatpush1.bf16.msra.mxu0 %v334
  %351 = vmatprep.subr.bf16.mxu0 0
  %352 = vmatpush1.bf16.msra.mxu0 %v333
  %353 = vmatprep.subr.bf16.mxu0 0
  %354 = vmatpush1.bf16.msra.mxu0 %v332
  %355 = vmatprep.subr.bf16.mxu0 0
  %356 = vmatpush1.bf16.msra.mxu0 %v331
  %357 = vmatprep.subr.bf16.mxu0 0
  %358 = vmatpush1.bf16.msra.mxu0 %v330
  %359 = vmatprep.subr.bf16.mxu0 0
  %360 = vmatpush1.bf16.msra.mxu0 %v329
  %361 = vmatprep.subr.bf16.mxu0 0
  %362 = vmatpush2.bf16.msra.mxu0 0
  %363 = vmatprep.subr.bf16.mxu0 0
  %364 = vmatpush2.bf16.msra.mxu0 0
  %365 = vmatprep.subr.bf16.mxu0 0
  %366 = vmatpush2.bf16.msra.mxu0 0
  %367 = vmatprep.subr.bf16.mxu0 0
  %368 = vmatpush2.bf16.msra.mxu0 0
  %369 = vmatprep.subr.bf16.mxu0 0
  %370 = vmatpush2.bf16.msra.mxu0 0
  %371 = vmatprep.subr.bf16.mxu0 0
  %372 = vmatpush2.bf16.msra.mxu0 0
  %373 = vmatprep.subr.bf16.mxu0 0
  %374 = vmatpush2.bf16.msra.mxu0 0
  %375 = vmatprep.subr.bf16.mxu0 0
  %376 = vmatpush2.bf16.msra.mxu0 0
  %377 = vmatprep.mubr.bf16.mxu0 0
  %378 = vmatmul.mubr.bf16.gmra.mxu0 %v233
  %v379 = vpop.f32.mrf.mxu0
  %v380 = vadd.f32 %v103, %v379
  %v381 = vpop.f32.mrf.mxu0
  %v382 = vpop.f32.mrf.mxu0
  %v383 = vadd.f32 %v103, %v382
  %v384 = vpop.f32.mrf.mxu0
  %385 = vmatprep.mubr.bf16.mxu0 0
  %386 = vmatmul.mubr.bf16.gmra.mxu0 %v234
  %v387 = vpop.f32.mrf.mxu0
  %v388 = vadd.f32 %v103, %v387
  %v389 = vpop.f32.mrf.mxu0
  %v390 = vpop.f32.mrf.mxu0
  %v391 = vadd.f32 %v103, %v390
  %v392 = vpop.f32.mrf.mxu0
  %393 = vmatprep.mubr.bf16.mxu0 0
  %394 = vmatmul.mubr.bf16.gmra.mxu0 %v235
  %v395 = vpop.f32.mrf.mxu0
  %v396 = vadd.f32 %v103, %v395
  %v397 = vpop.f32.mrf.mxu0
  %v398 = vpop.f32.mrf.mxu0
  %v399 = vadd.f32 %v103, %v398
  %v400 = vpop.f32.mrf.mxu0
  %401 = vmatprep.mubr.bf16.mxu0 0
  %402 = vmatmul.mubr.bf16.gmra.mxu0 %v236
  %v403 = vpop.f32.mrf.mxu0
  %v404 = vadd.f32 %v103, %v403
  %v405 = vpop.f32.mrf.mxu0
  %v406 = vpop.f32.mrf.mxu0
  %v407 = vadd.f32 %v103, %v406
  %v408 = vpop.f32.mrf.mxu0
  %409 = vmatprep.mubr.bf16.mxu0 0
  %410 = vmatmul.mubr.bf16.gmra.mxu0 %v237
  %v411 = vpop.f32.mrf.mxu0
  %v412 = vadd.f32 %v103, %v411
  %v413 = vpop.f32.mrf.mxu0
  %v414 = vpop.f32.mrf.mxu0
  %v415 = vadd.f32 %v103, %v414
  %v416 = vpop.f32.mrf.mxu0
  %417 = vmatprep.mubr.bf16.mxu0 0
  %418 = vmatmul.mubr.bf16.gmra.mxu0 %v238
  %v419 = vpop.f32.mrf.mxu0
  %v420 = vadd.f32 %v103, %v419
  %v421 = vpop.f32.mrf.mxu0
  %v422 = vpop.f32.mrf.mxu0
  %v423 = vadd.f32 %v103, %v422
  %v424 = vpop.f32.mrf.mxu0
  %425 = vmatprep.mubr.bf16.mxu0 0
  %426 = vmatmul.mubr.bf16.gmra.mxu0 %v239
  %v427 = vpop.f32.mrf.mxu0
  %v428 = vadd.f32 %v103, %v427
  %v429 = vpop.f32.mrf.mxu0
  %v430 = vpop.f32.mrf.mxu0
  %v431 = vadd.f32 %v103, %v430
  %v432 = vpop.f32.mrf.mxu0
  %433 = vmatprep.mubr.bf16.mxu0 0
  %434 = vmatmul.mubr.bf16.gmra.mxu0 %v240
  %v435 = vpop.f32.mrf.mxu0
  %v436 = vadd.f32 %v103, %v435
  %v437 = vpop.f32.mrf.mxu0
  %v438 = vpop.f32.mrf.mxu0
  %v439 = vadd.f32 %v103, %v438
  %v440 = vpop.f32.mrf.mxu0
  %441 = vmatprep.mubr.bf16.mxu0 0
  %442 = vmatmul.mubr.bf16.gmra.mxu0 %v241
  %v443 = vpop.f32.mrf.mxu0
  %v444 = vadd.f32 %v103, %v443
  %v445 = vpop.f32.mrf.mxu0
  %v446 = vpop.f32.mrf.mxu0
  %v447 = vadd.f32 %v103, %v446
  %v448 = vpop.f32.mrf.mxu0
  %449 = vmatprep.mubr.bf16.mxu0 0
  %450 = vmatmul.mubr.bf16.gmra.mxu0 %v242
  %v451 = vpop.f32.mrf.mxu0
  %v452 = vadd.f32 %v103, %v451
  %v453 = vpop.f32.mrf.mxu0
  %v454 = vpop.f32.mrf.mxu0
  %v455 = vadd.f32 %v103, %v454
  %v456 = vpop.f32.mrf.mxu0
  %457 = vmatprep.mubr.bf16.mxu0 0
  %458 = vmatmul.mubr.bf16.gmra.mxu0 %v243
  %v459 = vpop.f32.mrf.mxu0
  %v460 = vadd.f32 %v103, %v459
  %v461 = vpop.f32.mrf.mxu0
  %v462 = vpop.f32.mrf.mxu0
  %v463 = vadd.f32 %v103, %v462
  %v464 = vpop.f32.mrf.mxu0
  %465 = vmatprep.mubr.bf16.mxu0 0
  %466 = vmatmul.mubr.bf16.gmra.mxu0 %v244
  %v467 = vpop.f32.mrf.mxu0
  %v468 = vadd.f32 %v103, %v467
  %v469 = vpop.f32.mrf.mxu0
  %v470 = vpop.f32.mrf.mxu0
  %v471 = vadd.f32 %v103, %v470
  %v472 = vpop.f32.mrf.mxu0
  %473 = vmatprep.mubr.bf16.mxu0 0
  %474 = vmatmul.mubr.bf16.gmra.mxu0 %v245
  %v475 = vpop.f32.mrf.mxu0
  %v476 = vadd.f32 %v103, %v475
  %v477 = vpop.f32.mrf.mxu0
  %v478 = vpop.f32.mrf.mxu0
  %v479 = vadd.f32 %v103, %v478
  %v480 = vpop.f32.mrf.mxu0
  %481 = vmatprep.mubr.bf16.mxu0 0
  %482 = vmatmul.mubr.bf16.gmra.mxu0 %v246
  %v483 = vpop.f32.mrf.mxu0
  %v484 = vadd.f32 %v103, %v483
  %v485 = vpop.f32.mrf.mxu0
  %v486 = vpop.f32.mrf.mxu0
  %v487 = vadd.f32 %v103, %v486
  %v488 = vpop.f32.mrf.mxu0
  %489 = vmatprep.mubr.bf16.mxu0 0
  %490 = vmatmul.mubr.bf16.gmra.mxu0 %v247
  %v491 = vpop.f32.mrf.mxu0
  %v492 = vadd.f32 %v103, %v491
  %v493 = vpop.f32.mrf.mxu0
  %v494 = vpop.f32.mrf.mxu0
  %v495 = vadd.f32 %v103, %v494
  %v496 = vpop.f32.mrf.mxu0
  %497 = vmatprep.mubr.bf16.mxu0 0
  %498 = vmatmul.mubr.bf16.gmra.mxu0 %v248
  %v499 = vpop.f32.mrf.mxu0
  %v500 = vadd.f32 %v103, %v499
  %v501 = vpop.f32.mrf.mxu0
  %v502 = vpop.f32.mrf.mxu0
  %v503 = vadd.f32 %v103, %v502
  %v504 = vpop.f32.mrf.mxu0
  %505 = vmatprep.mubr.bf16.mxu0 0
  %506 = vmatmul.mubr.bf16.gmra.mxu0 %v249
  %v507 = vpop.f32.mrf.mxu0
  %v508 = vadd.f32 %v103, %v507
  %v509 = vpop.f32.mrf.mxu0
  %v510 = vpop.f32.mrf.mxu0
  %v511 = vadd.f32 %v103, %v510
  %v512 = vpop.f32.mrf.mxu0
  %513 = vmatprep.mubr.bf16.mxu0 0
  %514 = vmatmul.mubr.bf16.gmra.mxu0 %v250
  %v515 = vpop.f32.mrf.mxu0
  %v516 = vadd.f32 %v103, %v515
  %v517 = vpop.f32.mrf.mxu0
  %v518 = vpop.f32.mrf.mxu0
  %v519 = vadd.f32 %v103, %v518
  %v520 = vpop.f32.mrf.mxu0
  %521 = vmatprep.mubr.bf16.mxu0 0
  %522 = vmatmul.mubr.bf16.gmra.mxu0 %v251
  %v523 = vpop.f32.mrf.mxu0
  %v524 = vadd.f32 %v103, %v523
  %v525 = vpop.f32.mrf.mxu0
  %v526 = vpop.f32.mrf.mxu0
  %v527 = vadd.f32 %v103, %v526
  %v528 = vpop.f32.mrf.mxu0
  %529 = vmatprep.mubr.bf16.mxu0 0
  %530 = vmatmul.mubr.bf16.gmra.mxu0 %v252
  %v531 = vpop.f32.mrf.mxu0
  %v532 = vadd.f32 %v103, %v531
  %v533 = vpop.f32.mrf.mxu0
  %v534 = vpop.f32.mrf.mxu0
  %v535 = vadd.f32 %v103, %v534
  %v536 = vpop.f32.mrf.mxu0
  %537 = vmatprep.mubr.bf16.mxu0 0
  %538 = vmatmul.mubr.bf16.gmra.mxu0 %v253
  %v539 = vpop.f32.mrf.mxu0
  %v540 = vadd.f32 %v103, %v539
  %v541 = vpop.f32.mrf.mxu0
  %v542 = vpop.f32.mrf.mxu0
  %v543 = vadd.f32 %v103, %v542
  %v544 = vpop.f32.mrf.mxu0
  %545 = vmatprep.mubr.bf16.mxu0 0
  %546 = vmatmul.mubr.bf16.gmra.mxu0 %v254
  %v547 = vpop.f32.mrf.mxu0
  %v548 = vadd.f32 %v103, %v547
  %v549 = vpop.f32.mrf.mxu0
  %v550 = vpop.f32.mrf.mxu0
  %v551 = vadd.f32 %v103, %v550
  %v552 = vpop.f32.mrf.mxu0
  %553 = vmatprep.mubr.bf16.mxu0 0
  %554 = vmatmul.mubr.bf16.gmra.mxu0 %v255
  %v555 = vpop.f32.mrf.mxu0
  %v556 = vadd.f32 %v103, %v555
  %v557 = vpop.f32.mrf.mxu0
  %v558 = vpop.f32.mrf.mxu0
  %v559 = vadd.f32 %v103, %v558
  %v560 = vpop.f32.mrf.mxu0
  %561 = vmatprep.mubr.bf16.mxu0 0
  %562 = vmatmul.mubr.bf16.gmra.mxu0 %v256
  %v563 = vpop.f32.mrf.mxu0
  %v564 = vadd.f32 %v103, %v563
  %v565 = vpop.f32.mrf.mxu0
  %v566 = vpop.f32.mrf.mxu0
  %v567 = vadd.f32 %v103, %v566
  %v568 = vpop.f32.mrf.mxu0
  %569 = vmatprep.mubr.bf16.mxu0 0
  %570 = vmatmul.mubr.bf16.gmra.mxu0 %v257
  %v571 = vpop.f32.mrf.mxu0
  %v572 = vadd.f32 %v103, %v571
  %v573 = vpop.f32.mrf.mxu0
  %v574 = vpop.f32.mrf.mxu0
  %v575 = vadd.f32 %v103, %v574
  %v576 = vpop.f32.mrf.mxu0
  %577 = vmatprep.mubr.bf16.mxu0 0
  %578 = vmatmul.mubr.bf16.gmra.mxu0 %v258
  %v579 = vpop.f32.mrf.mxu0
  %v580 = vadd.f32 %v103, %v579
  %v581 = vpop.f32.mrf.mxu0
  %v582 = vpop.f32.mrf.mxu0
  %v583 = vadd.f32 %v103, %v582
  %v584 = vpop.f32.mrf.mxu0
  %585 = vmatprep.mubr.bf16.mxu0 0
  %586 = vmatmul.mubr.bf16.gmra.mxu0 %v259
  %v587 = vpop.f32.mrf.mxu0
  %v588 = vadd.f32 %v103, %v587
  %v589 = vpop.f32.mrf.mxu0
  %v590 = vpop.f32.mrf.mxu0
  %v591 = vadd.f32 %v103, %v590
  %v592 = vpop.f32.mrf.mxu0
  %593 = vmatprep.mubr.bf16.mxu0 0
  %594 = vmatmul.mubr.bf16.gmra.mxu0 %v260
  %v595 = vpop.f32.mrf.mxu0
  %v596 = vadd.f32 %v103, %v595
  %v597 = vpop.f32.mrf.mxu0
  %v598 = vpop.f32.mrf.mxu0
  %v599 = vadd.f32 %v103, %v598
  %v600 = vpop.f32.mrf.mxu0
  %601 = vmatprep.mubr.bf16.mxu0 0
  %602 = vmatmul.mubr.bf16.gmra.mxu0 %v261
  %v603 = vpop.f32.mrf.mxu0
  %v604 = vadd.f32 %v103, %v603
  %v605 = vpop.f32.mrf.mxu0
  %v606 = vpop.f32.mrf.mxu0
  %v607 = vadd.f32 %v103, %v606
  %v608 = vpop.f32.mrf.mxu0
  %609 = vmatprep.mubr.bf16.mxu0 0
  %610 = vmatmul.mubr.bf16.gmra.mxu0 %v262
  %v611 = vpop.f32.mrf.mxu0
  %v612 = vadd.f32 %v103, %v611
  %v613 = vpop.f32.mrf.mxu0
  %v614 = vpop.f32.mrf.mxu0
  %v615 = vadd.f32 %v103, %v614
  %v616 = vpop.f32.mrf.mxu0
  %617 = vmatprep.mubr.bf16.mxu0 0
  %618 = vmatmul.mubr.bf16.gmra.mxu0 %v263
  %v619 = vpop.f32.mrf.mxu0
  %v620 = vadd.f32 %v103, %v619
  %v621 = vpop.f32.mrf.mxu0
  %v622 = vpop.f32.mrf.mxu0
  %v623 = vadd.f32 %v103, %v622
  %v624 = vpop.f32.mrf.mxu0
  %625 = vmatprep.mubr.bf16.mxu0 0
  %626 = vmatmul.mubr.bf16.gmra.mxu0 %v264
  %v627 = vpop.f32.mrf.mxu0
  %v628 = vadd.f32 %v103, %v627
  %v629 = vpop.f32.mrf.mxu0
  %v630 = vpop.f32.mrf.mxu0
  %v631 = vadd.f32 %v103, %v630
  %v632 = vpop.f32.mrf.mxu0
  %633 = vdwg.mxu0
  %v634 = vld [vmem:[%s3] sm:$0xf]
  %v635 = vld [vmem:[%s3 + $0x4] sm:$0xf]
  %v636 = vld [vmem:[%s3 + $0x8] sm:$0xf]
  %v637 = vld [vmem:[%s3 + $0xc] sm:$0xf]
  %v638 = vld [vmem:[%s3 + $0x10] sm:$0xf]
  %v639 = vld [vmem:[%s3 + $0x14] sm:$0xf]
  %v640 = vld [vmem:[%s3 + $0x18] sm:$0xf]
  %v641 = vld [vmem:[%s3 + $0x1c] sm:$0xf]
  %v642 = vld [vmem:[%s3 + $0x20] sm:$0xf]
  %v643 = vld [vmem:[%s3 + $0x24] sm:$0xf]
  %v644 = vld [vmem:[%s3 + $0x28] sm:$0xf]
  %v645 = vld [vmem:[%s3 + $0x2c] sm:$0xf]
  %v646 = vld [vmem:[%s3 + $0x30] sm:$0xf]
  %v647 = vld [vmem:[%s3 + $0x34] sm:$0xf]
  %v648 = vld [vmem:[%s3 + $0x38] sm:$0xf]
  %v649 = vld [vmem:[%s3 + $0x3c] sm:$0xf]
  %v650 = vld [vmem:[%s3 + $0x40] sm:$0xf]
  %v651 = vld [vmem:[%s3 + $0x44] sm:$0xf]
  %v652 = vld [vmem:[%s3 + $0x48] sm:$0xf]
  %v653 = vld [vmem:[%s3 + $0x4c] sm:$0xf]
  %v654 = vld [vmem:[%s3 + $0x50] sm:$0xf]
  %v655 = vld [vmem:[%s3 + $0x54] sm:$0xf]
  %v656 = vld [vmem:[%s3 + $0x58] sm:$0xf]
  %v657 = vld [vmem:[%s3 + $0x5c] sm:$0xf]
  %v658 = vld [vmem:[%s3 + $0x60] sm:$0xf]
  %v659 = vld [vmem:[%s3 + $0x64] sm:$0xf]
  %v660 = vld [vmem:[%s3 + $0x68] sm:$0xf]
  %v661 = vld [vmem:[%s3 + $0x6c] sm:$0xf]
  %v662 = vld [vmem:[%s3 + $0x70] sm:$0xf]
  %v663 = vld [vmem:[%s3 + $0x74] sm:$0xf]
  %v664 = vld [vmem:[%s3 + $0x78] sm:$0xf]
  %v665 = vld [vmem:[%s3 + $0x7c] sm:$0xf]
  %v666 = vld [vmem:[%s3 + $0x80] sm:$0xf]
  %v667 = vld [vmem:[%s3 + $0x84] sm:$0xf]
  %v668 = vld [vmem:[%s3 + $0x88] sm:$0xf]
  %v669 = vld [vmem:[%s3 + $0x8c] sm:$0xf]
  %v670 = vld [vmem:[%s3 + $0x90] sm:$0xf]
  %v671 = vld [vmem:[%s3 + $0x94] sm:$0xf]
  %v672 = vld [vmem:[%s3 + $0x98] sm:$0xf]
  %v673 = vld [vmem:[%s3 + $0x9c] sm:$0xf]
  %v674 = vld [vmem:[%s3 + $0xa0] sm:$0xf]
  %v675 = vld [vmem:[%s3 + $0xa4] sm:$0xf]
  %v676 = vld [vmem:[%s3 + $0xa8] sm:$0xf]
  %v677 = vld [vmem:[%s3 + $0xac] sm:$0xf]
  %v678 = vld [vmem:[%s3 + $0xb0] sm:$0xf]
  %v679 = vld [vmem:[%s3 + $0xb4] sm:$0xf]
  %v680 = vld [vmem:[%s3 + $0xb8] sm:$0xf]
  %v681 = vld [vmem:[%s3 + $0xbc] sm:$0xf]
  %v682 = vld [vmem:[%s3 + $0xc0] sm:$0xf]
  %v683 = vld [vmem:[%s3 + $0xc4] sm:$0xf]
  %v684 = vld [vmem:[%s3 + $0xc8] sm:$0xf]
  %v685 = vld [vmem:[%s3 + $0xcc] sm:$0xf]
  %v686 = vld [vmem:[%s3 + $0xd0] sm:$0xf]
  %v687 = vld [vmem:[%s3 + $0xd4] sm:$0xf]
  %v688 = vld [vmem:[%s3 + $0xd8] sm:$0xf]
  %v689 = vld [vmem:[%s3 + $0xdc] sm:$0xf]
  %v690 = vld [vmem:[%s3 + $0xe0] sm:$0xf]
  %v691 = vld [vmem:[%s3 + $0xe4] sm:$0xf]
  %v692 = vld [vmem:[%s3 + $0xe8] sm:$0xf]
  %v693 = vld [vmem:[%s3 + $0xec] sm:$0xf]
  %v694 = vld [vmem:[%s3 + $0xf0] sm:$0xf]
  %v695 = vld [vmem:[%s3 + $0xf4] sm:$0xf]
  %v696 = vld [vmem:[%s3 + $0xf8] sm:$0xf]
  %v697 = vld [vmem:[%s3 + $0xfc] sm:$0xf]
  %v698 = vunpack.c.l.bf16 %v634
  %v699 = vunpack.c.l.bf16 %v635
  %v700 = vunpack.c.l.bf16 %v636
  %v701 = vunpack.c.l.bf16 %v637
  %v702 = vunpack.c.l.bf16 %v638
  %v703 = vunpack.c.l.bf16 %v639
  %v704 = vunpack.c.l.bf16 %v640
  %v705 = vunpack.c.l.bf16 %v641
  %v706 = vunpack.c.l.bf16 %v642
  %v707 = vunpack.c.l.bf16 %v643
  %v708 = vunpack.c.l.bf16 %v644
  %v709 = vunpack.c.l.bf16 %v645
  %v710 = vunpack.c.l.bf16 %v646
  %v711 = vunpack.c.l.bf16 %v647
  %v712 = vunpack.c.l.bf16 %v648
  %v713 = vunpack.c.l.bf16 %v649
  %v714 = vunpack.c.l.bf16 %v650
  %v715 = vunpack.c.l.bf16 %v651
  %v716 = vunpack.c.l.bf16 %v652
  %v717 = vunpack.c.l.bf16 %v653
  %v718 = vunpack.c.l.bf16 %v654
  %v719 = vunpack.c.l.bf16 %v655
  %v720 = vunpack.c.l.bf16 %v656
  %v721 = vunpack.c.l.bf16 %v657
  %v722 = vunpack.c.l.bf16 %v658
  %v723 = vunpack.c.l.bf16 %v659
  %v724 = vunpack.c.l.bf16 %v660
  %v725 = vunpack.c.l.bf16 %v661
  %v726 = vunpack.c.l.bf16 %v662
  %v727 = vunpack.c.l.bf16 %v663
  %v728 = vunpack.c.l.bf16 %v664
  %v729 = vunpack.c.l.bf16 %v665
  %v730 = vunpack.c.l.bf16 %v666
  %v731 = vunpack.c.l.bf16 %v667
  %v732 = vunpack.c.l.bf16 %v668
  %v733 = vunpack.c.l.bf16 %v669
  %v734 = vunpack.c.l.bf16 %v670
  %v735 = vunpack.c.l.bf16 %v671
  %v736 = vunpack.c.l.bf16 %v672
  %v737 = vunpack.c.l.bf16 %v673
  %v738 = vunpack.c.l.bf16 %v674
  %v739 = vunpack.c.l.bf16 %v675
  %v740 = vunpack.c.l.bf16 %v676
  %v741 = vunpack.c.l.bf16 %v677
  %v742 = vunpack.c.l.bf16 %v678
  %v743 = vunpack.c.l.bf16 %v679
  %v744 = vunpack.c.l.bf16 %v680
  %v745 = vunpack.c.l.bf16 %v681
  %v746 = vunpack.c.l.bf16 %v682
  %v747 = vunpack.c.l.bf16 %v683
  %v748 = vunpack.c.l.bf16 %v684
  %v749 = vunpack.c.l.bf16 %v685
  %v750 = vunpack.c.l.bf16 %v686
  %v751 = vunpack.c.l.bf16 %v687
  %v752 = vunpack.c.l.bf16 %v688
  %v753 = vunpack.c.l.bf16 %v689
  %v754 = vunpack.c.l.bf16 %v690
  %v755 = vunpack.c.l.bf16 %v691
  %v756 = vunpack.c.l.bf16 %v692
  %v757 = vunpack.c.l.bf16 %v693
  %v758 = vunpack.c.l.bf16 %v694
  %v759 = vunpack.c.l.bf16 %v695
  %v760 = vunpack.c.l.bf16 %v696
  %v761 = vunpack.c.l.bf16 %v697
  %v762 = vadd.f32 %v380, %v698
  %v763 = vadd.f32 %v383, %v699
  %v764 = vadd.f32 %v388, %v700
  %v765 = vadd.f32 %v391, %v701
  %v766 = vadd.f32 %v396, %v702
  %v767 = vadd.f32 %v399, %v703
  %v768 = vadd.f32 %v404, %v704
  %v769 = vadd.f32 %v407, %v705
  %v770 = vadd.f32 %v412, %v706
  %v771 = vadd.f32 %v415, %v707
  %v772 = vadd.f32 %v420, %v708
  %v773 = vadd.f32 %v423, %v709
  %v774 = vadd.f32 %v428, %v710
  %v775 = vadd.f32 %v431, %v711
  %v776 = vadd.f32 %v436, %v712
  %v777 = vadd.f32 %v439, %v713
  %v778 = vadd.f32 %v444, %v714
  %v779 = vadd.f32 %v447, %v715
  %v780 = vadd.f32 %v452, %v716
  %v781 = vadd.f32 %v455, %v717
  %v782 = vadd.f32 %v460, %v718
  %v783 = vadd.f32 %v463, %v719
  %v784 = vadd.f32 %v468, %v720
  %v785 = vadd.f32 %v471, %v721
  %v786 = vadd.f32 %v476, %v722
  %v787 = vadd.f32 %v479, %v723
  %v788 = vadd.f32 %v484, %v724
  %v789 = vadd.f32 %v487, %v725
  %v790 = vadd.f32 %v492, %v726
  %v791 = vadd.f32 %v495, %v727
  %v792 = vadd.f32 %v500, %v728
  %v793 = vadd.f32 %v503, %v729
  %v794 = vadd.f32 %v508, %v730
  %v795 = vadd.f32 %v511, %v731
  %v796 = vadd.f32 %v516, %v732
  %v797 = vadd.f32 %v519, %v733
  %v798 = vadd.f32 %v524, %v734
  %v799 = vadd.f32 %v527, %v735
  %v800 = vadd.f32 %v532, %v736
  %v801 = vadd.f32 %v535, %v737
  %v802 = vadd.f32 %v540, %v738
  %v803 = vadd.f32 %v543, %v739
  %v804 = vadd.f32 %v548, %v740
  %v805 = vadd.f32 %v551, %v741
  %v806 = vadd.f32 %v556, %v742
  %v807 = vadd.f32 %v559, %v743
  %v808 = vadd.f32 %v564, %v744
  %v809 = vadd.f32 %v567, %v745
  %v810 = vadd.f32 %v572, %v746
  %v811 = vadd.f32 %v575, %v747
  %v812 = vadd.f32 %v580, %v748
  %v813 = vadd.f32 %v583, %v749
  %v814 = vadd.f32 %v588, %v750
  %v815 = vadd.f32 %v591, %v751
  %v816 = vadd.f32 %v596, %v752
  %v817 = vadd.f32 %v599, %v753
  %v818 = vadd.f32 %v604, %v754
  %v819 = vadd.f32 %v607, %v755
  %v820 = vadd.f32 %v612, %v756
  %v821 = vadd.f32 %v615, %v757
  %v822 = vadd.f32 %v620, %v758
  %v823 = vadd.f32 %v623, %v759
  %v824 = vadd.f32 %v628, %v760
  %v825 = vadd.f32 %v631, %v761
  %v826 = vmax.f32 %v762, 0.0
  %v827 = vmax.f32 %v763, 0.0
  %v828 = vmax.f32 %v764, 0.0
  %v829 = vmax.f32 %v765, 0.0
  %v830 = vmax.f32 %v766, 0.0
  %v831 = vmax.f32 %v767, 0.0
  %v832 = vmax.f32 %v768, 0.0
  %v833 = vmax.f32 %v769, 0.0
  %v834 = vmax.f32 %v770, 0.0
  %v835 = vmax.f32 %v771, 0.0
  %v836 = vmax.f32 %v772, 0.0
  %v837 = vmax.f32 %v773, 0.0
  %v838 = vmax.f32 %v774, 0.0
  %v839 = vmax.f32 %v775, 0.0
  %v840 = vmax.f32 %v776, 0.0
  %v841 = vmax.f32 %v777, 0.0
  %v842 = vmax.f32 %v778, 0.0
  %v843 = vmax.f32 %v779, 0.0
  %v844 = vmax.f32 %v780, 0.0
  %v845 = vmax.f32 %v781, 0.0
  %v846 = vmax.f32 %v782, 0.0
  %v847 = vmax.f32 %v783, 0.0
  %v848 = vmax.f32 %v784, 0.0
  %v849 = vmax.f32 %v785, 0.0
  %v850 = vmax.f32 %v786, 0.0
  %v851 = vmax.f32 %v787, 0.0
  %v852 = vmax.f32 %v788, 0.0
  %v853 = vmax.f32 %v789, 0.0
  %v854 = vmax.f32 %v790, 0.0
  %v855 = vmax.f32 %v791, 0.0
  %v856 = vmax.f32 %v792, 0.0
  %v857 = vmax.f32 %v793, 0.0
  %v858 = vmax.f32 %v794, 0.0
  %v859 = vmax.f32 %v795, 0.0
  %v860 = vmax.f32 %v796, 0.0
  %v861 = vmax.f32 %v797, 0.0
  %v862 = vmax.f32 %v798, 0.0
  %v863 = vmax.f32 %v799, 0.0
  %v864 = vmax.f32 %v800, 0.0
  %v865 = vmax.f32 %v801, 0.0
  %v866 = vmax.f32 %v802, 0.0
  %v867 = vmax.f32 %v803, 0.0
  %v868 = vmax.f32 %v804, 0.0
  %v869 = vmax.f32 %v805, 0.0
  %v870 = vmax.f32 %v806, 0.0
  %v871 = vmax.f32 %v807, 0.0
  %v872 = vmax.f32 %v808, 0.0
  %v873 = vmax.f32 %v809, 0.0
  %v874 = vmax.f32 %v810, 0.0
  %v875 = vmax.f32 %v811, 0.0
  %v876 = vmax.f32 %v812, 0.0
  %v877 = vmax.f32 %v813, 0.0
  %v878 = vmax.f32 %v814, 0.0
  %v879 = vmax.f32 %v815, 0.0
  %v880 = vmax.f32 %v816, 0.0
  %v881 = vmax.f32 %v817, 0.0
  %v882 = vmax.f32 %v818, 0.0
  %v883 = vmax.f32 %v819, 0.0
  %v884 = vmax.f32 %v820, 0.0
  %v885 = vmax.f32 %v821, 0.0
  %v886 = vmax.f32 %v822, 0.0
  %v887 = vmax.f32 %v823, 0.0
  %v888 = vmax.f32 %v824, 0.0
  %v889 = vmax.f32 %v825, 0.0
  %v890 = vpack.c.bf16 %v827, %v826
  %v891 = vpack.c.bf16 %v829, %v828
  %v892 = vpack.c.bf16 %v831, %v830
  %v893 = vpack.c.bf16 %v833, %v832
  %v894 = vpack.c.bf16 %v835, %v834
  %v895 = vpack.c.bf16 %v837, %v836
  %v896 = vpack.c.bf16 %v839, %v838
  %v897 = vpack.c.bf16 %v841, %v840
  %v898 = vpack.c.bf16 %v843, %v842
  %v899 = vpack.c.bf16 %v845, %v844
  %v900 = vpack.c.bf16 %v847, %v846
  %v901 = vpack.c.bf16 %v849, %v848
  %v902 = vpack.c.bf16 %v851, %v850
  %v903 = vpack.c.bf16 %v853, %v852
  %v904 = vpack.c.bf16 %v855, %v854
  %v905 = vpack.c.bf16 %v857, %v856
  %v906 = vpack.c.bf16 %v859, %v858
  %v907 = vpack.c.bf16 %v861, %v860
  %v908 = vpack.c.bf16 %v863, %v862
  %v909 = vpack.c.bf16 %v865, %v864
  %v910 = vpack.c.bf16 %v867, %v866
  %v911 = vpack.c.bf16 %v869, %v868
  %v912 = vpack.c.bf16 %v871, %v870
  %v913 = vpack.c.bf16 %v873, %v872
  %v914 = vpack.c.bf16 %v875, %v874
  %v915 = vpack.c.bf16 %v877, %v876
  %v916 = vpack.c.bf16 %v879, %v878
  %v917 = vpack.c.bf16 %v881, %v880
  %v918 = vpack.c.bf16 %v883, %v882
  %v919 = vpack.c.bf16 %v885, %v884
  %v920 = vpack.c.bf16 %v887, %v886
  %v921 = vpack.c.bf16 %v889, %v888
  %v954 = vunpack.c.l.b16 %v890
  %v955 = vunpack.c.h.b16 %v890
  %v956 = vunpack.c.l.b16 %v891
  %v957 = vunpack.c.h.b16 %v891
  %v958 = vunpack.c.l.b16 %v892
  %v959 = vunpack.c.h.b16 %v892
  %v960 = vunpack.c.l.b16 %v893
  %v961 = vunpack.c.h.b16 %v893
  %v962 = vunpack.c.l.b16 %v894
  %v963 = vunpack.c.h.b16 %v894
  %v964 = vunpack.c.l.b16 %v895
  %v965 = vunpack.c.h.b16 %v895
  %v966 = vunpack.c.l.b16 %v896
  %v967 = vunpack.c.h.b16 %v896
  %v968 = vunpack.c.l.b16 %v897
  %v969 = vunpack.c.h.b16 %v897
  %v970 = vunpack.c.l.b16 %v898
  %v971 = vunpack.c.h.b16 %v898
  %v972 = vunpack.c.l.b16 %v899
  %v973 = vunpack.c.h.b16 %v899
  %v974 = vunpack.c.l.b16 %v900
  %v975 = vunpack.c.h.b16 %v900
  %v976 = vunpack.c.l.b16 %v901
  %v977 = vunpack.c.h.b16 %v901
  %v978 = vunpack.c.l.b16 %v902
  %v979 = vunpack.c.h.b16 %v902
  %v980 = vunpack.c.l.b16 %v903
  %v981 = vunpack.c.h.b16 %v903
  %v982 = vunpack.c.l.b16 %v904
  %v983 = vunpack.c.h.b16 %v904
  %v984 = vunpack.c.l.b16 %v905
  %v985 = vunpack.c.h.b16 %v905
  %v986 = vunpack.c.l.b16 %v906
  %v987 = vunpack.c.h.b16 %v906
  %v988 = vunpack.c.l.b16 %v907
  %v989 = vunpack.c.h.b16 %v907
  %v990 = vunpack.c.l.b16 %v908
  %v991 = vunpack.c.h.b16 %v908
  %v992 = vunpack.c.l.b16 %v909
  %v993 = vunpack.c.h.b16 %v909
  %v994 = vunpack.c.l.b16 %v910
  %v995 = vunpack.c.h.b16 %v910
  %v996 = vunpack.c.l.b16 %v911
  %v997 = vunpack.c.h.b16 %v911
  %v998 = vunpack.c.l.b16 %v912
  %v999 = vunpack.c.h.b16 %v912
  %v1000 = vunpack.c.l.b16 %v913
  %v1001 = vunpack.c.h.b16 %v913
  %v1002 = vunpack.c.l.b16 %v914
  %v1003 = vunpack.c.h.b16 %v914
  %v1004 = vunpack.c.l.b16 %v915
  %v1005 = vunpack.c.h.b16 %v915
  %v1006 = vunpack.c.l.b16 %v916
  %v1007 = vunpack.c.h.b16 %v916
  %v1008 = vunpack.c.l.b16 %v917
  %v1009 = vunpack.c.h.b16 %v917
  %v1010 = vunpack.c.l.b16 %v918
  %v1011 = vunpack.c.h.b16 %v918
  %v1012 = vunpack.c.l.b16 %v919
  %v1013 = vunpack.c.h.b16 %v919
  %v1014 = vunpack.c.l.b16 %v920
  %v1015 = vunpack.c.h.b16 %v920
  %v1016 = vunpack.c.l.b16 %v921
  %v1017 = vunpack.c.h.b16 %v921
  %v1018 = vpack.c.b16 %v954, %v954
  %v1019 = vpack.c.b16 %v955, %v955
  %v1020 = vpack.c.b16 %v956, %v956
  %v1021 = vpack.c.b16 %v957, %v957
  %v1022 = vpack.c.b16 %v958, %v958
  %v1023 = vpack.c.b16 %v959, %v959
  %v1024 = vpack.c.b16 %v960, %v960
  %v1025 = vpack.c.b16 %v961, %v961
  %v1026 = vpack.c.b16 %v962, %v962
  %v1027 = vpack.c.b16 %v963, %v963
  %v1028 = vpack.c.b16 %v964, %v964
  %v1029 = vpack.c.b16 %v965, %v965
  %v1030 = vpack.c.b16 %v966, %v966
  %v1031 = vpack.c.b16 %v967, %v967
  %v1032 = vpack.c.b16 %v968, %v968
  %v1033 = vpack.c.b16 %v969, %v969
  %v1034 = vpack.c.b16 %v970, %v970
  %v1035 = vpack.c.b16 %v971, %v971
  %v1036 = vpack.c.b16 %v972, %v972
  %v1037 = vpack.c.b16 %v973, %v973
  %v1038 = vpack.c.b16 %v974, %v974
  %v1039 = vpack.c.b16 %v975, %v975
  %v1040 = vpack.c.b16 %v976, %v976
  %v1041 = vpack.c.b16 %v977, %v977
  %v1042 = vpack.c.b16 %v978, %v978
  %v1043 = vpack.c.b16 %v979, %v979
  %v1044 = vpack.c.b16 %v980, %v980
  %v1045 = vpack.c.b16 %v981, %v981
  %v1046 = vpack.c.b16 %v982, %v982
  %v1047 = vpack.c.b16 %v983, %v983
  %v1048 = vpack.c.b16 %v984, %v984
  %v1049 = vpack.c.b16 %v985, %v985
  %v1050 = vpack.c.b16 %v986, %v986
  %v1051 = vpack.c.b16 %v987, %v987
  %v1052 = vpack.c.b16 %v988, %v988
  %v1053 = vpack.c.b16 %v989, %v989
  %v1054 = vpack.c.b16 %v990, %v990
  %v1055 = vpack.c.b16 %v991, %v991
  %v1056 = vpack.c.b16 %v992, %v992
  %v1057 = vpack.c.b16 %v993, %v993
  %v1058 = vpack.c.b16 %v994, %v994
  %v1059 = vpack.c.b16 %v995, %v995
  %v1060 = vpack.c.b16 %v996, %v996
  %v1061 = vpack.c.b16 %v997, %v997
  %v1062 = vpack.c.b16 %v998, %v998
  %v1063 = vpack.c.b16 %v999, %v999
  %v1064 = vpack.c.b16 %v1000, %v1000
  %v1065 = vpack.c.b16 %v1001, %v1001
  %v1066 = vpack.c.b16 %v1002, %v1002
  %v1067 = vpack.c.b16 %v1003, %v1003
  %v1068 = vpack.c.b16 %v1004, %v1004
  %v1069 = vpack.c.b16 %v1005, %v1005
  %v1070 = vpack.c.b16 %v1006, %v1006
  %v1071 = vpack.c.b16 %v1007, %v1007
  %v1072 = vpack.c.b16 %v1008, %v1008
  %v1073 = vpack.c.b16 %v1009, %v1009
  %v1074 = vpack.c.b16 %v1010, %v1010
  %v1075 = vpack.c.b16 %v1011, %v1011
  %v1076 = vpack.c.b16 %v1012, %v1012
  %v1077 = vpack.c.b16 %v1013, %v1013
  %v1078 = vpack.c.b16 %v1014, %v1014
  %v1079 = vpack.c.b16 %v1015, %v1015
  %v1080 = vpack.c.b16 %v1016, %v1016
  %v1081 = vpack.c.b16 %v1017, %v1017
  %1146 = vst [vmem:[%s4] sm:$0xf] %v1018
  %1147 = vst [vmem:[%s4 + $0x4] sm:$0xf] %v1019
  %1148 = vst [vmem:[%s4 + $0x8] sm:$0xf] %v1020
  %1149 = vst [vmem:[%s4 + $0xc] sm:$0xf] %v1021
  %1150 = vst [vmem:[%s4 + $0x10] sm:$0xf] %v1022
  %1151 = vst [vmem:[%s4 + $0x14] sm:$0xf] %v1023
  %1152 = vst [vmem:[%s4 + $0x18] sm:$0xf] %v1024
  %1153 = vst [vmem:[%s4 + $0x1c] sm:$0xf] %v1025
  %1154 = vst [vmem:[%s4 + $0x20] sm:$0xf] %v1026
  %1155 = vst [vmem:[%s4 + $0x24] sm:$0xf] %v1027
  %1156 = vst [vmem:[%s4 + $0x28] sm:$0xf] %v1028
  %1157 = vst [vmem:[%s4 + $0x2c] sm:$0xf] %v1029
  %1158 = vst [vmem:[%s4 + $0x30] sm:$0xf] %v1030
  %1159 = vst [vmem:[%s4 + $0x34] sm:$0xf] %v1031
  %1160 = vst [vmem:[%s4 + $0x38] sm:$0xf] %v1032
  %1161 = vst [vmem:[%s4 + $0x3c] sm:$0xf] %v1033
  %1162 = vst [vmem:[%s4 + $0x40] sm:$0xf] %v1034
  %1163 = vst [vmem:[%s4 + $0x44] sm:$0xf] %v1035
  %1164 = vst [vmem:[%s4 + $0x48] sm:$0xf] %v1036
  %1165 = vst [vmem:[%s4 + $0x4c] sm:$0xf] %v1037
  %1166 = vst [vmem:[%s4 + $0x50] sm:$0xf] %v1038
  %1167 = vst [vmem:[%s4 + $0x54] sm:$0xf] %v1039
  %1168 = vst [vmem:[%s4 + $0x58] sm:$0xf] %v1040
  %1169 = vst [vmem:[%s4 + $0x5c] sm:$0xf] %v1041
  %1170 = vst [vmem:[%s4 + $0x60] sm:$0xf] %v1042
  %1171 = vst [vmem:[%s4 + $0x64] sm:$0xf] %v1043
  %1172 = vst [vmem:[%s4 + $0x68] sm:$0xf] %v1044
  %1173 = vst [vmem:[%s4 + $0x6c] sm:$0xf] %v1045
  %1174 = vst [vmem:[%s4 + $0x70] sm:$0xf] %v1046
  %1175 = vst [vmem:[%s4 + $0x74] sm:$0xf] %v1047
  %1176 = vst [vmem:[%s4 + $0x78] sm:$0xf] %v1048
  %1177 = vst [vmem:[%s4 + $0x7c] sm:$0xf] %v1049
  %1178 = vst [vmem:[%s4 + $0x80] sm:$0xf] %v1050
  %1179 = vst [vmem:[%s4 + $0x84] sm:$0xf] %v1051
  %1180 = vst [vmem:[%s4 + $0x88] sm:$0xf] %v1052
  %1181 = vst [vmem:[%s4 + $0x8c] sm:$0xf] %v1053
  %1182 = vst [vmem:[%s4 + $0x90] sm:$0xf] %v1054
  %1183 = vst [vmem:[%s4 + $0x94] sm:$0xf] %v1055
  %1184 = vst [vmem:[%s4 + $0x98] sm:$0xf] %v1056
  %1185 = vst [vmem:[%s4 + $0x9c] sm:$0xf] %v1057
  %1186 = vst [vmem:[%s4 + $0xa0] sm:$0xf] %v1058
  %1187 = vst [vmem:[%s4 + $0xa4] sm:$0xf] %v1059
  %1188 = vst [vmem:[%s4 + $0xa8] sm:$0xf] %v1060
  %1189 = vst [vmem:[%s4 + $0xac] sm:$0xf] %v1061
  %1190 = vst [vmem:[%s4 + $0xb0] sm:$0xf] %v1062
  %1191 = vst [vmem:[%s4 + $0xb4] sm:$0xf] %v1063
  %1192 = vst [vmem:[%s4 + $0xb8] sm:$0xf] %v1064
  %1193 = vst [vmem:[%s4 + $0xbc] sm:$0xf] %v1065
  %1194 = vst [vmem:[%s4 + $0xc0] sm:$0xf] %v1066
  %1195 = vst [vmem:[%s4 + $0xc4] sm:$0xf] %v1067
  %1196 = vst [vmem:[%s4 + $0xc8] sm:$0xf] %v1068
  %1197 = vst [vmem:[%s4 + $0xcc] sm:$0xf] %v1069
  %1198 = vst [vmem:[%s4 + $0xd0] sm:$0xf] %v1070
  %1199 = vst [vmem:[%s4 + $0xd4] sm:$0xf] %v1071
  %1200 = vst [vmem:[%s4 + $0xd8] sm:$0xf] %v1072
  %1201 = vst [vmem:[%s4 + $0xdc] sm:$0xf] %v1073
  %1202 = vst [vmem:[%s4 + $0xe0] sm:$0xf] %v1074
  %1203 = vst [vmem:[%s4 + $0xe4] sm:$0xf] %v1075
  %1204 = vst [vmem:[%s4 + $0xe8] sm:$0xf] %v1076
  %1205 = vst [vmem:[%s4 + $0xec] sm:$0xf] %v1077
  %1206 = vst [vmem:[%s4 + $0xf0] sm:$0xf] %v1078
  %1207 = vst [vmem:[%s4 + $0xf4] sm:$0xf] %v1079
  %1208 = vst [vmem:[%s4 + $0xf8] sm:$0xf] %v1080
  %1209 = vst [vmem:[%s4 + $0xfc] sm:$0xf] %v1081
  // Predicated region
  $region18: #{resnet_forward.8} parent=0 // pred_check
    _
  $region19: #{resnet_forward.8} parent=0 // pred_check_branch
    %1211 = sbr.rel (0) target = $region21
  $region20: #{resnet_forward.8} parent=0 // pred_region
    _
  $region21: #{resnet_forward.8} parent=0 // pred_fallthru
    _
  // Predicated region
  $region22: #{resnet_forward.8} parent=0 // pred_check
    _
  $region23: #{resnet_forward.8} parent=0 // pred_check_branch
    %1213 = sbr.rel (0) target = $region25
  $region24: #{resnet_forward.8} parent=0 // pred_region
    _
  $region25: #{resnet_forward.8} parent=0 // pred_fallthru
    _

// kernel: resnet_forward.11
$region0: #{resnet_forward.11}
  #allocation0 [shape = 'u32[]', space=smem, size = 0x4, offset = 0x4, fixed_abs, tag = 'smem constant byte address 0x4 - core index']
  #allocation1 [shape = 'u32[144,128]{1,0:T(1,128)}', space=vmem, size = 0x12000, scoped, tag = 'internal scratch']
  %s0 = inlined_call_operand.vmem [shape: bf16[2,64,128], index: 0, kind: input, shape index: {}]
  %s1 = inlined_call_operand.vmem [shape: f32[128,128], index: 1, kind: input, shape index: {}]
  %s2 = inlined_call_operand.vmem [shape: f32[1,128], index: 2, kind: input, shape index: {}]
  %s3 = inlined_call_operand.hbm [shape: f32[2,128], index: 3, kind: output, shape index: {}]
  %s4 = sld [smem:[#allocation0]]
  $region22: #{resnet_forward.11} parent=0
    _
  %s6 = ssub.s32 1, %s4
  %s7 = scalar_select 0, %s6, %s4
  $region1: #{resnet_forward.11} parent=0
    #allocation2 [shape = 'u8[1024]{0}', space=vmem, size = 0x400, scoped, tag = 'output window, operand 0, single buffered']
    #allocation3 [shape = 's32[1]{0}', space=sflag, size = 0x4, scoped, tag = 'scoped memory for resnet_forward.11']
    %8 = vsyncpa [#allocation3], 0
    // Predicated region
    $region2: #{resnet_forward.11} parent=1 // pred_check
      _
    $region3: #{resnet_forward.11} parent=1 // pred_check_branch
      %10 = sbr.rel (0) target = $region5
    $region4: #{resnet_forward.11} parent=1 // pred_region
      _
    $region5: #{resnet_forward.11} parent=1 // pred_fallthru
      _
    // Predicated region
    $region6: #{resnet_forward.11} parent=1 // pred_check
      _
    $region7: #{resnet_forward.11} parent=1 // pred_check_branch
      %12 = sbr.rel (0) target = $region9
    $region8: #{resnet_forward.11} parent=1 // pred_region
      _
    $region9: #{resnet_forward.11} parent=1 // pred_fallthru
      _
    // Predicated region
    $region10: #{resnet_forward.11} parent=1 // pred_check
      _
    $region11: #{resnet_forward.11} parent=1 // pred_check_branch
      %14 = sbr.rel (0) target = $region13
    $region12: #{resnet_forward.11} parent=1 // pred_region
      _
    $region13: #{resnet_forward.11} parent=1 // pred_fallthru
      _
    %v15 = vld [vmem:[%s0] sm:$0xf]
    %v16 = vld [vmem:[%s0 + $0x4] sm:$0xf]
    %v17 = vld [vmem:[%s0 + $0x8] sm:$0xf]
    %v18 = vld [vmem:[%s0 + $0xc] sm:$0xf]
    %v19 = vld [vmem:[%s0 + $0x10] sm:$0xf]
    %v20 = vld [vmem:[%s0 + $0x14] sm:$0xf]
    %v21 = vld [vmem:[%s0 + $0x18] sm:$0xf]
    %v22 = vld [vmem:[%s0 + $0x1c] sm:$0xf]
    %v23 = vld [vmem:[%s0 + $0x20] sm:$0xf]
    %v24 = vld [vmem:[%s0 + $0x24] sm:$0xf]
    %v25 = vld [vmem:[%s0 + $0x28] sm:$0xf]
    %v26 = vld [vmem:[%s0 + $0x2c] sm:$0xf]
    %v27 = vld [vmem:[%s0 + $0x30] sm:$0xf]
    %v28 = vld [vmem:[%s0 + $0x34] sm:$0xf]
    %v29 = vld [vmem:[%s0 + $0x38] sm:$0xf]
    %v30 = vld [vmem:[%s0 + $0x3c] sm:$0xf]
    %v31 = vunpack.c.l.bf16 %v15
    %v32 = vunpack.c.l.bf16 %v16
    %v33 = vunpack.c.l.bf16 %v17
    %v34 = vunpack.c.l.bf16 %v18
    %v35 = vunpack.c.l.bf16 %v19
    %v36 = vunpack.c.l.bf16 %v20
    %v37 = vunpack.c.l.bf16 %v21
    %v38 = vunpack.c.l.bf16 %v22
    %v39 = vunpack.c.l.bf16 %v23
    %v40 = vunpack.c.l.bf16 %v24
    %v41 = vunpack.c.l.bf16 %v25
    %v42 = vunpack.c.l.bf16 %v26
    %v43 = vunpack.c.l.bf16 %v27
    %v44 = vunpack.c.l.bf16 %v28
    %v45 = vunpack.c.l.bf16 %v29
    %v46 = vunpack.c.l.bf16 %v30
    %v47 = vadd.f32 %v31, %v32
    %v48 = vadd.f32 %v47, %v33
    %v49 = vadd.f32 %v48, %v34
    %v50 = vadd.f32 %v49, %v35
    %v51 = vadd.f32 %v50, %v36
    %v52 = vadd.f32 %v51, %v37
    %v53 = vadd.f32 %v52, %v38
    %v54 = vrot.slane %v53, 4
    %v55 = vadd.f32 %v53, %v54
    %v56 = vrot.slane %v55, 2
    %v57 = vadd.f32 %v55, %v56
    %v58 = vrot.slane %v57, 1
    %v59 = vadd.f32 %v57, %v58
    %v60 = vadd.f32 %v39, %v40
    %v61 = vadd.f32 %v60, %v41
    %v62 = vadd.f32 %v61, %v42
    %v63 = vadd.f32 %v62, %v43
    %v64 = vadd.f32 %v63, %v44
    %v65 = vadd.f32 %v64, %v45
    %v66 = vadd.f32 %v65, %v46
    %v67 = vrot.slane %v66, 4
    %v68 = vadd.f32 %v66, %v67
    %v69 = vrot.slane %v68, 2
    %v70 = vadd.f32 %v68, %v69
    %v71 = vrot.slane %v70, 1
    %v72 = vadd.f32 %v70, %v71
    %v73 = vmul.f32 %v59, 0.015625
    %v74 = vmul.f32 %v72, 0.015625
    %v75 = vld [vmem:[%s1] sm:$0xff]
    %v76 = vld [vmem:[%s1 + $0x8] sm:$0xff]
    %v77 = vld [vmem:[%s1 + $0x10] sm:$0xff]
    %v78 = vld [vmem:[%s1 + $0x18] sm:$0xff]
    %v79 = vld [vmem:[%s1 + $0x20] sm:$0xff]
    %v80 = vld [vmem:[%s1 + $0x28] sm:$0xff]
    %v81 = vld [vmem:[%s1 + $0x30] sm:$0xff]
    %v82 = vld [vmem:[%s1 + $0x38] sm:$0xff]
    %v83 = vld [vmem:[%s1 + $0x40] sm:$0xff]
    %v84 = vld [vmem:[%s1 + $0x48] sm:$0xff]
    %v85 = vld [vmem:[%s1 + $0x50] sm:$0xff]
    %v86 = vld [vmem:[%s1 + $0x58] sm:$0xff]
    %v87 = vld [vmem:[%s1 + $0x60] sm:$0xff]
    %v88 = vld [vmem:[%s1 + $0x68] sm:$0xff]
    %v89 = vld [vmem:[%s1 + $0x70] sm:$0xff]
    %v90 = vld [vmem:[%s1 + $0x78] sm:$0xff]
    %v91 = vld [vmem:[%s2] sm:$0x1]
    %v93 = vlaneseq
    %v94 = vshrl.u32 %v93, 7
    %v95 = vsub.s32 0, %v94
    %v96 = vrot.slane %v91, %v95
    %vm100 = vcmask 1041409
    %v101 = vsel %vm100, %v74, %v73
    %103 = vmatprep.subr.mxu0 0.0
    %104 = vmatpush1.msra.mxu0 %v90
    %105 = vmatprep.subr.mxu0 0.0
    %106 = vmatpush1.msra.mxu0 %v89
    %107 = vmatprep.subr.mxu0 0.0
    %108 = vmatpush1.msra.mxu0 %v88
    %109 = vmatprep.subr.mxu0 0.0
    %110 = vmatpush1.msra.mxu0 %v87
    %111 = vmatprep.subr.mxu0 0.0
    %112 = vmatpush1.msra.mxu0 %v86
    %113 = vmatprep.subr.mxu0 0.0
    %114 = vmatpush1.msra.mxu0 %v85
    %115 = vmatprep.subr.mxu0 0.0
    %116 = vmatpush1.msra.mxu0 %v84
    %117 = vmatprep.subr.mxu0 0.0
    %118 = vmatpush1.msra.mxu0 %v83
    %119 = vmatprep.subr.mxu0 0.0
    %120 = vmatpush1.msra.mxu0 %v82
    %121 = vmatprep.subr.mxu0 0.0
    %122 = vmatpush1.msra.mxu0 %v81
    %123 = vmatprep.subr.mxu0 0.0
    %124 = vmatpush1.msra.mxu0 %v80
    %125 = vmatprep.subr.mxu0 0.0
    %126 = vmatpush1.msra.mxu0 %v79
    %127 = vmatprep.subr.mxu0 0.0
    %128 = vmatpush1.msra.mxu0 %v78
    %129 = vmatprep.subr.mxu0 0.0
    %130 = vmatpush1.msra.mxu0 %v77
    %131 = vmatprep.subr.mxu0 0.0
    %132 = vmatpush1.msra.mxu0 %v76
    %133 = vmatprep.subr.mxu0 0.0
    %134 = vmatpush1.msra.mxu0 %v75
    %135 = vmatprep.subr.mxu0 0.0
    %136 = vmatpush2.msra.mxu0 0.0
    %137 = vmatprep.subr.mxu0 0.0
    %138 = vmatpush2.msra.mxu0 0.0
    %139 = vmatprep.subr.mxu0 0.0
    %140 = vmatpush2.msra.mxu0 0.0
    %141 = vmatprep.subr.mxu0 0.0
    %142 = vmatpush2.msra.mxu0 0.0
    %143 = vmatprep.subr.mxu0 0.0
    %144 = vmatpush2.msra.mxu0 0.0
    %145 = vmatprep.subr.mxu0 0.0
    %146 = vmatpush2.msra.mxu0 0.0
    %147 = vmatprep.subr.mxu0 0.0
    %148 = vmatpush2.msra.mxu0 0.0
    %149 = vmatprep.subr.mxu0 0.0
    %150 = vmatpush2.msra.mxu0 0.0
    %151 = vmatprep.subr.mxu0 0.0
    %152 = vmatpush2.msra.mxu0 0.0
    %153 = vmatprep.subr.mxu0 0.0
    %154 = vmatpush2.msra.mxu0 0.0
    %155 = vmatprep.subr.mxu0 0.0
    %156 = vmatpush2.msra.mxu0 0.0
    %157 = vmatprep.subr.mxu0 0.0
    %158 = vmatpush2.msra.mxu0 0.0
    %159 = vmatprep.subr.mxu0 0.0
    %160 = vmatpush2.msra.mxu0 0.0
    %161 = vmatprep.subr.mxu0 0.0
    %162 = vmatpush2.msra.mxu0 0.0
    %163 = vmatprep.subr.mxu0 0.0
    %164 = vmatpush2.msra.mxu0 0.0
    %165 = vmatprep.subr.mxu0 0.0
    %166 = vmatpush2.msra.mxu0 0.0
    %167 = vmatprep.mubr.f32.mxu0 0.0
    %168 = vmatmul.mubr.f32.gmra.mxu0 %v101
    %v169 = vpop.f32.mrf.mxu0
    %v170 = vadd.f32 %v96, %v169
    %v171 = vpop.f32.mrf.mxu0
    %172 = vdwg.mxu0
    %173 = vst [vmem:[#allocation2] sm:$0x3] %v170
    // Predicated region
    $region14: #{resnet_forward.11} parent=1 // pred_check
      _
    $region15: #{resnet_forward.11} parent=1 // pred_check_branch
      %175 = sbr.rel (0) target = $region17
    $region16: #{resnet_forward.11} parent=1 // pred_region
      %s177 = ssub.s32 32, 32
      %178 = vsyncadd [#allocation3], %s177
      %s180 = sshll.u32 [#allocation2], 4
      %s181 = int_to_ptr.vmem [resolvable:$true] %s180
      %183 = dma.vmem_to_hbm [thread:$0]  %s181, 32, %s3, [#allocation3]
    $region17: #{resnet_forward.11} parent=1 // pred_fallthru
      _
    // Predicated region
    $region18: #{resnet_forward.11} parent=1 // pred_check
      _
    $region19: #{resnet_forward.11} parent=1 // pred_check_branch
      %185 = sbr.rel (0) target = $region21
    $region20: #{resnet_forward.11} parent=1 // pred_region
      %186 = dma.done [#allocation3], 32
    $region21: #{resnet_forward.11} parent=1 // pred_fallthru
      _
    %187 = vsyncpa [#allocation3], 1

// kernel: resnet_forward.10
$region0: #{resnet_forward.10}
  #allocation0 [shape = 'u32[]', space=smem, size = 0x4, offset = 0x4, fixed_abs, tag = 'smem constant byte address 0x4 - core index']
  #allocation1 [shape = 'u32[144,128]{1,0:T(1,128)}', space=vmem, size = 0x12000, scoped, tag = 'internal scratch']
  %s0 = inlined_call_operand.vmem [shape: bf16[128,128], index: 0, kind: input, shape index: {}]
  %s1 = inlined_call_operand.vmem [shape: bf16[128,128], index: 1, kind: input, shape index: {}]
  %s2 = inlined_call_operand.vmem [shape: f32[1,128], index: 2, kind: input, shape index: {}]
  %s3 = inlined_call_operand.vmem [shape: bf16[128,128], index: 3, kind: input, shape index: {}]
  %s4 = inlined_call_operand.vmem [shape: bf16[128,128], index: 4, kind: input, shape index: {}]
  %s5 = inlined_call_operand.vmem [shape: f32[1,128], index: 5, kind: input, shape index: {}]
  %s6 = inlined_call_operand.vmem [shape: bf16[128,128], index: 6, kind: output, shape index: {}]
  %s7 = sld [smem:[#allocation0]]
  $region34: #{resnet_forward.10} parent=0
    _
  %s9 = ssub.s32 1, %s7
  %s10 = scalar_select 0, %s9, %s7
  // Predicated region
  $region2: #{resnet_forward.10} parent=0 // pred_check
    _
  $region3: #{resnet_forward.10} parent=0 // pred_check_branch
    %12 = sbr.rel (0) target = $region5
  $region4: #{resnet_forward.10} parent=0 // pred_region
    _
  $region5: #{resnet_forward.10} parent=0 // pred_fallthru
    _
  // Predicated region
  $region6: #{resnet_forward.10} parent=0 // pred_check
    _
  $region7: #{resnet_forward.10} parent=0 // pred_check_branch
    %14 = sbr.rel (0) target = $region9
  $region8: #{resnet_forward.10} parent=0 // pred_region
    _
  $region9: #{resnet_forward.10} parent=0 // pred_fallthru
    _
  // Predicated region
  $region10: #{resnet_forward.10} parent=0 // pred_check
    _
  $region11: #{resnet_forward.10} parent=0 // pred_check_branch
    %16 = sbr.rel (0) target = $region13
  $region12: #{resnet_forward.10} parent=0 // pred_region
    _
  $region13: #{resnet_forward.10} parent=0 // pred_fallthru
    _
  // Predicated region
  $region14: #{resnet_forward.10} parent=0 // pred_check
    _
  $region15: #{resnet_forward.10} parent=0 // pred_check_branch
    %18 = sbr.rel (0) target = $region17
  $region16: #{resnet_forward.10} parent=0 // pred_region
    _
  $region17: #{resnet_forward.10} parent=0 // pred_fallthru
    _
  // Predicated region
  $region18: #{resnet_forward.10} parent=0 // pred_check
    _
  $region19: #{resnet_forward.10} parent=0 // pred_check_branch
    %20 = sbr.rel (0) target = $region21
  $region20: #{resnet_forward.10} parent=0 // pred_region
    _
  $region21: #{resnet_forward.10} parent=0 // pred_fallthru
    _
  // Predicated region
  $region22: #{resnet_forward.10} parent=0 // pred_check
    _
  $region23: #{resnet_forward.10} parent=0 // pred_check_branch
    %22 = sbr.rel (0) target = $region25
  $region24: #{resnet_forward.10} parent=0 // pred_region
    _
  $region25: #{resnet_forward.10} parent=0 // pred_fallthru
    _
  %v24 = vld [vmem:[%s0] sm:$0xf]
  %v25 = vld [vmem:[%s0 + $0x4] sm:$0xf]
  %v26 = vld [vmem:[%s0 + $0x8] sm:$0xf]
  %v27 = vld [vmem:[%s0 + $0xc] sm:$0xf]
  %v28 = vld [vmem:[%s0 + $0x10] sm:$0xf]
  %v29 = vld [vmem:[%s0 + $0x14] sm:$0xf]
  %v30 = vld [vmem:[%s0 + $0x18] sm:$0xf]
  %v31 = vld [vmem:[%s0 + $0x1c] sm:$0xf]
  %v32 = vld [vmem:[%s0 + $0x20] sm:$0xf]
  %v33 = vld [vmem:[%s0 + $0x24] sm:$0xf]
  %v34 = vld [vmem:[%s0 + $0x28] sm:$0xf]
  %v35 = vld [vmem:[%s0 + $0x2c] sm:$0xf]
  %v36 = vld [vmem:[%s0 + $0x30] sm:$0xf]
  %v37 = vld [vmem:[%s0 + $0x34] sm:$0xf]
  %v38 = vld [vmem:[%s0 + $0x38] sm:$0xf]
  %v39 = vld [vmem:[%s0 + $0x3c] sm:$0xf]
  %v40 = vld [vmem:[%s1] sm:$0xf]
  %v41 = vld [vmem:[%s1 + $0x4] sm:$0xf]
  %v42 = vld [vmem:[%s1 + $0x8] sm:$0xf]
  %v43 = vld [vmem:[%s1 + $0xc] sm:$0xf]
  %v44 = vld [vmem:[%s1 + $0x10] sm:$0xf]
  %v45 = vld [vmem:[%s1 + $0x14] sm:$0xf]
  %v46 = vld [vmem:[%s1 + $0x18] sm:$0xf]
  %v47 = vld [vmem:[%s1 + $0x1c] sm:$0xf]
  %v48 = vld [vmem:[%s1 + $0x20] sm:$0xf]
  %v49 = vld [vmem:[%s1 + $0x24] sm:$0xf]
  %v50 = vld [vmem:[%s1 + $0x28] sm:$0xf]
  %v51 = vld [vmem:[%s1 + $0x2c] sm:$0xf]
  %v52 = vld [vmem:[%s1 + $0x30] sm:$0xf]
  %v53 = vld [vmem:[%s1 + $0x34] sm:$0xf]
  %v54 = vld [vmem:[%s1 + $0x38] sm:$0xf]
  %v55 = vld [vmem:[%s1 + $0x3c] sm:$0xf]
  %v56 = vld [vmem:[%s2] sm:$0x1]
  %v58 = vlaneseq
  %v59 = vshrl.u32 %v58, 7
  %v60 = vsub.s32 0, %v59
  %v61 = vrot.slane %v56, %v60
  %v79 = vunpack.c.l.b16 %v24
  %v80 = vunpack.c.l.b16 %v25
  %v81 = vunpack.c.l.b16 %v26
  %v82 = vunpack.c.l.b16 %v27
  %v83 = vunpack.c.l.b16 %v28
  %v84 = vunpack.c.l.b16 %v29
  %v85 = vunpack.c.l.b16 %v30
  %v86 = vunpack.c.l.b16 %v31
  %v87 = vunpack.c.l.b16 %v32
  %v88 = vunpack.c.l.b16 %v33
  %v89 = vunpack.c.l.b16 %v34
  %v90 = vunpack.c.l.b16 %v35
  %v91 = vunpack.c.l.b16 %v36
  %v92 = vunpack.c.l.b16 %v37
  %v93 = vunpack.c.l.b16 %v38
  %v94 = vunpack.c.l.b16 %v39
  %v95 = vpack.c.b16 %v80, %v79
  %v96 = vpack.c.b16 %v82, %v81
  %v97 = vpack.c.b16 %v84, %v83
  %v98 = vpack.c.b16 %v86, %v85
  %v99 = vpack.c.b16 %v88, %v87
  %v100 = vpack.c.b16 %v90, %v89
  %v101 = vpack.c.b16 %v92, %v91
  %v102 = vpack.c.b16 %v94, %v93
  %v127 = vunpack.c.l.b16 %v40
  %v128 = vunpack.c.l.b16 %v41
  %v129 = vunpack.c.l.b16 %v42
  %v130 = vunpack.c.l.b16 %v43
  %v131 = vunpack.c.l.b16 %v44
  %v132 = vunpack.c.l.b16 %v45
  %v133 = vunpack.c.l.b16 %v46
  %v134 = vunpack.c.l.b16 %v47
  %v135 = vunpack.c.l.b16 %v48
  %v136 = vunpack.c.l.b16 %v49
  %v137 = vunpack.c.l.b16 %v50
  %v138 = vunpack.c.l.b16 %v51
  %v139 = vunpack.c.l.b16 %v52
  %v140 = vunpack.c.l.b16 %v53
  %v141 = vunpack.c.l.b16 %v54
  %v142 = vunpack.c.l.b16 %v55
  %v143 = vpack.c.b16 %v128, %v127
  %v144 = vpack.c.b16 %v130, %v129
  %v145 = vpack.c.b16 %v132, %v131
  %v146 = vpack.c.b16 %v134, %v133
  %v147 = vpack.c.b16 %v136, %v135
  %v148 = vpack.c.b16 %v138, %v137
  %v149 = vpack.c.b16 %v140, %v139
  %v150 = vpack.c.b16 %v142, %v141
  %159 = vmatprep.subr.bf16.mxu0 0
  %160 = vmatpush1.bf16.msra.mxu0 %v150
  %161 = vmatprep.subr.bf16.mxu0 0
  %162 = vmatpush1.bf16.msra.mxu0 %v149
  %163 = vmatprep.subr.bf16.mxu0 0
  %164 = vmatpush1.bf16.msra.mxu0 %v148
  %165 = vmatprep.subr.bf16.mxu0 0
  %166 = vmatpush1.bf16.msra.mxu0 %v147
  %167 = vmatprep.subr.bf16.mxu0 0
  %168 = vmatpush1.bf16.msra.mxu0 %v146
  %169 = vmatprep.subr.bf16.mxu0 0
  %170 = vmatpush1.bf16.msra.mxu0 %v145
  %171 = vmatprep.subr.bf16.mxu0 0
  %172 = vmatpush1.bf16.msra.mxu0 %v144
  %173 = vmatprep.subr.bf16.mxu0 0
  %174 = vmatpush1.bf16.msra.mxu0 %v143
  %175 = vmatprep.subr.bf16.mxu0 0
  %176 = vmatpush2.bf16.msra.mxu0 0
  %177 = vmatprep.subr.bf16.mxu0 0
  %178 = vmatpush2.bf16.msra.mxu0 0
  %179 = vmatprep.subr.bf16.mxu0 0
  %180 = vmatpush2.bf16.msra.mxu0 0
  %181 = vmatprep.subr.bf16.mxu0 0
  %182 = vmatpush2.bf16.msra.mxu0 0
  %183 = vmatprep.subr.bf16.mxu0 0
  %184 = vmatpush2.bf16.msra.mxu0 0
  %185 = vmatprep.subr.bf16.mxu0 0
  %186 = vmatpush2.bf16.msra.mxu0 0
  %187 = vmatprep.subr.bf16.mxu0 0
  %188 = vmatpush2.bf16.msra.mxu0 0
  %189 = vmatprep.subr.bf16.mxu0 0
  %190 = vmatpush2.bf16.msra.mxu0 0
  %191 = vmatprep.mubr.bf16.mxu0 0
  %192 = vmatmul.mubr.bf16.gmra.mxu0 %v95
  %v193 = vpop.f32.mrf.mxu0
  %v194 = vadd.f32 %v61, %v193
  %v195 = vpop.f32.mrf.mxu0
  %v196 = vpop.f32.mrf.mxu0
  %v197 = vadd.f32 %v61, %v196
  %v198 = vpop.f32.mrf.mxu0
  %199 = vmatprep.mubr.bf16.mxu0 0
  %200 = vmatmul.mubr.bf16.gmra.mxu0 %v96
  %v201 = vpop.f32.mrf.mxu0
  %v202 = vadd.f32 %v61, %v201
  %v203 = vpop.f32.mrf.mxu0
  %v204 = vpop.f32.mrf.mxu0
  %v205 = vadd.f32 %v61, %v204
  %v206 = vpop.f32.mrf.mxu0
  %207 = vmatprep.mubr.bf16.mxu0 0
  %208 = vmatmul.mubr.bf16.gmra.mxu0 %v97
  %v209 = vpop.f32.mrf.mxu0
  %v210 = vadd.f32 %v61, %v209
  %v211 = vpop.f32.mrf.mxu0
  %v212 = vpop.f32.mrf.mxu0
  %v213 = vadd.f32 %v61, %v212
  %v214 = vpop.f32.mrf.mxu0
  %215 = vmatprep.mubr.bf16.mxu0 0
  %216 = vmatmul.mubr.bf16.gmra.mxu0 %v98
  %v217 = vpop.f32.mrf.mxu0
  %v218 = vadd.f32 %v61, %v217
  %v219 = vpop.f32.mrf.mxu0
  %v220 = vpop.f32.mrf.mxu0
  %v221 = vadd.f32 %v61, %v220
  %v222 = vpop.f32.mrf.mxu0
  %223 = vmatprep.mubr.bf16.mxu0 0
  %224 = vmatmul.mubr.bf16.gmra.mxu0 %v99
  %v225 = vpop.f32.mrf.mxu0
  %v226 = vadd.f32 %v61, %v225
  %v227 = vpop.f32.mrf.mxu0
  %v228 = vpop.f32.mrf.mxu0
  %v229 = vadd.f32 %v61, %v228
  %v230 = vpop.f32.mrf.mxu0
  %231 = vmatprep.mubr.bf16.mxu0 0
  %232 = vmatmul.mubr.bf16.gmra.mxu0 %v100
  %v233 = vpop.f32.mrf.mxu0
  %v234 = vadd.f32 %v61, %v233
  %v235 = vpop.f32.mrf.mxu0
  %v236 = vpop.f32.mrf.mxu0
  %v237 = vadd.f32 %v61, %v236
  %v238 = vpop.f32.mrf.mxu0
  %239 = vmatprep.mubr.bf16.mxu0 0
  %240 = vmatmul.mubr.bf16.gmra.mxu0 %v101
  %v241 = vpop.f32.mrf.mxu0
  %v242 = vadd.f32 %v61, %v241
  %v243 = vpop.f32.mrf.mxu0
  %v244 = vpop.f32.mrf.mxu0
  %v245 = vadd.f32 %v61, %v244
  %v246 = vpop.f32.mrf.mxu0
  %247 = vmatprep.mubr.bf16.mxu0 0
  %248 = vmatmul.mubr.bf16.gmra.mxu0 %v102
  %v249 = vpop.f32.mrf.mxu0
  %v250 = vadd.f32 %v61, %v249
  %v251 = vpop.f32.mrf.mxu0
  %v252 = vpop.f32.mrf.mxu0
  %v253 = vadd.f32 %v61, %v252
  %v254 = vpop.f32.mrf.mxu0
  %255 = vdwg.mxu0
  %v256 = vld [vmem:[%s3] sm:$0xf]
  %v257 = vld [vmem:[%s3 + $0x4] sm:$0xf]
  %v258 = vld [vmem:[%s3 + $0x8] sm:$0xf]
  %v259 = vld [vmem:[%s3 + $0xc] sm:$0xf]
  %v260 = vld [vmem:[%s3 + $0x10] sm:$0xf]
  %v261 = vld [vmem:[%s3 + $0x14] sm:$0xf]
  %v262 = vld [vmem:[%s3 + $0x18] sm:$0xf]
  %v263 = vld [vmem:[%s3 + $0x1c] sm:$0xf]
  %v264 = vld [vmem:[%s3 + $0x20] sm:$0xf]
  %v265 = vld [vmem:[%s3 + $0x24] sm:$0xf]
  %v266 = vld [vmem:[%s3 + $0x28] sm:$0xf]
  %v267 = vld [vmem:[%s3 + $0x2c] sm:$0xf]
  %v268 = vld [vmem:[%s3 + $0x30] sm:$0xf]
  %v269 = vld [vmem:[%s3 + $0x34] sm:$0xf]
  %v270 = vld [vmem:[%s3 + $0x38] sm:$0xf]
  %v271 = vld [vmem:[%s3 + $0x3c] sm:$0xf]
  %v272 = vld [vmem:[%s4] sm:$0xf]
  %v273 = vld [vmem:[%s4 + $0x4] sm:$0xf]
  %v274 = vld [vmem:[%s4 + $0x8] sm:$0xf]
  %v275 = vld [vmem:[%s4 + $0xc] sm:$0xf]
  %v276 = vld [vmem:[%s4 + $0x10] sm:$0xf]
  %v277 = vld [vmem:[%s4 + $0x14] sm:$0xf]
  %v278 = vld [vmem:[%s4 + $0x18] sm:$0xf]
  %v279 = vld [vmem:[%s4 + $0x1c] sm:$0xf]
  %v280 = vld [vmem:[%s4 + $0x20] sm:$0xf]
  %v281 = vld [vmem:[%s4 + $0x24] sm:$0xf]
  %v282 = vld [vmem:[%s4 + $0x28] sm:$0xf]
  %v283 = vld [vmem:[%s4 + $0x2c] sm:$0xf]
  %v284 = vld [vmem:[%s4 + $0x30] sm:$0xf]
  %v285 = vld [vmem:[%s4 + $0x34] sm:$0xf]
  %v286 = vld [vmem:[%s4 + $0x38] sm:$0xf]
  %v287 = vld [vmem:[%s4 + $0x3c] sm:$0xf]
  %v304 = vunpack.c.l.b16 %v256
  %v305 = vunpack.c.l.b16 %v257
  %v306 = vunpack.c.l.b16 %v258
  %v307 = vunpack.c.l.b16 %v259
  %v308 = vunpack.c.l.b16 %v260
  %v309 = vunpack.c.l.b16 %v261
  %v310 = vunpack.c.l.b16 %v262
  %v311 = vunpack.c.l.b16 %v263
  %v312 = vunpack.c.l.b16 %v264
  %v313 = vunpack.c.l.b16 %v265
  %v314 = vunpack.c.l.b16 %v266
  %v315 = vunpack.c.l.b16 %v267
  %v316 = vunpack.c.l.b16 %v268
  %v317 = vunpack.c.l.b16 %v269
  %v318 = vunpack.c.l.b16 %v270
  %v319 = vunpack.c.l.b16 %v271
  %v320 = vpack.c.b16 %v305, %v304
  %v321 = vpack.c.b16 %v307, %v306
  %v322 = vpack.c.b16 %v309, %v308
  %v323 = vpack.c.b16 %v311, %v310
  %v324 = vpack.c.b16 %v313, %v312
  %v325 = vpack.c.b16 %v315, %v314
  %v326 = vpack.c.b16 %v317, %v316
  %v327 = vpack.c.b16 %v319, %v318
  %v352 = vunpack.c.l.b16 %v272
  %v353 = vunpack.c.l.b16 %v273
  %v354 = vunpack.c.l.b16 %v274
  %v355 = vunpack.c.l.b16 %v275
  %v356 = vunpack.c.l.b16 %v276
  %v357 = vunpack.c.l.b16 %v277
  %v358 = vunpack.c.l.b16 %v278
  %v359 = vunpack.c.l.b16 %v279
  %v360 = vunpack.c.l.b16 %v280
  %v361 = vunpack.c.l.b16 %v281
  %v362 = vunpack.c.l.b16 %v282
  %v363 = vunpack.c.l.b16 %v283
  %v364 = vunpack.c.l.b16 %v284
  %v365 = vunpack.c.l.b16 %v285
  %v366 = vunpack.c.l.b16 %v286
  %v367 = vunpack.c.l.b16 %v287
  %v368 = vpack.c.b16 %v353, %v352
  %v369 = vpack.c.b16 %v355, %v354
  %v370 = vpack.c.b16 %v357, %v356
  %v371 = vpack.c.b16 %v359, %v358
  %v372 = vpack.c.b16 %v361, %v360
  %v373 = vpack.c.b16 %v363, %v362
  %v374 = vpack.c.b16 %v365, %v364
  %v375 = vpack.c.b16 %v367, %v366
  %384 = vmatprep.subr.bf16.mxu0 0
  %385 = vmatpush1.bf16.msra.mxu0 %v375
  %386 = vmatprep.subr.bf16.mxu0 0
  %387 = vmatpush1.bf16.msra.mxu0 %v374
  %388 = vmatprep.subr.bf16.mxu0 0
  %389 = vmatpush1.bf16.msra.mxu0 %v373
  %390 = vmatprep.subr.bf16.mxu0 0
  %391 = vmatpush1.bf16.msra.mxu0 %v372
  %392 = vmatprep.subr.bf16.mxu0 0
  %393 = vmatpush1.bf16.msra.mxu0 %v371
  %394 = vmatprep.subr.bf16.mxu0 0
  %395 = vmatpush1.bf16.msra.mxu0 %v370
  %396 = vmatprep.subr.bf16.mxu0 0
  %397 = vmatpush1.bf16.msra.mxu0 %v369
  %398 = vmatprep.subr.bf16.mxu0 0
  %399 = vmatpush1.bf16.msra.mxu0 %v368
  %400 = vmatprep.subr.bf16.mxu0 0
  %401 = vmatpush2.bf16.msra.mxu0 0
  %402 = vmatprep.subr.bf16.mxu0 0
  %403 = vmatpush2.bf16.msra.mxu0 0
  %404 = vmatprep.subr.bf16.mxu0 0
  %405 = vmatpush2.bf16.msra.mxu0 0
  %406 = vmatprep.subr.bf16.mxu0 0
  %407 = vmatpush2.bf16.msra.mxu0 0
  %408 = vmatprep.subr.bf16.mxu0 0
  %409 = vmatpush2.bf16.msra.mxu0 0
  %410 = vmatprep.subr.bf16.mxu0 0
  %411 = vmatpush2.bf16.msra.mxu0 0
  %412 = vmatprep.subr.bf16.mxu0 0
  %413 = vmatpush2.bf16.msra.mxu0 0
  %414 = vmatprep.subr.bf16.mxu0 0
  %415 = vmatpush2.bf16.msra.mxu0 0
  %416 = vmatprep.mubr.bf16.mxu0 0
  %417 = vmatmul.mubr.bf16.gmra.mxu0 %v320
  %v418 = vpop.f32.mrf.mxu0
  %v419 = vadd.f32 0.0, %v418
  %v420 = vpop.f32.mrf.mxu0
  %v421 = vpop.f32.mrf.mxu0
  %v422 = vadd.f32 0.0, %v421
  %v423 = vpop.f32.mrf.mxu0
  %424 = vmatprep.mubr.bf16.mxu0 0
  %425 = vmatmul.mubr.bf16.gmra.mxu0 %v321
  %v426 = vpop.f32.mrf.mxu0
  %v427 = vadd.f32 0.0, %v426
  %v428 = vpop.f32.mrf.mxu0
  %v429 = vpop.f32.mrf.mxu0
  %v430 = vadd.f32 0.0, %v429
  %v431 = vpop.f32.mrf.mxu0
  %432 = vmatprep.mubr.bf16.mxu0 0
  %433 = vmatmul.mubr.bf16.gmra.mxu0 %v322
  %v434 = vpop.f32.mrf.mxu0
  %v435 = vadd.f32 0.0, %v434
  %v436 = vpop.f32.mrf.mxu0
  %v437 = vpop.f32.mrf.mxu0
  %v438 = vadd.f32 0.0, %v437
  %v439 = vpop.f32.mrf.mxu0
  %440 = vmatprep.mubr.bf16.mxu0 0
  %441 = vmatmul.mubr.bf16.gmra.mxu0 %v323
  %v442 = vpop.f32.mrf.mxu0
  %v443 = vadd.f32 0.0, %v442
  %v444 = vpop.f32.mrf.mxu0
  %v445 = vpop.f32.mrf.mxu0
  %v446 = vadd.f32 0.0, %v445
  %v447 = vpop.f32.mrf.mxu0
  %448 = vmatprep.mubr.bf16.mxu0 0
  %449 = vmatmul.mubr.bf16.gmra.mxu0 %v324
  %v450 = vpop.f32.mrf.mxu0
  %v451 = vadd.f32 0.0, %v450
  %v452 = vpop.f32.mrf.mxu0
  %v453 = vpop.f32.mrf.mxu0
  %v454 = vadd.f32 0.0, %v453
  %v455 = vpop.f32.mrf.mxu0
  %456 = vmatprep.mubr.bf16.mxu0 0
  %457 = vmatmul.mubr.bf16.gmra.mxu0 %v325
  %v458 = vpop.f32.mrf.mxu0
  %v459 = vadd.f32 0.0, %v458
  %v460 = vpop.f32.mrf.mxu0
  %v461 = vpop.f32.mrf.mxu0
  %v462 = vadd.f32 0.0, %v461
  %v463 = vpop.f32.mrf.mxu0
  %464 = vmatprep.mubr.bf16.mxu0 0
  %465 = vmatmul.mubr.bf16.gmra.mxu0 %v326
  %v466 = vpop.f32.mrf.mxu0
  %v467 = vadd.f32 0.0, %v466
  %v468 = vpop.f32.mrf.mxu0
  %v469 = vpop.f32.mrf.mxu0
  %v470 = vadd.f32 0.0, %v469
  %v471 = vpop.f32.mrf.mxu0
  %472 = vmatprep.mubr.bf16.mxu0 0
  %473 = vmatmul.mubr.bf16.gmra.mxu0 %v327
  %v474 = vpop.f32.mrf.mxu0
  %v475 = vadd.f32 0.0, %v474
  %v476 = vpop.f32.mrf.mxu0
  %v477 = vpop.f32.mrf.mxu0
  %v478 = vadd.f32 0.0, %v477
  %v479 = vpop.f32.mrf.mxu0
  %480 = vdwg.mxu0
  %v481 = vadd.f32 %v194, %v419
  %v482 = vadd.f32 %v197, %v422
  %v483 = vadd.f32 %v202, %v427
  %v484 = vadd.f32 %v205, %v430
  %v485 = vadd.f32 %v210, %v435
  %v486 = vadd.f32 %v213, %v438
  %v487 = vadd.f32 %v218, %v443
  %v488 = vadd.f32 %v221, %v446
  %v489 = vadd.f32 %v226, %v451
  %v490 = vadd.f32 %v229, %v454
  %v491 = vadd.f32 %v234, %v459
  %v492 = vadd.f32 %v237, %v462
  %v493 = vadd.f32 %v242, %v467
  %v494 = vadd.f32 %v245, %v470
  %v495 = vadd.f32 %v250, %v475
  %v496 = vadd.f32 %v253, %v478
  %v497 = vld [vmem:[%s5] sm:$0x1]
  %v499 = vlaneseq
  %v500 = vshrl.u32 %v499, 7
  %v501 = vsub.s32 0, %v500
  %v502 = vrot.slane %v497, %v501
  %v504 = vadd.f32 %v481, %v502
  %v505 = vadd.f32 %v482, %v502
  %v506 = vadd.f32 %v483, %v502
  %v507 = vadd.f32 %v484, %v502
  %v508 = vadd.f32 %v485, %v502
  %v509 = vadd.f32 %v486, %v502
  %v510 = vadd.f32 %v487, %v502
  %v511 = vadd.f32 %v488, %v502
  %v512 = vadd.f32 %v489, %v502
  %v513 = vadd.f32 %v490, %v502
  %v514 = vadd.f32 %v491, %v502
  %v515 = vadd.f32 %v492, %v502
  %v516 = vadd.f32 %v493, %v502
  %v517 = vadd.f32 %v494, %v502
  %v518 = vadd.f32 %v495, %v502
  %v519 = vadd.f32 %v496, %v502
  %v520 = vmax.f32 %v504, 0.0
  %v521 = vmax.f32 %v505, 0.0
  %v522 = vmax.f32 %v506, 0.0
  %v523 = vmax.f32 %v507, 0.0
  %v524 = vmax.f32 %v508, 0.0
  %v525 = vmax.f32 %v509, 0.0
  %v526 = vmax.f32 %v510, 0.0
  %v527 = vmax.f32 %v511, 0.0
  %v528 = vmax.f32 %v512, 0.0
  %v529 = vmax.f32 %v513, 0.0
  %v530 = vmax.f32 %v514, 0.0
  %v531 = vmax.f32 %v515, 0.0
  %v532 = vmax.f32 %v516, 0.0
  %v533 = vmax.f32 %v517, 0.0
  %v534 = vmax.f32 %v518, 0.0
  %v535 = vmax.f32 %v519, 0.0
  %v536 = vpack.c.bf16 %v521, %v520
  %v537 = vpack.c.bf16 %v523, %v522
  %v538 = vpack.c.bf16 %v525, %v524
  %v539 = vpack.c.bf16 %v527, %v526
  %v540 = vpack.c.bf16 %v529, %v528
  %v541 = vpack.c.bf16 %v531, %v530
  %v542 = vpack.c.bf16 %v533, %v532
  %v543 = vpack.c.bf16 %v535, %v534
  %v552 = vunpack.c.l.b16 %v536
  %v553 = vunpack.c.h.b16 %v536
  %v554 = vunpack.c.l.b16 %v537
  %v555 = vunpack.c.h.b16 %v537
  %v556 = vunpack.c.l.b16 %v538
  %v557 = vunpack.c.h.b16 %v538
  %v558 = vunpack.c.l.b16 %v539
  %v559 = vunpack.c.h.b16 %v539
  %v560 = vunpack.c.l.b16 %v540
  %v561 = vunpack.c.h.b16 %v540
  %v562 = vunpack.c.l.b16 %v541
  %v563 = vunpack.c.h.b16 %v541
  %v564 = vunpack.c.l.b16 %v542
  %v565 = vunpack.c.h.b16 %v542
  %v566 = vunpack.c.l.b16 %v543
  %v567 = vunpack.c.h.b16 %v543
  %v568 = vpack.c.b16 %v552, %v552
  %v569 = vpack.c.b16 %v553, %v553
  %v570 = vpack.c.b16 %v554, %v554
  %v571 = vpack.c.b16 %v555, %v555
  %v572 = vpack.c.b16 %v556, %v556
  %v573 = vpack.c.b16 %v557, %v557
  %v574 = vpack.c.b16 %v558, %v558
  %v575 = vpack.c.b16 %v559, %v559
  %v576 = vpack.c.b16 %v560, %v560
  %v577 = vpack.c.b16 %v561, %v561
  %v578 = vpack.c.b16 %v562, %v562
  %v579 = vpack.c.b16 %v563, %v563
  %v580 = vpack.c.b16 %v564, %v564
  %v581 = vpack.c.b16 %v565, %v565
  %v582 = vpack.c.b16 %v566, %v566
  %v583 = vpack.c.b16 %v567, %v567
  %600 = vst [vmem:[%s6] sm:$0xf] %v568
  %601 = vst [vmem:[%s6 + $0x4] sm:$0xf] %v569
  %602 = vst [vmem:[%s6 + $0x8] sm:$0xf] %v570
  %603 = vst [vmem:[%s6 + $0xc] sm:$0xf] %v571
  %604 = vst [vmem:[%s6 + $0x10] sm:$0xf] %v572
  %605 = vst [vmem:[%s6 + $0x14] sm:$0xf] %v573
  %606 = vst [vmem:[%s6 + $0x18] sm:$0xf] %v574
  %607 = vst [vmem:[%s6 + $0x1c] sm:$0xf] %v575
  %608 = vst [vmem:[%s6 + $0x20] sm:$0xf] %v576
  %609 = vst [vmem:[%s6 + $0x24] sm:$0xf] %v577
  %610 = vst [vmem:[%s6 + $0x28] sm:$0xf] %v578
  %611 = vst [vmem:[%s6 + $0x2c] sm:$0xf] %v579
  %612 = vst [vmem:[%s6 + $0x30] sm:$0xf] %v580
  %613 = vst [vmem:[%s6 + $0x34] sm:$0xf] %v581
  %614 = vst [vmem:[%s6 + $0x38] sm:$0xf] %v582
  %615 = vst [vmem:[%s6 + $0x3c] sm:$0xf] %v583
  // Predicated region
  $region26: #{resnet_forward.10} parent=0 // pred_check
    _
  $region27: #{resnet_forward.10} parent=0 // pred_check_branch
    %617 = sbr.rel (0) target = $region29
  $region28: #{resnet_forward.10} parent=0 // pred_region
    _
  $region29: #{resnet_forward.10} parent=0 // pred_fallthru
    _
  // Predicated region
  $region30: #{resnet_forward.10} parent=0 // pred_check
    _
  $region31: #{resnet_forward.10} parent=0 // pred_check_branch
    %619 = sbr.rel (0) target = $region33
  $region32: #{resnet_forward.10} parent=0 // pred_region
    _
  $region33: #{resnet_forward.10} parent=0 // pred_fallthru
    _

// kernel: resnet_forward.9
$region0: #{resnet_forward.9}
  #allocation0 [shape = 'u32[]', space=smem, size = 0x4, offset = 0x4, fixed_abs, tag = 'smem constant byte address 0x4 - core index']
  #allocation1 [shape = 'u32[144,128]{1,0:T(1,128)}', space=vmem, size = 0x12000, scoped, tag = 'internal scratch']
  #allocation2 [shape = 'f32[64,128]{1,0:T(8,128)}', space=vmem, size = 0x8000, scoped, tag = 'scratch operand']
  %s0 = inlined_call_operand.vmem [shape: bf16[2,4,9,9,128], index: 0, kind: input, shape index: {}]
  %s1 = inlined_call_operand.vmem [shape: bf16[9,128,128], index: 1, kind: input, shape index: {}]
  %s2 = inlined_call_operand.vmem [shape: f32[1,128], index: 2, kind: input, shape index: {}]
  %s3 = inlined_call_operand.vmem [shape: bf16[2,8,8,128], index: 3, kind: output, shape index: {0}]
  %s4 = inlined_call_operand.vmem [shape: bf16[2,8,8,128], index: 4, kind: output, shape index: {1}]
  %5 = xla_tuple %s3, %s4
  %s6 = sld [smem:[#allocation0]]
  $region53: #{resnet_forward.9} parent=0
    _
  %s8 = ssub.s32 1, %s6
  %s9 = scalar_select 0, %s8, %s6
  loop: start=0, step=1, limit=4
  $region2: #{resnet_forward.9} parent=0 // loop_pre_header
    _
  $region3: #{resnet_forward.9} parent=0 // loop_header
    %s11 = sphi 0, %s15
    %p12 = scmp.ge.s32.totalorder %s11, 4
    %s18 = sphi 0, %s30
    %s19 = sphi 0, %s26
    %s20 = sphi 0, %s18
    %s21 = sphi 0, %s19
    %s22 = sphi 0, %s20
    %s23 = sphi 0, %s21
    %s35 = sphi 0, %s37
    %s38 = sphi 0, %s35
    %s39 = sphi 0, %s38
    %s55 = sphi 0, %s39
    %s59 = sphi 0, %s59
    %s61 = sphi 0, %s59
    %s62 = sphi 0, %s61
    %s76 = sphi 0, %s62
    %s80 = sphi 0, %s80
    %s82 = sphi 0, %s80
    %s83 = sphi 0, %s82
    %s97 = sphi 0, %s83
    %s105 = sphi 0, %s107
    %s108 = sphi 0, %s105
    %s109 = sphi 0, %s108
    %s125 = sphi 0, %s109
    %s133 = sphi 0, %s135
    %s136 = sphi 0, %s133
    %s137 = sphi 0, %s136
    %s153 = sphi 0, %s137
  $region4: #{resnet_forward.9} parent=0 // loop_header_branch
    %14 = sbr.rel (%p12) target = $region8
  $region5: #{resnet_forward.9} parent=0 // loop_body
    %s16 = ssub.s32 %s11, 1
    %s17 = ssub.s32 %s11, 2
    %s24 = sadd.s32 1, %s19
    %p25 = scmp.ge.s32.totalorder %s24, 1
    %s26 = scalar_select %p25, 0, %s24
    %s27 = sadd.s32 1, %s18
    %s28 = scalar_select %p25, %s27, %s18
    %p29 = scmp.ge.s32.totalorder %s28, 2
    %s30 = scalar_select %p29, 0, %s28
    %s31 = sadd.s32 %s18, %s19
    %s32 = sadd.s32 %s30, %s26
    %s33 = ssub.s32 %s31, %s32
    %p34 = scmp.eq.s32.totalorder %s33, 0
    %s36 = sadd.s32 %s35, 1
    %s37 = scalar_select %p34, %s35, %s36
    %p40 = pneg %p34
    %p41 = scmp.eq.s32.totalorder %s11, 1
    %p42 = por %p40, %p41
    %p43 = scmp.ne.s32.totalorder %s35, %s38
    %p44 = scmp.eq.s32.totalorder %s11, 0
    %p45 = por %p43, %p44
    %p46 = scmp.ne.s32.totalorder %s35, %s38
    %p47 = scmp.eq.s32.totalorder %s16, 1
    %p48 = por %p46, %p47
    %p49 = scmp.ne.s32.totalorder %s38, %s39
    %p50 = scmp.eq.s32.totalorder %s16, 0
    %p51 = por %p49, %p50
    %p52 = scmp.ne.s32.totalorder %s38, %s39
    %p53 = scmp.eq.s32.totalorder %s17, 1
    %p54 = por %p52, %p53
    %p56 = scmp.ne.s32.totalorder %s39, %s55
    %p57 = scmp.eq.s32.totalorder %s17, 0
    %p58 = por %p56, %p57
    %s60 = sadd.s32 %s59, 1
    %p63 = scmp.eq.s32.totalorder %s11, 1
    %p64 = scmp.ne.s32.totalorder %s59, %s61
    %p65 = scmp.eq.s32.totalorder %s11, 0
    %p66 = por %p64, %p65
    %p67 = scmp.ne.s32.totalorder %s59, %s61
    %p68 = scmp.eq.s32.totalorder %s16, 1
    %p69 = por %p67, %p68
    %p70 = scmp.ne.s32.totalorder %s61, %s62
    %p71 = scmp.eq.s32.totalorder %s16, 0
    %p72 = por %p70, %p71
    %p73 = scmp.ne.s32.totalorder %s61, %s62
    %p74 = scmp.eq.s32.totalorder %s17, 1
    %p75 = por %p73, %p74
    %p77 = scmp.ne.s32.totalorder %s62, %s76
    %p78 = scmp.eq.s32.totalorder %s17, 0
    %p79 = por %p77, %p78
    %s81 = sadd.s32 %s80, 1
    %p84 = scmp.eq.s32.totalorder %s11, 1
    %p85 = scmp.ne.s32.totalorder %s80, %s82
    %p86 = scmp.eq.s32.totalorder %s11, 0
    %p87 = por %p85, %p86
    %p88 = scmp.ne.s32.totalorder %s80, %s82
    %p89 = scmp.eq.s32.totalorder %s16, 1
    %p90 = por %p88, %p89
    %p91 = scmp.ne.s32.totalorder %s82, %s83
    %p92 = scmp.eq.s32.totalorder %s16, 0
    %p93 = por %p91, %p92
    %p94 = scmp.ne.s32.totalorder %s82, %s83
    %p95 = scmp.eq.s32.totalorder %s17, 1
    %p96 = por %p94, %p95
    %p98 = scmp.ne.s32.totalorder %s83, %s97
    %p99 = scmp.eq.s32.totalorder %s17, 0
    %p100 = por %p98, %p99
    %s101 = ssub.s32 %s18, %s30
    %s102 = ssub.s32 %s19, %s26
    %s103 = sor.u32 %s101, %s102
    %p104 = scmp.eq.s32.totalorder %s103, 0
    %s106 = sadd.s32 %s105, 1
    %s107 = scalar_select %p104, %s105, %s106
    %p110 = pneg %p104
    %p111 = scmp.eq.s32.totalorder %s11, 1
    %p112 = por %p110, %p111
    %p113 = scmp.ne.s32.totalorder %s105, %s108
    %p114 = scmp.eq.s32.totalorder %s11, 0
    %p115 = por %p113, %p114
    %p116 = scmp.ne.s32.totalorder %s105, %s108
    %p117 = scmp.eq.s32.totalorder %s16, 1
    %p118 = por %p116, %p117
    %p119 = scmp.ne.s32.totalorder %s108, %s109
    %p120 = scmp.eq.s32.totalorder %s16, 0
    %p121 = por %p119, %p120
    %p122 = scmp.ne.s32.totalorder %s108, %s109
    %p123 = scmp.eq.s32.totalorder %s17, 1
    %p124 = por %p122, %p123
    %p126 = scmp.ne.s32.totalorder %s109, %s125
    %p127 = scmp.eq.s32.totalorder %s17, 0
    %p128 = por %p126, %p127
    %s129 = ssub.s32 %s18, %s30
    %s130 = ssub.s32 %s19, %s26
    %s131 = sor.u32 %s129, %s130
    %p132 = scmp.eq.s32.totalorder %s131, 0
    %s134 = sadd.s32 %s133, 1
    %s135 = scalar_select %p132, %s133, %s134
    %p138 = pneg %p132
    %p139 = scmp.eq.s32.totalorder %s11, 1
    %p140 = por %p138, %p139
    %p141 = scmp.ne.s32.totalorder %s133, %s136
    %p142 = scmp.eq.s32.totalorder %s11, 0
    %p143 = por %p141, %p142
    %p144 = scmp.ne.s32.totalorder %s133, %s136
    %p145 = scmp.eq.s32.totalorder %s16, 1
    %p146 = por %p144, %p145
    %p147 = scmp.ne.s32.totalorder %s136, %s137
    %p148 = scmp.eq.s32.totalorder %s16, 0
    %p149 = por %p147, %p148
    %p150 = scmp.ne.s32.totalorder %s136, %s137
    %p151 = scmp.eq.s32.totalorder %s17, 1
    %p152 = por %p150, %p151
    %p154 = scmp.ne.s32.totalorder %s137, %s153
    %p155 = scmp.eq.s32.totalorder %s17, 0
    %p156 = por %p154, %p155
    %p157 = scmp.le.s32.totalorder 1, %s11
    %p158 = scmp.lt.s32.totalorder %s11, 3
    %p159 = pnand %p157, %p158
    %p160 = pneg %p159
    // Predicated region
    $region9: #{resnet_forward.9} parent=5 // pred_check
      _
    $region10: #{resnet_forward.9} parent=5 // pred_check_branch
      %162 = sbr.rel (%p159) target = $region12
    $region11: #{resnet_forward.9} parent=5 // pred_region
      %s163 = ssub.s32 %s11, 1
      // Predicated region
      $region13: #{resnet_forward.9} parent=11 // pred_check
        %p164 = pneg %p72
      $region14: #{resnet_forward.9} parent=11 // pred_check_branch
        %166 = sbr.rel (%p164) target = $region16
      $region15: #{resnet_forward.9} parent=11 // pred_region
        _
      $region16: #{resnet_forward.9} parent=11 // pred_fallthru
        _
      // Predicated region
      $region17: #{resnet_forward.9} parent=11 // pred_check
        %p167 = pneg %p93
      $region18: #{resnet_forward.9} parent=11 // pred_check_branch
        %169 = sbr.rel (%p167) target = $region20
      $region19: #{resnet_forward.9} parent=11 // pred_region
        _
      $region20: #{resnet_forward.9} parent=11 // pred_fallthru
        _
    $region12: #{resnet_forward.9} parent=5 // pred_fallthru
      _
    %p170 = scmp.lt.s32.totalorder %s11, 2
    // Predicated region
    $region21: #{resnet_forward.9} parent=5 // pred_check
      %p171 = pneg %p170
    $region22: #{resnet_forward.9} parent=5 // pred_check_branch
      %173 = sbr.rel (%p171) target = $region24
    $region23: #{resnet_forward.9} parent=5 // pred_region
      // Predicated region
      $region25: #{resnet_forward.9} parent=23 // pred_check
        %p174 = pneg %p45
      $region26: #{resnet_forward.9} parent=23 // pred_check_branch
        %176 = sbr.rel (%p174) target = $region28
      $region27: #{resnet_forward.9} parent=23 // pred_region
        %s177 = sadd.s32 %s18, %s19
        %p178 = scmp.lt.s32.totalorder %s177, 1
        %s179 = scalar_select %p178, %s177, 1
        %s180 = smul.addr %s179, 72
        %s181 = smul.addr %s180, 4
        %s182 = scalar_lea.vmem %s0, %s181
        %s183 = sadd.s32 %s18, %s19
      $region28: #{resnet_forward.9} parent=23 // pred_fallthru
        _
    $region24: #{resnet_forward.9} parent=5 // pred_fallthru
      _
    %p184 = scmp.le.s32.totalorder 1, %s11
    %p185 = scmp.lt.s32.totalorder %s11, 3
    %p186 = pnand %p184, %p185
    %p187 = pneg %p186
    // Predicated region
    $region29: #{resnet_forward.9} parent=5 // pred_check
      _
    $region30: #{resnet_forward.9} parent=5 // pred_check_branch
      %189 = sbr.rel (%p186) target = $region32
    $region31: #{resnet_forward.9} parent=5 // pred_region
      %s190 = ssub.s32 %s11, 1
      %s191 = sadd.s32 %s20, %s21
      %p192 = scmp.lt.s32.totalorder %s191, 1
      %s193 = scalar_select %p192, %s191, 1
      %s194 = smul.addr %s193, 72
      %s195 = smul.addr %s194, 4
      %s196 = scalar_lea.vmem %s0, %s195
      %p197 = pneg %p51
      %p198 = pneg %p48
      %p199 = pneg %p72
      %p200 = pneg %p69
      %p201 = pneg %p93
      %p202 = pneg %p90
      %p203 = pneg %p121
      %p204 = pneg %p118
      %s205 = smul.u32 8, %s21
      %p206 = scmp.lt.s32.totalorder %s20, 1
      %s207 = scalar_select %p206, %s20, 1
      %p208 = scmp.lt.s32.totalorder %s205, 7
      %s209 = scalar_select %p208, %s205, 7
      %s210 = smul.addr %s207, 8
      %s211 = sadd.s32 %s209, %s210
      %s212 = smul.addr %s211, 4
      %s213 = scalar_lea.vmem %s3, %s212
      %p214 = pneg %p149
      %p215 = pneg %p146
      %s216 = smul.u32 8, %s21
      %p217 = scmp.lt.s32.totalorder %s20, 1
      %s218 = scalar_select %p217, %s20, 1
      %p219 = scmp.lt.s32.totalorder %s216, 7
      %s220 = scalar_select %p219, %s216, 7
      %s221 = smul.addr %s218, 8
      %s222 = sadd.s32 %s220, %s221
      %s223 = smul.addr %s222, 4
      %s224 = scalar_lea.vmem %s4, %s223
      %s225 = sadd.s32 %s20, %s21
      %p226 = scmp.lt.s32.totalorder %s225, 1
      %s227 = scalar_select %p226, %s225, 1
      %s228 = smul.addr %s227, 72
      %s229 = smul.addr %s228, 4
      %s230 = scalar_lea.vmem %s0, %s229
      %s231 = sadd.s32 %s20, %s21
      %s232 = smul.u32 8, %s21
      %p233 = scmp.lt.s32.totalorder %s20, 1
      %s234 = scalar_select %p233, %s20, 1
      %p235 = scmp.lt.s32.totalorder %s232, 7
      %s236 = scalar_select %p235, %s232, 7
      %s237 = smul.addr %s234, 8
      %s238 = sadd.s32 %s236, %s237
      %s239 = smul.addr %s238, 4
      %s240 = scalar_lea.vmem %s3, %s239
      %s241 = smul.u32 8, %s21
      %s242 = smul.u32 8, %s21
      %p243 = scmp.lt.s32.totalorder %s20, 1
      %s244 = scalar_select %p243, %s20, 1
      %p245 = scmp.lt.s32.totalorder %s242, 7
      %s246 = scalar_select %p245, %s242, 7
      %s247 = smul.addr %s244, 8
      %s248 = sadd.s32 %s246, %s247
      %s249 = smul.addr %s248, 4
      %s250 = scalar_lea.vmem %s4, %s249
      %s251 = smul.u32 8, %s21
      %253 = vst [vmem:[#allocation2] sm:$0xff] 0.0
      %254 = vst [vmem:[#allocation2 + $0x8] sm:$0xff] 0.0
      %255 = vst [vmem:[#allocation2 + $0x10] sm:$0xff] 0.0
      %256 = vst [vmem:[#allocation2 + $0x18] sm:$0xff] 0.0
      %257 = vst [vmem:[#allocation2 + $0x20] sm:$0xff] 0.0
      %258 = vst [vmem:[#allocation2 + $0x28] sm:$0xff] 0.0
      %259 = vst [vmem:[#allocation2 + $0x30] sm:$0xff] 0.0
      %260 = vst [vmem:[#allocation2 + $0x38] sm:$0xff] 0.0
      %v261 = vld [vmem:[%s230] sm:$0xf]
      %v262 = vld [vmem:[%s230 + $0x8] sm:$0xf]
      %v263 = vld [vmem:[%s230 + $0x10] sm:$0xf]
      %v264 = vld [vmem:[%s230 + $0x18] sm:$0xf]
      %v265 = vld [vmem:[%s230 + $0x20] sm:$0xf]
      %v266 = vld [vmem:[%s230 + $0x28] sm:$0xf]
      %v267 = vld [vmem:[%s230 + $0x30] sm:$0xf]
      %v268 = vld [vmem:[%s230 + $0x38] sm:$0xf]
      %v269 = vld [vmem:[#allocation2] sm:$0xff]
      %v270 = vld [vmem:[#allocation2 + $0x8] sm:$0xff]
      %v271 = vld [vmem:[#allocation2 + $0x10] sm:$0xff]
      %v272 = vld [vmem:[#allocation2 + $0x18] sm:$0xff]
      %v273 = vld [vmem:[#allocation2 + $0x20] sm:$0xff]
      %v274 = vld [vmem:[#allocation2 + $0x28] sm:$0xff]
      %v275 = vld [vmem:[#allocation2 + $0x30] sm:$0xff]
      %v276 = vld [vmem:[#allocation2 + $0x38] sm:$0xff]
      %v277 = vld [vmem:[%s1] sm:$0xf]
      %v278 = vld [vmem:[%s1 + $0x4] sm:$0xf]
      %v279 = vld [vmem:[%s1 + $0x8] sm:$0xf]
      %v280 = vld [vmem:[%s1 + $0xc] sm:$0xf]
      %v281 = vld [vmem:[%s1 + $0x10] sm:$0xf]
      %v282 = vld [vmem:[%s1 + $0x14] sm:$0xf]
      %v283 = vld [vmem:[%s1 + $0x18] sm:$0xf]
      %v284 = vld [vmem:[%s1 + $0x1c] sm:$0xf]
      %v285 = vld [vmem:[%s1 + $0x20] sm:$0xf]
      %v286 = vld [vmem:[%s1 + $0x24] sm:$0xf]
      %v287 = vld [vmem:[%s1 + $0x28] sm:$0xf]
      %v288 = vld [vmem:[%s1 + $0x2c] sm:$0xf]
      %v289 = vld [vmem:[%s1 + $0x30] sm:$0xf]
      %v290 = vld [vmem:[%s1 + $0x34] sm:$0xf]
      %v291 = vld [vmem:[%s1 + $0x38] sm:$0xf]
      %v292 = vld [vmem:[%s1 + $0x3c] sm:$0xf]
      %v301 = vunpack.c.l.b16 %v261
      %v302 = vunpack.c.l.b16 %v262
      %v303 = vunpack.c.l.b16 %v263
      %v304 = vunpack.c.l.b16 %v264
      %v305 = vunpack.c.l.b16 %v265
      %v306 = vunpack.c.l.b16 %v266
      %v307 = vunpack.c.l.b16 %v267
      %v308 = vunpack.c.l.b16 %v268
      %v309 = vpack.c.b16 %v302, %v301
      %v310 = vpack.c.b16 %v304, %v303
      %v311 = vpack.c.b16 %v306, %v305
      %v312 = vpack.c.b16 %v308, %v307
      %v333 = vunpack.c.l.b16 %v277
      %v334 = vunpack.c.l.b16 %v278
      %v335 = vunpack.c.l.b16 %v279
      %v336 = vunpack.c.l.b16 %v280
      %v337 = vunpack.c.l.b16 %v281
      %v338 = vunpack.c.l.b16 %v282
      %v339 = vunpack.c.l.b16 %v283
      %v340 = vunpack.c.l.b16 %v284
      %v341 = vunpack.c.l.b16 %v285
      %v342 = vunpack.c.l.b16 %v286
      %v343 = vunpack.c.l.b16 %v287
      %v344 = vunpack.c.l.b16 %v288
      %v345 = vunpack.c.l.b16 %v289
      %v346 = vunpack.c.l.b16 %v290
      %v347 = vunpack.c.l.b16 %v291
      %v348 = vunpack.c.l.b16 %v292
      %v349 = vpack.c.b16 %v334, %v333
      %v350 = vpack.c.b16 %v336, %v335
      %v351 = vpack.c.b16 %v338, %v337
      %v352 = vpack.c.b16 %v340, %v339
      %v353 = vpack.c.b16 %v342, %v341
      %v354 = vpack.c.b16 %v344, %v343
      %v355 = vpack.c.b16 %v346, %v345
      %v356 = vpack.c.b16 %v348, %v347
      %365 = vmatprep.subr.bf16.mxu0 0
      %366 = vmatpush1.bf16.msra.mxu0 %v356
      %367 = vmatprep.subr.bf16.mxu0 0
      %368 = vmatpush1.bf16.msra.mxu0 %v355
      %369 = vmatprep.subr.bf16.mxu0 0
      %370 = vmatpush1.bf16.msra.mxu0 %v354
      %371 = vmatprep.subr.bf16.mxu0 0
      %372 = vmatpush1.bf16.msra.mxu0 %v353
      %373 = vmatprep.subr.bf16.mxu0 0
      %374 = vmatpush1.bf16.msra.mxu0 %v352
      %375 = vmatprep.subr.bf16.mxu0 0
      %376 = vmatpush1.bf16.msra.mxu0 %v351
      %377 = vmatprep.subr.bf16.mxu0 0
      %378 = vmatpush1.bf16.msra.mxu0 %v350
      %379 = vmatprep.subr.bf16.mxu0 0
      %380 = vmatpush1.bf16.msra.mxu0 %v349
      %381 = vmatprep.subr.bf16.mxu0 0
      %382 = vmatpush2.bf16.msra.mxu0 0
      %383 = vmatprep.subr.bf16.mxu0 0
      %384 = vmatpush2.bf16.msra.mxu0 0
      %385 = vmatprep.subr.bf16.mxu0 0
      %386 = vmatpush2.bf16.msra.mxu0 0
      %387 = vmatprep.subr.bf16.mxu0 0
      %388 = vmatpush2.bf16.msra.mxu0 0
      %389 = vmatprep.subr.bf16.mxu0 0
      %390 = vmatpush2.bf16.msra.mxu0 0
      %391 = vmatprep.subr.bf16.mxu0 0
      %392 = vmatpush2.bf16.msra.mxu0 0
      %393 = vmatprep.subr.bf16.mxu0 0
      %394 = vmatpush2.bf16.msra.mxu0 0
      %395 = vmatprep.subr.bf16.mxu0 0
      %396 = vmatpush2.bf16.msra.mxu0 0
      %397 = vmatprep.mubr.bf16.mxu0 0
      %398 = vmatmul.mubr.bf16.gmra.mxu0 %v309
      %v399 = vpop.f32.mrf.mxu0
      %v400 = vadd.f32 0.0, %v399
      %v401 = vpop.f32.mrf.mxu0
      %v402 = vpop.f32.mrf.mxu0
      %v403 = vadd.f32 0.0, %v402
      %v404 = vpop.f32.mrf.mxu0
      %405 = vmatprep.mubr.bf16.mxu0 0
      %406 = vmatmul.mubr.bf16.gmra.mxu0 %v310
      %v407 = vpop.f32.mrf.mxu0
      %v408 = vadd.f32 0.0, %v407
      %v409 = vpop.f32.mrf.mxu0
      %v410 = vpop.f32.mrf.mxu0
      %v411 = vadd.f32 0.0, %v410
      %v412 = vpop.f32.mrf.mxu0
      %413 = vmatprep.mubr.bf16.mxu0 0
      %414 = vmatmul.mubr.bf16.gmra.mxu0 %v311
      %v415 = vpop.f32.mrf.mxu0
      %v416 = vadd.f32 0.0, %v415
      %v417 = vpop.f32.mrf.mxu0
      %v418 = vpop.f32.mrf.mxu0
      %v419 = vadd.f32 0.0, %v418
      %v420 = vpop.f32.mrf.mxu0
      %421 = vmatprep.mubr.bf16.mxu0 0
      %422 = vmatmul.mubr.bf16.gmra.mxu0 %v312
      %v423 = vpop.f32.mrf.mxu0
      %v424 = vadd.f32 0.0, %v423
      %v425 = vpop.f32.mrf.mxu0
      %v426 = vpop.f32.mrf.mxu0
      %v427 = vadd.f32 0.0, %v426
      %v428 = vpop.f32.mrf.mxu0
      %429 = vdwg.mxu0
      %v430 = vadd.f32 %v269, %v400
      %v431 = vadd.f32 %v270, %v403
      %v432 = vadd.f32 %v271, %v408
      %v433 = vadd.f32 %v272, %v411
      %v434 = vadd.f32 %v273, %v416
      %v435 = vadd.f32 %v274, %v419
      %v436 = vadd.f32 %v275, %v424
      %v437 = vadd.f32 %v276, %v427
      %438 = vst [vmem:[#allocation2] sm:$0xff] %v430
      %439 = vst [vmem:[#allocation2 + $0x8] sm:$0xff] %v431
      %440 = vst [vmem:[#allocation2 + $0x10] sm:$0xff] %v432
      %441 = vst [vmem:[#allocation2 + $0x18] sm:$0xff] %v433
      %442 = vst [vmem:[#allocation2 + $0x20] sm:$0xff] %v434
      %443 = vst [vmem:[#allocation2 + $0x28] sm:$0xff] %v435
      %444 = vst [vmem:[#allocation2 + $0x30] sm:$0xff] %v436
      %445 = vst [vmem:[#allocation2 + $0x38] sm:$0xff] %v437
      %s446 = scalar_lea.vmem %s230, 72
      %v447 = vld [vmem:[%s446] sm:$0xf]
      %v448 = vld [vmem:[%s446 + $0x8] sm:$0xf]
      %v449 = vld [vmem:[%s446 + $0x10] sm:$0xf]
      %v450 = vld [vmem:[%s446 + $0x18] sm:$0xf]
      %v451 = vld [vmem:[%s446 + $0x20] sm:$0xf]
      %v452 = vld [vmem:[%s446 + $0x28] sm:$0xf]
      %v453 = vld [vmem:[%s446 + $0x30] sm:$0xf]
      %v454 = vld [vmem:[%s446 + $0x38] sm:$0xf]
      %v455 = vld [vmem:[#allocation2] sm:$0xff]
      %v456 = vld [vmem:[#allocation2 + $0x8] sm:$0xff]
      %v457 = vld [vmem:[#allocation2 + $0x10] sm:$0xff]
      %v458 = vld [vmem:[#allocation2 + $0x18] sm:$0xff]
      %v459 = vld [vmem:[#allocation2 + $0x20] sm:$0xff]
      %v460 = vld [vmem:[#allocation2 + $0x28] sm:$0xff]
      %v461 = vld [vmem:[#allocation2 + $0x30] sm:$0xff]
      %v462 = vld [vmem:[#allocation2 + $0x38] sm:$0xff]
      %s463 = scalar_lea.vmem %s1, 64
      %v464 = vld [vmem:[%s463] sm:$0xf]
      %v465 = vld [vmem:[%s463 + $0x4] sm:$0xf]
      %v466 = vld [vmem:[%s463 + $0x8] sm:$0xf]
      %v467 = vld [vmem:[%s463 + $0xc] sm:$0xf]
      %v468 = vld [vmem:[%s463 + $0x10] sm:$0xf]
      %v469 = vld [vmem:[%s463 + $0x14] sm:$0xf]
      %v470 = vld [vmem:[%s463 + $0x18] sm:$0xf]
      %v471 = vld [vmem:[%s463 + $0x1c] sm:$0xf]
      %v472 = vld [vmem:[%s463 + $0x20] sm:$0xf]
      %v473 = vld [vmem:[%s463 + $0x24] sm:$0xf]
      %v474 = vld [vmem:[%s463 + $0x28] sm:$0xf]
      %v475 = vld [vmem:[%s463 + $0x2c] sm:$0xf]
      %v476 = vld [vmem:[%s463 + $0x30] sm:$0xf]
      %v477 = vld [vmem:[%s463 + $0x34] sm:$0xf]
      %v478 = vld [vmem:[%s463 + $0x38] sm:$0xf]
      %v479 = vld [vmem:[%s463 + $0x3c] sm:$0xf]
      %v488 = vunpack.c.l.b16 %v447
      %v489 = vunpack.c.l.b16 %v448
      %v490 = vunpack.c.l.b16 %v449
      %v491 = vunpack.c.l.b16 %v450
      %v492 = vunpack.c.l.b16 %v451
      %v493 = vunpack.c.l.b16 %v452
      %v494 = vunpack.c.l.b16 %v453
      %v495 = vunpack.c.l.b16 %v454
      %v496 = vpack.c.b16 %v489, %v488
      %v497 = vpack.c.b16 %v491, %v490
      %v498 = vpack.c.b16 %v493, %v492
      %v499 = vpack.c.b16 %v495, %v494
      %v520 = vunpack.c.l.b16 %v464
      %v521 = vunpack.c.l.b16 %v465
      %v522 = vunpack.c.l.b16 %v466
      %v523 = vunpack.c.l.b16 %v467
      %v524 = vunpack.c.l.b16 %v468
      %v525 = vunpack.c.l.b16 %v469
      %v526 = vunpack.c.l.b16 %v470
      %v527 = vunpack.c.l.b16 %v471
      %v528 = vunpack.c.l.b16 %v472
      %v529 = vunpack.c.l.b16 %v473
      %v530 = vunpack.c.l.b16 %v474
      %v531 = vunpack.c.l.b16 %v475
      %v532 = vunpack.c.l.b16 %v476
      %v533 = vunpack.c.l.b16 %v477
      %v534 = vunpack.c.l.b16 %v478
      %v535 = vunpack.c.l.b16 %v479
      %v536 = vpack.c.b16 %v521, %v520
      %v537 = vpack.c.b16 %v523, %v522
      %v538 = vpack.c.b16 %v525, %v524
      %v539 = vpack.c.b16 %v527, %v526
      %v540 = vpack.c.b16 %v529, %v528
      %v541 = vpack.c.b16 %v531, %v530
      %v542 = vpack.c.b16 %v533, %v532
      %v543 = vpack.c.b16 %v535, %v534
      %552 = vmatprep.subr.bf16.mxu0 0
      %553 = vmatpush1.bf16.msra.mxu0 %v543
      %554 = vmatprep.subr.bf16.mxu0 0
      %555 = vmatpush1.bf16.msra.mxu0 %v542
      %556 = vmatprep.subr.bf16.mxu0 0
      %557 = vmatpush1.bf16.msra.mxu0 %v541
      %558 = vmatprep.subr.bf16.mxu0 0
      %559 = vmatpush1.bf16.msra.mxu0 %v540
      %560 = vmatprep.subr.bf16.mxu0 0
      %561 = vmatpush1.bf16.msra.mxu0 %v539
      %562 = vmatprep.subr.bf16.mxu0 0
      %563 = vmatpush1.bf16.msra.mxu0 %v538
      %564 = vmatprep.subr.bf16.mxu0 0
      %565 = vmatpush1.bf16.msra.mxu0 %v537
      %566 = vmatprep.subr.bf16.mxu0 0
      %567 = vmatpush1.bf16.msra.mxu0 %v536
      %568 = vmatprep.subr.bf16.mxu0 0
      %569 = vmatpush2.bf16.msra.mxu0 0
      %570 = vmatprep.subr.bf16.mxu0 0
      %571 = vmatpush2.bf16.msra.mxu0 0
      %572 = vmatprep.subr.bf16.mxu0 0
      %573 = vmatpush2.bf16.msra.mxu0 0
      %574 = vmatprep.subr.bf16.mxu0 0
      %575 = vmatpush2.bf16.msra.mxu0 0
      %576 = vmatprep.subr.bf16.mxu0 0
      %577 = vmatpush2.bf16.msra.mxu0 0
      %578 = vmatprep.subr.bf16.mxu0 0
      %579 = vmatpush2.bf16.msra.mxu0 0
      %580 = vmatprep.subr.bf16.mxu0 0
      %581 = vmatpush2.bf16.msra.mxu0 0
      %582 = vmatprep.subr.bf16.mxu0 0
      %583 = vmatpush2.bf16.msra.mxu0 0
      %584 = vmatprep.mubr.bf16.mxu0 0
      %585 = vmatmul.mubr.bf16.gmra.mxu0 %v496
      %v586 = vpop.f32.mrf.mxu0
      %v587 = vadd.f32 0.0, %v586
      %v588 = vpop.f32.mrf.mxu0
      %v589 = vpop.f32.mrf.mxu0
      %v590 = vadd.f32 0.0, %v589
      %v591 = vpop.f32.mrf.mxu0
      %592 = vmatprep.mubr.bf16.mxu0 0
      %593 = vmatmul.mubr.bf16.gmra.mxu0 %v497
      %v594 = vpop.f32.mrf.mxu0
      %v595 = vadd.f32 0.0, %v594
      %v596 = vpop.f32.mrf.mxu0
      %v597 = vpop.f32.mrf.mxu0
      %v598 = vadd.f32 0.0, %v597
      %v599 = vpop.f32.mrf.mxu0
      %600 = vmatprep.mubr.bf16.mxu0 0
      %601 = vmatmul.mubr.bf16.gmra.mxu0 %v498
      %v602 = vpop.f32.mrf.mxu0
      %v603 = vadd.f32 0.0, %v602
      %v604 = vpop.f32.mrf.mxu0
      %v605 = vpop.f32.mrf.mxu0
      %v606 = vadd.f32 0.0, %v605
      %v607 = vpop.f32.mrf.mxu0
      %608 = vmatprep.mubr.bf16.mxu0 0
      %609 = vmatmul.mubr.bf16.gmra.mxu0 %v499
      %v610 = vpop.f32.mrf.mxu0
      %v611 = vadd.f32 0.0, %v610
      %v612 = vpop.f32.mrf.mxu0
      %v613 = vpop.f32.mrf.mxu0
      %v614 = vadd.f32 0.0, %v613
      %v615 = vpop.f32.mrf.mxu0
      %616 = vdwg.mxu0
      %v617 = vadd.f32 %v455, %v587
      %v618 = vadd.f32 %v456, %v590
      %v619 = vadd.f32 %v457, %v595
      %v620 = vadd.f32 %v458, %v598
      %v621 = vadd.f32 %v459, %v603
      %v622 = vadd.f32 %v460, %v606
      %v623 = vadd.f32 %v461, %v611
      %v624 = vadd.f32 %v462, %v614
      %625 = vst [vmem:[#allocation2] sm:$0xff] %v617
      %626 = vst [vmem:[#allocation2 + $0x8] sm:$0xff] %v618
      %627 = vst [vmem:[#allocation2 + $0x10] sm:$0xff] %v619
      %628 = vst [vmem:[#allocation2 + $0x18] sm:$0xff] %v620
      %629 = vst [vmem:[#allocation2 + $0x20] sm:$0xff] %v621
      %630 = vst [vmem:[#allocation2 + $0x28] sm:$0xff] %v622
      %631 = vst [vmem:[#allocation2 + $0x30] sm:$0xff] %v623
      %632 = vst [vmem:[#allocation2 + $0x38] sm:$0xff] %v624
      %v633 = vld [vmem:[%s230] sm:$0xf]
      %v634 = vld [vmem:[%s230 + $0x4] sm:$0x1]
      %v635 = vld [vmem:[%s230 + $0x8] sm:$0xf]
      %v636 = vld [vmem:[%s230 + $0xc] sm:$0x1]
      %v637 = vld [vmem:[%s230 + $0x10] sm:$0xf]
      %v638 = vld [vmem:[%s230 + $0x14] sm:$0x1]
      %v639 = vld [vmem:[%s230 + $0x18] sm:$0xf]
      %v640 = vld [vmem:[%s230 + $0x1c] sm:$0x1]
      %v641 = vld [vmem:[%s230 + $0x20] sm:$0xf]
      %v642 = vld [vmem:[%s230 + $0x24] sm:$0x1]
      %v643 = vld [vmem:[%s230 + $0x28] sm:$0xf]
      %v644 = vld [vmem:[%s230 + $0x2c] sm:$0x1]
      %v645 = vld [vmem:[%s230 + $0x30] sm:$0xf]
      %v646 = vld [vmem:[%s230 + $0x34] sm:$0x1]
      %v647 = vld [vmem:[%s230 + $0x38] sm:$0xf]
      %v648 = vld [vmem:[%s230 + $0x3c] sm:$0x1]
      %v649 = vld [vmem:[#allocation2] sm:$0xff]
      %v650 = vld [vmem:[#allocation2 + $0x8] sm:$0xff]
      %v651 = vld [vmem:[#allocation2 + $0x10] sm:$0xff]
      %v652 = vld [vmem:[#allocation2 + $0x18] sm:$0xff]
      %v653 = vld [vmem:[#allocation2 + $0x20] sm:$0xff]
      %v654 = vld [vmem:[#allocation2 + $0x28] sm:$0xff]
      %v655 = vld [vmem:[#allocation2 + $0x30] sm:$0xff]
      %v656 = vld [vmem:[#allocation2 + $0x38] sm:$0xff]
      %vm657 = vsmask.f32 3328
      %vm658 = vsmask.f32 7440
      %vm659 = vmor %vm657, %vm658
      %v661 = vshrl.u32 %v633, 16
      %v663 = vrot.slane %v661, 4
      %v664 = vshll.u32 %v633, 16
      %v666 = vrot.slane %v664, 5
      %v667 = vor.u32 %v663, %v666
      %v668 = vrot.slane %v667, 4
      %v670 = vshll.u32 %v634, 16
      %v672 = vrot.slane %v670, 5
      %v673 = vsel %vm659, %v668, %v672
      %v675 = vshrl.u32 %v635, 16
      %v677 = vrot.slane %v675, 4
      %v678 = vshll.u32 %v635, 16
      %v680 = vrot.slane %v678, 5
      %v681 = vor.u32 %v677, %v680
      %v682 = vrot.slane %v681, 4
      %v684 = vshll.u32 %v636, 16
      %v686 = vrot.slane %v684, 5
      %v687 = vsel %vm659, %v682, %v686
      %v689 = vshrl.u32 %v637, 16
      %v691 = vrot.slane %v689, 4
      %v692 = vshll.u32 %v637, 16
      %v694 = vrot.slane %v692, 5
      %v695 = vor.u32 %v691, %v694
      %v696 = vrot.slane %v695, 4
      %v698 = vshll.u32 %v638, 16
      %v700 = vrot.slane %v698, 5
      %v701 = vsel %vm659, %v696, %v700
      %v703 = vshrl.u32 %v639, 16
      %v705 = vrot.slane %v703, 4
      %v706 = vshll.u32 %v639, 16
      %v708 = vrot.slane %v706, 5
      %v709 = vor.u32 %v705, %v708
      %v710 = vrot.slane %v709, 4
      %v712 = vshll.u32 %v640, 16
      %v714 = vrot.slane %v712, 5
      %v715 = vsel %vm659, %v710, %v714
      %v717 = vshrl.u32 %v641, 16
      %v719 = vrot.slane %v717, 4
      %v720 = vshll.u32 %v641, 16
      %v722 = vrot.slane %v720, 5
      %v723 = vor.u32 %v719, %v722
      %v724 = vrot.slane %v723, 4
      %v726 = vshll.u32 %v642, 16
      %v728 = vrot.slane %v726, 5
      %v729 = vsel %vm659, %v724, %v728
      %v731 = vshrl.u32 %v643, 16
      %v733 = vrot.slane %v731, 4
      %v734 = vshll.u32 %v643, 16
      %v736 = vrot.slane %v734, 5
      %v737 = vor.u32 %v733, %v736
      %v738 = vrot.slane %v737, 4
      %v740 = vshll.u32 %v644, 16
      %v742 = vrot.slane %v740, 5
      %v743 = vsel %vm659, %v738, %v742
      %v745 = vshrl.u32 %v645, 16
      %v747 = vrot.slane %v745, 4
      %v748 = vshll.u32 %v645, 16
      %v750 = vrot.slane %v748, 5
      %v751 = vor.u32 %v747, %v750
      %v752 = vrot.slane %v751, 4
      %v754 = vshll.u32 %v646, 16
      %v756 = vrot.slane %v754, 5
      %v757 = vsel %vm659, %v752, %v756
      %v759 = vshrl.u32 %v647, 16
      %v761 = vrot.slane %v759, 4
      %v762 = vshll.u32 %v647, 16
      %v764 = vrot.slane %v762, 5
      %v765 = vor.u32 %v761, %v764
      %v766 = vrot.slane %v765, 4
      %v768 = vshll.u32 %v648, 16
      %v770 = vrot.slane %v768, 5
      %v771 = vsel %vm659, %v766, %v770
      %s772 = scalar_lea.vmem %s1, 128
      %v773 = vld [vmem:[%s772] sm:$0xf]
      %v774 = vld [vmem:[%s772 + $0x4] sm:$0xf]
      %v775 = vld [vmem:[%s772 + $0x8] sm:$0xf]
      %v776 = vld [vmem:[%s772 + $0xc] sm:$0xf]
      %v777 = vld [vmem:[%s772 + $0x10] sm:$0xf]
      %v778 = vld [vmem:[%s772 + $0x14] sm:$0xf]
      %v779 = vld [vmem:[%s772 + $0x18] sm:$0xf]
      %v780 = vld [vmem:[%s772 + $0x1c] sm:$0xf]
      %v781 = vld [vmem:[%s772 + $0x20] sm:$0xf]
      %v782 = vld [vmem:[%s772 + $0x24] sm:$0xf]
      %v783 = vld [vmem:[%s772 + $0x28] sm:$0xf]
      %v784 = vld [vmem:[%s772 + $0x2c] sm:$0xf]
      %v785 = vld [vmem:[%s772 + $0x30] sm:$0xf]
      %v786 = vld [vmem:[%s772 + $0x34] sm:$0xf]
      %v787 = vld [vmem:[%s772 + $0x38] sm:$0xf]
      %v788 = vld [vmem:[%s772 + $0x3c] sm:$0xf]
      %v789 = vunpack.c.l.b16 %v673
      %v790 = vunpack.c.l.b16 %v687
      %v791 = vunpack.c.l.b16 %v701
      %v792 = vunpack.c.l.b16 %v715
      %v793 = vunpack.c.l.b16 %v729
      %v794 = vunpack.c.l.b16 %v743
      %v795 = vunpack.c.l.b16 %v757
      %v796 = vunpack.c.l.b16 %v771
      %v797 = vpack.c.b16 %v790, %v789
      %v798 = vpack.c.b16 %v792, %v791
      %v799 = vpack.c.b16 %v794, %v793
      %v800 = vpack.c.b16 %v796, %v795
      %v821 = vunpack.c.l.b16 %v773
      %v822 = vunpack.c.l.b16 %v774
      %v823 = vunpack.c.l.b16 %v775
      %v824 = vunpack.c.l.b16 %v776
      %v825 = vunpack.c.l.b16 %v777
      %v826 = vunpack.c.l.b16 %v778
      %v827 = vunpack.c.l.b16 %v779
      %v828 = vunpack.c.l.b16 %v780
      %v829 = vunpack.c.l.b16 %v781
      %v830 = vunpack.c.l.b16 %v782
      %v831 = vunpack.c.l.b16 %v783
      %v832 = vunpack.c.l.b16 %v784
      %v833 = vunpack.c.l.b16 %v785
      %v834 = vunpack.c.l.b16 %v786
      %v835 = vunpack.c.l.b16 %v787
      %v836 = vunpack.c.l.b16 %v788
      %v837 = vpack.c.b16 %v822, %v821
      %v838 = vpack.c.b16 %v824, %v823
      %v839 = vpack.c.b16 %v826, %v825
      %v840 = vpack.c.b16 %v828, %v827
      %v841 = vpack.c.b16 %v830, %v829
      %v842 = vpack.c.b16 %v832, %v831
      %v843 = vpack.c.b16 %v834, %v833
      %v844 = vpack.c.b16 %v836, %v835
      %853 = vmatprep.subr.bf16.mxu0 0
      %854 = vmatpush1.bf16.msra.mxu0 %v844
      %855 = vmatprep.subr.bf16.mxu0 0
      %856 = vmatpush1.bf16.msra.mxu0 %v843
      %857 = vmatprep.subr.bf16.mxu0 0
      %858 = vmatpush1.bf16.msra.mxu0 %v842
      %859 = vmatprep.subr.bf16.mxu0 0
      %860 = vmatpush1.bf16.msra.mxu0 %v841
      %861 = vmatprep.subr.bf16.mxu0 0
      %862 = vmatpush1.bf16.msra.mxu0 %v840
      %863 = vmatprep.subr.bf16.mxu0 0
      %864 = vmatpush1.bf16.msra.mxu0 %v839
      %865 = vmatprep.subr.bf16.mxu0 0
      %866 = vmatpush1.bf16.msra.mxu0 %v838
      %867 = vmatprep.subr.bf16.mxu0 0
      %868 = vmatpush1.bf16.msra.mxu0 %v837
      %869 = vmatprep.subr.bf16.mxu0 0
      %870 = vmatpush2.bf16.msra.mxu0 0
      %871 = vmatprep.subr.bf16.mxu0 0
      %872 = vmatpush2.bf16.msra.mxu0 0
      %873 = vmatprep.subr.bf16.mxu0 0
      %874 = vmatpush2.bf16.msra.mxu0 0
      %875 = vmatprep.subr.bf16.mxu0 0
      %876 = vmatpush2.bf16.msra.mxu0 0
      %877 = vmatprep.subr.bf16.mxu0 0
      %878 = vmatpush2.bf16.msra.mxu0 0
      %879 = vmatprep.subr.bf16.mxu0 0
      %880 = vmatpush2.bf16.msra.mxu0 0
      %881 = vmatprep.subr.bf16.mxu0 0
      %882 = vmatpush2.bf16.msra.mxu0 0
      %883 = vmatprep.subr.bf16.mxu0 0
      %884 = vmatpush2.bf16.msra.mxu0 0
      %885 = vmatprep.mubr.bf16.mxu0 0
      %886 = vmatmul.mubr.bf16.gmra.mxu0 %v797
      %v887 = vpop.f32.mrf.mxu0
      %v888 = vadd.f32 0.0, %v887
      %v889 = vpop.f32.mrf.mxu0
      %v890 = vpop.f32.mrf.mxu0
      %v891 = vadd.f32 0.0, %v890
      %v892 = vpop.f32.mrf.mxu0
      %893 = vmatprep.mubr.bf16.mxu0 0
      %894 = vmatmul.mubr.bf16.gmra.mxu0 %v798
      %v895 = vpop.f32.mrf.mxu0
      %v896 = vadd.f32 0.0, %v895
      %v897 = vpop.f32.mrf.mxu0
      %v898 = vpop.f32.mrf.mxu0
      %v899 = vadd.f32 0.0, %v898
      %v900 = vpop.f32.mrf.mxu0
      %901 = vmatprep.mubr.bf16.mxu0 0
      %902 = vmatmul.mubr.bf16.gmra.mxu0 %v799
      %v903 = vpop.f32.mrf.mxu0
      %v904 = vadd.f32 0.0, %v903
      %v905 = vpop.f32.mrf.mxu0
      %v906 = vpop.f32.mrf.mxu0
      %v907 = vadd.f32 0.0, %v906
      %v908 = vpop.f32.mrf.mxu0
      %909 = vmatprep.mubr.bf16.mxu0 0
      %910 = vmatmul.mubr.bf16.gmra.mxu0 %v800
      %v911 = vpop.f32.mrf.mxu0
      %v912 = vadd.f32 0.0, %v911
      %v913 = vpop.f32.mrf.mxu0
      %v914 = vpop.f32.mrf.mxu0
      %v915 = vadd.f32 0.0, %v914
      %v916 = vpop.f32.mrf.mxu0
      %917 = vdwg.mxu0
      %v918 = vadd.f32 %v649, %v888
      %v919 = vadd.f32 %v650, %v891
      %v920 = vadd.f32 %v651, %v896
      %v921 = vadd.f32 %v652, %v899
      %v922 = vadd.f32 %v653, %v904
      %v923 = vadd.f32 %v654, %v907
      %v924 = vadd.f32 %v655, %v912
      %v925 = vadd.f32 %v656, %v915
      %926 = vst [vmem:[#allocation2] sm:$0xff] %v918
      %927 = vst [vmem:[#allocation2 + $0x8] sm:$0xff] %v919
      %928 = vst [vmem:[#allocation2 + $0x10] sm:$0xff] %v920
      %929 = vst [vmem:[#allocation2 + $0x18] sm:$0xff] %v921
      %930 = vst [vmem:[#allocation2 + $0x20] sm:$0xff] %v922
      %931 = vst [vmem:[#allocation2 + $0x28] sm:$0xff] %v923
      %932 = vst [vmem:[#allocation2 + $0x30] sm:$0xff] %v924
      %933 = vst [vmem:[#allocation2 + $0x38] sm:$0xff] %v925
      %s934 = scalar_lea.vmem %s230, 144
      %v935 = vld [vmem:[%s934] sm:$0xf]
      %v936 = vld [vmem:[%s934 + $0x8] sm:$0xf]
      %v937 = vld [vmem:[%s934 + $0x10] sm:$0xf]
      %v938 = vld [vmem:[%s934 + $0x18] sm:$0xf]
      %v939 = vld [vmem:[%s934 + $0x20] sm:$0xf]
      %v940 = vld [vmem:[%s934 + $0x28] sm:$0xf]
      %v941 = vld [vmem:[%s934 + $0x30] sm:$0xf]
      %v942 = vld [vmem:[%s934 + $0x38] sm:$0xf]
      %v943 = vld [vmem:[#allocation2] sm:$0xff]
      %v944 = vld [vmem:[#allocation2 + $0x8] sm:$0xff]
      %v945 = vld [vmem:[#allocation2 + $0x10] sm:$0xff]
      %v946 = vld [vmem:[#allocation2 + $0x18] sm:$0xff]
      %v947 = vld [vmem:[#allocation2 + $0x20] sm:$0xff]
      %v948 = vld [vmem:[#allocation2 + $0x28] sm:$0xff]
      %v949 = vld [vmem:[#allocation2 + $0x30] sm:$0xff]
      %v950 = vld [vmem:[#allocation2 + $0x38] sm:$0xff]
      %s951 = scalar_lea.vmem %s1, 192
      %v952 = vld [vmem:[%s951] sm:$0xf]
      %v953 = vld [vmem:[%s951 + $0x4] sm:$0xf]
      %v954 = vld [vmem:[%s951 + $0x8] sm:$0xf]
      %v955 = vld [vmem:[%s951 + $0xc] sm:$0xf]
      %v956 = vld [vmem:[%s951 + $0x10] sm:$0xf]
      %v957 = vld [vmem:[%s951 + $0x14] sm:$0xf]
      %v958 = vld [vmem:[%s951 + $0x18] sm:$0xf]
      %v959 = vld [vmem:[%s951 + $0x1c] sm:$0xf]
      %v960 = vld [vmem:[%s951 + $0x20] sm:$0xf]
      %v961 = vld [vmem:[%s951 + $0x24] sm:$0xf]
      %v962 = vld [vmem:[%s951 + $0x28] sm:$0xf]
      %v963 = vld [vmem:[%s951 + $0x2c] sm:$0xf]
      %v964 = vld [vmem:[%s951 + $0x30] sm:$0xf]
      %v965 = vld [vmem:[%s951 + $0x34] sm:$0xf]
      %v966 = vld [vmem:[%s951 + $0x38] sm:$0xf]
      %v967 = vld [vmem:[%s951 + $0x3c] sm:$0xf]
      %v976 = vunpack.c.l.b16 %v935
      %v977 = vunpack.c.l.b16 %v936
      %v978 = vunpack.c.l.b16 %v937
      %v979 = vunpack.c.l.b16 %v938
      %v980 = vunpack.c.l.b16 %v939
      %v981 = vunpack.c.l.b16 %v940
      %v982 = vunpack.c.l.b16 %v941
      %v983 = vunpack.c.l.b16 %v942
      %v984 = vpack.c.b16 %v977, %v976
      %v985 = vpack.c.b16 %v979, %v978
      %v986 = vpack.c.b16 %v981, %v980
      %v987 = vpack.c.b16 %v983, %v982
      %v1008 = vunpack.c.l.b16 %v952
      %v1009 = vunpack.c.l.b16 %v953
      %v1010 = vunpack.c.l.b16 %v954
      %v1011 = vunpack.c.l.b16 %v955
      %v1012 = vunpack.c.l.b16 %v956
      %v1013 = vunpack.c.l.b16 %v957
      %v1014 = vunpack.c.l.b16 %v958
      %v1015 = vunpack.c.l.b16 %v959
      %v1016 = vunpack.c.l.b16 %v960
      %v1017 = vunpack.c.l.b16 %v961
      %v1018 = vunpack.c.l.b16 %v962
      %v1019 = vunpack.c.l.b16 %v963
      %v1020 = vunpack.c.l.b16 %v964
      %v1021 = vunpack.c.l.b16 %v965
      %v1022 = vunpack.c.l.b16 %v966
      %v1023 = vunpack.c.l.b16 %v967
      %v1024 = vpack.c.b16 %v1009, %v1008
      %v1025 = vpack.c.b16 %v1011, %v1010
      %v1026 = vpack.c.b16 %v1013, %v1012
      %v1027 = vpack.c.b16 %v1015, %v1014
      %v1028 = vpack.c.b16 %v1017, %v1016
      %v1029 = vpack.c.b16 %v1019, %v1018
      %v1030 = vpack.c.b16 %v1021, %v1020
      %v1031 = vpack.c.b16 %v1023, %v1022
      %1040 = vmatprep.subr.bf16.mxu0 0
      %1041 = vmatpush1.bf16.msra.mxu0 %v1031
      %1042 = vmatprep.subr.bf16.mxu0 0
      %1043 = vmatpush1.bf16.msra.mxu0 %v1030
      %1044 = vmatprep.subr.bf16.mxu0 0
      %1045 = vmatpush1.bf16.msra.mxu0 %v1029
      %1046 = vmatprep.subr.bf16.mxu0 0
      %1047 = vmatpush1.bf16.msra.mxu0 %v1028
      %1048 = vmatprep.subr.bf16.mxu0 0
      %1049 = vmatpush1.bf16.msra.mxu0 %v1027
      %1050 = vmatprep.subr.bf16.mxu0 0
      %1051 = vmatpush1.bf16.msra.mxu0 %v1026
      %1052 = vmatprep.subr.bf16.mxu0 0
      %1053 = vmatpush1.bf16.msra.mxu0 %v1025
      %1054 = vmatprep.subr.bf16.mxu0 0
      %1055 = vmatpush1.bf16.msra.mxu0 %v1024
      %1056 = vmatprep.subr.bf16.mxu0 0
      %1057 = vmatpush2.bf16.msra.mxu0 0
      %1058 = vmatprep.subr.bf16.mxu0 0
      %1059 = vmatpush2.bf16.msra.mxu0 0
      %1060 = vmatprep.subr.bf16.mxu0 0
      %1061 = vmatpush2.bf16.msra.mxu0 0
      %1062 = vmatprep.subr.bf16.mxu0 0
      %1063 = vmatpush2.bf16.msra.mxu0 0
      %1064 = vmatprep.subr.bf16.mxu0 0
      %1065 = vmatpush2.bf16.msra.mxu0 0
      %1066 = vmatprep.subr.bf16.mxu0 0
      %1067 = vmatpush2.bf16.msra.mxu0 0
      %1068 = vmatprep.subr.bf16.mxu0 0
      %1069 = vmatpush2.bf16.msra.mxu0 0
      %1070 = vmatprep.subr.bf16.mxu0 0
      %1071 = vmatpush2.bf16.msra.mxu0 0
      %1072 = vmatprep.mubr.bf16.mxu0 0
      %1073 = vmatmul.mubr.bf16.gmra.mxu0 %v984
      %v1074 = vpop.f32.mrf.mxu0
      %v1075 = vadd.f32 0.0, %v1074
      %v1076 = vpop.f32.mrf.mxu0
      %v1077 = vpop.f32.mrf.mxu0
      %v1078 = vadd.f32 0.0, %v1077
      %v1079 = vpop.f32.mrf.mxu0
      %1080 = vmatprep.mubr.bf16.mxu0 0
      %1081 = vmatmul.mubr.bf16.gmra.mxu0 %v985
      %v1082 = vpop.f32.mrf.mxu0
      %v1083 = vadd.f32 0.0, %v1082
      %v1084 = vpop.f32.mrf.mxu0
      %v1085 = vpop.f32.mrf.mxu0
      %v1086 = vadd.f32 0.0, %v1085
      %v1087 = vpop.f32.mrf.mxu0
      %1088 = vmatprep.mubr.bf16.mxu0 0
      %1089 = vmatmul.mubr.bf16.gmra.mxu0 %v986
      %v1090 = vpop.f32.mrf.mxu0
      %v1091 = vadd.f32 0.0, %v1090
      %v1092 = vpop.f32.mrf.mxu0
      %v1093 = vpop.f32.mrf.mxu0
      %v1094 = vadd.f32 0.0, %v1093
      %v1095 = vpop.f32.mrf.mxu0
      %1096 = vmatprep.mubr.bf16.mxu0 0
      %1097 = vmatmul.mubr.bf16.gmra.mxu0 %v987
      %v1098 = vpop.f32.mrf.mxu0
      %v1099 = vadd.f32 0.0, %v1098
      %v1100 = vpop.f32.mrf.mxu0
      %v1101 = vpop.f32.mrf.mxu0
      %v1102 = vadd.f32 0.0, %v1101
      %v1103 = vpop.f32.mrf.mxu0
      %1104 = vdwg.mxu0
      %v1105 = vadd.f32 %v943, %v1075
      %v1106 = vadd.f32 %v944, %v1078
      %v1107 = vadd.f32 %v945, %v1083
      %v1108 = vadd.f32 %v946, %v1086
      %v1109 = vadd.f32 %v947, %v1091
      %v1110 = vadd.f32 %v948, %v1094
      %v1111 = vadd.f32 %v949, %v1099
      %v1112 = vadd.f32 %v950, %v1102
      %1113 = vst [vmem:[#allocation2] sm:$0xff] %v1105
      %1114 = vst [vmem:[#allocation2 + $0x8] sm:$0xff] %v1106
      %1115 = vst [vmem:[#allocation2 + $0x10] sm:$0xff] %v1107
      %1116 = vst [vmem:[#allocation2 + $0x18] sm:$0xff] %v1108
      %1117 = vst [vmem:[#allocation2 + $0x20] sm:$0xff] %v1109
      %1118 = vst [vmem:[#allocation2 + $0x28] sm:$0xff] %v1110
      %1119 = vst [vmem:[#allocation2 + $0x30] sm:$0xff] %v1111
      %1120 = vst [vmem:[#allocation2 + $0x38] sm:$0xff] %v1112
      %s1121 = scalar_lea.vmem %s230, 216
      %v1122 = vld [vmem:[%s1121] sm:$0xf]
      %v1123 = vld [vmem:[%s1121 + $0x8] sm:$0xf]
      %v1124 = vld [vmem:[%s1121 + $0x10] sm:$0xf]
      %v1125 = vld [vmem:[%s1121 + $0x18] sm:$0xf]
      %v1126 = vld [vmem:[%s1121 + $0x20] sm:$0xf]
      %v1127 = vld [vmem:[%s1121 + $0x28] sm:$0xf]
      %v1128 = vld [vmem:[%s1121 + $0x30] sm:$0xf]
      %v1129 = vld [vmem:[%s1121 + $0x38] sm:$0xf]
      %v1130 = vld [vmem:[#allocation2] sm:$0xff]
      %v1131 = vld [vmem:[#allocation2 + $0x8] sm:$0xff]
      %v1132 = vld [vmem:[#allocation2 + $0x10] sm:$0xff]
      %v1133 = vld [vmem:[#allocation2 + $0x18] sm:$0xff]
      %v1134 = vld [vmem:[#allocation2 + $0x20] sm:$0xff]
      %v1135 = vld [vmem:[#allocation2 + $0x28] sm:$0xff]
      %v1136 = vld [vmem:[#allocation2 + $0x30] sm:$0xff]
      %v1137 = vld [vmem:[#allocation2 + $0x38] sm:$0xff]
      %s1138 = scalar_lea.vmem %s1, 256
      %v1139 = vld [vmem:[%s1138] sm:$0xf]
      %v1140 = vld [vmem:[%s1138 + $0x4] sm:$0xf]
      %v1141 = vld [vmem:[%s1138 + $0x8] sm:$0xf]
      %v1142 = vld [vmem:[%s1138 + $0xc] sm:$0xf]
      %v1143 = vld [vmem:[%s1138 + $0x10] sm:$0xf]
      %v1144 = vld [vmem:[%s1138 + $0x14] sm:$0xf]
      %v1145 = vld [vmem:[%s1138 + $0x18] sm:$0xf]
      %v1146 = vld [vmem:[%s1138 + $0x1c] sm:$0xf]
      %v1147 = vld [vmem:[%s1138 + $0x20] sm:$0xf]
      %v1148 = vld [vmem:[%s1138 + $0x24] sm:$0xf]
      %v1149 = vld [vmem:[%s1138 + $0x28] sm:$0xf]
      %v1150 = vld [vmem:[%s1138 + $0x2c] sm:$0xf]
      %v1151 = vld [vmem:[%s1138 + $0x30] sm:$0xf]
      %v1152 = vld [vmem:[%s1138 + $0x34] sm:$0xf]
      %v1153 = vld [vmem:[%s1138 + $0x38] sm:$0xf]
      %v1154 = vld [vmem:[%s1138 + $0x3c] sm:$0xf]
      %v1163 = vunpack.c.l.b16 %v1122
      %v1164 = vunpack.c.l.b16 %v1123
      %v1165 = vunpack.c.l.b16 %v1124
      %v1166 = vunpack.c.l.b16 %v1125
      %v1167 = vunpack.c.l.b16 %v1126
      %v1168 = vunpack.c.l.b16 %v1127
      %v1169 = vunpack.c.l.b16 %v1128
      %v1170 = vunpack.c.l.b16 %v1129
      %v1171 = vpack.c.b16 %v1164, %v1163
      %v1172 = vpack.c.b16 %v1166, %v1165
      %v1173 = vpack.c.b16 %v1168, %v1167
      %v1174 = vpack.c.b16 %v1170, %v1169
      %v1195 = vunpack.c.l.b16 %v1139
      %v1196 = vunpack.c.l.b16 %v1140
      %v1197 = vunpack.c.l.b16 %v1141
      %v1198 = vunpack.c.l.b16 %v1142
      %v1199 = vunpack.c.l.b16 %v1143
      %v1200 = vunpack.c.l.b16 %v1144
      %v1201 = vunpack.c.l.b16 %v1145
      %v1202 = vunpack.c.l.b16 %v1146
      %v1203 = vunpack.c.l.b16 %v1147
      %v1204 = vunpack.c.l.b16 %v1148
      %v1205 = vunpack.c.l.b16 %v1149
      %v1206 = vunpack.c.l.b16 %v1150
      %v1207 = vunpack.c.l.b16 %v1151
      %v1208 = vunpack.c.l.b16 %v1152
      %v1209 = vunpack.c.l.b16 %v1153
      %v1210 = vunpack.c.l.b16 %v1154
      %v1211 = vpack.c.b16 %v1196, %v1195
      %v1212 = vpack.c.b16 %v1198, %v1197
      %v1213 = vpack.c.b16 %v1200, %v1199
      %v1214 = vpack.c.b16 %v1202, %v1201
      %v1215 = vpack.c.b16 %v1204, %v1203
      %v1216 = vpack.c.b16 %v1206, %v1205
      %v1217 = vpack.c.b16 %v1208, %v1207
      %v1218 = vpack.c.b16 %v1210, %v1209
      %1227 = vmatprep.subr.bf16.mxu0 0
      %1228 = vmatpush1.bf16.msra.mxu0 %v1218
      %1229 = vmatprep.subr.bf16.mxu0 0
      %1230 = vmatpush1.bf16.msra.mxu0 %v1217
      %1231 = vmatprep.subr.bf16.mxu0 0
      %1232 = vmatpush1.bf16.msra.mxu0 %v1216
      %1233 = vmatprep.subr.bf16.mxu0 0
      %1234 = vmatpush1.bf16.msra.mxu0 %v1215
      %1235 = vmatprep.subr.bf16.mxu0 0
      %1236 = vmatpush1.bf16.msra.mxu0 %v1214
      %1237 = vmatprep.subr.bf16.mxu0 0
      %1238 = vmatpush1.bf16.msra.mxu0 %v1213
      %1239 = vmatprep.subr.bf16.mxu0 0
      %1240 = vmatpush1.bf16.msra.mxu0 %v1212
      %1241 = vmatprep.subr.bf16.mxu0 0
      %1242 = vmatpush1.bf16.msra.mxu0 %v1211
      %1243 = vmatprep.subr.bf16.mxu0 0
      %1244 = vmatpush2.bf16.msra.mxu0 0
      %1245 = vmatprep.subr.bf16.mxu0 0
      %1246 = vmatpush2.bf16.msra.mxu0 0
      %1247 = vmatprep.subr.bf16.mxu0 0
      %1248 = vmatpush2.bf16.msra.mxu0 0
      %1249 = vmatprep.subr.bf16.mxu0 0
      %1250 = vmatpush2.bf16.msra.mxu0 0
      %1251 = vmatprep.subr.bf16.mxu0 0
      %1252 = vmatpush2.bf16.msra.mxu0 0
      %1253 = vmatprep.subr.bf16.mxu0 0
      %1254 = vmatpush2.bf16.msra.mxu0 0
      %1255 = vmatprep.subr.bf16.mxu0 0
      %1256 = vmatpush2.bf16.msra.mxu0 0
      %1257 = vmatprep.subr.bf16.mxu0 0
      %1258 = vmatpush2.bf16.msra.mxu0 0
      %1259 = vmatprep.mubr.bf16.mxu0 0
      %1260 = vmatmul.mubr.bf16.gmra.mxu0 %v1171
      %v1261 = vpop.f32.mrf.mxu0
      %v1262 = vadd.f32 0.0, %v1261
      %v1263 = vpop.f32.mrf.mxu0
      %v1264 = vpop.f32.mrf.mxu0
      %v1265 = vadd.f32 0.0, %v1264
      %v1266 = vpop.f32.mrf.mxu0
      %1267 = vmatprep.mubr.bf16.mxu0 0
      %1268 = vmatmul.mubr.bf16.gmra.mxu0 %v1172
      %v1269 = vpop.f32.mrf.mxu0
      %v1270 = vadd.f32 0.0, %v1269
      %v1271 = vpop.f32.mrf.mxu0
      %v1272 = vpop.f32.mrf.mxu0
      %v1273 = vadd.f32 0.0, %v1272
      %v1274 = vpop.f32.mrf.mxu0
      %1275 = vmatprep.mubr.bf16.mxu0 0
      %1276 = vmatmul.mubr.bf16.gmra.mxu0 %v1173
      %v1277 = vpop.f32.mrf.mxu0
      %v1278 = vadd.f32 0.0, %v1277
      %v1279 = vpop.f32.mrf.mxu0
      %v1280 = vpop.f32.mrf.mxu0
      %v1281 = vadd.f32 0.0, %v1280
      %v1282 = vpop.f32.mrf.mxu0
      %1283 = vmatprep.mubr.bf16.mxu0 0
      %1284 = vmatmul.mubr.bf16.gmra.mxu0 %v1174
      %v1285 = vpop.f32.mrf.mxu0
      %v1286 = vadd.f32 0.0, %v1285
      %v1287 = vpop.f32.mrf.mxu0
      %v1288 = vpop.f32.mrf.mxu0
      %v1289 = vadd.f32 0.0, %v1288
      %v1290 = vpop.f32.mrf.mxu0
      %1291 = vdwg.mxu0
      %v1292 = vadd.f32 %v1130, %v1262
      %v1293 = vadd.f32 %v1131, %v1265
      %v1294 = vadd.f32 %v1132, %v1270
      %v1295 = vadd.f32 %v1133, %v1273
      %v1296 = vadd.f32 %v1134, %v1278
      %v1297 = vadd.f32 %v1135, %v1281
      %v1298 = vadd.f32 %v1136, %v1286
      %v1299 = vadd.f32 %v1137, %v1289
      %1300 = vst [vmem:[#allocation2] sm:$0xff] %v1292
      %1301 = vst [vmem:[#allocation2 + $0x8] sm:$0xff] %v1293
      %1302 = vst [vmem:[#allocation2 + $0x10] sm:$0xff] %v1294
      %1303 = vst [vmem:[#allocation2 + $0x18] sm:$0xff] %v1295
      %1304 = vst [vmem:[#allocation2 + $0x20] sm:$0xff] %v1296
      %1305 = vst [vmem:[#allocation2 + $0x28] sm:$0xff] %v1297
      %1306 = vst [vmem:[#allocation2 + $0x30] sm:$0xff] %v1298
      %1307 = vst [vmem:[#allocation2 + $0x38] sm:$0xff] %v1299
      %v1308 = vld [vmem:[%s934] sm:$0xf]
      %v1309 = vld [vmem:[%s934 + $0x4] sm:$0x1]
      %v1310 = vld [vmem:[%s934 + $0x8] sm:$0xf]
      %v1311 = vld [vmem:[%s934 + $0xc] sm:$0x1]
      %v1312 = vld [vmem:[%s934 + $0x10] sm:$0xf]
      %v1313 = vld [vmem:[%s934 + $0x14] sm:$0x1]
      %v1314 = vld [vmem:[%s934 + $0x18] sm:$0xf]
      %v1315 = vld [vmem:[%s934 + $0x1c] sm:$0x1]
      %v1316 = vld [vmem:[%s934 + $0x20] sm:$0xf]
      %v1317 = vld [vmem:[%s934 + $0x24] sm:$0x1]
      %v1318 = vld [vmem:[%s934 + $0x28] sm:$0xf]
      %v1319 = vld [vmem:[%s934 + $0x2c] sm:$0x1]
      %v1320 = vld [vmem:[%s934 + $0x30] sm:$0xf]
      %v1321 = vld [vmem:[%s934 + $0x34] sm:$0x1]
      %v1322 = vld [vmem:[%s934 + $0x38] sm:$0xf]
      %v1323 = vld [vmem:[%s934 + $0x3c] sm:$0x1]
      %v1324 = vld [vmem:[#allocation2] sm:$0xff]
      %v1325 = vld [vmem:[#allocation2 + $0x8] sm:$0xff]
      %v1326 = vld [vmem:[#allocation2 + $0x10] sm:$0xff]
      %v1327 = vld [vmem:[#allocation2 + $0x18] sm:$0xff]
      %v1328 = vld [vmem:[#allocation2 + $0x20] sm:$0xff]
      %v1329 = vld [vmem:[#allocation2 + $0x28] sm:$0xff]
      %v1330 = vld [vmem:[#allocation2 + $0x30] sm:$0xff]
      %v1331 = vld [vmem:[#allocation2 + $0x38] sm:$0xff]
      %v1333 = vshrl.u32 %v1308, 16
      %v1335 = vrot.slane %v1333, 4
      %v1336 = vshll.u32 %v1308, 16
      %v1338 = vrot.slane %v1336, 5
      %v1339 = vor.u32 %v1335, %v1338
      %v1340 = vrot.slane %v1339, 4
      %v1342 = vshll.u32 %v1309, 16
      %v1344 = vrot.slane %v1342, 5
      %v1345 = vsel %vm659, %v1340, %v1344
      %v1347 = vshrl.u32 %v1310, 16
      %v1349 = vrot.slane %v1347, 4
      %v1350 = vshll.u32 %v1310, 16
      %v1352 = vrot.slane %v1350, 5
      %v1353 = vor.u32 %v1349, %v1352
      %v1354 = vrot.slane %v1353, 4
      %v1356 = vshll.u32 %v1311, 16
      %v1358 = vrot.slane %v1356, 5
      %v1359 = vsel %vm659, %v1354, %v1358
      %v1361 = vshrl.u32 %v1312, 16
      %v1363 = vrot.slane %v1361, 4
      %v1364 = vshll.u32 %v1312, 16
      %v1366 = vrot.slane %v1364, 5
      %v1367 = vor.u32 %v1363, %v1366
      %v1368 = vrot.slane %v1367, 4
      %v1370 = vshll.u32 %v1313, 16
      %v1372 = vrot.slane %v1370, 5
      %v1373 = vsel %vm659, %v1368, %v1372
      %v1375 = vshrl.u32 %v1314, 16
      %v1377 = vrot.slane %v1375, 4
      %v1378 = vshll.u32 %v1314, 16
      %v1380 = vrot.slane %v1378, 5
      %v1381 = vor.u32 %v1377, %v1380
      %v1382 = vrot.slane %v1381, 4
      %v1384 = vshll.u32 %v1315, 16
      %v1386 = vrot.slane %v1384, 5
      %v1387 = vsel %vm659, %v1382, %v1386
      %v1389 = vshrl.u32 %v1316, 16
      %v1391 = vrot.slane %v1389, 4
      %v1392 = vshll.u32 %v1316, 16
      %v1394 = vrot.slane %v1392, 5
      %v1395 = vor.u32 %v1391, %v1394
      %v1396 = vrot.slane %v1395, 4
      %v1398 = vshll.u32 %v1317, 16
      %v1400 = vrot.slane %v1398, 5
      %v1401 = vsel %vm659, %v1396, %v1400
      %v1403 = vshrl.u32 %v1318, 16
      %v1405 = vrot.slane %v1403, 4
      %v1406 = vshll.u32 %v1318, 16
      %v1408 = vrot.slane %v1406, 5
      %v1409 = vor.u32 %v1405, %v1408
      %v1410 = vrot.slane %v1409, 4
      %v1412 = vshll.u32 %v1319, 16
      %v1414 = vrot.slane %v1412, 5
      %v1415 = vsel %vm659, %v1410, %v1414
      %v1417 = vshrl.u32 %v1320, 16
      %v1419 = vrot.slane %v1417, 4
      %v1420 = vshll.u32 %v1320, 16
      %v1422 = vrot.slane %v1420, 5
      %v1423 = vor.u32 %v1419, %v1422
      %v1424 = vrot.slane %v1423, 4
      %v1426 = vshll.u32 %v1321, 16
      %v1428 = vrot.slane %v1426, 5
      %v1429 = vsel %vm659, %v1424, %v1428
      %v1431 = vshrl.u32 %v1322, 16
      %v1433 = vrot.slane %v1431, 4
      %v1434 = vshll.u32 %v1322, 16
      %v1436 = vrot.slane %v1434, 5
      %v1437 = vor.u32 %v1433, %v1436
      %v1438 = vrot.slane %v1437, 4
      %v1440 = vshll.u32 %v1323, 16
      %v1442 = vrot.slane %v1440, 5
      %v1443 = vsel %vm659, %v1438, %v1442
      %s1444 = scalar_lea.vmem %s1, 320
      %v1445 = vld [vmem:[%s1444] sm:$0xf]
      %v1446 = vld [vmem:[%s1444 + $0x4] sm:$0xf]
      %v1447 = vld [vmem:[%s1444 + $0x8] sm:$0xf]
      %v1448 = vld [vmem:[%s1444 + $0xc] sm:$0xf]
      %v1449 = vld [vmem:[%s1444 + $0x10] sm:$0xf]
      %v1450 = vld [vmem:[%s1444 + $0x14] sm:$0xf]
      %v1451 = vld [vmem:[%s1444 + $0x18] sm:$0xf]
      %v1452 = vld [vmem:[%s1444 + $0x1c] sm:$0xf]
      %v1453 = vld [vmem:[%s1444 + $0x20] sm:$0xf]
      %v1454 = vld [vmem:[%s1444 + $0x24] sm:$0xf]
      %v1455 = vld [vmem:[%s1444 + $0x28] sm:$0xf]
      %v1456 = vld [vmem:[%s1444 + $0x2c] sm:$0xf]
      %v1457 = vld [vmem:[%s1444 + $0x30] sm:$0xf]
      %v1458 = vld [vmem:[%s1444 + $0x34] sm:$0xf]
      %v1459 = vld [vmem:[%s1444 + $0x38] sm:$0xf]
      %v1460 = vld [vmem:[%s1444 + $0x3c] sm:$0xf]
      %v1461 = vunpack.c.l.b16 %v1345
      %v1462 = vunpack.c.l.b16 %v1359
      %v1463 = vunpack.c.l.b16 %v1373
      %v1464 = vunpack.c.l.b16 %v1387
      %v1465 = vunpack.c.l.b16 %v1401
      %v1466 = vunpack.c.l.b16 %v1415
      %v1467 = vunpack.c.l.b16 %v1429
      %v1468 = vunpack.c.l.b16 %v1443
      %v1469 = vpack.c.b16 %v1462, %v1461
      %v1470 = vpack.c.b16 %v1464, %v1463
      %v1471 = vpack.c.b16 %v1466, %v1465
      %v1472 = vpack.c.b16 %v1468, %v1467
      %v1493 = vunpack.c.l.b16 %v1445
      %v1494 = vunpack.c.l.b16 %v1446
      %v1495 = vunpack.c.l.b16 %v1447
      %v1496 = vunpack.c.l.b16 %v1448
      %v1497 = vunpack.c.l.b16 %v1449
      %v1498 = vunpack.c.l.b16 %v1450
      %v1499 = vunpack.c.l.b16 %v1451
      %v1500 = vunpack.c.l.b16 %v1452
      %v1501 = vunpack.c.l.b16 %v1453
      %v1502 = vunpack.c.l.b16 %v1454
      %v1503 = vunpack.c.l.b16 %v1455
      %v1504 = vunpack.c.l.b16 %v1456
      %v1505 = vunpack.c.l.b16 %v1457
      %v1506 = vunpack.c.l.b16 %v1458
      %v1507 = vunpack.c.l.b16 %v1459
      %v1508 = vunpack.c.l.b16 %v1460
      %v1509 = vpack.c.b16 %v1494, %v1493
      %v1510 = vpack.c.b16 %v1496, %v1495
      %v1511 = vpack.c.b16 %v1498, %v1497
      %v1512 = vpack.c.b16 %v1500, %v1499
      %v1513 = vpack.c.b16 %v1502, %v1501
      %v1514 = vpack.c.b16 %v1504, %v1503
      %v1515 = vpack.c.b16 %v1506, %v1505
      %v1516 = vpack.c.b16 %v1508, %v1507
      %1525 = vmatprep.subr.bf16.mxu0 0
      %1526 = vmatpush1.bf16.msra.mxu0 %v1516
      %1527 = vmatprep.subr.bf16.mxu0 0
      %1528 = vmatpush1.bf16.msra.mxu0 %v1515
      %1529 = vmatprep.subr.bf16.mxu0 0
      %1530 = vmatpush1.bf16.msra.mxu0 %v1514
      %1531 = vmatprep.subr.bf16.mxu0 0
      %1532 = vmatpush1.bf16.msra.mxu0 %v1513
      %1533 = vmatprep.subr.bf16.mxu0 0
      %1534 = vmatpush1.bf16.msra.mxu0 %v1512
      %1535 = vmatprep.subr.bf16.mxu0 0
      %1536 = vmatpush1.bf16.msra.mxu0 %v1511
      %1537 = vmatprep.subr.bf16.mxu0 0
      %1538 = vmatpush1.bf16.msra.mxu0 %v1510
      %1539 = vmatprep.subr.bf16.mxu0 0
      %1540 = vmatpush1.bf16.msra.mxu0 %v1509
      %1541 = vmatprep.subr.bf16.mxu0 0
      %1542 = vmatpush2.bf16.msra.mxu0 0
      %1543 = vmatprep.subr.bf16.mxu0 0
      %1544 = vmatpush2.bf16.msra.mxu0 0
      %1545 = vmatprep.subr.bf16.mxu0 0
      %1546 = vmatpush2.bf16.msra.mxu0 0
      %1547 = vmatprep.subr.bf16.mxu0 0
      %1548 = vmatpush2.bf16.msra.mxu0 0
      %1549 = vmatprep.subr.bf16.mxu0 0
      %1550 = vmatpush2.bf16.msra.mxu0 0
      %1551 = vmatprep.subr.bf16.mxu0 0
      %1552 = vmatpush2.bf16.msra.mxu0 0
      %1553 = vmatprep.subr.bf16.mxu0 0
      %1554 = vmatpush2.bf16.msra.mxu0 0
      %1555 = vmatprep.subr.bf16.mxu0 0
      %1556 = vmatpush2.bf16.msra.mxu0 0
      %1557 = vmatprep.mubr.bf16.mxu0 0
      %1558 = vmatmul.mubr.bf16.gmra.mxu0 %v1469
      %v1559 = vpop.f32.mrf.mxu0
      %v1560 = vadd.f32 0.0, %v1559
      %v1561 = vpop.f32.mrf.mxu0
      %v1562 = vpop.f32.mrf.mxu0
      %v1563 = vadd.f32 0.0, %v1562
      %v1564 = vpop.f32.mrf.mxu0
      %1565 = vmatprep.mubr.bf16.mxu0 0
      %1566 = vmatmul.mubr.bf16.gmra.mxu0 %v1470
      %v1567 = vpop.f32.mrf.mxu0
      %v1568 = vadd.f32 0.0, %v1567
      %v1569 = vpop.f32.mrf.mxu0
      %v1570 = vpop.f32.mrf.mxu0
      %v1571 = vadd.f32 0.0, %v1570
      %v1572 = vpop.f32.mrf.mxu0
      %1573 = vmatprep.mubr.bf16.mxu0 0
      %1574 = vmatmul.mubr.bf16.gmra.mxu0 %v1471
      %v1575 = vpop.f32.mrf.mxu0
      %v1576 = vadd.f32 0.0, %v1575
      %v1577 = vpop.f32.mrf.mxu0
      %v1578 = vpop.f32.mrf.mxu0
      %v1579 = vadd.f32 0.0, %v1578
      %v1580 = vpop.f32.mrf.mxu0
      %1581 = vmatprep.mubr.bf16.mxu0 0
      %1582 = vmatmul.mubr.bf16.gmra.mxu0 %v1472
      %v1583 = vpop.f32.mrf.mxu0
      %v1584 = vadd.f32 0.0, %v1583
      %v1585 = vpop.f32.mrf.mxu0
      %v1586 = vpop.f32.mrf.mxu0
      %v1587 = vadd.f32 0.0, %v1586
      %v1588 = vpop.f32.mrf.mxu0
      %1589 = vdwg.mxu0
      %v1590 = vadd.f32 %v1324, %v1560
      %v1591 = vadd.f32 %v1325, %v1563
      %v1592 = vadd.f32 %v1326, %v1568
      %v1593 = vadd.f32 %v1327, %v1571
      %v1594 = vadd.f32 %v1328, %v1576
      %v1595 = vadd.f32 %v1329, %v1579
      %v1596 = vadd.f32 %v1330, %v1584
      %v1597 = vadd.f32 %v1331, %v1587
      %1598 = vst [vmem:[#allocation2] sm:$0xff] %v1590
      %1599 = vst [vmem:[#allocation2 + $0x8] sm:$0xff] %v1591
      %1600 = vst [vmem:[#allocation2 + $0x10] sm:$0xff] %v1592
      %1601 = vst [vmem:[#allocation2 + $0x18] sm:$0xff] %v1593
      %1602 = vst [vmem:[#allocation2 + $0x20] sm:$0xff] %v1594
      %1603 = vst [vmem:[#allocation2 + $0x28] sm:$0xff] %v1595
      %1604 = vst [vmem:[#allocation2 + $0x30] sm:$0xff] %v1596
      %1605 = vst [vmem:[#allocation2 + $0x38] sm:$0xff] %v1597
      %s1606 = scalar_lea.vmem %s230, 8
      %v1607 = vld [vmem:[%s1606] sm:$0xf]
      %v1608 = vld [vmem:[%s1606 + $0x8] sm:$0xf]
      %v1609 = vld [vmem:[%s1606 + $0x10] sm:$0xf]
      %v1610 = vld [vmem:[%s1606 + $0x18] sm:$0xf]
      %v1611 = vld [vmem:[%s1606 + $0x20] sm:$0xf]
      %v1612 = vld [vmem:[%s1606 + $0x28] sm:$0xf]
      %v1613 = vld [vmem:[%s1606 + $0x30] sm:$0xf]
      %v1614 = vld [vmem:[%s1606 + $0x38] sm:$0xf]
      %v1615 = vld [vmem:[#allocation2] sm:$0xff]
      %v1616 = vld [vmem:[#allocation2 + $0x8] sm:$0xff]
      %v1617 = vld [vmem:[#allocation2 + $0x10] sm:$0xff]
      %v1618 = vld [vmem:[#allocation2 + $0x18] sm:$0xff]
      %v1619 = vld [vmem:[#allocation2 + $0x20] sm:$0xff]
      %v1620 = vld [vmem:[#allocation2 + $0x28] sm:$0xff]
      %v1621 = vld [vmem:[#allocation2 + $0x30] sm:$0xff]
      %v1622 = vld [vmem:[#allocation2 + $0x38] sm:$0xff]
      %s1623 = scalar_lea.vmem %s1, 384
      %v1624 = vld [vmem:[%s1623] sm:$0xf]
      %v1625 = vld [vmem:[%s1623 + $0x4] sm:$0xf]
      %v1626 = vld [vmem:[%s1623 + $0x8] sm:$0xf]
      %v1627 = vld [vmem:[%s1623 + $0xc] sm:$0xf]
      %v1628 = vld [vmem:[%s1623 + $0x10] sm:$0xf]
      %v1629 = vld [vmem:[%s1623 + $0x14] sm:$0xf]
      %v1630 = vld [vmem:[%s1623 + $0x18] sm:$0xf]
      %v1631 = vld [vmem:[%s1623 + $0x1c] sm:$0xf]
      %v1632 = vld [vmem:[%s1623 + $0x20] sm:$0xf]
      %v1633 = vld [vmem:[%s1623 + $0x24] sm:$0xf]
      %v1634 = vld [vmem:[%s1623 + $0x28] sm:$0xf]
      %v1635 = vld [vmem:[%s1623 + $0x2c] sm:$0xf]
      %v1636 = vld [vmem:[%s1623 + $0x30] sm:$0xf]
      %v1637 = vld [vmem:[%s1623 + $0x34] sm:$0xf]
      %v1638 = vld [vmem:[%s1623 + $0x38] sm:$0xf]
      %v1639 = vld [vmem:[%s1623 + $0x3c] sm:$0xf]
      %v1648 = vunpack.c.l.b16 %v1607
      %v1649 = vunpack.c.l.b16 %v1608
      %v1650 = vunpack.c.l.b16 %v1609
      %v1651 = vunpack.c.l.b16 %v1610
      %v1652 = vunpack.c.l.b16 %v1611
      %v1653 = vunpack.c.l.b16 %v1612
      %v1654 = vunpack.c.l.b16 %v1613
      %v1655 = vunpack.c.l.b16 %v1614
      %v1656 = vpack.c.b16 %v1649, %v1648
      %v1657 = vpack.c.b16 %v1651, %v1650
      %v1658 = vpack.c.b16 %v1653, %v1652
      %v1659 = vpack.c.b16 %v1655, %v1654
      %v1680 = vunpack.c.l.b16 %v1624
      %v1681 = vunpack.c.l.b16 %v1625
      %v1682 = vunpack.c.l.b16 %v1626
      %v1683 = vunpack.c.l.b16 %v1627
      %v1684 = vunpack.c.l.b16 %v1628
      %v1685 = vunpack.c.l.b16 %v1629
      %v1686 = vunpack.c.l.b16 %v1630
      %v1687 = vunpack.c.l.b16 %v1631
      %v1688 = vunpack.c.l.b16 %v1632
      %v1689 = vunpack.c.l.b16 %v1633
      %v1690 = vunpack.c.l.b16 %v1634
      %v1691 = vunpack.c.l.b16 %v1635
      %v1692 = vunpack.c.l.b16 %v1636
      %v1693 = vunpack.c.l.b16 %v1637
      %v1694 = vunpack.c.l.b16 %v1638
      %v1695 = vunpack.c.l.b16 %v1639
      %v1696 = vpack.c.b16 %v1681, %v1680
      %v1697 = vpack.c.b16 %v1683, %v1682
      %v1698 = vpack.c.b16 %v1685, %v1684
      %v1699 = vpack.c.b16 %v1687, %v1686
      %v1700 = vpack.c.b16 %v1689, %v1688
      %v1701 = vpack.c.b16 %v1691, %v1690
      %v1702 = vpack.c.b16 %v1693, %v1692
      %v1703 = vpack.c.b16 %v1695, %v1694
      %1712 = vmatprep.subr.bf16.mxu0 0
      %1713 = vmatpush1.bf16.msra.mxu0 %v1703
      %1714 = vmatprep.subr.bf16.mxu0 0
      %1715 = vmatpush1.bf16.msra.mxu0 %v1702
      %1716 = vmatprep.subr.bf16.mxu0 0
      %1717 = vmatpush1.bf16.msra.mxu0 %v1701
      %1718 = vmatprep.subr.bf16.mxu0 0
      %1719 = vmatpush1.bf16.msra.mxu0 %v1700
      %1720 = vmatprep.subr.bf16.mxu0 0
      %1721 = vmatpush1.bf16.msra.mxu0 %v1699
      %1722 = vmatprep.subr.bf16.mxu0 0
      %1723 = vmatpush1.bf16.msra.mxu0 %v1698
      %1724 = vmatprep.subr.bf16.mxu0 0
      %1725 = vmatpush1.bf16.msra.mxu0 %v1697
      %1726 = vmatprep.subr.bf16.mxu0 0
      %1727 = vmatpush1.bf16.msra.mxu0 %v1696
      %1728 = vmatprep.subr.bf16.mxu0 0
      %1729 = vmatpush2.bf16.msra.mxu0 0
      %1730 = vmatprep.subr.bf16.mxu0 0
      %1731 = vmatpush2.bf16.msra.mxu0 0
      %1732 = vmatprep.subr.bf16.mxu0 0
      %1733 = vmatpush2.bf16.msra.mxu0 0
      %1734 = vmatprep.subr.bf16.mxu0 0
      %1735 = vmatpush2.bf16.msra.mxu0 0
      %1736 = vmatprep.subr.bf16.mxu0 0
      %1737 = vmatpush2.bf16.msra.mxu0 0
      %1738 = vmatprep.subr.bf16.mxu0 0
      %1739 = vmatpush2.bf16.msra.mxu0 0
      %1740 = vmatprep.subr.bf16.mxu0 0
      %1741 = vmatpush2.bf16.msra.mxu0 0
      %1742 = vmatprep.subr.bf16.mxu0 0
      %1743 = vmatpush2.bf16.msra.mxu0 0
      %1744 = vmatprep.mubr.bf16.mxu0 0
      %1745 = vmatmul.mubr.bf16.gmra.mxu0 %v1656
      %v1746 = vpop.f32.mrf.mxu0
      %v1747 = vadd.f32 0.0, %v1746
      %v1748 = vpop.f32.mrf.mxu0
      %v1749 = vpop.f32.mrf.mxu0
      %v1750 = vadd.f32 0.0, %v1749
      %v1751 = vpop.f32.mrf.mxu0
      %1752 = vmatprep.mubr.bf16.mxu0 0
      %1753 = vmatmul.mubr.bf16.gmra.mxu0 %v1657
      %v1754 = vpop.f32.mrf.mxu0
      %v1755 = vadd.f32 0.0, %v1754
      %v1756 = vpop.f32.mrf.mxu0
      %v1757 = vpop.f32.mrf.mxu0
      %v1758 = vadd.f32 0.0, %v1757
      %v1759 = vpop.f32.mrf.mxu0
      %1760 = vmatprep.mubr.bf16.mxu0 0
      %1761 = vmatmul.mubr.bf16.gmra.mxu0 %v1658
      %v1762 = vpop.f32.mrf.mxu0
      %v1763 = vadd.f32 0.0, %v1762
      %v1764 = vpop.f32.mrf.mxu0
      %v1765 = vpop.f32.mrf.mxu0
      %v1766 = vadd.f32 0.0, %v1765
      %v1767 = vpop.f32.mrf.mxu0
      %1768 = vmatprep.mubr.bf16.mxu0 0
      %1769 = vmatmul.mubr.bf16.gmra.mxu0 %v1659
      %v1770 = vpop.f32.mrf.mxu0
      %v1771 = vadd.f32 0.0, %v1770
      %v1772 = vpop.f32.mrf.mxu0
      %v1773 = vpop.f32.mrf.mxu0
      %v1774 = vadd.f32 0.0, %v1773
      %v1775 = vpop.f32.mrf.mxu0
      %1776 = vdwg.mxu0
      %v1777 = vadd.f32 %v1615, %v1747
      %v1778 = vadd.f32 %v1616, %v1750
      %v1779 = vadd.f32 %v1617, %v1755
      %v1780 = vadd.f32 %v1618, %v1758
      %v1781 = vadd.f32 %v1619, %v1763
      %v1782 = vadd.f32 %v1620, %v1766
      %v1783 = vadd.f32 %v1621, %v1771
      %v1784 = vadd.f32 %v1622, %v1774
      %1785 = vst [vmem:[#allocation2] sm:$0xff] %v1777
      %1786 = vst [vmem:[#allocation2 + $0x8] sm:$0xff] %v1778
      %1787 = vst [vmem:[#allocation2 + $0x10] sm:$0xff] %v1779
      %1788 = vst [vmem:[#allocation2 + $0x18] sm:$0xff] %v1780
      %1789 = vst [vmem:[#allocation2 + $0x20] sm:$0xff] %v1781
      %1790 = vst [vmem:[#allocation2 + $0x28] sm:$0xff] %v1782
      %1791 = vst [vmem:[#allocation2 + $0x30] sm:$0xff] %v1783
      %1792 = vst [vmem:[#allocation2 + $0x38] sm:$0xff] %v1784
      %s1793 = scalar_lea.vmem %s230, 80
      %v1794 = vld [vmem:[%s1793] sm:$0xf]
      %v1795 = vld [vmem:[%s1793 + $0x8] sm:$0xf]
      %v1796 = vld [vmem:[%s1793 + $0x10] sm:$0xf]
      %v1797 = vld [vmem:[%s1793 + $0x18] sm:$0xf]
      %v1798 = vld [vmem:[%s1793 + $0x20] sm:$0xf]
      %v1799 = vld [vmem:[%s1793 + $0x28] sm:$0xf]
      %v1800 = vld [vmem:[%s1793 + $0x30] sm:$0xf]
      %v1801 = vld [vmem:[%s1793 + $0x38] sm:$0xf]
      %v1802 = vld [vmem:[#allocation2] sm:$0xff]
      %v1803 = vld [vmem:[#allocation2 + $0x8] sm:$0xff]
      %v1804 = vld [vmem:[#allocation2 + $0x10] sm:$0xff]
      %v1805 = vld [vmem:[#allocation2 + $0x18] sm:$0xff]
      %v1806 = vld [vmem:[#allocation2 + $0x20] sm:$0xff]
      %v1807 = vld [vmem:[#allocation2 + $0x28] sm:$0xff]
      %v1808 = vld [vmem:[#allocation2 + $0x30] sm:$0xff]
      %v1809 = vld [vmem:[#allocation2 + $0x38] sm:$0xff]
      %s1810 = scalar_lea.vmem %s1, 448
      %v1811 = vld [vmem:[%s1810] sm:$0xf]
      %v1812 = vld [vmem:[%s1810 + $0x4] sm:$0xf]
      %v1813 = vld [vmem:[%s1810 + $0x8] sm:$0xf]
      %v1814 = vld [vmem:[%s1810 + $0xc] sm:$0xf]
      %v1815 = vld [vmem:[%s1810 + $0x10] sm:$0xf]
      %v1816 = vld [vmem:[%s1810 + $0x14] sm:$0xf]
      %v1817 = vld [vmem:[%s1810 + $0x18] sm:$0xf]
      %v1818 = vld [vmem:[%s1810 + $0x1c] sm:$0xf]
      %v1819 = vld [vmem:[%s1810 + $0x20] sm:$0xf]
      %v1820 = vld [vmem:[%s1810 + $0x24] sm:$0xf]
      %v1821 = vld [vmem:[%s1810 + $0x28] sm:$0xf]
      %v1822 = vld [vmem:[%s1810 + $0x2c] sm:$0xf]
      %v1823 = vld [vmem:[%s1810 + $0x30] sm:$0xf]
      %v1824 = vld [vmem:[%s1810 + $0x34] sm:$0xf]
      %v1825 = vld [vmem:[%s1810 + $0x38] sm:$0xf]
      %v1826 = vld [vmem:[%s1810 + $0x3c] sm:$0xf]
      %v1835 = vunpack.c.l.b16 %v1794
      %v1836 = vunpack.c.l.b16 %v1795
      %v1837 = vunpack.c.l.b16 %v1796
      %v1838 = vunpack.c.l.b16 %v1797
      %v1839 = vunpack.c.l.b16 %v1798
      %v1840 = vunpack.c.l.b16 %v1799
      %v1841 = vunpack.c.l.b16 %v1800
      %v1842 = vunpack.c.l.b16 %v1801
      %v1843 = vpack.c.b16 %v1836, %v1835
      %v1844 = vpack.c.b16 %v1838, %v1837
      %v1845 = vpack.c.b16 %v1840, %v1839
      %v1846 = vpack.c.b16 %v1842, %v1841
      %v1867 = vunpack.c.l.b16 %v1811
      %v1868 = vunpack.c.l.b16 %v1812
      %v1869 = vunpack.c.l.b16 %v1813
      %v1870 = vunpack.c.l.b16 %v1814
      %v1871 = vunpack.c.l.b16 %v1815
      %v1872 = vunpack.c.l.b16 %v1816
      %v1873 = vunpack.c.l.b16 %v1817
      %v1874 = vunpack.c.l.b16 %v1818
      %v1875 = vunpack.c.l.b16 %v1819
      %v1876 = vunpack.c.l.b16 %v1820
      %v1877 = vunpack.c.l.b16 %v1821
      %v1878 = vunpack.c.l.b16 %v1822
      %v1879 = vunpack.c.l.b16 %v1823
      %v1880 = vunpack.c.l.b16 %v1824
      %v1881 = vunpack.c.l.b16 %v1825
      %v1882 = vunpack.c.l.b16 %v1826
      %v1883 = vpack.c.b16 %v1868, %v1867
      %v1884 = vpack.c.b16 %v1870, %v1869
      %v1885 = vpack.c.b16 %v1872, %v1871
      %v1886 = vpack.c.b16 %v1874, %v1873
      %v1887 = vpack.c.b16 %v1876, %v1875
      %v1888 = vpack.c.b16 %v1878, %v1877
      %v1889 = vpack.c.b16 %v1880, %v1879
      %v1890 = vpack.c.b16 %v1882, %v1881
      %1899 = vmatprep.subr.bf16.mxu0 0
      %1900 = vmatpush1.bf16.msra.mxu0 %v1890
      %1901 = vmatprep.subr.bf16.mxu0 0
      %1902 = vmatpush1.bf16.msra.mxu0 %v1889
      %1903 = vmatprep.subr.bf16.mxu0 0
      %1904 = vmatpush1.bf16.msra.mxu0 %v1888
      %1905 = vmatprep.subr.bf16.mxu0 0
      %1906 = vmatpush1.bf16.msra.mxu0 %v1887
      %1907 = vmatprep.subr.bf16.mxu0 0
      %1908 = vmatpush1.bf16.msra.mxu0 %v1886
      %1909 = vmatprep.subr.bf16.mxu0 0
      %1910 = vmatpush1.bf16.msra.mxu0 %v1885
      %1911 = vmatprep.subr.bf16.mxu0 0
      %1912 = vmatpush1.bf16.msra.mxu0 %v1884
      %1913 = vmatprep.subr.bf16.mxu0 0
      %1914 = vmatpush1.bf16.msra.mxu0 %v1883
      %1915 = vmatprep.subr.bf16.mxu0 0
      %1916 = vmatpush2.bf16.msra.mxu0 0
      %1917 = vmatprep.subr.bf16.mxu0 0
      %1918 = vmatpush2.bf16.msra.mxu0 0
      %1919 = vmatprep.subr.bf16.mxu0 0
      %1920 = vmatpush2.bf16.msra.mxu0 0
      %1921 = vmatprep.subr.bf16.mxu0 0
      %1922 = vmatpush2.bf16.msra.mxu0 0
      %1923 = vmatprep.subr.bf16.mxu0 0
      %1924 = vmatpush2.bf16.msra.mxu0 0
      %1925 = vmatprep.subr.bf16.mxu0 0
      %1926 = vmatpush2.bf16.msra.mxu0 0
      %1927 = vmatprep.subr.bf16.mxu0 0
      %1928 = vmatpush2.bf16.msra.mxu0 0
      %1929 = vmatprep.subr.bf16.mxu0 0
      %1930 = vmatpush2.bf16.msra.mxu0 0
      %1931 = vmatprep.mubr.bf16.mxu0 0
      %1932 = vmatmul.mubr.bf16.gmra.mxu0 %v1843
      %v1933 = vpop.f32.mrf.mxu0
      %v1934 = vadd.f32 0.0, %v1933
      %v1935 = vpop.f32.mrf.mxu0
      %v1936 = vpop.f32.mrf.mxu0
      %v1937 = vadd.f32 0.0, %v1936
      %v1938 = vpop.f32.mrf.mxu0
      %1939 = vmatprep.mubr.bf16.mxu0 0
      %1940 = vmatmul.mubr.bf16.gmra.mxu0 %v1844
      %v1941 = vpop.f32.mrf.mxu0
      %v1942 = vadd.f32 0.0, %v1941
      %v1943 = vpop.f32.mrf.mxu0
      %v1944 = vpop.f32.mrf.mxu0
      %v1945 = vadd.f32 0.0, %v1944
      %v1946 = vpop.f32.mrf.mxu0
      %1947 = vmatprep.mubr.bf16.mxu0 0
      %1948 = vmatmul.mubr.bf16.gmra.mxu0 %v1845
      %v1949 = vpop.f32.mrf.mxu0
      %v1950 = vadd.f32 0.0, %v1949
      %v1951 = vpop.f32.mrf.mxu0
      %v1952 = vpop.f32.mrf.mxu0
      %v1953 = vadd.f32 0.0, %v1952
      %v1954 = vpop.f32.mrf.mxu0
      %1955 = vmatprep.mubr.bf16.mxu0 0
      %1956 = vmatmul.mubr.bf16.gmra.mxu0 %v1846
      %v1957 = vpop.f32.mrf.mxu0
      %v1958 = vadd.f32 0.0, %v1957
      %v1959 = vpop.f32.mrf.mxu0
      %v1960 = vpop.f32.mrf.mxu0
      %v1961 = vadd.f32 0.0, %v1960
      %v1962 = vpop.f32.mrf.mxu0
      %1963 = vdwg.mxu0
      %v1964 = vadd.f32 %v1802, %v1934
      %v1965 = vadd.f32 %v1803, %v1937
      %v1966 = vadd.f32 %v1804, %v1942
      %v1967 = vadd.f32 %v1805, %v1945
      %v1968 = vadd.f32 %v1806, %v1950
      %v1969 = vadd.f32 %v1807, %v1953
      %v1970 = vadd.f32 %v1808, %v1958
      %v1971 = vadd.f32 %v1809, %v1961
      %1972 = vst [vmem:[#allocation2] sm:$0xff] %v1964
      %1973 = vst [vmem:[#allocation2 + $0x8] sm:$0xff] %v1965
      %1974 = vst [vmem:[#allocation2 + $0x10] sm:$0xff] %v1966
      %1975 = vst [vmem:[#allocation2 + $0x18] sm:$0xff] %v1967
      %1976 = vst [vmem:[#allocation2 + $0x20] sm:$0xff] %v1968
      %1977 = vst [vmem:[#allocation2 + $0x28] sm:$0xff] %v1969
      %1978 = vst [vmem:[#allocation2 + $0x30] sm:$0xff] %v1970
      %1979 = vst [vmem:[#allocation2 + $0x38] sm:$0xff] %v1971
      %v1980 = vld [vmem:[%s1606] sm:$0xf]
      %v1981 = vld [vmem:[%s1606 + $0x4] sm:$0x1]
      %v1982 = vld [vmem:[%s1606 + $0x8] sm:$0xf]
      %v1983 = vld [vmem:[%s1606 + $0xc] sm:$0x1]
      %v1984 = vld [vmem:[%s1606 + $0x10] sm:$0xf]
      %v1985 = vld [vmem:[%s1606 + $0x14] sm:$0x1]
      %v1986 = vld [vmem:[%s1606 + $0x18] sm:$0xf]
      %v1987 = vld [vmem:[%s1606 + $0x1c] sm:$0x1]
      %v1988 = vld [vmem:[%s1606 + $0x20] sm:$0xf]
      %v1989 = vld [vmem:[%s1606 + $0x24] sm:$0x1]
      %v1990 = vld [vmem:[%s1606 + $0x28] sm:$0xf]
      %v1991 = vld [vmem:[%s1606 + $0x2c] sm:$0x1]
      %v1992 = vld [vmem:[%s1606 + $0x30] sm:$0xf]
      %v1993 = vld [vmem:[%s1606 + $0x34] sm:$0x1]
      %v1994 = vld [vmem:[%s1606 + $0x38] sm:$0xf]
      %v1995 = vld [vmem:[%s1606 + $0x3c] sm:$0x1]
      %v1996 = vld [vmem:[#allocation2] sm:$0xff]
      %v1997 = vld [vmem:[#allocation2 + $0x8] sm:$0xff]
      %v1998 = vld [vmem:[#allocation2 + $0x10] sm:$0xff]
      %v1999 = vld [vmem:[#allocation2 + $0x18] sm:$0xff]
      %v2000 = vld [vmem:[#allocation2 + $0x20] sm:$0xff]
      %v2001 = vld [vmem:[#allocation2 + $0x28] sm:$0xff]
      %v2002 = vld [vmem:[#allocation2 + $0x30] sm:$0xff]
      %v2003 = vld [vmem:[#allocation2 + $0x38] sm:$0xff]
      %v2005 = vshrl.u32 %v1980, 16
      %v2007 = vrot.slane %v2005, 4
      %v2008 = vshll.u32 %v1980, 16
      %v2010 = vrot.slane %v2008, 5
      %v2011 = vor.u32 %v2007, %v2010
      %v2012 = vrot.slane %v2011, 4
      %v2014 = vshll.u32 %v1981, 16
      %v2016 = vrot.slane %v2014, 5
      %v2017 = vsel %vm659, %v2012, %v2016
      %v2019 = vshrl.u32 %v1982, 16
      %v2021 = vrot.slane %v2019, 4
      %v2022 = vshll.u32 %v1982, 16
      %v2024 = vrot.slane %v2022, 5
      %v2025 = vor.u32 %v2021, %v2024
      %v2026 = vrot.slane %v2025, 4
      %v2028 = vshll.u32 %v1983, 16
      %v2030 = vrot.slane %v2028, 5
      %v2031 = vsel %vm659, %v2026, %v2030
      %v2033 = vshrl.u32 %v1984, 16
      %v2035 = vrot.slane %v2033, 4
      %v2036 = vshll.u32 %v1984, 16
      %v2038 = vrot.slane %v2036, 5
      %v2039 = vor.u32 %v2035, %v2038
      %v2040 = vrot.slane %v2039, 4
      %v2042 = vshll.u32 %v1985, 16
      %v2044 = vrot.slane %v2042, 5
      %v2045 = vsel %vm659, %v2040, %v2044
      %v2047 = vshrl.u32 %v1986, 16
      %v2049 = vrot.slane %v2047, 4
      %v2050 = vshll.u32 %v1986, 16
      %v2052 = vrot.slane %v2050, 5
      %v2053 = vor.u32 %v2049, %v2052
      %v2054 = vrot.slane %v2053, 4
      %v2056 = vshll.u32 %v1987, 16
      %v2058 = vrot.slane %v2056, 5
      %v2059 = vsel %vm659, %v2054, %v2058
      %v2061 = vshrl.u32 %v1988, 16
      %v2063 = vrot.slane %v2061, 4
      %v2064 = vshll.u32 %v1988, 16
      %v2066 = vrot.slane %v2064, 5
      %v2067 = vor.u32 %v2063, %v2066
      %v2068 = vrot.slane %v2067, 4
      %v2070 = vshll.u32 %v1989, 16
      %v2072 = vrot.slane %v2070, 5
      %v2073 = vsel %vm659, %v2068, %v2072
      %v2075 = vshrl.u32 %v1990, 16
      %v2077 = vrot.slane %v2075, 4
      %v2078 = vshll.u32 %v1990, 16
      %v2080 = vrot.slane %v2078, 5
      %v2081 = vor.u32 %v2077, %v2080
      %v2082 = vrot.slane %v2081, 4
      %v2084 = vshll.u32 %v1991, 16
      %v2086 = vrot.slane %v2084, 5
      %v2087 = vsel %vm659, %v2082, %v2086
      %v2089 = vshrl.u32 %v1992, 16
      %v2091 = vrot.slane %v2089, 4
      %v2092 = vshll.u32 %v1992, 16
      %v2094 = vrot.slane %v2092, 5
      %v2095 = vor.u32 %v2091, %v2094
      %v2096 = vrot.slane %v2095, 4
      %v2098 = vshll.u32 %v1993, 16
      %v2100 = vrot.slane %v2098, 5
      %v2101 = vsel %vm659, %v2096, %v2100
      %v2103 = vshrl.u32 %v1994, 16
      %v2105 = vrot.slane %v2103, 4
      %v2106 = vshll.u32 %v1994, 16
      %v2108 = vrot.slane %v2106, 5
      %v2109 = vor.u32 %v2105, %v2108
      %v2110 = vrot.slane %v2109, 4
      %v2112 = vshll.u32 %v1995, 16
      %v2114 = vrot.slane %v2112, 5
      %v2115 = vsel %vm659, %v2110, %v2114
      %s2116 = scalar_lea.vmem %s1, 512
      %v2117 = vld [vmem:[%s2116] sm:$0xf]
      %v2118 = vld [vmem:[%s2116 + $0x4] sm:$0xf]
      %v2119 = vld [vmem:[%s2116 + $0x8] sm:$0xf]
      %v2120 = vld [vmem:[%s2116 + $0xc] sm:$0xf]
      %v2121 = vld [vmem:[%s2116 + $0x10] sm:$0xf]
      %v2122 = vld [vmem:[%s2116 + $0x14] sm:$0xf]
      %v2123 = vld [vmem:[%s2116 + $0x18] sm:$0xf]
      %v2124 = vld [vmem:[%s2116 + $0x1c] sm:$0xf]
      %v2125 = vld [vmem:[%s2116 + $0x20] sm:$0xf]
      %v2126 = vld [vmem:[%s2116 + $0x24] sm:$0xf]
      %v2127 = vld [vmem:[%s2116 + $0x28] sm:$0xf]
      %v2128 = vld [vmem:[%s2116 + $0x2c] sm:$0xf]
      %v2129 = vld [vmem:[%s2116 + $0x30] sm:$0xf]
      %v2130 = vld [vmem:[%s2116 + $0x34] sm:$0xf]
      %v2131 = vld [vmem:[%s2116 + $0x38] sm:$0xf]
      %v2132 = vld [vmem:[%s2116 + $0x3c] sm:$0xf]
      %v2133 = vunpack.c.l.b16 %v2017
      %v2134 = vunpack.c.l.b16 %v2031
      %v2135 = vunpack.c.l.b16 %v2045
      %v2136 = vunpack.c.l.b16 %v2059
      %v2137 = vunpack.c.l.b16 %v2073
      %v2138 = vunpack.c.l.b16 %v2087
      %v2139 = vunpack.c.l.b16 %v2101
      %v2140 = vunpack.c.l.b16 %v2115
      %v2141 = vpack.c.b16 %v2134, %v2133
      %v2142 = vpack.c.b16 %v2136, %v2135
      %v2143 = vpack.c.b16 %v2138, %v2137
      %v2144 = vpack.c.b16 %v2140, %v2139
      %v2165 = vunpack.c.l.b16 %v2117
      %v2166 = vunpack.c.l.b16 %v2118
      %v2167 = vunpack.c.l.b16 %v2119
      %v2168 = vunpack.c.l.b16 %v2120
      %v2169 = vunpack.c.l.b16 %v2121
      %v2170 = vunpack.c.l.b16 %v2122
      %v2171 = vunpack.c.l.b16 %v2123
      %v2172 = vunpack.c.l.b16 %v2124
      %v2173 = vunpack.c.l.b16 %v2125
      %v2174 = vunpack.c.l.b16 %v2126
      %v2175 = vunpack.c.l.b16 %v2127
      %v2176 = vunpack.c.l.b16 %v2128
      %v2177 = vunpack.c.l.b16 %v2129
      %v2178 = vunpack.c.l.b16 %v2130
      %v2179 = vunpack.c.l.b16 %v2131
      %v2180 = vunpack.c.l.b16 %v2132
      %v2181 = vpack.c.b16 %v2166, %v2165
      %v2182 = vpack.c.b16 %v2168, %v2167
      %v2183 = vpack.c.b16 %v2170, %v2169
      %v2184 = vpack.c.b16 %v2172, %v2171
      %v2185 = vpack.c.b16 %v2174, %v2173
      %v2186 = vpack.c.b16 %v2176, %v2175
      %v2187 = vpack.c.b16 %v2178, %v2177
      %v2188 = vpack.c.b16 %v2180, %v2179
      %2197 = vmatprep.subr.bf16.mxu0 0
      %2198 = vmatpush1.bf16.msra.mxu0 %v2188
      %2199 = vmatprep.subr.bf16.mxu0 0
      %2200 = vmatpush1.bf16.msra.mxu0 %v2187
      %2201 = vmatprep.subr.bf16.mxu0 0
      %2202 = vmatpush1.bf16.msra.mxu0 %v2186
      %2203 = vmatprep.subr.bf16.mxu0 0
      %2204 = vmatpush1.bf16.msra.mxu0 %v2185
      %2205 = vmatprep.subr.bf16.mxu0 0
      %2206 = vmatpush1.bf16.msra.mxu0 %v2184
      %2207 = vmatprep.subr.bf16.mxu0 0
      %2208 = vmatpush1.bf16.msra.mxu0 %v2183
      %2209 = vmatprep.subr.bf16.mxu0 0
      %2210 = vmatpush1.bf16.msra.mxu0 %v2182
      %2211 = vmatprep.subr.bf16.mxu0 0
      %2212 = vmatpush1.bf16.msra.mxu0 %v2181
      %2213 = vmatprep.subr.bf16.mxu0 0
      %2214 = vmatpush2.bf16.msra.mxu0 0
      %2215 = vmatprep.subr.bf16.mxu0 0
      %2216 = vmatpush2.bf16.msra.mxu0 0
      %2217 = vmatprep.subr.bf16.mxu0 0
      %2218 = vmatpush2.bf16.msra.mxu0 0
      %2219 = vmatprep.subr.bf16.mxu0 0
      %2220 = vmatpush2.bf16.msra.mxu0 0
      %2221 = vmatprep.subr.bf16.mxu0 0
      %2222 = vmatpush2.bf16.msra.mxu0 0
      %2223 = vmatprep.subr.bf16.mxu0 0
      %2224 = vmatpush2.bf16.msra.mxu0 0
      %2225 = vmatprep.subr.bf16.mxu0 0
      %2226 = vmatpush2.bf16.msra.mxu0 0
      %2227 = vmatprep.subr.bf16.mxu0 0
      %2228 = vmatpush2.bf16.msra.mxu0 0
      %2229 = vmatprep.mubr.bf16.mxu0 0
      %2230 = vmatmul.mubr.bf16.gmra.mxu0 %v2141
      %v2231 = vpop.f32.mrf.mxu0
      %v2232 = vadd.f32 0.0, %v2231
      %v2233 = vpop.f32.mrf.mxu0
      %v2234 = vpop.f32.mrf.mxu0
      %v2235 = vadd.f32 0.0, %v2234
      %v2236 = vpop.f32.mrf.mxu0
      %2237 = vmatprep.mubr.bf16.mxu0 0
      %2238 = vmatmul.mubr.bf16.gmra.mxu0 %v2142
      %v2239 = vpop.f32.mrf.mxu0
      %v2240 = vadd.f32 0.0, %v2239
      %v2241 = vpop.f32.mrf.mxu0
      %v2242 = vpop.f32.mrf.mxu0
      %v2243 = vadd.f32 0.0, %v2242
      %v2244 = vpop.f32.mrf.mxu0
      %2245 = vmatprep.mubr.bf16.mxu0 0
      %2246 = vmatmul.mubr.bf16.gmra.mxu0 %v2143
      %v2247 = vpop.f32.mrf.mxu0
      %v2248 = vadd.f32 0.0, %v2247
      %v2249 = vpop.f32.mrf.mxu0
      %v2250 = vpop.f32.mrf.mxu0
      %v2251 = vadd.f32 0.0, %v2250
      %v2252 = vpop.f32.mrf.mxu0
      %2253 = vmatprep.mubr.bf16.mxu0 0
      %2254 = vmatmul.mubr.bf16.gmra.mxu0 %v2144
      %v2255 = vpop.f32.mrf.mxu0
      %v2256 = vadd.f32 0.0, %v2255
      %v2257 = vpop.f32.mrf.mxu0
      %v2258 = vpop.f32.mrf.mxu0
      %v2259 = vadd.f32 0.0, %v2258
      %v2260 = vpop.f32.mrf.mxu0
      %2261 = vdwg.mxu0
      %v2262 = vadd.f32 %v1996, %v2232
      %v2263 = vadd.f32 %v1997, %v2235
      %v2264 = vadd.f32 %v1998, %v2240
      %v2265 = vadd.f32 %v1999, %v2243
      %v2266 = vadd.f32 %v2000, %v2248
      %v2267 = vadd.f32 %v2001, %v2251
      %v2268 = vadd.f32 %v2002, %v2256
      %v2269 = vadd.f32 %v2003, %v2259
      %2270 = vst [vmem:[#allocation2] sm:$0xff] %v2262
      %2271 = vst [vmem:[#allocation2 + $0x8] sm:$0xff] %v2263
      %2272 = vst [vmem:[#allocation2 + $0x10] sm:$0xff] %v2264
      %2273 = vst [vmem:[#allocation2 + $0x18] sm:$0xff] %v2265
      %2274 = vst [vmem:[#allocation2 + $0x20] sm:$0xff] %v2266
      %2275 = vst [vmem:[#allocation2 + $0x28] sm:$0xff] %v2267
      %2276 = vst [vmem:[#allocation2 + $0x30] sm:$0xff] %v2268
      %2277 = vst [vmem:[#allocation2 + $0x38] sm:$0xff] %v2269
      %v2278 = vld [vmem:[#allocation2] sm:$0xff]
      %v2279 = vld [vmem:[#allocation2 + $0x8] sm:$0xff]
      %v2280 = vld [vmem:[#allocation2 + $0x10] sm:$0xff]
      %v2281 = vld [vmem:[#allocation2 + $0x18] sm:$0xff]
      %v2282 = vld [vmem:[#allocation2 + $0x20] sm:$0xff]
      %v2283 = vld [vmem:[#allocation2 + $0x28] sm:$0xff]
      %v2284 = vld [vmem:[#allocation2 + $0x30] sm:$0xff]
      %v2285 = vld [vmem:[#allocation2 + $0x38] sm:$0xff]
      %v2286 = vld [vmem:[%s2] sm:$0x1]
      %v2288 = vlaneseq
      %v2289 = vshrl.u32 %v2288, 7
      %v2290 = vsub.s32 0, %v2289
      %v2291 = vrot.slane %v2286, %v2290
      %v2293 = vadd.f32 %v2278, %v2291
      %v2294 = vadd.f32 %v2279, %v2291
      %v2295 = vadd.f32 %v2280, %v2291
      %v2296 = vadd.f32 %v2281, %v2291
      %v2297 = vadd.f32 %v2282, %v2291
      %v2298 = vadd.f32 %v2283, %v2291
      %v2299 = vadd.f32 %v2284, %v2291
      %v2300 = vadd.f32 %v2285, %v2291
      %v2301 = vmax.f32 %v2293, 0.0
      %v2302 = vmax.f32 %v2294, 0.0
      %v2303 = vmax.f32 %v2295, 0.0
      %v2304 = vmax.f32 %v2296, 0.0
      %v2305 = vmax.f32 %v2297, 0.0
      %v2306 = vmax.f32 %v2298, 0.0
      %v2307 = vmax.f32 %v2299, 0.0
      %v2308 = vmax.f32 %v2300, 0.0
      %v2309 = vpack.c.bf16 %v2301, %v2301
      %v2310 = vpack.c.bf16 %v2302, %v2302
      %v2311 = vpack.c.bf16 %v2303, %v2303
      %v2312 = vpack.c.bf16 %v2304, %v2304
      %v2313 = vpack.c.bf16 %v2305, %v2305
      %v2314 = vpack.c.bf16 %v2306, %v2306
      %v2315 = vpack.c.bf16 %v2307, %v2307
      %v2316 = vpack.c.bf16 %v2308, %v2308
      %2317 = vst [vmem:[%s240] sm:$0xf] %v2309
      %2318 = vst [vmem:[%s240 + $0x4] sm:$0xf] %v2310
      %2319 = vst [vmem:[%s240 + $0x8] sm:$0xf] %v2311
      %2320 = vst [vmem:[%s240 + $0xc] sm:$0xf] %v2312
      %2321 = vst [vmem:[%s240 + $0x10] sm:$0xf] %v2313
      %2322 = vst [vmem:[%s240 + $0x14] sm:$0xf] %v2314
      %2323 = vst [vmem:[%s240 + $0x18] sm:$0xf] %v2315
      %2324 = vst [vmem:[%s240 + $0x1c] sm:$0xf] %v2316
      %v2325 = vld [vmem:[%s1121] sm:$0xf]
      %v2326 = vld [vmem:[%s1121 + $0x8] sm:$0xf]
      %v2327 = vld [vmem:[%s1121 + $0x10] sm:$0xf]
      %v2328 = vld [vmem:[%s1121 + $0x18] sm:$0xf]
      %v2329 = vld [vmem:[%s1121 + $0x20] sm:$0xf]
      %v2330 = vld [vmem:[%s1121 + $0x28] sm:$0xf]
      %v2331 = vld [vmem:[%s1121 + $0x30] sm:$0xf]
      %v2332 = vld [vmem:[%s1121 + $0x38] sm:$0xf]
      %2333 = vst [vmem:[%s250] sm:$0xf] %v2325
      %2334 = vst [vmem:[%s250 + $0x4] sm:$0xf] %v2326
      %2335 = vst [vmem:[%s250 + $0x8] sm:$0xf] %v2327
      %2336 = vst [vmem:[%s250 + $0xc] sm:$0xf] %v2328
      %2337 = vst [vmem:[%s250 + $0x10] sm:$0xf] %v2329
      %2338 = vst [vmem:[%s250 + $0x14] sm:$0xf] %v2330
      %2339 = vst [vmem:[%s250 + $0x18] sm:$0xf] %v2331
      %2340 = vst [vmem:[%s250 + $0x1c] sm:$0xf] %v2332
      %s2341 = smul.u32 8, %s21
      %p2342 = scmp.lt.s32.totalorder %s20, 1
      %s2343 = scalar_select %p2342, %s20, 1
      %p2344 = scmp.lt.s32.totalorder %s2341, 7
      %s2345 = scalar_select %p2344, %s2341, 7
      %s2346 = smul.addr %s2343, 8
      %s2347 = sadd.s32 %s2345, %s2346
      %s2348 = smul.addr %s2347, 4
      %s2349 = scalar_lea.vmem %s3, %s2348
      %s2350 = smul.u32 8, %s21
      %p2351 = scmp.lt.s32.totalorder %s20, 1
      %s2352 = scalar_select %p2351, %s20, 1
      %p2353 = scmp.lt.s32.totalorder %s2350, 7
      %s2354 = scalar_select %p2353, %s2350, 7
      %s2355 = smul.addr %s2352, 8
      %s2356 = sadd.s32 %s2354, %s2355
      %s2357 = smul.addr %s2356, 4
      %s2358 = scalar_lea.vmem %s4, %s2357
      // Predicated region
      $region33: #{resnet_forward.9} parent=31 // pred_check
        %p2359 = pneg %p118
      $region34: #{resnet_forward.9} parent=31 // pred_check_branch
        %2361 = sbr.rel (%p2359) target = $region36
      $region35: #{resnet_forward.9} parent=31 // pred_region
        %s2362 = smul.u32 8, %s21
      $region36: #{resnet_forward.9} parent=31 // pred_fallthru
        _
      // Predicated region
      $region37: #{resnet_forward.9} parent=31 // pred_check
        %p2363 = pneg %p146
      $region38: #{resnet_forward.9} parent=31 // pred_check_branch
        %2365 = sbr.rel (%p2363) target = $region40
      $region39: #{resnet_forward.9} parent=31 // pred_region
        %s2366 = smul.u32 8, %s21
      $region40: #{resnet_forward.9} parent=31 // pred_fallthru
        _
    $region32: #{resnet_forward.9} parent=5 // pred_fallthru
      _
    %p2367 = scmp.le.s32.totalorder 2, %s11
    // Predicated region
    $region41: #{resnet_forward.9} parent=5 // pred_check
      %p2368 = pneg %p2367
    $region42: #{resnet_forward.9} parent=5 // pred_check_branch
      %2370 = sbr.rel (%p2368) target = $region44
    $region43: #{resnet_forward.9} parent=5 // pred_region
      %s2371 = ssub.s32 %s11, 2
      // Predicated region
      $region45: #{resnet_forward.9} parent=43 // pred_check
        %p2372 = pneg %p124
      $region46: #{resnet_forward.9} parent=43 // pred_check_branch
        %2374 = sbr.rel (%p2372) target = $region48
      $region47: #{resnet_forward.9} parent=43 // pred_region
        %s2375 = smul.u32 8, %s23
        %p2376 = scmp.lt.s32.totalorder %s22, 1
        %s2377 = scalar_select %p2376, %s22, 1
        %p2378 = scmp.lt.s32.totalorder %s2375, 7
        %s2379 = scalar_select %p2378, %s2375, 7
        %s2380 = smul.addr %s2377, 8
        %s2381 = sadd.s32 %s2379, %s2380
        %s2382 = smul.addr %s2381, 4
        %s2383 = scalar_lea.vmem %s3, %s2382
      $region48: #{resnet_forward.9} parent=43 // pred_fallthru
        _
      // Predicated region
      $region49: #{resnet_forward.9} parent=43 // pred_check
        %p2384 = pneg %p152
      $region50: #{resnet_forward.9} parent=43 // pred_check_branch
        %2386 = sbr.rel (%p2384) target = $region52
      $region51: #{resnet_forward.9} parent=43 // pred_region
        %s2387 = smul.u32 8, %s23
        %p2388 = scmp.lt.s32.totalorder %s22, 1
        %s2389 = scalar_select %p2388, %s22, 1
        %p2390 = scmp.lt.s32.totalorder %s2387, 7
        %s2391 = scalar_select %p2390, %s2387, 7
        %s2392 = smul.addr %s2389, 8
        %s2393 = sadd.s32 %s2391, %s2392
        %s2394 = smul.addr %s2393, 4
        %s2395 = scalar_lea.vmem %s4, %s2394
      $region52: #{resnet_forward.9} parent=43 // pred_fallthru
        _
    $region44: #{resnet_forward.9} parent=5 // pred_fallthru
      _
  $region6: #{resnet_forward.9} parent=0 // loop_footer
    %s15 = sadd.s32 1, %s11
  $region7: #{resnet_forward.9} parent=0 // loop_footer_branch
    %10 = sbr.rel target = $region3
  $region8: #{resnet_forward.9} parent=0 // loop_exit
    _

// kernel: resnet_forward.7
$region0: #{resnet_forward.7}
  #allocation0 [shape = 'u32[]', space=smem, size = 0x4, offset = 0x4, fixed_abs, tag = 'smem constant byte address 0x4 - core index']
  #allocation1 [shape = 'u32[144,128]{1,0:T(1,128)}', space=vmem, size = 0x12000, scoped, tag = 'internal scratch']
  #allocation2 [shape = 'f32[256,128]{1,0:T(8,128)}', space=vmem, size = 0x20000, scoped, tag = 'scratch operand']
  %s0 = inlined_call_operand.vmem [shape: bf16[2,1,18,18,128], index: 0, kind: input, shape index: {}]
  %s1 = inlined_call_operand.vmem [shape: bf16[9,128,128], index: 1, kind: input, shape index: {}]
  %s2 = inlined_call_operand.vmem [shape: f32[1,128], index: 2, kind: input, shape index: {}]
  %s3 = inlined_call_operand.vmem [shape: bf16[2,16,16,128], index: 3, kind: output, shape index: {}]
  %s4 = sld [smem:[#allocation0]]
  $region45: #{resnet_forward.7} parent=0
    _
  %s6 = ssub.s32 1, %s4
  %s7 = scalar_select 0, %s6, %s4
  loop: start=0, step=1, limit=4
  $region2: #{resnet_forward.7} parent=0 // loop_pre_header
    _
  $region3: #{resnet_forward.7} parent=0 // loop_header
    %s9 = sphi 0, %s13
    %p10 = scmp.ge.s32.totalorder %s9, 4
    %s16 = sphi 0, %s28
    %s17 = sphi 0, %s24
    %s18 = sphi 0, %s16
    %s19 = sphi 0, %s17
    %s20 = sphi 0, %s18
    %s21 = sphi 0, %s19
    %s33 = sphi 0, %s35
    %s36 = sphi 0, %s33
    %s37 = sphi 0, %s36
    %s53 = sphi 0, %s37
    %s57 = sphi 0, %s57
    %s59 = sphi 0, %s57
    %s60 = sphi 0, %s59
    %s74 = sphi 0, %s60
    %s78 = sphi 0, %s78
    %s80 = sphi 0, %s78
    %s81 = sphi 0, %s80
    %s95 = sphi 0, %s81
    %s103 = sphi 0, %s105
    %s106 = sphi 0, %s103
    %s107 = sphi 0, %s106
    %s123 = sphi 0, %s107
  $region4: #{resnet_forward.7} parent=0 // loop_header_branch
    %12 = sbr.rel (%p10) target = $region8
  $region5: #{resnet_forward.7} parent=0 // loop_body
    %s14 = ssub.s32 %s9, 1
    %s15 = ssub.s32 %s9, 2
    %s22 = sadd.s32 1, %s17
    %p23 = scmp.ge.s32.totalorder %s22, 1
    %s24 = scalar_select %p23, 0, %s22
    %s25 = sadd.s32 1, %s16
    %s26 = scalar_select %p23, %s25, %s16
    %p27 = scmp.ge.s32.totalorder %s26, 2
    %s28 = scalar_select %p27, 0, %s26
    %s29 = sadd.s32 %s16, %s17
    %s30 = sadd.s32 %s28, %s24
    %s31 = ssub.s32 %s29, %s30
    %p32 = scmp.eq.s32.totalorder %s31, 0
    %s34 = sadd.s32 %s33, 1
    %s35 = scalar_select %p32, %s33, %s34
    %p38 = pneg %p32
    %p39 = scmp.eq.s32.totalorder %s9, 1
    %p40 = por %p38, %p39
    %p41 = scmp.ne.s32.totalorder %s33, %s36
    %p42 = scmp.eq.s32.totalorder %s9, 0
    %p43 = por %p41, %p42
    %p44 = scmp.ne.s32.totalorder %s33, %s36
    %p45 = scmp.eq.s32.totalorder %s14, 1
    %p46 = por %p44, %p45
    %p47 = scmp.ne.s32.totalorder %s36, %s37
    %p48 = scmp.eq.s32.totalorder %s14, 0
    %p49 = por %p47, %p48
    %p50 = scmp.ne.s32.totalorder %s36, %s37
    %p51 = scmp.eq.s32.totalorder %s15, 1
    %p52 = por %p50, %p51
    %p54 = scmp.ne.s32.totalorder %s37, %s53
    %p55 = scmp.eq.s32.totalorder %s15, 0
    %p56 = por %p54, %p55
    %s58 = sadd.s32 %s57, 1
    %p61 = scmp.eq.s32.totalorder %s9, 1
    %p62 = scmp.ne.s32.totalorder %s57, %s59
    %p63 = scmp.eq.s32.totalorder %s9, 0
    %p64 = por %p62, %p63
    %p65 = scmp.ne.s32.totalorder %s57, %s59
    %p66 = scmp.eq.s32.totalorder %s14, 1
    %p67 = por %p65, %p66
    %p68 = scmp.ne.s32.totalorder %s59, %s60
    %p69 = scmp.eq.s32.totalorder %s14, 0
    %p70 = por %p68, %p69
    %p71 = scmp.ne.s32.totalorder %s59, %s60
    %p72 = scmp.eq.s32.totalorder %s15, 1
    %p73 = por %p71, %p72
    %p75 = scmp.ne.s32.totalorder %s60, %s74
    %p76 = scmp.eq.s32.totalorder %s15, 0
    %p77 = por %p75, %p76
    %s79 = sadd.s32 %s78, 1
    %p82 = scmp.eq.s32.totalorder %s9, 1
    %p83 = scmp.ne.s32.totalorder %s78, %s80
    %p84 = scmp.eq.s32.totalorder %s9, 0
    %p85 = por %p83, %p84
    %p86 = scmp.ne.s32.totalorder %s78, %s80
    %p87 = scmp.eq.s32.totalorder %s14, 1
    %p88 = por %p86, %p87
    %p89 = scmp.ne.s32.totalorder %s80, %s81
    %p90 = scmp.eq.s32.totalorder %s14, 0
    %p91 = por %p89, %p90
    %p92 = scmp.ne.s32.totalorder %s80, %s81
    %p93 = scmp.eq.s32.totalorder %s15, 1
    %p94 = por %p92, %p93
    %p96 = scmp.ne.s32.totalorder %s81, %s95
    %p97 = scmp.eq.s32.totalorder %s15, 0
    %p98 = por %p96, %p97
    %s99 = ssub.s32 %s16, %s28
    %s100 = ssub.s32 %s17, %s24
    %s101 = sor.u32 %s99, %s100
    %p102 = scmp.eq.s32.totalorder %s101, 0
    %s104 = sadd.s32 %s103, 1
    %s105 = scalar_select %p102, %s103, %s104
    %p108 = pneg %p102
    %p109 = scmp.eq.s32.totalorder %s9, 1
    %p110 = por %p108, %p109
    %p111 = scmp.ne.s32.totalorder %s103, %s106
    %p112 = scmp.eq.s32.totalorder %s9, 0
    %p113 = por %p111, %p112
    %p114 = scmp.ne.s32.totalorder %s103, %s106
    %p115 = scmp.eq.s32.totalorder %s14, 1
    %p116 = por %p114, %p115
    %p117 = scmp.ne.s32.totalorder %s106, %s107
    %p118 = scmp.eq.s32.totalorder %s14, 0
    %p119 = por %p117, %p118
    %p120 = scmp.ne.s32.totalorder %s106, %s107
    %p121 = scmp.eq.s32.totalorder %s15, 1
    %p122 = por %p120, %p121
    %p124 = scmp.ne.s32.totalorder %s107, %s123
    %p125 = scmp.eq.s32.totalorder %s15, 0
    %p126 = por %p124, %p125
    %p127 = scmp.le.s32.totalorder 1, %s9
    %p128 = scmp.lt.s32.totalorder %s9, 3
    %p129 = pnand %p127, %p128
    %p130 = pneg %p129
    // Predicated region
    $region9: #{resnet_forward.7} parent=5 // pred_check
      _
    $region10: #{resnet_forward.7} parent=5 // pred_check_branch
      %132 = sbr.rel (%p129) target = $region12
    $region11: #{resnet_forward.7} parent=5 // pred_region
      %s133 = ssub.s32 %s9, 1
      // Predicated region
      $region13: #{resnet_forward.7} parent=11 // pred_check
        %p134 = pneg %p70
      $region14: #{resnet_forward.7} parent=11 // pred_check_branch
        %136 = sbr.rel (%p134) target = $region16
      $region15: #{resnet_forward.7} parent=11 // pred_region
        _
      $region16: #{resnet_forward.7} parent=11 // pred_fallthru
        _
      // Predicated region
      $region17: #{resnet_forward.7} parent=11 // pred_check
        %p137 = pneg %p91
      $region18: #{resnet_forward.7} parent=11 // pred_check_branch
        %139 = sbr.rel (%p137) target = $region20
      $region19: #{resnet_forward.7} parent=11 // pred_region
        _
      $region20: #{resnet_forward.7} parent=11 // pred_fallthru
        _
    $region12: #{resnet_forward.7} parent=5 // pred_fallthru
      _
    %p140 = scmp.lt.s32.totalorder %s9, 2
    // Predicated region
    $region21: #{resnet_forward.7} parent=5 // pred_check
      %p141 = pneg %p140
    $region22: #{resnet_forward.7} parent=5 // pred_check_branch
      %143 = sbr.rel (%p141) target = $region24
    $region23: #{resnet_forward.7} parent=5 // pred_region
      // Predicated region
      $region25: #{resnet_forward.7} parent=23 // pred_check
        %p144 = pneg %p43
      $region26: #{resnet_forward.7} parent=23 // pred_check_branch
        %146 = sbr.rel (%p144) target = $region28
      $region27: #{resnet_forward.7} parent=23 // pred_region
        %s147 = sadd.s32 %s16, %s17
        %p148 = scmp.lt.s32.totalorder %s147, 1
        %s149 = scalar_select %p148, %s147, 1
        %s150 = smul.addr %s149, 54
        %s151 = smul.addr %s150, 4
        %s152 = scalar_lea.vmem %s0, %s151
        %s153 = sadd.s32 %s16, %s17
      $region28: #{resnet_forward.7} parent=23 // pred_fallthru
        _
    $region24: #{resnet_forward.7} parent=5 // pred_fallthru
      _
    %p154 = scmp.le.s32.totalorder 1, %s9
    %p155 = scmp.lt.s32.totalorder %s9, 3
    %p156 = pnand %p154, %p155
    %p157 = pneg %p156
    // Predicated region
    $region29: #{resnet_forward.7} parent=5 // pred_check
      _
    $region30: #{resnet_forward.7} parent=5 // pred_check_branch
      %159 = sbr.rel (%p156) target = $region32
    $region31: #{resnet_forward.7} parent=5 // pred_region
      %s160 = ssub.s32 %s9, 1
      %s161 = sadd.s32 %s18, %s19
      %p162 = scmp.lt.s32.totalorder %s161, 1
      %s163 = scalar_select %p162, %s161, 1
      %s164 = smul.addr %s163, 54
      %s165 = smul.addr %s164, 4
      %s166 = scalar_lea.vmem %s0, %s165
      %p167 = pneg %p49
      %p168 = pneg %p46
      %p169 = pneg %p70
      %p170 = pneg %p67
      %p171 = pneg %p91
      %p172 = pneg %p88
      %p173 = pneg %p119
      %p174 = pneg %p116
      %s175 = smul.u32 16, %s19
      %p176 = scmp.lt.s32.totalorder %s18, 1
      %s177 = scalar_select %p176, %s18, 1
      %p178 = scmp.lt.s32.totalorder %s175, 15
      %s179 = scalar_select %p178, %s175, 15
      %s180 = smul.addr %s179, 2
      %s181 = smul.addr %s177, 32
      %s182 = sadd.s32 %s180, %s181
      %s183 = smul.addr %s182, 4
      %s184 = scalar_lea.vmem %s3, %s183
      %s185 = sadd.s32 %s18, %s19
      %p186 = scmp.lt.s32.totalorder %s185, 1
      %s187 = scalar_select %p186, %s185, 1
      %s188 = smul.addr %s187, 54
      %s189 = smul.addr %s188, 4
      %s190 = scalar_lea.vmem %s0, %s189
      %s191 = sadd.s32 %s18, %s19
      %s192 = smul.u32 16, %s19
      %p193 = scmp.lt.s32.totalorder %s18, 1
      %s194 = scalar_select %p193, %s18, 1
      %p195 = scmp.lt.s32.totalorder %s192, 15
      %s196 = scalar_select %p195, %s192, 15
      %s197 = smul.addr %s196, 2
      %s198 = smul.addr %s194, 32
      %s199 = sadd.s32 %s197, %s198
      %s200 = smul.addr %s199, 4
      %s201 = scalar_lea.vmem %s3, %s200
      %s202 = smul.u32 16, %s19
      %204 = vst [vmem:[#allocation2] sm:$0xff] 0.0
      %205 = vst [vmem:[#allocation2 + $0x8] sm:$0xff] 0.0
      %206 = vst [vmem:[#allocation2 + $0x10] sm:$0xff] 0.0
      %207 = vst [vmem:[#allocation2 + $0x18] sm:$0xff] 0.0
      %208 = vst [vmem:[#allocation2 + $0x20] sm:$0xff] 0.0
      %209 = vst [vmem:[#allocation2 + $0x28] sm:$0xff] 0.0
      %210 = vst [vmem:[#allocation2 + $0x30] sm:$0xff] 0.0
      %211 = vst [vmem:[#allocation2 + $0x38] sm:$0xff] 0.0
      %212 = vst [vmem:[#allocation2 + $0x40] sm:$0xff] 0.0
      %213 = vst [vmem:[#allocation2 + $0x48] sm:$0xff] 0.0
      %214 = vst [vmem:[#allocation2 + $0x50] sm:$0xff] 0.0
      %215 = vst [vmem:[#allocation2 + $0x58] sm:$0xff] 0.0
      %216 = vst [vmem:[#allocation2 + $0x60] sm:$0xff] 0.0
      %217 = vst [vmem:[#allocation2 + $0x68] sm:$0xff] 0.0
      %218 = vst [vmem:[#allocation2 + $0x70] sm:$0xff] 0.0
      %219 = vst [vmem:[#allocation2 + $0x78] sm:$0xff] 0.0
      %220 = vst [vmem:[#allocation2 + $0x80] sm:$0xff] 0.0
      %221 = vst [vmem:[#allocation2 + $0x88] sm:$0xff] 0.0
      %222 = vst [vmem:[#allocation2 + $0x90] sm:$0xff] 0.0
      %223 = vst [vmem:[#allocation2 + $0x98] sm:$0xff] 0.0
      %224 = vst [vmem:[#allocation2 + $0xa0] sm:$0xff] 0.0
      %225 = vst [vmem:[#allocation2 + $0xa8] sm:$0xff] 0.0
      %226 = vst [vmem:[#allocation2 + $0xb0] sm:$0xff] 0.0
      %227 = vst [vmem:[#allocation2 + $0xb8] sm:$0xff] 0.0
      %228 = vst [vmem:[#allocation2 + $0xc0] sm:$0xff] 0.0
      %229 = vst [vmem:[#allocation2 + $0xc8] sm:$0xff] 0.0
      %230 = vst [vmem:[#allocation2 + $0xd0] sm:$0xff] 0.0
      %231 = vst [vmem:[#allocation2 + $0xd8] sm:$0xff] 0.0
      %232 = vst [vmem:[#allocation2 + $0xe0] sm:$0xff] 0.0
      %233 = vst [vmem:[#allocation2 + $0xe8] sm:$0xff] 0.0
      %234 = vst [vmem:[#allocation2 + $0xf0] sm:$0xff] 0.0
      %235 = vst [vmem:[#allocation2 + $0xf8] sm:$0xff] 0.0
      %v236 = vld [vmem:[%s190] sm:$0xf]
      %v237 = vld [vmem:[%s190 + $0x4] sm:$0xf]
      %v238 = vld [vmem:[%s190 + $0xc] sm:$0xf]
      %v239 = vld [vmem:[%s190 + $0x10] sm:$0xf]
      %v240 = vld [vmem:[%s190 + $0x18] sm:$0xf]
      %v241 = vld [vmem:[%s190 + $0x1c] sm:$0xf]
      %v242 = vld [vmem:[%s190 + $0x24] sm:$0xf]
      %v243 = vld [vmem:[%s190 + $0x28] sm:$0xf]
      %v244 = vld [vmem:[%s190 + $0x30] sm:$0xf]
      %v245 = vld [vmem:[%s190 + $0x34] sm:$0xf]
      %v246 = vld [vmem:[%s190 + $0x3c] sm:$0xf]
      %v247 = vld [vmem:[%s190 + $0x40] sm:$0xf]
      %v248 = vld [vmem:[%s190 + $0x48] sm:$0xf]
      %v249 = vld [vmem:[%s190 + $0x4c] sm:$0xf]
      %v250 = vld [vmem:[%s190 + $0x54] sm:$0xf]
      %v251 = vld [vmem:[%s190 + $0x58] sm:$0xf]
      %v252 = vld [vmem:[%s190 + $0x60] sm:$0xf]
      %v253 = vld [vmem:[%s190 + $0x64] sm:$0xf]
      %v254 = vld [vmem:[%s190 + $0x6c] sm:$0xf]
      %v255 = vld [vmem:[%s190 + $0x70] sm:$0xf]
      %v256 = vld [vmem:[%s190 + $0x78] sm:$0xf]
      %v257 = vld [vmem:[%s190 + $0x7c] sm:$0xf]
      %v258 = vld [vmem:[%s190 + $0x84] sm:$0xf]
      %v259 = vld [vmem:[%s190 + $0x88] sm:$0xf]
      %v260 = vld [vmem:[%s190 + $0x90] sm:$0xf]
      %v261 = vld [vmem:[%s190 + $0x94] sm:$0xf]
      %v262 = vld [vmem:[%s190 + $0x9c] sm:$0xf]
      %v263 = vld [vmem:[%s190 + $0xa0] sm:$0xf]
      %v264 = vld [vmem:[%s190 + $0xa8] sm:$0xf]
      %v265 = vld [vmem:[%s190 + $0xac] sm:$0xf]
      %v266 = vld [vmem:[%s190 + $0xb4] sm:$0xf]
      %v267 = vld [vmem:[%s190 + $0xb8] sm:$0xf]
      %v268 = vld [vmem:[#allocation2] sm:$0xff]
      %v269 = vld [vmem:[#allocation2 + $0x8] sm:$0xff]
      %v270 = vld [vmem:[#allocation2 + $0x10] sm:$0xff]
      %v271 = vld [vmem:[#allocation2 + $0x18] sm:$0xff]
      %v272 = vld [vmem:[#allocation2 + $0x20] sm:$0xff]
      %v273 = vld [vmem:[#allocation2 + $0x28] sm:$0xff]
      %v274 = vld [vmem:[#allocation2 + $0x30] sm:$0xff]
      %v275 = vld [vmem:[#allocation2 + $0x38] sm:$0xff]
      %v276 = vld [vmem:[#allocation2 + $0x40] sm:$0xff]
      %v277 = vld [vmem:[#allocation2 + $0x48] sm:$0xff]
      %v278 = vld [vmem:[#allocation2 + $0x50] sm:$0xff]
      %v279 = vld [vmem:[#allocation2 + $0x58] sm:$0xff]
      %v280 = vld [vmem:[#allocation2 + $0x60] sm:$0xff]
      %v281 = vld [vmem:[#allocation2 + $0x68] sm:$0xff]
      %v282 = vld [vmem:[#allocation2 + $0x70] sm:$0xff]
      %v283 = vld [vmem:[#allocation2 + $0x78] sm:$0xff]
      %v284 = vld [vmem:[#allocation2 + $0x80] sm:$0xff]
      %v285 = vld [vmem:[#allocation2 + $0x88] sm:$0xff]
      %v286 = vld [vmem:[#allocation2 + $0x90] sm:$0xff]
      %v287 = vld [vmem:[#allocation2 + $0x98] sm:$0xff]
      %v288 = vld [vmem:[#allocation2 + $0xa0] sm:$0xff]
      %v289 = vld [vmem:[#allocation2 + $0xa8] sm:$0xff]
      %v290 = vld [vmem:[#allocation2 + $0xb0] sm:$0xff]
      %v291 = vld [vmem:[#allocation2 + $0xb8] sm:$0xff]
      %v292 = vld [vmem:[#allocation2 + $0xc0] sm:$0xff]
      %v293 = vld [vmem:[#allocation2 + $0xc8] sm:$0xff]
      %v294 = vld [vmem:[#allocation2 + $0xd0] sm:$0xff]
      %v295 = vld [vmem:[#allocation2 + $0xd8] sm:$0xff]
      %v296 = vld [vmem:[#allocation2 + $0xe0] sm:$0xff]
      %v297 = vld [vmem:[#allocation2 + $0xe8] sm:$0xff]
      %v298 = vld [vmem:[#allocation2 + $0xf0] sm:$0xff]
      %v299 = vld [vmem:[#allocation2 + $0xf8] sm:$0xff]
      %v300 = vld [vmem:[%s1] sm:$0xf]
      %v301 = vld [vmem:[%s1 + $0x4] sm:$0xf]
      %v302 = vld [vmem:[%s1 + $0x8] sm:$0xf]
      %v303 = vld [vmem:[%s1 + $0xc] sm:$0xf]
      %v304 = vld [vmem:[%s1 + $0x10] sm:$0xf]
      %v305 = vld [vmem:[%s1 + $0x14] sm:$0xf]
      %v306 = vld [vmem:[%s1 + $0x18] sm:$0xf]
      %v307 = vld [vmem:[%s1 + $0x1c] sm:$0xf]
      %v308 = vld [vmem:[%s1 + $0x20] sm:$0xf]
      %v309 = vld [vmem:[%s1 + $0x24] sm:$0xf]
      %v310 = vld [vmem:[%s1 + $0x28] sm:$0xf]
      %v311 = vld [vmem:[%s1 + $0x2c] sm:$0xf]
      %v312 = vld [vmem:[%s1 + $0x30] sm:$0xf]
      %v313 = vld [vmem:[%s1 + $0x34] sm:$0xf]
      %v314 = vld [vmem:[%s1 + $0x38] sm:$0xf]
      %v315 = vld [vmem:[%s1 + $0x3c] sm:$0xf]
      %v348 = vunpack.c.l.b16 %v236
      %v349 = vunpack.c.l.b16 %v237
      %v350 = vunpack.c.l.b16 %v238
      %v351 = vunpack.c.l.b16 %v239
      %v352 = vunpack.c.l.b16 %v240
      %v353 = vunpack.c.l.b16 %v241
      %v354 = vunpack.c.l.b16 %v242
      %v355 = vunpack.c.l.b16 %v243
      %v356 = vunpack.c.l.b16 %v244
      %v357 = vunpack.c.l.b16 %v245
      %v358 = vunpack.c.l.b16 %v246
      %v359 = vunpack.c.l.b16 %v247
      %v360 = vunpack.c.l.b16 %v248
      %v361 = vunpack.c.l.b16 %v249
      %v362 = vunpack.c.l.b16 %v250
      %v363 = vunpack.c.l.b16 %v251
      %v364 = vunpack.c.l.b16 %v252
      %v365 = vunpack.c.l.b16 %v253
      %v366 = vunpack.c.l.b16 %v254
      %v367 = vunpack.c.l.b16 %v255
      %v368 = vunpack.c.l.b16 %v256
      %v369 = vunpack.c.l.b16 %v257
      %v370 = vunpack.c.l.b16 %v258
      %v371 = vunpack.c.l.b16 %v259
      %v372 = vunpack.c.l.b16 %v260
      %v373 = vunpack.c.l.b16 %v261
      %v374 = vunpack.c.l.b16 %v262
      %v375 = vunpack.c.l.b16 %v263
      %v376 = vunpack.c.l.b16 %v264
      %v377 = vunpack.c.l.b16 %v265
      %v378 = vunpack.c.l.b16 %v266
      %v379 = vunpack.c.l.b16 %v267
      %v380 = vpack.c.b16 %v349, %v348
      %v381 = vpack.c.b16 %v351, %v350
      %v382 = vpack.c.b16 %v353, %v352
      %v383 = vpack.c.b16 %v355, %v354
      %v384 = vpack.c.b16 %v357, %v356
      %v385 = vpack.c.b16 %v359, %v358
      %v386 = vpack.c.b16 %v361, %v360
      %v387 = vpack.c.b16 %v363, %v362
      %v388 = vpack.c.b16 %v365, %v364
      %v389 = vpack.c.b16 %v367, %v366
      %v390 = vpack.c.b16 %v369, %v368
      %v391 = vpack.c.b16 %v371, %v370
      %v392 = vpack.c.b16 %v373, %v372
      %v393 = vpack.c.b16 %v375, %v374
      %v394 = vpack.c.b16 %v377, %v376
      %v395 = vpack.c.b16 %v379, %v378
      %v428 = vunpack.c.l.b16 %v300
      %v429 = vunpack.c.l.b16 %v301
      %v430 = vunpack.c.l.b16 %v302
      %v431 = vunpack.c.l.b16 %v303
      %v432 = vunpack.c.l.b16 %v304
      %v433 = vunpack.c.l.b16 %v305
      %v434 = vunpack.c.l.b16 %v306
      %v435 = vunpack.c.l.b16 %v307
      %v436 = vunpack.c.l.b16 %v308
      %v437 = vunpack.c.l.b16 %v309
      %v438 = vunpack.c.l.b16 %v310
      %v439 = vunpack.c.l.b16 %v311
      %v440 = vunpack.c.l.b16 %v312
      %v441 = vunpack.c.l.b16 %v313
      %v442 = vunpack.c.l.b16 %v314
      %v443 = vunpack.c.l.b16 %v315
      %v444 = vpack.c.b16 %v429, %v428
      %v445 = vpack.c.b16 %v431, %v430
      %v446 = vpack.c.b16 %v433, %v432
      %v447 = vpack.c.b16 %v435, %v434
      %v448 = vpack.c.b16 %v437, %v436
      %v449 = vpack.c.b16 %v439, %v438
      %v450 = vpack.c.b16 %v441, %v440
      %v451 = vpack.c.b16 %v443, %v442
      %460 = vmatprep.subr.bf16.mxu0 0
      %461 = vmatpush1.bf16.msra.mxu0 %v451
      %462 = vmatprep.subr.bf16.mxu0 0
      %463 = vmatpush1.bf16.msra.mxu0 %v450
      %464 = vmatprep.subr.bf16.mxu0 0
      %465 = vmatpush1.bf16.msra.mxu0 %v449
      %466 = vmatprep.subr.bf16.mxu0 0
      %467 = vmatpush1.bf16.msra.mxu0 %v448
      %468 = vmatprep.subr.bf16.mxu0 0
      %469 = vmatpush1.bf16.msra.mxu0 %v447
      %470 = vmatprep.subr.bf16.mxu0 0
      %471 = vmatpush1.bf16.msra.mxu0 %v446
      %472 = vmatprep.subr.bf16.mxu0 0
      %473 = vmatpush1.bf16.msra.mxu0 %v445
      %474 = vmatprep.subr.bf16.mxu0 0
      %475 = vmatpush1.bf16.msra.mxu0 %v444
      %476 = vmatprep.subr.bf16.mxu0 0
      %477 = vmatpush2.bf16.msra.mxu0 0
      %478 = vmatprep.subr.bf16.mxu0 0
      %479 = vmatpush2.bf16.msra.mxu0 0
      %480 = vmatprep.subr.bf16.mxu0 0
      %481 = vmatpush2.bf16.msra.mxu0 0
      %482 = vmatprep.subr.bf16.mxu0 0
      %483 = vmatpush2.bf16.msra.mxu0 0
      %484 = vmatprep.subr.bf16.mxu0 0
      %485 = vmatpush2.bf16.msra.mxu0 0
      %486 = vmatprep.subr.bf16.mxu0 0
      %487 = vmatpush2.bf16.msra.mxu0 0
      %488 = vmatprep.subr.bf16.mxu0 0
      %489 = vmatpush2.bf16.msra.mxu0 0
      %490 = vmatprep.subr.bf16.mxu0 0
      %491 = vmatpush2.bf16.msra.mxu0 0
      %492 = vmatprep.mubr.bf16.mxu0 0
      %493 = vmatmul.mubr.bf16.gmra.mxu0 %v380
      %v494 = vpop.f32.mrf.mxu0
      %v495 = vadd.f32 0.0, %v494
      %v496 = vpop.f32.mrf.mxu0
      %v497 = vpop.f32.mrf.mxu0
      %v498 = vadd.f32 0.0, %v497
      %v499 = vpop.f32.mrf.mxu0
      %500 = vmatprep.mubr.bf16.mxu0 0
      %501 = vmatmul.mubr.bf16.gmra.mxu0 %v381
      %v502 = vpop.f32.mrf.mxu0
      %v503 = vadd.f32 0.0, %v502
      %v504 = vpop.f32.mrf.mxu0
      %v505 = vpop.f32.mrf.mxu0
      %v506 = vadd.f32 0.0, %v505
      %v507 = vpop.f32.mrf.mxu0
      %508 = vmatprep.mubr.bf16.mxu0 0
      %509 = vmatmul.mubr.bf16.gmra.mxu0 %v382
      %v510 = vpop.f32.mrf.mxu0
      %v511 = vadd.f32 0.0, %v510
      %v512 = vpop.f32.mrf.mxu0
      %v513 = vpop.f32.mrf.mxu0
      %v514 = vadd.f32 0.0, %v513
      %v515 = vpop.f32.mrf.mxu0
      %516 = vmatprep.mubr.bf16.mxu0 0
      %517 = vmatmul.mubr.bf16.gmra.mxu0 %v383
      %v518 = vpop.f32.mrf.mxu0
      %v519 = vadd.f32 0.0, %v518
      %v520 = vpop.f32.mrf.mxu0
      %v521 = vpop.f32.mrf.mxu0
      %v522 = vadd.f32 0.0, %v521
      %v523 = vpop.f32.mrf.mxu0
      %524 = vmatprep.mubr.bf16.mxu0 0
      %525 = vmatmul.mubr.bf16.gmra.mxu0 %v384
      %v526 = vpop.f32.mrf.mxu0
      %v527 = vadd.f32 0.0, %v526
      %v528 = vpop.f32.mrf.mxu0
      %v529 = vpop.f32.mrf.mxu0
      %v530 = vadd.f32 0.0, %v529
      %v531 = vpop.f32.mrf.mxu0
      %532 = vmatprep.mubr.bf16.mxu0 0
      %533 = vmatmul.mubr.bf16.gmra.mxu0 %v385
      %v534 = vpop.f32.mrf.mxu0
      %v535 = vadd.f32 0.0, %v534
      %v536 = vpop.f32.mrf.mxu0
      %v537 = vpop.f32.mrf.mxu0
      %v538 = vadd.f32 0.0, %v537
      %v539 = vpop.f32.mrf.mxu0
      %540 = vmatprep.mubr.bf16.mxu0 0
      %541 = vmatmul.mubr.bf16.gmra.mxu0 %v386
      %v542 = vpop.f32.mrf.mxu0
      %v543 = vadd.f32 0.0, %v542
      %v544 = vpop.f32.mrf.mxu0
      %v545 = vpop.f32.mrf.mxu0
      %v546 = vadd.f32 0.0, %v545
      %v547 = vpop.f32.mrf.mxu0
      %548 = vmatprep.mubr.bf16.mxu0 0
      %549 = vmatmul.mubr.bf16.gmra.mxu0 %v387
      %v550 = vpop.f32.mrf.mxu0
      %v551 = vadd.f32 0.0, %v550
      %v552 = vpop.f32.mrf.mxu0
      %v553 = vpop.f32.mrf.mxu0
      %v554 = vadd.f32 0.0, %v553
      %v555 = vpop.f32.mrf.mxu0
      %556 = vmatprep.mubr.bf16.mxu0 0
      %557 = vmatmul.mubr.bf16.gmra.mxu0 %v388
      %v558 = vpop.f32.mrf.mxu0
      %v559 = vadd.f32 0.0, %v558
      %v560 = vpop.f32.mrf.mxu0
      %v561 = vpop.f32.mrf.mxu0
      %v562 = vadd.f32 0.0, %v561
      %v563 = vpop.f32.mrf.mxu0
      %564 = vmatprep.mubr.bf16.mxu0 0
      %565 = vmatmul.mubr.bf16.gmra.mxu0 %v389
      %v566 = vpop.f32.mrf.mxu0
      %v567 = vadd.f32 0.0, %v566
      %v568 = vpop.f32.mrf.mxu0
      %v569 = vpop.f32.mrf.mxu0
      %v570 = vadd.f32 0.0, %v569
      %v571 = vpop.f32.mrf.mxu0
      %572 = vmatprep.mubr.bf16.mxu0 0
      %573 = vmatmul.mubr.bf16.gmra.mxu0 %v390
      %v574 = vpop.f32.mrf.mxu0
      %v575 = vadd.f32 0.0, %v574
      %v576 = vpop.f32.mrf.mxu0
      %v577 = vpop.f32.mrf.mxu0
      %v578 = vadd.f32 0.0, %v577
      %v579 = vpop.f32.mrf.mxu0
      %580 = vmatprep.mubr.bf16.mxu0 0
      %581 = vmatmul.mubr.bf16.gmra.mxu0 %v391
      %v582 = vpop.f32.mrf.mxu0
      %v583 = vadd.f32 0.0, %v582
      %v584 = vpop.f32.mrf.mxu0
      %v585 = vpop.f32.mrf.mxu0
      %v586 = vadd.f32 0.0, %v585
      %v587 = vpop.f32.mrf.mxu0
      %588 = vmatprep.mubr.bf16.mxu0 0
      %589 = vmatmul.mubr.bf16.gmra.mxu0 %v392
      %v590 = vpop.f32.mrf.mxu0
      %v591 = vadd.f32 0.0, %v590
      %v592 = vpop.f32.mrf.mxu0
      %v593 = vpop.f32.mrf.mxu0
      %v594 = vadd.f32 0.0, %v593
      %v595 = vpop.f32.mrf.mxu0
      %596 = vmatprep.mubr.bf16.mxu0 0
      %597 = vmatmul.mubr.bf16.gmra.mxu0 %v393
      %v598 = vpop.f32.mrf.mxu0
      %v599 = vadd.f32 0.0, %v598
      %v600 = vpop.f32.mrf.mxu0
      %v601 = vpop.f32.mrf.mxu0
      %v602 = vadd.f32 0.0, %v601
      %v603 = vpop.f32.mrf.mxu0
      %604 = vmatprep.mubr.bf16.mxu0 0
      %605 = vmatmul.mubr.bf16.gmra.mxu0 %v394
      %v606 = vpop.f32.mrf.mxu0
      %v607 = vadd.f32 0.0, %v606
      %v608 = vpop.f32.mrf.mxu0
      %v609 = vpop.f32.mrf.mxu0
      %v610 = vadd.f32 0.0, %v609
      %v611 = vpop.f32.mrf.mxu0
      %612 = vmatprep.mubr.bf16.mxu0 0
      %613 = vmatmul.mubr.bf16.gmra.mxu0 %v395
      %v614 = vpop.f32.mrf.mxu0
      %v615 = vadd.f32 0.0, %v614
      %v616 = vpop.f32.mrf.mxu0
      %v617 = vpop.f32.mrf.mxu0
      %v618 = vadd.f32 0.0, %v617
      %v619 = vpop.f32.mrf.mxu0
      %620 = vdwg.mxu0
      %v621 = vadd.f32 %v268, %v495
      %v622 = vadd.f32 %v269, %v498
      %v623 = vadd.f32 %v270, %v503
      %v624 = vadd.f32 %v271, %v506
      %v625 = vadd.f32 %v272, %v511
      %v626 = vadd.f32 %v273, %v514
      %v627 = vadd.f32 %v274, %v519
      %v628 = vadd.f32 %v275, %v522
      %v629 = vadd.f32 %v276, %v527
      %v630 = vadd.f32 %v277, %v530
      %v631 = vadd.f32 %v278, %v535
      %v632 = vadd.f32 %v279, %v538
      %v633 = vadd.f32 %v280, %v543
      %v634 = vadd.f32 %v281, %v546
      %v635 = vadd.f32 %v282, %v551
      %v636 = vadd.f32 %v283, %v554
      %v637 = vadd.f32 %v284, %v559
      %v638 = vadd.f32 %v285, %v562
      %v639 = vadd.f32 %v286, %v567
      %v640 = vadd.f32 %v287, %v570
      %v641 = vadd.f32 %v288, %v575
      %v642 = vadd.f32 %v289, %v578
      %v643 = vadd.f32 %v290, %v583
      %v644 = vadd.f32 %v291, %v586
      %v645 = vadd.f32 %v292, %v591
      %v646 = vadd.f32 %v293, %v594
      %v647 = vadd.f32 %v294, %v599
      %v648 = vadd.f32 %v295, %v602
      %v649 = vadd.f32 %v296, %v607
      %v650 = vadd.f32 %v297, %v610
      %v651 = vadd.f32 %v298, %v615
      %v652 = vadd.f32 %v299, %v618
      %653 = vst [vmem:[#allocation2] sm:$0xff] %v621
      %654 = vst [vmem:[#allocation2 + $0x8] sm:$0xff] %v622
      %655 = vst [vmem:[#allocation2 + $0x10] sm:$0xff] %v623
      %656 = vst [vmem:[#allocation2 + $0x18] sm:$0xff] %v624
      %657 = vst [vmem:[#allocation2 + $0x20] sm:$0xff] %v625
      %658 = vst [vmem:[#allocation2 + $0x28] sm:$0xff] %v626
      %659 = vst [vmem:[#allocation2 + $0x30] sm:$0xff] %v627
      %660 = vst [vmem:[#allocation2 + $0x38] sm:$0xff] %v628
      %661 = vst [vmem:[#allocation2 + $0x40] sm:$0xff] %v629
      %662 = vst [vmem:[#allocation2 + $0x48] sm:$0xff] %v630
      %663 = vst [vmem:[#allocation2 + $0x50] sm:$0xff] %v631
      %664 = vst [vmem:[#allocation2 + $0x58] sm:$0xff] %v632
      %665 = vst [vmem:[#allocation2 + $0x60] sm:$0xff] %v633
      %666 = vst [vmem:[#allocation2 + $0x68] sm:$0xff] %v634
      %667 = vst [vmem:[#allocation2 + $0x70] sm:$0xff] %v635
      %668 = vst [vmem:[#allocation2 + $0x78] sm:$0xff] %v636
      %669 = vst [vmem:[#allocation2 + $0x80] sm:$0xff] %v637
      %670 = vst [vmem:[#allocation2 + $0x88] sm:$0xff] %v638
      %671 = vst [vmem:[#allocation2 + $0x90] sm:$0xff] %v639
      %672 = vst [vmem:[#allocation2 + $0x98] sm:$0xff] %v640
      %673 = vst [vmem:[#allocation2 + $0xa0] sm:$0xff] %v641
      %674 = vst [vmem:[#allocation2 + $0xa8] sm:$0xff] %v642
      %675 = vst [vmem:[#allocation2 + $0xb0] sm:$0xff] %v643
      %676 = vst [vmem:[#allocation2 + $0xb8] sm:$0xff] %v644
      %677 = vst [vmem:[#allocation2 + $0xc0] sm:$0xff] %v645
      %678 = vst [vmem:[#allocation2 + $0xc8] sm:$0xff] %v646
      %679 = vst [vmem:[#allocation2 + $0xd0] sm:$0xff] %v647
      %680 = vst [vmem:[#allocation2 + $0xd8] sm:$0xff] %v648
      %681 = vst [vmem:[#allocation2 + $0xe0] sm:$0xff] %v649
      %682 = vst [vmem:[#allocation2 + $0xe8] sm:$0xff] %v650
      %683 = vst [vmem:[#allocation2 + $0xf0] sm:$0xff] %v651
      %684 = vst [vmem:[#allocation2 + $0xf8] sm:$0xff] %v652
      %v685 = vld [vmem:[%s190] sm:$0xf]
      %v686 = vld [vmem:[%s190 + $0x4] sm:$0xf]
      %v687 = vld [vmem:[%s190 + $0x8] sm:$0x1]
      %v688 = vld [vmem:[%s190 + $0xc] sm:$0xf]
      %v689 = vld [vmem:[%s190 + $0x10] sm:$0xf]
      %v690 = vld [vmem:[%s190 + $0x14] sm:$0x1]
      %v691 = vld [vmem:[%s190 + $0x18] sm:$0xf]
      %v692 = vld [vmem:[%s190 + $0x1c] sm:$0xf]
      %v693 = vld [vmem:[%s190 + $0x20] sm:$0x1]
      %v694 = vld [vmem:[%s190 + $0x24] sm:$0xf]
      %v695 = vld [vmem:[%s190 + $0x28] sm:$0xf]
      %v696 = vld [vmem:[%s190 + $0x2c] sm:$0x1]
      %v697 = vld [vmem:[%s190 + $0x30] sm:$0xf]
      %v698 = vld [vmem:[%s190 + $0x34] sm:$0xf]
      %v699 = vld [vmem:[%s190 + $0x38] sm:$0x1]
      %v700 = vld [vmem:[%s190 + $0x3c] sm:$0xf]
      %v701 = vld [vmem:[%s190 + $0x40] sm:$0xf]
      %v702 = vld [vmem:[%s190 + $0x44] sm:$0x1]
      %v703 = vld [vmem:[%s190 + $0x48] sm:$0xf]
      %v704 = vld [vmem:[%s190 + $0x4c] sm:$0xf]
      %v705 = vld [vmem:[%s190 + $0x50] sm:$0x1]
      %v706 = vld [vmem:[%s190 + $0x54] sm:$0xf]
      %v707 = vld [vmem:[%s190 + $0x58] sm:$0xf]
      %v708 = vld [vmem:[%s190 + $0x5c] sm:$0x1]
      %v709 = vld [vmem:[%s190 + $0x60] sm:$0xf]
      %v710 = vld [vmem:[%s190 + $0x64] sm:$0xf]
      %v711 = vld [vmem:[%s190 + $0x68] sm:$0x1]
      %v712 = vld [vmem:[%s190 + $0x6c] sm:$0xf]
      %v713 = vld [vmem:[%s190 + $0x70] sm:$0xf]
      %v714 = vld [vmem:[%s190 + $0x74] sm:$0x1]
      %v715 = vld [vmem:[%s190 + $0x78] sm:$0xf]
      %v716 = vld [vmem:[%s190 + $0x7c] sm:$0xf]
      %v717 = vld [vmem:[%s190 + $0x80] sm:$0x1]
      %v718 = vld [vmem:[%s190 + $0x84] sm:$0xf]
      %v719 = vld [vmem:[%s190 + $0x88] sm:$0xf]
      %v720 = vld [vmem:[%s190 + $0x8c] sm:$0x1]
      %v721 = vld [vmem:[%s190 + $0x90] sm:$0xf]
      %v722 = vld [vmem:[%s190 + $0x94] sm:$0xf]
      %v723 = vld [vmem:[%s190 + $0x98] sm:$0x1]
      %v724 = vld [vmem:[%s190 + $0x9c] sm:$0xf]
      %v725 = vld [vmem:[%s190 + $0xa0] sm:$0xf]
      %v726 = vld [vmem:[%s190 + $0xa4] sm:$0x1]
      %v727 = vld [vmem:[%s190 + $0xa8] sm:$0xf]
      %v728 = vld [vmem:[%s190 + $0xac] sm:$0xf]
      %v729 = vld [vmem:[%s190 + $0xb0] sm:$0x1]
      %v730 = vld [vmem:[%s190 + $0xb4] sm:$0xf]
      %v731 = vld [vmem:[%s190 + $0xb8] sm:$0xf]
      %v732 = vld [vmem:[%s190 + $0xbc] sm:$0x1]
      %v733 = vld [vmem:[#allocation2] sm:$0xff]
      %v734 = vld [vmem:[#allocation2 + $0x8] sm:$0xff]
      %v735 = vld [vmem:[#allocation2 + $0x10] sm:$0xff]
      %v736 = vld [vmem:[#allocation2 + $0x18] sm:$0xff]
      %v737 = vld [vmem:[#allocation2 + $0x20] sm:$0xff]
      %v738 = vld [vmem:[#allocation2 + $0x28] sm:$0xff]
      %v739 = vld [vmem:[#allocation2 + $0x30] sm:$0xff]
      %v740 = vld [vmem:[#allocation2 + $0x38] sm:$0xff]
      %v741 = vld [vmem:[#allocation2 + $0x40] sm:$0xff]
      %v742 = vld [vmem:[#allocation2 + $0x48] sm:$0xff]
      %v743 = vld [vmem:[#allocation2 + $0x50] sm:$0xff]
      %v744 = vld [vmem:[#allocation2 + $0x58] sm:$0xff]
      %v745 = vld [vmem:[#allocation2 + $0x60] sm:$0xff]
      %v746 = vld [vmem:[#allocation2 + $0x68] sm:$0xff]
      %v747 = vld [vmem:[#allocation2 + $0x70] sm:$0xff]
      %v748 = vld [vmem:[#allocation2 + $0x78] sm:$0xff]
      %v749 = vld [vmem:[#allocation2 + $0x80] sm:$0xff]
      %v750 = vld [vmem:[#allocation2 + $0x88] sm:$0xff]
      %v751 = vld [vmem:[#allocation2 + $0x90] sm:$0xff]
      %v752 = vld [vmem:[#allocation2 + $0x98] sm:$0xff]
      %v753 = vld [vmem:[#allocation2 + $0xa0] sm:$0xff]
      %v754 = vld [vmem:[#allocation2 + $0xa8] sm:$0xff]
      %v755 = vld [vmem:[#allocation2 + $0xb0] sm:$0xff]
      %v756 = vld [vmem:[#allocation2 + $0xb8] sm:$0xff]
      %v757 = vld [vmem:[#allocation2 + $0xc0] sm:$0xff]
      %v758 = vld [vmem:[#allocation2 + $0xc8] sm:$0xff]
      %v759 = vld [vmem:[#allocation2 + $0xd0] sm:$0xff]
      %v760 = vld [vmem:[#allocation2 + $0xd8] sm:$0xff]
      %v761 = vld [vmem:[#allocation2 + $0xe0] sm:$0xff]
      %v762 = vld [vmem:[#allocation2 + $0xe8] sm:$0xff]
      %v763 = vld [vmem:[#allocation2 + $0xf0] sm:$0xff]
      %v764 = vld [vmem:[#allocation2 + $0xf8] sm:$0xff]
      %vm765 = vsmask.f32 3328
      %vm766 = vsmask.f32 7440
      %vm767 = vmor %vm765, %vm766
      %v769 = vshrl.u32 %v685, 16
      %v771 = vrot.slane %v769, 4
      %v772 = vshll.u32 %v685, 16
      %v774 = vrot.slane %v772, 5
      %v775 = vor.u32 %v771, %v774
      %v776 = vrot.slane %v775, 4
      %v778 = vshll.u32 %v686, 16
      %v780 = vrot.slane %v778, 5
      %v781 = vsel %vm767, %v776, %v780
      %v782 = vshrl.u32 %v686, 16
      %v784 = vrot.slane %v782, 4
      %v785 = vor.u32 %v784, %v780
      %v786 = vrot.slane %v785, 4
      %v788 = vshll.u32 %v687, 16
      %v790 = vrot.slane %v788, 5
      %v791 = vsel %vm767, %v786, %v790
      %v793 = vshrl.u32 %v688, 16
      %v795 = vrot.slane %v793, 4
      %v796 = vshll.u32 %v688, 16
      %v798 = vrot.slane %v796, 5
      %v799 = vor.u32 %v795, %v798
      %v800 = vrot.slane %v799, 4
      %v802 = vshll.u32 %v689, 16
      %v804 = vrot.slane %v802, 5
      %v805 = vsel %vm767, %v800, %v804
      %v806 = vshrl.u32 %v689, 16
      %v808 = vrot.slane %v806, 4
      %v809 = vor.u32 %v808, %v804
      %v810 = vrot.slane %v809, 4
      %v812 = vshll.u32 %v690, 16
      %v814 = vrot.slane %v812, 5
      %v815 = vsel %vm767, %v810, %v814
      %v817 = vshrl.u32 %v691, 16
      %v819 = vrot.slane %v817, 4
      %v820 = vshll.u32 %v691, 16
      %v822 = vrot.slane %v820, 5
      %v823 = vor.u32 %v819, %v822
      %v824 = vrot.slane %v823, 4
      %v826 = vshll.u32 %v692, 16
      %v828 = vrot.slane %v826, 5
      %v829 = vsel %vm767, %v824, %v828
      %v830 = vshrl.u32 %v692, 16
      %v832 = vrot.slane %v830, 4
      %v833 = vor.u32 %v832, %v828
      %v834 = vrot.slane %v833, 4
      %v836 = vshll.u32 %v693, 16
      %v838 = vrot.slane %v836, 5
      %v839 = vsel %vm767, %v834, %v838
      %v841 = vshrl.u32 %v694, 16
      %v843 = vrot.slane %v841, 4
      %v844 = vshll.u32 %v694, 16
      %v846 = vrot.slane %v844, 5
      %v847 = vor.u32 %v843, %v846
      %v848 = vrot.slane %v847, 4
      %v850 = vshll.u32 %v695, 16
      %v852 = vrot.slane %v850, 5
      %v853 = vsel %vm767, %v848, %v852
      %v854 = vshrl.u32 %v695, 16
      %v856 = vrot.slane %v854, 4
      %v857 = vor.u32 %v856, %v852
      %v858 = vrot.slane %v857, 4
      %v860 = vshll.u32 %v696, 16
      %v862 = vrot.slane %v860, 5
      %v863 = vsel %vm767, %v858, %v862
      %v865 = vshrl.u32 %v697, 16
      %v867 = vrot.slane %v865, 4
      %v868 = vshll.u32 %v697, 16
      %v870 = vrot.slane %v868, 5
      %v871 = vor.u32 %v867, %v870
      %v872 = vrot.slane %v871, 4
      %v874 = vshll.u32 %v698, 16
      %v876 = vrot.slane %v874, 5
      %v877 = vsel %vm767, %v872, %v876
      %v878 = vshrl.u32 %v698, 16
      %v880 = vrot.slane %v878, 4
      %v881 = vor.u32 %v880, %v876
      %v882 = vrot.slane %v881, 4
      %v884 = vshll.u32 %v699, 16
      %v886 = vrot.slane %v884, 5
      %v887 = vsel %vm767, %v882, %v886
      %v889 = vshrl.u32 %v700, 16
      %v891 = vrot.slane %v889, 4
      %v892 = vshll.u32 %v700, 16
      %v894 = vrot.slane %v892, 5
      %v895 = vor.u32 %v891, %v894
      %v896 = vrot.slane %v895, 4
      %v898 = vshll.u32 %v701, 16
      %v900 = vrot.slane %v898, 5
      %v901 = vsel %vm767, %v896, %v900
      %v902 = vshrl.u32 %v701, 16
      %v904 = vrot.slane %v902, 4
      %v905 = vor.u32 %v904, %v900
      %v906 = vrot.slane %v905, 4
      %v908 = vshll.u32 %v702, 16
      %v910 = vrot.slane %v908, 5
      %v911 = vsel %vm767, %v906, %v910
      %v913 = vshrl.u32 %v703, 16
      %v915 = vrot.slane %v913, 4
      %v916 = vshll.u32 %v703, 16
      %v918 = vrot.slane %v916, 5
      %v919 = vor.u32 %v915, %v918
      %v920 = vrot.slane %v919, 4
      %v922 = vshll.u32 %v704, 16
      %v924 = vrot.slane %v922, 5
      %v925 = vsel %vm767, %v920, %v924
      %v926 = vshrl.u32 %v704, 16
      %v928 = vrot.slane %v926, 4
      %v929 = vor.u32 %v928, %v924
      %v930 = vrot.slane %v929, 4
      %v932 = vshll.u32 %v705, 16
      %v934 = vrot.slane %v932, 5
      %v935 = vsel %vm767, %v930, %v934
      %v937 = vshrl.u32 %v706, 16
      %v939 = vrot.slane %v937, 4
      %v940 = vshll.u32 %v706, 16
      %v942 = vrot.slane %v940, 5
      %v943 = vor.u32 %v939, %v942
      %v944 = vrot.slane %v943, 4
      %v946 = vshll.u32 %v707, 16
      %v948 = vrot.slane %v946, 5
      %v949 = vsel %vm767, %v944, %v948
      %v950 = vshrl.u32 %v707, 16
      %v952 = vrot.slane %v950, 4
      %v953 = vor.u32 %v952, %v948
      %v954 = vrot.slane %v953, 4
      %v956 = vshll.u32 %v708, 16
      %v958 = vrot.slane %v956, 5
      %v959 = vsel %vm767, %v954, %v958
      %v961 = vshrl.u32 %v709, 16
      %v963 = vrot.slane %v961, 4
      %v964 = vshll.u32 %v709, 16
      %v966 = vrot.slane %v964, 5
      %v967 = vor.u32 %v963, %v966
      %v968 = vrot.slane %v967, 4
      %v970 = vshll.u32 %v710, 16
      %v972 = vrot.slane %v970, 5
      %v973 = vsel %vm767, %v968, %v972
      %v974 = vshrl.u32 %v710, 16
      %v976 = vrot.slane %v974, 4
      %v977 = vor.u32 %v976, %v972
      %v978 = vrot.slane %v977, 4
      %v980 = vshll.u32 %v711, 16
      %v982 = vrot.slane %v980, 5
      %v983 = vsel %vm767, %v978, %v982
      %v985 = vshrl.u32 %v712, 16
      %v987 = vrot.slane %v985, 4
      %v988 = vshll.u32 %v712, 16
      %v990 = vrot.slane %v988, 5
      %v991 = vor.u32 %v987, %v990
      %v992 = vrot.slane %v991, 4
      %v994 = vshll.u32 %v713, 16
      %v996 = vrot.slane %v994, 5
      %v997 = vsel %vm767, %v992, %v996
      %v998 = vshrl.u32 %v713, 16
      %v1000 = vrot.slane %v998, 4
      %v1001 = vor.u32 %v1000, %v996
      %v1002 = vrot.slane %v1001, 4
      %v1004 = vshll.u32 %v714, 16
      %v1006 = vrot.slane %v1004, 5
      %v1007 = vsel %vm767, %v1002, %v1006
      %v1009 = vshrl.u32 %v715, 16
      %v1011 = vrot.slane %v1009, 4
      %v1012 = vshll.u32 %v715, 16
      %v1014 = vrot.slane %v1012, 5
      %v1015 = vor.u32 %v1011, %v1014
      %v1016 = vrot.slane %v1015, 4
      %v1018 = vshll.u32 %v716, 16
      %v1020 = vrot.slane %v1018, 5
      %v1021 = vsel %vm767, %v1016, %v1020
      %v1022 = vshrl.u32 %v716, 16
      %v1024 = vrot.slane %v1022, 4
      %v1025 = vor.u32 %v1024, %v1020
      %v1026 = vrot.slane %v1025, 4
      %v1028 = vshll.u32 %v717, 16
      %v1030 = vrot.slane %v1028, 5
      %v1031 = vsel %vm767, %v1026, %v1030
      %v1033 = vshrl.u32 %v718, 16
      %v1035 = vrot.slane %v1033, 4
      %v1036 = vshll.u32 %v718, 16
      %v1038 = vrot.slane %v1036, 5
      %v1039 = vor.u32 %v1035, %v1038
      %v1040 = vrot.slane %v1039, 4
      %v1042 = vshll.u32 %v719, 16
      %v1044 = vrot.slane %v1042, 5
      %v1045 = vsel %vm767, %v1040, %v1044
      %v1046 = vshrl.u32 %v719, 16
      %v1048 = vrot.slane %v1046, 4
      %v1049 = vor.u32 %v1048, %v1044
      %v1050 = vrot.slane %v1049, 4
      %v1052 = vshll.u32 %v720, 16
      %v1054 = vrot.slane %v1052, 5
      %v1055 = vsel %vm767, %v1050, %v1054
      %v1057 = vshrl.u32 %v721, 16
      %v1059 = vrot.slane %v1057, 4
      %v1060 = vshll.u32 %v721, 16
      %v1062 = vrot.slane %v1060, 5
      %v1063 = vor.u32 %v1059, %v1062
      %v1064 = vrot.slane %v1063, 4
      %v1066 = vshll.u32 %v722, 16
      %v1068 = vrot.slane %v1066, 5
      %v1069 = vsel %vm767, %v1064, %v1068
      %v1070 = vshrl.u32 %v722, 16
      %v1072 = vrot.slane %v1070, 4
      %v1073 = vor.u32 %v1072, %v1068
      %v1074 = vrot.slane %v1073, 4
      %v1076 = vshll.u32 %v723, 16
      %v1078 = vrot.slane %v1076, 5
      %v1079 = vsel %vm767, %v1074, %v1078
      %v1081 = vshrl.u32 %v724, 16
      %v1083 = vrot.slane %v1081, 4
      %v1084 = vshll.u32 %v724, 16
      %v1086 = vrot.slane %v1084, 5
      %v1087 = vor.u32 %v1083, %v1086
      %v1088 = vrot.slane %v1087, 4
      %v1090 = vshll.u32 %v725, 16
      %v1092 = vrot.slane %v1090, 5
      %v1093 = vsel %vm767, %v1088, %v1092
      %v1094 = vshrl.u32 %v725, 16
      %v1096 = vrot.slane %v1094, 4
      %v1097 = vor.u32 %v1096, %v1092
      %v1098 = vrot.slane %v1097, 4
      %v1100 = vshll.u32 %v726, 16
      %v1102 = vrot.slane %v1100, 5
      %v1103 = vsel %vm767, %v1098, %v1102
      %v1105 = vshrl.u32 %v727, 16
      %v1107 = vrot.slane %v1105, 4
      %v1108 = vshll.u32 %v727, 16
      %v1110 = vrot.slane %v1108, 5
      %v1111 = vor.u32 %v1107, %v1110
      %v1112 = vrot.slane %v1111, 4
      %v1114 = vshll.u32 %v728, 16
      %v1116 = vrot.slane %v1114, 5
      %v1117 = vsel %vm767, %v1112, %v1116
      %v1118 = vshrl.u32 %v728, 16
      %v1120 = vrot.slane %v1118, 4
      %v1121 = vor.u32 %v1120, %v1116
      %v1122 = vrot.slane %v1121, 4
      %v1124 = vshll.u32 %v729, 16
      %v1126 = vrot.slane %v1124, 5
      %v1127 = vsel %vm767, %v1122, %v1126
      %v1129 = vshrl.u32 %v730, 16
      %v1131 = vrot.slane %v1129, 4
      %v1132 = vshll.u32 %v730, 16
      %v1134 = vrot.slane %v1132, 5
      %v1135 = vor.u32 %v1131, %v1134
      %v1136 = vrot.slane %v1135, 4
      %v1138 = vshll.u32 %v731, 16
      %v1140 = vrot.slane %v1138, 5
      %v1141 = vsel %vm767, %v1136, %v1140
      %v1142 = vshrl.u32 %v731, 16
      %v1144 = vrot.slane %v1142, 4
      %v1145 = vor.u32 %v1144, %v1140
      %v1146 = vrot.slane %v1145, 4
      %v1148 = vshll.u32 %v732, 16
      %v1150 = vrot.slane %v1148, 5
      %v1151 = vsel %vm767, %v1146, %v1150
      %s1152 = scalar_lea.vmem %s1, 64
      %v1153 = vld [vmem:[%s1152] sm:$0xf]
      %v1154 = vld [vmem:[%s1152 + $0x4] sm:$0xf]
      %v1155 = vld [vmem:[%s1152 + $0x8] sm:$0xf]
      %v1156 = vld [vmem:[%s1152 + $0xc] sm:$0xf]
      %v1157 = vld [vmem:[%s1152 + $0x10] sm:$0xf]
      %v1158 = vld [vmem:[%s1152 + $0x14] sm:$0xf]
      %v1159 = vld [vmem:[%s1152 + $0x18] sm:$0xf]
      %v1160 = vld [vmem:[%s1152 + $0x1c] sm:$0xf]
      %v1161 = vld [vmem:[%s1152 + $0x20] sm:$0xf]
      %v1162 = vld [vmem:[%s1152 + $0x24] sm:$0xf]
      %v1163 = vld [vmem:[%s1152 + $0x28] sm:$0xf]
      %v1164 = vld [vmem:[%s1152 + $0x2c] sm:$0xf]
      %v1165 = vld [vmem:[%s1152 + $0x30] sm:$0xf]
      %v1166 = vld [vmem:[%s1152 + $0x34] sm:$0xf]
      %v1167 = vld [vmem:[%s1152 + $0x38] sm:$0xf]
      %v1168 = vld [vmem:[%s1152 + $0x3c] sm:$0xf]
      %v1169 = vunpack.c.l.b16 %v781
      %v1170 = vunpack.c.l.b16 %v791
      %v1171 = vunpack.c.l.b16 %v805
      %v1172 = vunpack.c.l.b16 %v815
      %v1173 = vunpack.c.l.b16 %v829
      %v1174 = vunpack.c.l.b16 %v839
      %v1175 = vunpack.c.l.b16 %v853
      %v1176 = vunpack.c.l.b16 %v863
      %v1177 = vunpack.c.l.b16 %v877
      %v1178 = vunpack.c.l.b16 %v887
      %v1179 = vunpack.c.l.b16 %v901
      %v1180 = vunpack.c.l.b16 %v911
      %v1181 = vunpack.c.l.b16 %v925
      %v1182 = vunpack.c.l.b16 %v935
      %v1183 = vunpack.c.l.b16 %v949
      %v1184 = vunpack.c.l.b16 %v959
      %v1185 = vunpack.c.l.b16 %v973
      %v1186 = vunpack.c.l.b16 %v983
      %v1187 = vunpack.c.l.b16 %v997
      %v1188 = vunpack.c.l.b16 %v1007
      %v1189 = vunpack.c.l.b16 %v1021
      %v1190 = vunpack.c.l.b16 %v1031
      %v1191 = vunpack.c.l.b16 %v1045
      %v1192 = vunpack.c.l.b16 %v1055
      %v1193 = vunpack.c.l.b16 %v1069
      %v1194 = vunpack.c.l.b16 %v1079
      %v1195 = vunpack.c.l.b16 %v1093
      %v1196 = vunpack.c.l.b16 %v1103
      %v1197 = vunpack.c.l.b16 %v1117
      %v1198 = vunpack.c.l.b16 %v1127
      %v1199 = vunpack.c.l.b16 %v1141
      %v1200 = vunpack.c.l.b16 %v1151
      %v1201 = vpack.c.b16 %v1170, %v1169
      %v1202 = vpack.c.b16 %v1172, %v1171
      %v1203 = vpack.c.b16 %v1174, %v1173
      %v1204 = vpack.c.b16 %v1176, %v1175
      %v1205 = vpack.c.b16 %v1178, %v1177
      %v1206 = vpack.c.b16 %v1180, %v1179
      %v1207 = vpack.c.b16 %v1182, %v1181
      %v1208 = vpack.c.b16 %v1184, %v1183
      %v1209 = vpack.c.b16 %v1186, %v1185
      %v1210 = vpack.c.b16 %v1188, %v1187
      %v1211 = vpack.c.b16 %v1190, %v1189
      %v1212 = vpack.c.b16 %v1192, %v1191
      %v1213 = vpack.c.b16 %v1194, %v1193
      %v1214 = vpack.c.b16 %v1196, %v1195
      %v1215 = vpack.c.b16 %v1198, %v1197
      %v1216 = vpack.c.b16 %v1200, %v1199
      %v1249 = vunpack.c.l.b16 %v1153
      %v1250 = vunpack.c.l.b16 %v1154
      %v1251 = vunpack.c.l.b16 %v1155
      %v1252 = vunpack.c.l.b16 %v1156
      %v1253 = vunpack.c.l.b16 %v1157
      %v1254 = vunpack.c.l.b16 %v1158
      %v1255 = vunpack.c.l.b16 %v1159
      %v1256 = vunpack.c.l.b16 %v1160
      %v1257 = vunpack.c.l.b16 %v1161
      %v1258 = vunpack.c.l.b16 %v1162
      %v1259 = vunpack.c.l.b16 %v1163
      %v1260 = vunpack.c.l.b16 %v1164
      %v1261 = vunpack.c.l.b16 %v1165
      %v1262 = vunpack.c.l.b16 %v1166
      %v1263 = vunpack.c.l.b16 %v1167
      %v1264 = vunpack.c.l.b16 %v1168
      %v1265 = vpack.c.b16 %v1250, %v1249
      %v1266 = vpack.c.b16 %v1252, %v1251
      %v1267 = vpack.c.b16 %v1254, %v1253
      %v1268 = vpack.c.b16 %v1256, %v1255
      %v1269 = vpack.c.b16 %v1258, %v1257
      %v1270 = vpack.c.b16 %v1260, %v1259
      %v1271 = vpack.c.b16 %v1262, %v1261
      %v1272 = vpack.c.b16 %v1264, %v1263
      %1281 = vmatprep.subr.bf16.mxu0 0
      %1282 = vmatpush1.bf16.msra.mxu0 %v1272
      %1283 = vmatprep.subr.bf16.mxu0 0
      %1284 = vmatpush1.bf16.msra.mxu0 %v1271
      %1285 = vmatprep.subr.bf16.mxu0 0
      %1286 = vmatpush1.bf16.msra.mxu0 %v1270
      %1287 = vmatprep.subr.bf16.mxu0 0
      %1288 = vmatpush1.bf16.msra.mxu0 %v1269
      %1289 = vmatprep.subr.bf16.mxu0 0
      %1290 = vmatpush1.bf16.msra.mxu0 %v1268
      %1291 = vmatprep.subr.bf16.mxu0 0
      %1292 = vmatpush1.bf16.msra.mxu0 %v1267
      %1293 = vmatprep.subr.bf16.mxu0 0
      %1294 = vmatpush1.bf16.msra.mxu0 %v1266
      %1295 = vmatprep.subr.bf16.mxu0 0
      %1296 = vmatpush1.bf16.msra.mxu0 %v1265
      %1297 = vmatprep.subr.bf16.mxu0 0
      %1298 = vmatpush2.bf16.msra.mxu0 0
      %1299 = vmatprep.subr.bf16.mxu0 0
      %1300 = vmatpush2.bf16.msra.mxu0 0
      %1301 = vmatprep.subr.bf16.mxu0 0
      %1302 = vmatpush2.bf16.msra.mxu0 0
      %1303 = vmatprep.subr.bf16.mxu0 0
      %1304 = vmatpush2.bf16.msra.mxu0 0
      %1305 = vmatprep.subr.bf16.mxu0 0
      %1306 = vmatpush2.bf16.msra.mxu0 0
      %1307 = vmatprep.subr.bf16.mxu0 0
      %1308 = vmatpush2.bf16.msra.mxu0 0
      %1309 = vmatprep.subr.bf16.mxu0 0
      %1310 = vmatpush2.bf16.msra.mxu0 0
      %1311 = vmatprep.subr.bf16.mxu0 0
      %1312 = vmatpush2.bf16.msra.mxu0 0
      %1313 = vmatprep.mubr.bf16.mxu0 0
      %1314 = vmatmul.mubr.bf16.gmra.mxu0 %v1201
      %v1315 = vpop.f32.mrf.mxu0
      %v1316 = vadd.f32 0.0, %v1315
      %v1317 = vpop.f32.mrf.mxu0
      %v1318 = vpop.f32.mrf.mxu0
      %v1319 = vadd.f32 0.0, %v1318
      %v1320 = vpop.f32.mrf.mxu0
      %1321 = vmatprep.mubr.bf16.mxu0 0
      %1322 = vmatmul.mubr.bf16.gmra.mxu0 %v1202
      %v1323 = vpop.f32.mrf.mxu0
      %v1324 = vadd.f32 0.0, %v1323
      %v1325 = vpop.f32.mrf.mxu0
      %v1326 = vpop.f32.mrf.mxu0
      %v1327 = vadd.f32 0.0, %v1326
      %v1328 = vpop.f32.mrf.mxu0
      %1329 = vmatprep.mubr.bf16.mxu0 0
      %1330 = vmatmul.mubr.bf16.gmra.mxu0 %v1203
      %v1331 = vpop.f32.mrf.mxu0
      %v1332 = vadd.f32 0.0, %v1331
      %v1333 = vpop.f32.mrf.mxu0
      %v1334 = vpop.f32.mrf.mxu0
      %v1335 = vadd.f32 0.0, %v1334
      %v1336 = vpop.f32.mrf.mxu0
      %1337 = vmatprep.mubr.bf16.mxu0 0
      %1338 = vmatmul.mubr.bf16.gmra.mxu0 %v1204
      %v1339 = vpop.f32.mrf.mxu0
      %v1340 = vadd.f32 0.0, %v1339
      %v1341 = vpop.f32.mrf.mxu0
      %v1342 = vpop.f32.mrf.mxu0
      %v1343 = vadd.f32 0.0, %v1342
      %v1344 = vpop.f32.mrf.mxu0
      %1345 = vmatprep.mubr.bf16.mxu0 0
      %1346 = vmatmul.mubr.bf16.gmra.mxu0 %v1205
      %v1347 = vpop.f32.mrf.mxu0
      %v1348 = vadd.f32 0.0, %v1347
      %v1349 = vpop.f32.mrf.mxu0
      %v1350 = vpop.f32.mrf.mxu0
      %v1351 = vadd.f32 0.0, %v1350
      %v1352 = vpop.f32.mrf.mxu0
      %1353 = vmatprep.mubr.bf16.mxu0 0
      %1354 = vmatmul.mubr.bf16.gmra.mxu0 %v1206
      %v1355 = vpop.f32.mrf.mxu0
      %v1356 = vadd.f32 0.0, %v1355
      %v1357 = vpop.f32.mrf.mxu0
      %v1358 = vpop.f32.mrf.mxu0
      %v1359 = vadd.f32 0.0, %v1358
      %v1360 = vpop.f32.mrf.mxu0
      %1361 = vmatprep.mubr.bf16.mxu0 0
      %1362 = vmatmul.mubr.bf16.gmra.mxu0 %v1207
      %v1363 = vpop.f32.mrf.mxu0
      %v1364 = vadd.f32 0.0, %v1363
      %v1365 = vpop.f32.mrf.mxu0
      %v1366 = vpop.f32.mrf.mxu0
      %v1367 = vadd.f32 0.0, %v1366
      %v1368 = vpop.f32.mrf.mxu0
      %1369 = vmatprep.mubr.bf16.mxu0 0
      %1370 = vmatmul.mubr.bf16.gmra.mxu0 %v1208
      %v1371 = vpop.f32.mrf.mxu0
      %v1372 = vadd.f32 0.0, %v1371
      %v1373 = vpop.f32.mrf.mxu0
      %v1374 = vpop.f32.mrf.mxu0
      %v1375 = vadd.f32 0.0, %v1374
      %v1376 = vpop.f32.mrf.mxu0
      %1377 = vmatprep.mubr.bf16.mxu0 0
      %1378 = vmatmul.mubr.bf16.gmra.mxu0 %v1209
      %v1379 = vpop.f32.mrf.mxu0
      %v1380 = vadd.f32 0.0, %v1379
      %v1381 = vpop.f32.mrf.mxu0
      %v1382 = vpop.f32.mrf.mxu0
      %v1383 = vadd.f32 0.0, %v1382
      %v1384 = vpop.f32.mrf.mxu0
      %1385 = vmatprep.mubr.bf16.mxu0 0
      %1386 = vmatmul.mubr.bf16.gmra.mxu0 %v1210
      %v1387 = vpop.f32.mrf.mxu0
      %v1388 = vadd.f32 0.0, %v1387
      %v1389 = vpop.f32.mrf.mxu0
      %v1390 = vpop.f32.mrf.mxu0
      %v1391 = vadd.f32 0.0, %v1390
      %v1392 = vpop.f32.mrf.mxu0
      %1393 = vmatprep.mubr.bf16.mxu0 0
      %1394 = vmatmul.mubr.bf16.gmra.mxu0 %v1211
      %v1395 = vpop.f32.mrf.mxu0
      %v1396 = vadd.f32 0.0, %v1395
      %v1397 = vpop.f32.mrf.mxu0
      %v1398 = vpop.f32.mrf.mxu0
      %v1399 = vadd.f32 0.0, %v1398
      %v1400 = vpop.f32.mrf.mxu0
      %1401 = vmatprep.mubr.bf16.mxu0 0
      %1402 = vmatmul.mubr.bf16.gmra.mxu0 %v1212
      %v1403 = vpop.f32.mrf.mxu0
      %v1404 = vadd.f32 0.0, %v1403
      %v1405 = vpop.f32.mrf.mxu0
      %v1406 = vpop.f32.mrf.mxu0
      %v1407 = vadd.f32 0.0, %v1406
      %v1408 = vpop.f32.mrf.mxu0
      %1409 = vmatprep.mubr.bf16.mxu0 0
      %1410 = vmatmul.mubr.bf16.gmra.mxu0 %v1213
      %v1411 = vpop.f32.mrf.mxu0
      %v1412 = vadd.f32 0.0, %v1411
      %v1413 = vpop.f32.mrf.mxu0
      %v1414 = vpop.f32.mrf.mxu0
      %v1415 = vadd.f32 0.0, %v1414
      %v1416 = vpop.f32.mrf.mxu0
      %1417 = vmatprep.mubr.bf16.mxu0 0
      %1418 = vmatmul.mubr.bf16.gmra.mxu0 %v1214
      %v1419 = vpop.f32.mrf.mxu0
      %v1420 = vadd.f32 0.0, %v1419
      %v1421 = vpop.f32.mrf.mxu0
      %v1422 = vpop.f32.mrf.mxu0
      %v1423 = vadd.f32 0.0, %v1422
      %v1424 = vpop.f32.mrf.mxu0
      %1425 = vmatprep.mubr.bf16.mxu0 0
      %1426 = vmatmul.mubr.bf16.gmra.mxu0 %v1215
      %v1427 = vpop.f32.mrf.mxu0
      %v1428 = vadd.f32 0.0, %v1427
      %v1429 = vpop.f32.mrf.mxu0
      %v1430 = vpop.f32.mrf.mxu0
      %v1431 = vadd.f32 0.0, %v1430
      %v1432 = vpop.f32.mrf.mxu0
      %1433 = vmatprep.mubr.bf16.mxu0 0
      %1434 = vmatmul.mubr.bf16.gmra.mxu0 %v1216
      %v1435 = vpop.f32.mrf.mxu0
      %v1436 = vadd.f32 0.0, %v1435
      %v1437 = vpop.f32.mrf.mxu0
      %v1438 = vpop.f32.mrf.mxu0
      %v1439 = vadd.f32 0.0, %v1438
      %v1440 = vpop.f32.mrf.mxu0
      %1441 = vdwg.mxu0
      %v1442 = vadd.f32 %v733, %v1316
      %v1443 = vadd.f32 %v734, %v1319
      %v1444 = vadd.f32 %v735, %v1324
      %v1445 = vadd.f32 %v736, %v1327
      %v1446 = vadd.f32 %v737, %v1332
      %v1447 = vadd.f32 %v738, %v1335
      %v1448 = vadd.f32 %v739, %v1340
      %v1449 = vadd.f32 %v740, %v1343
      %v1450 = vadd.f32 %v741, %v1348
      %v1451 = vadd.f32 %v742, %v1351
      %v1452 = vadd.f32 %v743, %v1356
      %v1453 = vadd.f32 %v744, %v1359
      %v1454 = vadd.f32 %v745, %v1364
      %v1455 = vadd.f32 %v746, %v1367
      %v1456 = vadd.f32 %v747, %v1372
      %v1457 = vadd.f32 %v748, %v1375
      %v1458 = vadd.f32 %v749, %v1380
      %v1459 = vadd.f32 %v750, %v1383
      %v1460 = vadd.f32 %v751, %v1388
      %v1461 = vadd.f32 %v752, %v1391
      %v1462 = vadd.f32 %v753, %v1396
      %v1463 = vadd.f32 %v754, %v1399
      %v1464 = vadd.f32 %v755, %v1404
      %v1465 = vadd.f32 %v756, %v1407
      %v1466 = vadd.f32 %v757, %v1412
      %v1467 = vadd.f32 %v758, %v1415
      %v1468 = vadd.f32 %v759, %v1420
      %v1469 = vadd.f32 %v760, %v1423
      %v1470 = vadd.f32 %v761, %v1428
      %v1471 = vadd.f32 %v762, %v1431
      %v1472 = vadd.f32 %v763, %v1436
      %v1473 = vadd.f32 %v764, %v1439
      %1474 = vst [vmem:[#allocation2] sm:$0xff] %v1442
      %1475 = vst [vmem:[#allocation2 + $0x8] sm:$0xff] %v1443
      %1476 = vst [vmem:[#allocation2 + $0x10] sm:$0xff] %v1444
      %1477 = vst [vmem:[#allocation2 + $0x18] sm:$0xff] %v1445
      %1478 = vst [vmem:[#allocation2 + $0x20] sm:$0xff] %v1446
      %1479 = vst [vmem:[#allocation2 + $0x28] sm:$0xff] %v1447
      %1480 = vst [vmem:[#allocation2 + $0x30] sm:$0xff] %v1448
      %1481 = vst [vmem:[#allocation2 + $0x38] sm:$0xff] %v1449
      %1482 = vst [vmem:[#allocation2 + $0x40] sm:$0xff] %v1450
      %1483 = vst [vmem:[#allocation2 + $0x48] sm:$0xff] %v1451
      %1484 = vst [vmem:[#allocation2 + $0x50] sm:$0xff] %v1452
      %1485 = vst [vmem:[#allocation2 + $0x58] sm:$0xff] %v1453
      %1486 = vst [vmem:[#allocation2 + $0x60] sm:$0xff] %v1454
      %1487 = vst [vmem:[#allocation2 + $0x68] sm:$0xff] %v1455
      %1488 = vst [vmem:[#allocation2 + $0x70] sm:$0xff] %v1456
      %1489 = vst [vmem:[#allocation2 + $0x78] sm:$0xff] %v1457
      %1490 = vst [vmem:[#allocation2 + $0x80] sm:$0xff] %v1458
      %1491 = vst [vmem:[#allocation2 + $0x88] sm:$0xff] %v1459
      %1492 = vst [vmem:[#allocation2 + $0x90] sm:$0xff] %v1460
      %1493 = vst [vmem:[#allocation2 + $0x98] sm:$0xff] %v1461
      %1494 = vst [vmem:[#allocation2 + $0xa0] sm:$0xff] %v1462
      %1495 = vst [vmem:[#allocation2 + $0xa8] sm:$0xff] %v1463
      %1496 = vst [vmem:[#allocation2 + $0xb0] sm:$0xff] %v1464
      %1497 = vst [vmem:[#allocation2 + $0xb8] sm:$0xff] %v1465
      %1498 = vst [vmem:[#allocation2 + $0xc0] sm:$0xff] %v1466
      %1499 = vst [vmem:[#allocation2 + $0xc8] sm:$0xff] %v1467
      %1500 = vst [vmem:[#allocation2 + $0xd0] sm:$0xff] %v1468
      %1501 = vst [vmem:[#allocation2 + $0xd8] sm:$0xff] %v1469
      %1502 = vst [vmem:[#allocation2 + $0xe0] sm:$0xff] %v1470
      %1503 = vst [vmem:[#allocation2 + $0xe8] sm:$0xff] %v1471
      %1504 = vst [vmem:[#allocation2 + $0xf0] sm:$0xff] %v1472
      %1505 = vst [vmem:[#allocation2 + $0xf8] sm:$0xff] %v1473
      %v1506 = vld [vmem:[%s190] sm:$0xe]
      %v1507 = vld [vmem:[%s190 + $0x4] sm:$0xf]
      %v1508 = vld [vmem:[%s190 + $0x8] sm:$0x1]
      %v1509 = vld [vmem:[%s190 + $0xc] sm:$0xe]
      %v1510 = vld [vmem:[%s190 + $0x10] sm:$0xf]
      %v1511 = vld [vmem:[%s190 + $0x14] sm:$0x1]
      %v1512 = vld [vmem:[%s190 + $0x18] sm:$0xe]
      %v1513 = vld [vmem:[%s190 + $0x1c] sm:$0xf]
      %v1514 = vld [vmem:[%s190 + $0x20] sm:$0x1]
      %v1515 = vld [vmem:[%s190 + $0x24] sm:$0xe]
      %v1516 = vld [vmem:[%s190 + $0x28] sm:$0xf]
      %v1517 = vld [vmem:[%s190 + $0x2c] sm:$0x1]
      %v1518 = vld [vmem:[%s190 + $0x30] sm:$0xe]
      %v1519 = vld [vmem:[%s190 + $0x34] sm:$0xf]
      %v1520 = vld [vmem:[%s190 + $0x38] sm:$0x1]
      %v1521 = vld [vmem:[%s190 + $0x3c] sm:$0xe]
      %v1522 = vld [vmem:[%s190 + $0x40] sm:$0xf]
      %v1523 = vld [vmem:[%s190 + $0x44] sm:$0x1]
      %v1524 = vld [vmem:[%s190 + $0x48] sm:$0xe]
      %v1525 = vld [vmem:[%s190 + $0x4c] sm:$0xf]
      %v1526 = vld [vmem:[%s190 + $0x50] sm:$0x1]
      %v1527 = vld [vmem:[%s190 + $0x54] sm:$0xe]
      %v1528 = vld [vmem:[%s190 + $0x58] sm:$0xf]
      %v1529 = vld [vmem:[%s190 + $0x5c] sm:$0x1]
      %v1530 = vld [vmem:[%s190 + $0x60] sm:$0xe]
      %v1531 = vld [vmem:[%s190 + $0x64] sm:$0xf]
      %v1532 = vld [vmem:[%s190 + $0x68] sm:$0x1]
      %v1533 = vld [vmem:[%s190 + $0x6c] sm:$0xe]
      %v1534 = vld [vmem:[%s190 + $0x70] sm:$0xf]
      %v1535 = vld [vmem:[%s190 + $0x74] sm:$0x1]
      %v1536 = vld [vmem:[%s190 + $0x78] sm:$0xe]
      %v1537 = vld [vmem:[%s190 + $0x7c] sm:$0xf]
      %v1538 = vld [vmem:[%s190 + $0x80] sm:$0x1]
      %v1539 = vld [vmem:[%s190 + $0x84] sm:$0xe]
      %v1540 = vld [vmem:[%s190 + $0x88] sm:$0xf]
      %v1541 = vld [vmem:[%s190 + $0x8c] sm:$0x1]
      %v1542 = vld [vmem:[%s190 + $0x90] sm:$0xe]
      %v1543 = vld [vmem:[%s190 + $0x94] sm:$0xf]
      %v1544 = vld [vmem:[%s190 + $0x98] sm:$0x1]
      %v1545 = vld [vmem:[%s190 + $0x9c] sm:$0xe]
      %v1546 = vld [vmem:[%s190 + $0xa0] sm:$0xf]
      %v1547 = vld [vmem:[%s190 + $0xa4] sm:$0x1]
      %v1548 = vld [vmem:[%s190 + $0xa8] sm:$0xe]
      %v1549 = vld [vmem:[%s190 + $0xac] sm:$0xf]
      %v1550 = vld [vmem:[%s190 + $0xb0] sm:$0x1]
      %v1551 = vld [vmem:[%s190 + $0xb4] sm:$0xe]
      %v1552 = vld [vmem:[%s190 + $0xb8] sm:$0xf]
      %v1553 = vld [vmem:[%s190 + $0xbc] sm:$0x1]
      %v1554 = vld [vmem:[#allocation2] sm:$0xff]
      %v1555 = vld [vmem:[#allocation2 + $0x8] sm:$0xff]
      %v1556 = vld [vmem:[#allocation2 + $0x10] sm:$0xff]
      %v1557 = vld [vmem:[#allocation2 + $0x18] sm:$0xff]
      %v1558 = vld [vmem:[#allocation2 + $0x20] sm:$0xff]
      %v1559 = vld [vmem:[#allocation2 + $0x28] sm:$0xff]
      %v1560 = vld [vmem:[#allocation2 + $0x30] sm:$0xff]
      %v1561 = vld [vmem:[#allocation2 + $0x38] sm:$0xff]
      %v1562 = vld [vmem:[#allocation2 + $0x40] sm:$0xff]
      %v1563 = vld [vmem:[#allocation2 + $0x48] sm:$0xff]
      %v1564 = vld [vmem:[#allocation2 + $0x50] sm:$0xff]
      %v1565 = vld [vmem:[#allocation2 + $0x58] sm:$0xff]
      %v1566 = vld [vmem:[#allocation2 + $0x60] sm:$0xff]
      %v1567 = vld [vmem:[#allocation2 + $0x68] sm:$0xff]
      %v1568 = vld [vmem:[#allocation2 + $0x70] sm:$0xff]
      %v1569 = vld [vmem:[#allocation2 + $0x78] sm:$0xff]
      %v1570 = vld [vmem:[#allocation2 + $0x80] sm:$0xff]
      %v1571 = vld [vmem:[#allocation2 + $0x88] sm:$0xff]
      %v1572 = vld [vmem:[#allocation2 + $0x90] sm:$0xff]
      %v1573 = vld [vmem:[#allocation2 + $0x98] sm:$0xff]
      %v1574 = vld [vmem:[#allocation2 + $0xa0] sm:$0xff]
      %v1575 = vld [vmem:[#allocation2 + $0xa8] sm:$0xff]
      %v1576 = vld [vmem:[#allocation2 + $0xb0] sm:$0xff]
      %v1577 = vld [vmem:[#allocation2 + $0xb8] sm:$0xff]
      %v1578 = vld [vmem:[#allocation2 + $0xc0] sm:$0xff]
      %v1579 = vld [vmem:[#allocation2 + $0xc8] sm:$0xff]
      %v1580 = vld [vmem:[#allocation2 + $0xd0] sm:$0xff]
      %v1581 = vld [vmem:[#allocation2 + $0xd8] sm:$0xff]
      %v1582 = vld [vmem:[#allocation2 + $0xe0] sm:$0xff]
      %v1583 = vld [vmem:[#allocation2 + $0xe8] sm:$0xff]
      %v1584 = vld [vmem:[#allocation2 + $0xf0] sm:$0xff]
      %v1585 = vld [vmem:[#allocation2 + $0xf8] sm:$0xff]
      %vm1634 = vcmask 1042432
      %vm1635 = vcmask 1046532
      %vm1636 = vmor %vm1634, %vm1635
      %v1637 = vrot.slane %v1506, 5
      %v1638 = vrot.slane %v1637, 4
      %v1639 = vrot.slane %v1507, 5
      %v1640 = vsel %vm1636, %v1638, %v1639
      %v1641 = vrot.slane %v1639, 4
      %v1642 = vrot.slane %v1508, 5
      %v1643 = vsel %vm1636, %v1641, %v1642
      %v1644 = vrot.slane %v1509, 5
      %v1645 = vrot.slane %v1644, 4
      %v1646 = vrot.slane %v1510, 5
      %v1647 = vsel %vm1636, %v1645, %v1646
      %v1648 = vrot.slane %v1646, 4
      %v1649 = vrot.slane %v1511, 5
      %v1650 = vsel %vm1636, %v1648, %v1649
      %v1651 = vrot.slane %v1512, 5
      %v1652 = vrot.slane %v1651, 4
      %v1653 = vrot.slane %v1513, 5
      %v1654 = vsel %vm1636, %v1652, %v1653
      %v1655 = vrot.slane %v1653, 4
      %v1656 = vrot.slane %v1514, 5
      %v1657 = vsel %vm1636, %v1655, %v1656
      %v1658 = vrot.slane %v1515, 5
      %v1659 = vrot.slane %v1658, 4
      %v1660 = vrot.slane %v1516, 5
      %v1661 = vsel %vm1636, %v1659, %v1660
      %v1662 = vrot.slane %v1660, 4
      %v1663 = vrot.slane %v1517, 5
      %v1664 = vsel %vm1636, %v1662, %v1663
      %v1665 = vrot.slane %v1518, 5
      %v1666 = vrot.slane %v1665, 4
      %v1667 = vrot.slane %v1519, 5
      %v1668 = vsel %vm1636, %v1666, %v1667
      %v1669 = vrot.slane %v1667, 4
      %v1670 = vrot.slane %v1520, 5
      %v1671 = vsel %vm1636, %v1669, %v1670
      %v1672 = vrot.slane %v1521, 5
      %v1673 = vrot.slane %v1672, 4
      %v1674 = vrot.slane %v1522, 5
      %v1675 = vsel %vm1636, %v1673, %v1674
      %v1676 = vrot.slane %v1674, 4
      %v1677 = vrot.slane %v1523, 5
      %v1678 = vsel %vm1636, %v1676, %v1677
      %v1679 = vrot.slane %v1524, 5
      %v1680 = vrot.slane %v1679, 4
      %v1681 = vrot.slane %v1525, 5
      %v1682 = vsel %vm1636, %v1680, %v1681
      %v1683 = vrot.slane %v1681, 4
      %v1684 = vrot.slane %v1526, 5
      %v1685 = vsel %vm1636, %v1683, %v1684
      %v1686 = vrot.slane %v1527, 5
      %v1687 = vrot.slane %v1686, 4
      %v1688 = vrot.slane %v1528, 5
      %v1689 = vsel %vm1636, %v1687, %v1688
      %v1690 = vrot.slane %v1688, 4
      %v1691 = vrot.slane %v1529, 5
      %v1692 = vsel %vm1636, %v1690, %v1691
      %v1693 = vrot.slane %v1530, 5
      %v1694 = vrot.slane %v1693, 4
      %v1695 = vrot.slane %v1531, 5
      %v1696 = vsel %vm1636, %v1694, %v1695
      %v1697 = vrot.slane %v1695, 4
      %v1698 = vrot.slane %v1532, 5
      %v1699 = vsel %vm1636, %v1697, %v1698
      %v1700 = vrot.slane %v1533, 5
      %v1701 = vrot.slane %v1700, 4
      %v1702 = vrot.slane %v1534, 5
      %v1703 = vsel %vm1636, %v1701, %v1702
      %v1704 = vrot.slane %v1702, 4
      %v1705 = vrot.slane %v1535, 5
      %v1706 = vsel %vm1636, %v1704, %v1705
      %v1707 = vrot.slane %v1536, 5
      %v1708 = vrot.slane %v1707, 4
      %v1709 = vrot.slane %v1537, 5
      %v1710 = vsel %vm1636, %v1708, %v1709
      %v1711 = vrot.slane %v1709, 4
      %v1712 = vrot.slane %v1538, 5
      %v1713 = vsel %vm1636, %v1711, %v1712
      %v1714 = vrot.slane %v1539, 5
      %v1715 = vrot.slane %v1714, 4
      %v1716 = vrot.slane %v1540, 5
      %v1717 = vsel %vm1636, %v1715, %v1716
      %v1718 = vrot.slane %v1716, 4
      %v1719 = vrot.slane %v1541, 5
      %v1720 = vsel %vm1636, %v1718, %v1719
      %v1721 = vrot.slane %v1542, 5
      %v1722 = vrot.slane %v1721, 4
      %v1723 = vrot.slane %v1543, 5
      %v1724 = vsel %vm1636, %v1722, %v1723
      %v1725 = vrot.slane %v1723, 4
      %v1726 = vrot.slane %v1544, 5
      %v1727 = vsel %vm1636, %v1725, %v1726
      %v1728 = vrot.slane %v1545, 5
      %v1729 = vrot.slane %v1728, 4
      %v1730 = vrot.slane %v1546, 5
      %v1731 = vsel %vm1636, %v1729, %v1730
      %v1732 = vrot.slane %v1730, 4
      %v1733 = vrot.slane %v1547, 5
      %v1734 = vsel %vm1636, %v1732, %v1733
      %v1735 = vrot.slane %v1548, 5
      %v1736 = vrot.slane %v1735, 4
      %v1737 = vrot.slane %v1549, 5
      %v1738 = vsel %vm1636, %v1736, %v1737
      %v1739 = vrot.slane %v1737, 4
      %v1740 = vrot.slane %v1550, 5
      %v1741 = vsel %vm1636, %v1739, %v1740
      %v1742 = vrot.slane %v1551, 5
      %v1743 = vrot.slane %v1742, 4
      %v1744 = vrot.slane %v1552, 5
      %v1745 = vsel %vm1636, %v1743, %v1744
      %v1746 = vrot.slane %v1744, 4
      %v1747 = vrot.slane %v1553, 5
      %v1748 = vsel %vm1636, %v1746, %v1747
      %s1749 = scalar_lea.vmem %s1, 128
      %v1750 = vld [vmem:[%s1749] sm:$0xf]
      %v1751 = vld [vmem:[%s1749 + $0x4] sm:$0xf]
      %v1752 = vld [vmem:[%s1749 + $0x8] sm:$0xf]
      %v1753 = vld [vmem:[%s1749 + $0xc] sm:$0xf]
      %v1754 = vld [vmem:[%s1749 + $0x10] sm:$0xf]
      %v1755 = vld [vmem:[%s1749 + $0x14] sm:$0xf]
      %v1756 = vld [vmem:[%s1749 + $0x18] sm:$0xf]
      %v1757 = vld [vmem:[%s1749 + $0x1c] sm:$0xf]
      %v1758 = vld [vmem:[%s1749 + $0x20] sm:$0xf]
      %v1759 = vld [vmem:[%s1749 + $0x24] sm:$0xf]
      %v1760 = vld [vmem:[%s1749 + $0x28] sm:$0xf]
      %v1761 = vld [vmem:[%s1749 + $0x2c] sm:$0xf]
      %v1762 = vld [vmem:[%s1749 + $0x30] sm:$0xf]
      %v1763 = vld [vmem:[%s1749 + $0x34] sm:$0xf]
      %v1764 = vld [vmem:[%s1749 + $0x38] sm:$0xf]
      %v1765 = vld [vmem:[%s1749 + $0x3c] sm:$0xf]
      %v1766 = vunpack.c.l.b16 %v1640
      %v1767 = vunpack.c.l.b16 %v1643
      %v1768 = vunpack.c.l.b16 %v1647
      %v1769 = vunpack.c.l.b16 %v1650
      %v1770 = vunpack.c.l.b16 %v1654
      %v1771 = vunpack.c.l.b16 %v1657
      %v1772 = vunpack.c.l.b16 %v1661
      %v1773 = vunpack.c.l.b16 %v1664
      %v1774 = vunpack.c.l.b16 %v1668
      %v1775 = vunpack.c.l.b16 %v1671
      %v1776 = vunpack.c.l.b16 %v1675
      %v1777 = vunpack.c.l.b16 %v1678
      %v1778 = vunpack.c.l.b16 %v1682
      %v1779 = vunpack.c.l.b16 %v1685
      %v1780 = vunpack.c.l.b16 %v1689
      %v1781 = vunpack.c.l.b16 %v1692
      %v1782 = vunpack.c.l.b16 %v1696
      %v1783 = vunpack.c.l.b16 %v1699
      %v1784 = vunpack.c.l.b16 %v1703
      %v1785 = vunpack.c.l.b16 %v1706
      %v1786 = vunpack.c.l.b16 %v1710
      %v1787 = vunpack.c.l.b16 %v1713
      %v1788 = vunpack.c.l.b16 %v1717
      %v1789 = vunpack.c.l.b16 %v1720
      %v1790 = vunpack.c.l.b16 %v1724
      %v1791 = vunpack.c.l.b16 %v1727
      %v1792 = vunpack.c.l.b16 %v1731
      %v1793 = vunpack.c.l.b16 %v1734
      %v1794 = vunpack.c.l.b16 %v1738
      %v1795 = vunpack.c.l.b16 %v1741
      %v1796 = vunpack.c.l.b16 %v1745
      %v1797 = vunpack.c.l.b16 %v1748
      %v1798 = vpack.c.b16 %v1767, %v1766
      %v1799 = vpack.c.b16 %v1769, %v1768
      %v1800 = vpack.c.b16 %v1771, %v1770
      %v1801 = vpack.c.b16 %v1773, %v1772
      %v1802 = vpack.c.b16 %v1775, %v1774
      %v1803 = vpack.c.b16 %v1777, %v1776
      %v1804 = vpack.c.b16 %v1779, %v1778
      %v1805 = vpack.c.b16 %v1781, %v1780
      %v1806 = vpack.c.b16 %v1783, %v1782
      %v1807 = vpack.c.b16 %v1785, %v1784
      %v1808 = vpack.c.b16 %v1787, %v1786
      %v1809 = vpack.c.b16 %v1789, %v1788
      %v1810 = vpack.c.b16 %v1791, %v1790
      %v1811 = vpack.c.b16 %v1793, %v1792
      %v1812 = vpack.c.b16 %v1795, %v1794
      %v1813 = vpack.c.b16 %v1797, %v1796
      %v1846 = vunpack.c.l.b16 %v1750
      %v1847 = vunpack.c.l.b16 %v1751
      %v1848 = vunpack.c.l.b16 %v1752
      %v1849 = vunpack.c.l.b16 %v1753
      %v1850 = vunpack.c.l.b16 %v1754
      %v1851 = vunpack.c.l.b16 %v1755
      %v1852 = vunpack.c.l.b16 %v1756
      %v1853 = vunpack.c.l.b16 %v1757
      %v1854 = vunpack.c.l.b16 %v1758
      %v1855 = vunpack.c.l.b16 %v1759
      %v1856 = vunpack.c.l.b16 %v1760
      %v1857 = vunpack.c.l.b16 %v1761
      %v1858 = vunpack.c.l.b16 %v1762
      %v1859 = vunpack.c.l.b16 %v1763
      %v1860 = vunpack.c.l.b16 %v1764
      %v1861 = vunpack.c.l.b16 %v1765
      %v1862 = vpack.c.b16 %v1847, %v1846
      %v1863 = vpack.c.b16 %v1849, %v1848
      %v1864 = vpack.c.b16 %v1851, %v1850
      %v1865 = vpack.c.b16 %v1853, %v1852
      %v1866 = vpack.c.b16 %v1855, %v1854
      %v1867 = vpack.c.b16 %v1857, %v1856
      %v1868 = vpack.c.b16 %v1859, %v1858
      %v1869 = vpack.c.b16 %v1861, %v1860
      %1878 = vmatprep.subr.bf16.mxu0 0
      %1879 = vmatpush1.bf16.msra.mxu0 %v1869
      %1880 = vmatprep.subr.bf16.mxu0 0
      %1881 = vmatpush1.bf16.msra.mxu0 %v1868
      %1882 = vmatprep.subr.bf16.mxu0 0
      %1883 = vmatpush1.bf16.msra.mxu0 %v1867
      %1884 = vmatprep.subr.bf16.mxu0 0
      %1885 = vmatpush1.bf16.msra.mxu0 %v1866
      %1886 = vmatprep.subr.bf16.mxu0 0
      %1887 = vmatpush1.bf16.msra.mxu0 %v1865
      %1888 = vmatprep.subr.bf16.mxu0 0
      %1889 = vmatpush1.bf16.msra.mxu0 %v1864
      %1890 = vmatprep.subr.bf16.mxu0 0
      %1891 = vmatpush1.bf16.msra.mxu0 %v1863
      %1892 = vmatprep.subr.bf16.mxu0 0
      %1893 = vmatpush1.bf16.msra.mxu0 %v1862
      %1894 = vmatprep.subr.bf16.mxu0 0
      %1895 = vmatpush2.bf16.msra.mxu0 0
      %1896 = vmatprep.subr.bf16.mxu0 0
      %1897 = vmatpush2.bf16.msra.mxu0 0
      %1898 = vmatprep.subr.bf16.mxu0 0
      %1899 = vmatpush2.bf16.msra.mxu0 0
      %1900 = vmatprep.subr.bf16.mxu0 0
      %1901 = vmatpush2.bf16.msra.mxu0 0
      %1902 = vmatprep.subr.bf16.mxu0 0
      %1903 = vmatpush2.bf16.msra.mxu0 0
      %1904 = vmatprep.subr.bf16.mxu0 0
      %1905 = vmatpush2.bf16.msra.mxu0 0
      %1906 = vmatprep.subr.bf16.mxu0 0
      %1907 = vmatpush2.bf16.msra.mxu0 0
      %1908 = vmatprep.subr.bf16.mxu0 0
      %1909 = vmatpush2.bf16.msra.mxu0 0
      %1910 = vmatprep.mubr.bf16.mxu0 0
      %1911 = vmatmul.mubr.bf16.gmra.mxu0 %v1798
      %v1912 = vpop.f32.mrf.mxu0
      %v1913 = vadd.f32 0.0, %v1912
      %v1914 = vpop.f32.mrf.mxu0
      %v1915 = vpop.f32.mrf.mxu0
      %v1916 = vadd.f32 0.0, %v1915
      %v1917 = vpop.f32.mrf.mxu0
      %1918 = vmatprep.mubr.bf16.mxu0 0
      %1919 = vmatmul.mubr.bf16.gmra.mxu0 %v1799
      %v1920 = vpop.f32.mrf.mxu0
      %v1921 = vadd.f32 0.0, %v1920
      %v1922 = vpop.f32.mrf.mxu0
      %v1923 = vpop.f32.mrf.mxu0
      %v1924 = vadd.f32 0.0, %v1923
      %v1925 = vpop.f32.mrf.mxu0
      %1926 = vmatprep.mubr.bf16.mxu0 0
      %1927 = vmatmul.mubr.bf16.gmra.mxu0 %v1800
      %v1928 = vpop.f32.mrf.mxu0
      %v1929 = vadd.f32 0.0, %v1928
      %v1930 = vpop.f32.mrf.mxu0
      %v1931 = vpop.f32.mrf.mxu0
      %v1932 = vadd.f32 0.0, %v1931
      %v1933 = vpop.f32.mrf.mxu0
      %1934 = vmatprep.mubr.bf16.mxu0 0
      %1935 = vmatmul.mubr.bf16.gmra.mxu0 %v1801
      %v1936 = vpop.f32.mrf.mxu0
      %v1937 = vadd.f32 0.0, %v1936
      %v1938 = vpop.f32.mrf.mxu0
      %v1939 = vpop.f32.mrf.mxu0
      %v1940 = vadd.f32 0.0, %v1939
      %v1941 = vpop.f32.mrf.mxu0
      %1942 = vmatprep.mubr.bf16.mxu0 0
      %1943 = vmatmul.mubr.bf16.gmra.mxu0 %v1802
      %v1944 = vpop.f32.mrf.mxu0
      %v1945 = vadd.f32 0.0, %v1944
      %v1946 = vpop.f32.mrf.mxu0
      %v1947 = vpop.f32.mrf.mxu0
      %v1948 = vadd.f32 0.0, %v1947
      %v1949 = vpop.f32.mrf.mxu0
      %1950 = vmatprep.mubr.bf16.mxu0 0
      %1951 = vmatmul.mubr.bf16.gmra.mxu0 %v1803
      %v1952 = vpop.f32.mrf.mxu0
      %v1953 = vadd.f32 0.0, %v1952
      %v1954 = vpop.f32.mrf.mxu0
      %v1955 = vpop.f32.mrf.mxu0
      %v1956 = vadd.f32 0.0, %v1955
      %v1957 = vpop.f32.mrf.mxu0
      %1958 = vmatprep.mubr.bf16.mxu0 0
      %1959 = vmatmul.mubr.bf16.gmra.mxu0 %v1804
      %v1960 = vpop.f32.mrf.mxu0
      %v1961 = vadd.f32 0.0, %v1960
      %v1962 = vpop.f32.mrf.mxu0
      %v1963 = vpop.f32.mrf.mxu0
      %v1964 = vadd.f32 0.0, %v1963
      %v1965 = vpop.f32.mrf.mxu0
      %1966 = vmatprep.mubr.bf16.mxu0 0
      %1967 = vmatmul.mubr.bf16.gmra.mxu0 %v1805
      %v1968 = vpop.f32.mrf.mxu0
      %v1969 = vadd.f32 0.0, %v1968
      %v1970 = vpop.f32.mrf.mxu0
      %v1971 = vpop.f32.mrf.mxu0
      %v1972 = vadd.f32 0.0, %v1971
      %v1973 = vpop.f32.mrf.mxu0
      %1974 = vmatprep.mubr.bf16.mxu0 0
      %1975 = vmatmul.mubr.bf16.gmra.mxu0 %v1806
      %v1976 = vpop.f32.mrf.mxu0
      %v1977 = vadd.f32 0.0, %v1976
      %v1978 = vpop.f32.mrf.mxu0
      %v1979 = vpop.f32.mrf.mxu0
      %v1980 = vadd.f32 0.0, %v1979
      %v1981 = vpop.f32.mrf.mxu0
      %1982 = vmatprep.mubr.bf16.mxu0 0
      %1983 = vmatmul.mubr.bf16.gmra.mxu0 %v1807
      %v1984 = vpop.f32.mrf.mxu0
      %v1985 = vadd.f32 0.0, %v1984
      %v1986 = vpop.f32.mrf.mxu0
      %v1987 = vpop.f32.mrf.mxu0
      %v1988 = vadd.f32 0.0, %v1987
      %v1989 = vpop.f32.mrf.mxu0
      %1990 = vmatprep.mubr.bf16.mxu0 0
      %1991 = vmatmul.mubr.bf16.gmra.mxu0 %v1808
      %v1992 = vpop.f32.mrf.mxu0
      %v1993 = vadd.f32 0.0, %v1992
      %v1994 = vpop.f32.mrf.mxu0
      %v1995 = vpop.f32.mrf.mxu0
      %v1996 = vadd.f32 0.0, %v1995
      %v1997 = vpop.f32.mrf.mxu0
      %1998 = vmatprep.mubr.bf16.mxu0 0
      %1999 = vmatmul.mubr.bf16.gmra.mxu0 %v1809
      %v2000 = vpop.f32.mrf.mxu0
      %v2001 = vadd.f32 0.0, %v2000
      %v2002 = vpop.f32.mrf.mxu0
      %v2003 = vpop.f32.mrf.mxu0
      %v2004 = vadd.f32 0.0, %v2003
      %v2005 = vpop.f32.mrf.mxu0
      %2006 = vmatprep.mubr.bf16.mxu0 0
      %2007 = vmatmul.mubr.bf16.gmra.mxu0 %v1810
      %v2008 = vpop.f32.mrf.mxu0
      %v2009 = vadd.f32 0.0, %v2008
      %v2010 = vpop.f32.mrf.mxu0
      %v2011 = vpop.f32.mrf.mxu0
      %v2012 = vadd.f32 0.0, %v2011
      %v2013 = vpop.f32.mrf.mxu0
      %2014 = vmatprep.mubr.bf16.mxu0 0
      %2015 = vmatmul.mubr.bf16.gmra.mxu0 %v1811
      %v2016 = vpop.f32.mrf.mxu0
      %v2017 = vadd.f32 0.0, %v2016
      %v2018 = vpop.f32.mrf.mxu0
      %v2019 = vpop.f32.mrf.mxu0
      %v2020 = vadd.f32 0.0, %v2019
      %v2021 = vpop.f32.mrf.mxu0
      %2022 = vmatprep.mubr.bf16.mxu0 0
      %2023 = vmatmul.mubr.bf16.gmra.mxu0 %v1812
      %v2024 = vpop.f32.mrf.mxu0
      %v2025 = vadd.f32 0.0, %v2024
      %v2026 = vpop.f32.mrf.mxu0
      %v2027 = vpop.f32.mrf.mxu0
      %v2028 = vadd.f32 0.0, %v2027
      %v2029 = vpop.f32.mrf.mxu0
      %2030 = vmatprep.mubr.bf16.mxu0 0
      %2031 = vmatmul.mubr.bf16.gmra.mxu0 %v1813
      %v2032 = vpop.f32.mrf.mxu0
      %v2033 = vadd.f32 0.0, %v2032
      %v2034 = vpop.f32.mrf.mxu0
      %v2035 = vpop.f32.mrf.mxu0
      %v2036 = vadd.f32 0.0, %v2035
      %v2037 = vpop.f32.mrf.mxu0
      %2038 = vdwg.mxu0
      %v2039 = vadd.f32 %v1554, %v1913
      %v2040 = vadd.f32 %v1555, %v1916
      %v2041 = vadd.f32 %v1556, %v1921
      %v2042 = vadd.f32 %v1557, %v1924
      %v2043 = vadd.f32 %v1558, %v1929
      %v2044 = vadd.f32 %v1559, %v1932
      %v2045 = vadd.f32 %v1560, %v1937
      %v2046 = vadd.f32 %v1561, %v1940
      %v2047 = vadd.f32 %v1562, %v1945
      %v2048 = vadd.f32 %v1563, %v1948
      %v2049 = vadd.f32 %v1564, %v1953
      %v2050 = vadd.f32 %v1565, %v1956
      %v2051 = vadd.f32 %v1566, %v1961
      %v2052 = vadd.f32 %v1567, %v1964
      %v2053 = vadd.f32 %v1568, %v1969
      %v2054 = vadd.f32 %v1569, %v1972
      %v2055 = vadd.f32 %v1570, %v1977
      %v2056 = vadd.f32 %v1571, %v1980
      %v2057 = vadd.f32 %v1572, %v1985
      %v2058 = vadd.f32 %v1573, %v1988
      %v2059 = vadd.f32 %v1574, %v1993
      %v2060 = vadd.f32 %v1575, %v1996
      %v2061 = vadd.f32 %v1576, %v2001
      %v2062 = vadd.f32 %v1577, %v2004
      %v2063 = vadd.f32 %v1578, %v2009
      %v2064 = vadd.f32 %v1579, %v2012
      %v2065 = vadd.f32 %v1580, %v2017
      %v2066 = vadd.f32 %v1581, %v2020
      %v2067 = vadd.f32 %v1582, %v2025
      %v2068 = vadd.f32 %v1583, %v2028
      %v2069 = vadd.f32 %v1584, %v2033
      %v2070 = vadd.f32 %v1585, %v2036
      %2071 = vst [vmem:[#allocation2] sm:$0xff] %v2039
      %2072 = vst [vmem:[#allocation2 + $0x8] sm:$0xff] %v2040
      %2073 = vst [vmem:[#allocation2 + $0x10] sm:$0xff] %v2041
      %2074 = vst [vmem:[#allocation2 + $0x18] sm:$0xff] %v2042
      %2075 = vst [vmem:[#allocation2 + $0x20] sm:$0xff] %v2043
      %2076 = vst [vmem:[#allocation2 + $0x28] sm:$0xff] %v2044
      %2077 = vst [vmem:[#allocation2 + $0x30] sm:$0xff] %v2045
      %2078 = vst [vmem:[#allocation2 + $0x38] sm:$0xff] %v2046
      %2079 = vst [vmem:[#allocation2 + $0x40] sm:$0xff] %v2047
      %2080 = vst [vmem:[#allocation2 + $0x48] sm:$0xff] %v2048
      %2081 = vst [vmem:[#allocation2 + $0x50] sm:$0xff] %v2049
      %2082 = vst [vmem:[#allocation2 + $0x58] sm:$0xff] %v2050
      %2083 = vst [vmem:[#allocation2 + $0x60] sm:$0xff] %v2051
      %2084 = vst [vmem:[#allocation2 + $0x68] sm:$0xff] %v2052
      %2085 = vst [vmem:[#allocation2 + $0x70] sm:$0xff] %v2053
      %2086 = vst [vmem:[#allocation2 + $0x78] sm:$0xff] %v2054
      %2087 = vst [vmem:[#allocation2 + $0x80] sm:$0xff] %v2055
      %2088 = vst [vmem:[#allocation2 + $0x88] sm:$0xff] %v2056
      %2089 = vst [vmem:[#allocation2 + $0x90] sm:$0xff] %v2057
      %2090 = vst [vmem:[#allocation2 + $0x98] sm:$0xff] %v2058
      %2091 = vst [vmem:[#allocation2 + $0xa0] sm:$0xff] %v2059
      %2092 = vst [vmem:[#allocation2 + $0xa8] sm:$0xff] %v2060
      %2093 = vst [vmem:[#allocation2 + $0xb0] sm:$0xff] %v2061
      %2094 = vst [vmem:[#allocation2 + $0xb8] sm:$0xff] %v2062
      %2095 = vst [vmem:[#allocation2 + $0xc0] sm:$0xff] %v2063
      %2096 = vst [vmem:[#allocation2 + $0xc8] sm:$0xff] %v2064
      %2097 = vst [vmem:[#allocation2 + $0xd0] sm:$0xff] %v2065
      %2098 = vst [vmem:[#allocation2 + $0xd8] sm:$0xff] %v2066
      %2099 = vst [vmem:[#allocation2 + $0xe0] sm:$0xff] %v2067
      %2100 = vst [vmem:[#allocation2 + $0xe8] sm:$0xff] %v2068
      %2101 = vst [vmem:[#allocation2 + $0xf0] sm:$0xff] %v2069
      %2102 = vst [vmem:[#allocation2 + $0xf8] sm:$0xff] %v2070
      %s2103 = scalar_lea.vmem %s190, 12
      %v2104 = vld [vmem:[%s2103] sm:$0xf]
      %v2105 = vld [vmem:[%s2103 + $0x4] sm:$0xf]
      %v2106 = vld [vmem:[%s2103 + $0xc] sm:$0xf]
      %v2107 = vld [vmem:[%s2103 + $0x10] sm:$0xf]
      %v2108 = vld [vmem:[%s2103 + $0x18] sm:$0xf]
      %v2109 = vld [vmem:[%s2103 + $0x1c] sm:$0xf]
      %v2110 = vld [vmem:[%s2103 + $0x24] sm:$0xf]
      %v2111 = vld [vmem:[%s2103 + $0x28] sm:$0xf]
      %v2112 = vld [vmem:[%s2103 + $0x30] sm:$0xf]
      %v2113 = vld [vmem:[%s2103 + $0x34] sm:$0xf]
      %v2114 = vld [vmem:[%s2103 + $0x3c] sm:$0xf]
      %v2115 = vld [vmem:[%s2103 + $0x40] sm:$0xf]
      %v2116 = vld [vmem:[%s2103 + $0x48] sm:$0xf]
      %v2117 = vld [vmem:[%s2103 + $0x4c] sm:$0xf]
      %v2118 = vld [vmem:[%s2103 + $0x54] sm:$0xf]
      %v2119 = vld [vmem:[%s2103 + $0x58] sm:$0xf]
      %v2120 = vld [vmem:[%s2103 + $0x60] sm:$0xf]
      %v2121 = vld [vmem:[%s2103 + $0x64] sm:$0xf]
      %v2122 = vld [vmem:[%s2103 + $0x6c] sm:$0xf]
      %v2123 = vld [vmem:[%s2103 + $0x70] sm:$0xf]
      %v2124 = vld [vmem:[%s2103 + $0x78] sm:$0xf]
      %v2125 = vld [vmem:[%s2103 + $0x7c] sm:$0xf]
      %v2126 = vld [vmem:[%s2103 + $0x84] sm:$0xf]
      %v2127 = vld [vmem:[%s2103 + $0x88] sm:$0xf]
      %v2128 = vld [vmem:[%s2103 + $0x90] sm:$0xf]
      %v2129 = vld [vmem:[%s2103 + $0x94] sm:$0xf]
      %v2130 = vld [vmem:[%s2103 + $0x9c] sm:$0xf]
      %v2131 = vld [vmem:[%s2103 + $0xa0] sm:$0xf]
      %v2132 = vld [vmem:[%s2103 + $0xa8] sm:$0xf]
      %v2133 = vld [vmem:[%s2103 + $0xac] sm:$0xf]
      %v2134 = vld [vmem:[%s2103 + $0xb4] sm:$0xf]
      %v2135 = vld [vmem:[%s2103 + $0xb8] sm:$0xf]
      %v2136 = vld [vmem:[#allocation2] sm:$0xff]
      %v2137 = vld [vmem:[#allocation2 + $0x8] sm:$0xff]
      %v2138 = vld [vmem:[#allocation2 + $0x10] sm:$0xff]
      %v2139 = vld [vmem:[#allocation2 + $0x18] sm:$0xff]
      %v2140 = vld [vmem:[#allocation2 + $0x20] sm:$0xff]
      %v2141 = vld [vmem:[#allocation2 + $0x28] sm:$0xff]
      %v2142 = vld [vmem:[#allocation2 + $0x30] sm:$0xff]
      %v2143 = vld [vmem:[#allocation2 + $0x38] sm:$0xff]
      %v2144 = vld [vmem:[#allocation2 + $0x40] sm:$0xff]
      %v2145 = vld [vmem:[#allocation2 + $0x48] sm:$0xff]
      %v2146 = vld [vmem:[#allocation2 + $0x50] sm:$0xff]
      %v2147 = vld [vmem:[#allocation2 + $0x58] sm:$0xff]
      %v2148 = vld [vmem:[#allocation2 + $0x60] sm:$0xff]
      %v2149 = vld [vmem:[#allocation2 + $0x68] sm:$0xff]
      %v2150 = vld [vmem:[#allocation2 + $0x70] sm:$0xff]
      %v2151 = vld [vmem:[#allocation2 + $0x78] sm:$0xff]
      %v2152 = vld [vmem:[#allocation2 + $0x80] sm:$0xff]
      %v2153 = vld [vmem:[#allocation2 + $0x88] sm:$0xff]
      %v2154 = vld [vmem:[#allocation2 + $0x90] sm:$0xff]
      %v2155 = vld [vmem:[#allocation2 + $0x98] sm:$0xff]
      %v2156 = vld [vmem:[#allocation2 + $0xa0] sm:$0xff]
      %v2157 = vld [vmem:[#allocation2 + $0xa8] sm:$0xff]
      %v2158 = vld [vmem:[#allocation2 + $0xb0] sm:$0xff]
      %v2159 = vld [vmem:[#allocation2 + $0xb8] sm:$0xff]
      %v2160 = vld [vmem:[#allocation2 + $0xc0] sm:$0xff]
      %v2161 = vld [vmem:[#allocation2 + $0xc8] sm:$0xff]
      %v2162 = vld [vmem:[#allocation2 + $0xd0] sm:$0xff]
      %v2163 = vld [vmem:[#allocation2 + $0xd8] sm:$0xff]
      %v2164 = vld [vmem:[#allocation2 + $0xe0] sm:$0xff]
      %v2165 = vld [vmem:[#allocation2 + $0xe8] sm:$0xff]
      %v2166 = vld [vmem:[#allocation2 + $0xf0] sm:$0xff]
      %v2167 = vld [vmem:[#allocation2 + $0xf8] sm:$0xff]
      %s2168 = scalar_lea.vmem %s1, 192
      %v2169 = vld [vmem:[%s2168] sm:$0xf]
      %v2170 = vld [vmem:[%s2168 + $0x4] sm:$0xf]
      %v2171 = vld [vmem:[%s2168 + $0x8] sm:$0xf]
      %v2172 = vld [vmem:[%s2168 + $0xc] sm:$0xf]
      %v2173 = vld [vmem:[%s2168 + $0x10] sm:$0xf]
      %v2174 = vld [vmem:[%s2168 + $0x14] sm:$0xf]
      %v2175 = vld [vmem:[%s2168 + $0x18] sm:$0xf]
      %v2176 = vld [vmem:[%s2168 + $0x1c] sm:$0xf]
      %v2177 = vld [vmem:[%s2168 + $0x20] sm:$0xf]
      %v2178 = vld [vmem:[%s2168 + $0x24] sm:$0xf]
      %v2179 = vld [vmem:[%s2168 + $0x28] sm:$0xf]
      %v2180 = vld [vmem:[%s2168 + $0x2c] sm:$0xf]
      %v2181 = vld [vmem:[%s2168 + $0x30] sm:$0xf]
      %v2182 = vld [vmem:[%s2168 + $0x34] sm:$0xf]
      %v2183 = vld [vmem:[%s2168 + $0x38] sm:$0xf]
      %v2184 = vld [vmem:[%s2168 + $0x3c] sm:$0xf]
      %v2217 = vunpack.c.l.b16 %v2104
      %v2218 = vunpack.c.l.b16 %v2105
      %v2219 = vunpack.c.l.b16 %v2106
      %v2220 = vunpack.c.l.b16 %v2107
      %v2221 = vunpack.c.l.b16 %v2108
      %v2222 = vunpack.c.l.b16 %v2109
      %v2223 = vunpack.c.l.b16 %v2110
      %v2224 = vunpack.c.l.b16 %v2111
      %v2225 = vunpack.c.l.b16 %v2112
      %v2226 = vunpack.c.l.b16 %v2113
      %v2227 = vunpack.c.l.b16 %v2114
      %v2228 = vunpack.c.l.b16 %v2115
      %v2229 = vunpack.c.l.b16 %v2116
      %v2230 = vunpack.c.l.b16 %v2117
      %v2231 = vunpack.c.l.b16 %v2118
      %v2232 = vunpack.c.l.b16 %v2119
      %v2233 = vunpack.c.l.b16 %v2120
      %v2234 = vunpack.c.l.b16 %v2121
      %v2235 = vunpack.c.l.b16 %v2122
      %v2236 = vunpack.c.l.b16 %v2123
      %v2237 = vunpack.c.l.b16 %v2124
      %v2238 = vunpack.c.l.b16 %v2125
      %v2239 = vunpack.c.l.b16 %v2126
      %v2240 = vunpack.c.l.b16 %v2127
      %v2241 = vunpack.c.l.b16 %v2128
      %v2242 = vunpack.c.l.b16 %v2129
      %v2243 = vunpack.c.l.b16 %v2130
      %v2244 = vunpack.c.l.b16 %v2131
      %v2245 = vunpack.c.l.b16 %v2132
      %v2246 = vunpack.c.l.b16 %v2133
      %v2247 = vunpack.c.l.b16 %v2134
      %v2248 = vunpack.c.l.b16 %v2135
      %v2249 = vpack.c.b16 %v2218, %v2217
      %v2250 = vpack.c.b16 %v2220, %v2219
      %v2251 = vpack.c.b16 %v2222, %v2221
      %v2252 = vpack.c.b16 %v2224, %v2223
      %v2253 = vpack.c.b16 %v2226, %v2225
      %v2254 = vpack.c.b16 %v2228, %v2227
      %v2255 = vpack.c.b16 %v2230, %v2229
      %v2256 = vpack.c.b16 %v2232, %v2231
      %v2257 = vpack.c.b16 %v2234, %v2233
      %v2258 = vpack.c.b16 %v2236, %v2235
      %v2259 = vpack.c.b16 %v2238, %v2237
      %v2260 = vpack.c.b16 %v2240, %v2239
      %v2261 = vpack.c.b16 %v2242, %v2241
      %v2262 = vpack.c.b16 %v2244, %v2243
      %v2263 = vpack.c.b16 %v2246, %v2245
      %v2264 = vpack.c.b16 %v2248, %v2247
      %v2297 = vunpack.c.l.b16 %v2169
      %v2298 = vunpack.c.l.b16 %v2170
      %v2299 = vunpack.c.l.b16 %v2171
      %v2300 = vunpack.c.l.b16 %v2172
      %v2301 = vunpack.c.l.b16 %v2173
      %v2302 = vunpack.c.l.b16 %v2174
      %v2303 = vunpack.c.l.b16 %v2175
      %v2304 = vunpack.c.l.b16 %v2176
      %v2305 = vunpack.c.l.b16 %v2177
      %v2306 = vunpack.c.l.b16 %v2178
      %v2307 = vunpack.c.l.b16 %v2179
      %v2308 = vunpack.c.l.b16 %v2180
      %v2309 = vunpack.c.l.b16 %v2181
      %v2310 = vunpack.c.l.b16 %v2182
      %v2311 = vunpack.c.l.b16 %v2183
      %v2312 = vunpack.c.l.b16 %v2184
      %v2313 = vpack.c.b16 %v2298, %v2297
      %v2314 = vpack.c.b16 %v2300, %v2299
      %v2315 = vpack.c.b16 %v2302, %v2301
      %v2316 = vpack.c.b16 %v2304, %v2303
      %v2317 = vpack.c.b16 %v2306, %v2305
      %v2318 = vpack.c.b16 %v2308, %v2307
      %v2319 = vpack.c.b16 %v2310, %v2309
      %v2320 = vpack.c.b16 %v2312, %v2311
      %2329 = vmatprep.subr.bf16.mxu0 0
      %2330 = vmatpush1.bf16.msra.mxu0 %v2320
      %2331 = vmatprep.subr.bf16.mxu0 0
      %2332 = vmatpush1.bf16.msra.mxu0 %v2319
      %2333 = vmatprep.subr.bf16.mxu0 0
      %2334 = vmatpush1.bf16.msra.mxu0 %v2318
      %2335 = vmatprep.subr.bf16.mxu0 0
      %2336 = vmatpush1.bf16.msra.mxu0 %v2317
      %2337 = vmatprep.subr.bf16.mxu0 0
      %2338 = vmatpush1.bf16.msra.mxu0 %v2316
      %2339 = vmatprep.subr.bf16.mxu0 0
      %2340 = vmatpush1.bf16.msra.mxu0 %v2315
      %2341 = vmatprep.subr.bf16.mxu0 0
      %2342 = vmatpush1.bf16.msra.mxu0 %v2314
      %2343 = vmatprep.subr.bf16.mxu0 0
      %2344 = vmatpush1.bf16.msra.mxu0 %v2313
      %2345 = vmatprep.subr.bf16.mxu0 0
      %2346 = vmatpush2.bf16.msra.mxu0 0
      %2347 = vmatprep.subr.bf16.mxu0 0
      %2348 = vmatpush2.bf16.msra.mxu0 0
      %2349 = vmatprep.subr.bf16.mxu0 0
      %2350 = vmatpush2.bf16.msra.mxu0 0
      %2351 = vmatprep.subr.bf16.mxu0 0
      %2352 = vmatpush2.bf16.msra.mxu0 0
      %2353 = vmatprep.subr.bf16.mxu0 0
      %2354 = vmatpush2.bf16.msra.mxu0 0
      %2355 = vmatprep.subr.bf16.mxu0 0
      %2356 = vmatpush2.bf16.msra.mxu0 0
      %2357 = vmatprep.subr.bf16.mxu0 0
      %2358 = vmatpush2.bf16.msra.mxu0 0
      %2359 = vmatprep.subr.bf16.mxu0 0
      %2360 = vmatpush2.bf16.msra.mxu0 0
      %2361 = vmatprep.mubr.bf16.mxu0 0
      %2362 = vmatmul.mubr.bf16.gmra.mxu0 %v2249
      %v2363 = vpop.f32.mrf.mxu0
      %v2364 = vadd.f32 0.0, %v2363
      %v2365 = vpop.f32.mrf.mxu0
      %v2366 = vpop.f32.mrf.mxu0
      %v2367 = vadd.f32 0.0, %v2366
      %v2368 = vpop.f32.mrf.mxu0
      %2369 = vmatprep.mubr.bf16.mxu0 0
      %2370 = vmatmul.mubr.bf16.gmra.mxu0 %v2250
      %v2371 = vpop.f32.mrf.mxu0
      %v2372 = vadd.f32 0.0, %v2371
      %v2373 = vpop.f32.mrf.mxu0
      %v2374 = vpop.f32.mrf.mxu0
      %v2375 = vadd.f32 0.0, %v2374
      %v2376 = vpop.f32.mrf.mxu0
      %2377 = vmatprep.mubr.bf16.mxu0 0
      %2378 = vmatmul.mubr.bf16.gmra.mxu0 %v2251
      %v2379 = vpop.f32.mrf.mxu0
      %v2380 = vadd.f32 0.0, %v2379
      %v2381 = vpop.f32.mrf.mxu0
      %v2382 = vpop.f32.mrf.mxu0
      %v2383 = vadd.f32 0.0, %v2382
      %v2384 = vpop.f32.mrf.mxu0
      %2385 = vmatprep.mubr.bf16.mxu0 0
      %2386 = vmatmul.mubr.bf16.gmra.mxu0 %v2252
      %v2387 = vpop.f32.mrf.mxu0
      %v2388 = vadd.f32 0.0, %v2387
      %v2389 = vpop.f32.mrf.mxu0
      %v2390 = vpop.f32.mrf.mxu0
      %v2391 = vadd.f32 0.0, %v2390
      %v2392 = vpop.f32.mrf.mxu0
      %2393 = vmatprep.mubr.bf16.mxu0 0
      %2394 = vmatmul.mubr.bf16.gmra.mxu0 %v2253
      %v2395 = vpop.f32.mrf.mxu0
      %v2396 = vadd.f32 0.0, %v2395
      %v2397 = vpop.f32.mrf.mxu0
      %v2398 = vpop.f32.mrf.mxu0
      %v2399 = vadd.f32 0.0, %v2398
      %v2400 = vpop.f32.mrf.mxu0
      %2401 = vmatprep.mubr.bf16.mxu0 0
      %2402 = vmatmul.mubr.bf16.gmra.mxu0 %v2254
      %v2403 = vpop.f32.mrf.mxu0
      %v2404 = vadd.f32 0.0, %v2403
      %v2405 = vpop.f32.mrf.mxu0
      %v2406 = vpop.f32.mrf.mxu0
      %v2407 = vadd.f32 0.0, %v2406
      %v2408 = vpop.f32.mrf.mxu0
      %2409 = vmatprep.mubr.bf16.mxu0 0
      %2410 = vmatmul.mubr.bf16.gmra.mxu0 %v2255
      %v2411 = vpop.f32.mrf.mxu0
      %v2412 = vadd.f32 0.0, %v2411
      %v2413 = vpop.f32.mrf.mxu0
      %v2414 = vpop.f32.mrf.mxu0
      %v2415 = vadd.f32 0.0, %v2414
      %v2416 = vpop.f32.mrf.mxu0
      %2417 = vmatprep.mubr.bf16.mxu0 0
      %2418 = vmatmul.mubr.bf16.gmra.mxu0 %v2256
      %v2419 = vpop.f32.mrf.mxu0
      %v2420 = vadd.f32 0.0, %v2419
      %v2421 = vpop.f32.mrf.mxu0
      %v2422 = vpop.f32.mrf.mxu0
      %v2423 = vadd.f32 0.0, %v2422
      %v2424 = vpop.f32.mrf.mxu0
      %2425 = vmatprep.mubr.bf16.mxu0 0
      %2426 = vmatmul.mubr.bf16.gmra.mxu0 %v2257
      %v2427 = vpop.f32.mrf.mxu0
      %v2428 = vadd.f32 0.0, %v2427
      %v2429 = vpop.f32.mrf.mxu0
      %v2430 = vpop.f32.mrf.mxu0
      %v2431 = vadd.f32 0.0, %v2430
      %v2432 = vpop.f32.mrf.mxu0
      %2433 = vmatprep.mubr.bf16.mxu0 0
      %2434 = vmatmul.mubr.bf16.gmra.mxu0 %v2258
      %v2435 = vpop.f32.mrf.mxu0
      %v2436 = vadd.f32 0.0, %v2435
      %v2437 = vpop.f32.mrf.mxu0
      %v2438 = vpop.f32.mrf.mxu0
      %v2439 = vadd.f32 0.0, %v2438
      %v2440 = vpop.f32.mrf.mxu0
      %2441 = vmatprep.mubr.bf16.mxu0 0
      %2442 = vmatmul.mubr.bf16.gmra.mxu0 %v2259
      %v2443 = vpop.f32.mrf.mxu0
      %v2444 = vadd.f32 0.0, %v2443
      %v2445 = vpop.f32.mrf.mxu0
      %v2446 = vpop.f32.mrf.mxu0
      %v2447 = vadd.f32 0.0, %v2446
      %v2448 = vpop.f32.mrf.mxu0
      %2449 = vmatprep.mubr.bf16.mxu0 0
      %2450 = vmatmul.mubr.bf16.gmra.mxu0 %v2260
      %v2451 = vpop.f32.mrf.mxu0
      %v2452 = vadd.f32 0.0, %v2451
      %v2453 = vpop.f32.mrf.mxu0
      %v2454 = vpop.f32.mrf.mxu0
      %v2455 = vadd.f32 0.0, %v2454
      %v2456 = vpop.f32.mrf.mxu0
      %2457 = vmatprep.mubr.bf16.mxu0 0
      %2458 = vmatmul.mubr.bf16.gmra.mxu0 %v2261
      %v2459 = vpop.f32.mrf.mxu0
      %v2460 = vadd.f32 0.0, %v2459
      %v2461 = vpop.f32.mrf.mxu0
      %v2462 = vpop.f32.mrf.mxu0
      %v2463 = vadd.f32 0.0, %v2462
      %v2464 = vpop.f32.mrf.mxu0
      %2465 = vmatprep.mubr.bf16.mxu0 0
      %2466 = vmatmul.mubr.bf16.gmra.mxu0 %v2262
      %v2467 = vpop.f32.mrf.mxu0
      %v2468 = vadd.f32 0.0, %v2467
      %v2469 = vpop.f32.mrf.mxu0
      %v2470 = vpop.f32.mrf.mxu0
      %v2471 = vadd.f32 0.0, %v2470
      %v2472 = vpop.f32.mrf.mxu0
      %2473 = vmatprep.mubr.bf16.mxu0 0
      %2474 = vmatmul.mubr.bf16.gmra.mxu0 %v2263
      %v2475 = vpop.f32.mrf.mxu0
      %v2476 = vadd.f32 0.0, %v2475
      %v2477 = vpop.f32.mrf.mxu0
      %v2478 = vpop.f32.mrf.mxu0
      %v2479 = vadd.f32 0.0, %v2478
      %v2480 = vpop.f32.mrf.mxu0
      %2481 = vmatprep.mubr.bf16.mxu0 0
      %2482 = vmatmul.mubr.bf16.gmra.mxu0 %v2264
      %v2483 = vpop.f32.mrf.mxu0
      %v2484 = vadd.f32 0.0, %v2483
      %v2485 = vpop.f32.mrf.mxu0
      %v2486 = vpop.f32.mrf.mxu0
      %v2487 = vadd.f32 0.0, %v2486
      %v2488 = vpop.f32.mrf.mxu0
      %2489 = vdwg.mxu0
      %v2490 = vadd.f32 %v2136, %v2364
      %v2491 = vadd.f32 %v2137, %v2367
      %v2492 = vadd.f32 %v2138, %v2372
      %v2493 = vadd.f32 %v2139, %v2375
      %v2494 = vadd.f32 %v2140, %v2380
      %v2495 = vadd.f32 %v2141, %v2383
      %v2496 = vadd.f32 %v2142, %v2388
      %v2497 = vadd.f32 %v2143, %v2391
      %v2498 = vadd.f32 %v2144, %v2396
      %v2499 = vadd.f32 %v2145, %v2399
      %v2500 = vadd.f32 %v2146, %v2404
      %v2501 = vadd.f32 %v2147, %v2407
      %v2502 = vadd.f32 %v2148, %v2412
      %v2503 = vadd.f32 %v2149, %v2415
      %v2504 = vadd.f32 %v2150, %v2420
      %v2505 = vadd.f32 %v2151, %v2423
      %v2506 = vadd.f32 %v2152, %v2428
      %v2507 = vadd.f32 %v2153, %v2431
      %v2508 = vadd.f32 %v2154, %v2436
      %v2509 = vadd.f32 %v2155, %v2439
      %v2510 = vadd.f32 %v2156, %v2444
      %v2511 = vadd.f32 %v2157, %v2447
      %v2512 = vadd.f32 %v2158, %v2452
      %v2513 = vadd.f32 %v2159, %v2455
      %v2514 = vadd.f32 %v2160, %v2460
      %v2515 = vadd.f32 %v2161, %v2463
      %v2516 = vadd.f32 %v2162, %v2468
      %v2517 = vadd.f32 %v2163, %v2471
      %v2518 = vadd.f32 %v2164, %v2476
      %v2519 = vadd.f32 %v2165, %v2479
      %v2520 = vadd.f32 %v2166, %v2484
      %v2521 = vadd.f32 %v2167, %v2487
      %2522 = vst [vmem:[#allocation2] sm:$0xff] %v2490
      %2523 = vst [vmem:[#allocation2 + $0x8] sm:$0xff] %v2491
      %2524 = vst [vmem:[#allocation2 + $0x10] sm:$0xff] %v2492
      %2525 = vst [vmem:[#allocation2 + $0x18] sm:$0xff] %v2493
      %2526 = vst [vmem:[#allocation2 + $0x20] sm:$0xff] %v2494
      %2527 = vst [vmem:[#allocation2 + $0x28] sm:$0xff] %v2495
      %2528 = vst [vmem:[#allocation2 + $0x30] sm:$0xff] %v2496
      %2529 = vst [vmem:[#allocation2 + $0x38] sm:$0xff] %v2497
      %2530 = vst [vmem:[#allocation2 + $0x40] sm:$0xff] %v2498
      %2531 = vst [vmem:[#allocation2 + $0x48] sm:$0xff] %v2499
      %2532 = vst [vmem:[#allocation2 + $0x50] sm:$0xff] %v2500
      %2533 = vst [vmem:[#allocation2 + $0x58] sm:$0xff] %v2501
      %2534 = vst [vmem:[#allocation2 + $0x60] sm:$0xff] %v2502
      %2535 = vst [vmem:[#allocation2 + $0x68] sm:$0xff] %v2503
      %2536 = vst [vmem:[#allocation2 + $0x70] sm:$0xff] %v2504
      %2537 = vst [vmem:[#allocation2 + $0x78] sm:$0xff] %v2505
      %2538 = vst [vmem:[#allocation2 + $0x80] sm:$0xff] %v2506
      %2539 = vst [vmem:[#allocation2 + $0x88] sm:$0xff] %v2507
      %2540 = vst [vmem:[#allocation2 + $0x90] sm:$0xff] %v2508
      %2541 = vst [vmem:[#allocation2 + $0x98] sm:$0xff] %v2509
      %2542 = vst [vmem:[#allocation2 + $0xa0] sm:$0xff] %v2510
      %2543 = vst [vmem:[#allocation2 + $0xa8] sm:$0xff] %v2511
      %2544 = vst [vmem:[#allocation2 + $0xb0] sm:$0xff] %v2512
      %2545 = vst [vmem:[#allocation2 + $0xb8] sm:$0xff] %v2513
      %2546 = vst [vmem:[#allocation2 + $0xc0] sm:$0xff] %v2514
      %2547 = vst [vmem:[#allocation2 + $0xc8] sm:$0xff] %v2515
      %2548 = vst [vmem:[#allocation2 + $0xd0] sm:$0xff] %v2516
      %2549 = vst [vmem:[#allocation2 + $0xd8] sm:$0xff] %v2517
      %2550 = vst [vmem:[#allocation2 + $0xe0] sm:$0xff] %v2518
      %2551 = vst [vmem:[#allocation2 + $0xe8] sm:$0xff] %v2519
      %2552 = vst [vmem:[#allocation2 + $0xf0] sm:$0xff] %v2520
      %2553 = vst [vmem:[#allocation2 + $0xf8] sm:$0xff] %v2521
      %v2554 = vld [vmem:[%s2103] sm:$0xf]
      %v2555 = vld [vmem:[%s2103 + $0x4] sm:$0xf]
      %v2556 = vld [vmem:[%s2103 + $0x8] sm:$0x1]
      %v2557 = vld [vmem:[%s2103 + $0xc] sm:$0xf]
      %v2558 = vld [vmem:[%s2103 + $0x10] sm:$0xf]
      %v2559 = vld [vmem:[%s2103 + $0x14] sm:$0x1]
      %v2560 = vld [vmem:[%s2103 + $0x18] sm:$0xf]
      %v2561 = vld [vmem:[%s2103 + $0x1c] sm:$0xf]
      %v2562 = vld [vmem:[%s2103 + $0x20] sm:$0x1]
      %v2563 = vld [vmem:[%s2103 + $0x24] sm:$0xf]
      %v2564 = vld [vmem:[%s2103 + $0x28] sm:$0xf]
      %v2565 = vld [vmem:[%s2103 + $0x2c] sm:$0x1]
      %v2566 = vld [vmem:[%s2103 + $0x30] sm:$0xf]
      %v2567 = vld [vmem:[%s2103 + $0x34] sm:$0xf]
      %v2568 = vld [vmem:[%s2103 + $0x38] sm:$0x1]
      %v2569 = vld [vmem:[%s2103 + $0x3c] sm:$0xf]
      %v2570 = vld [vmem:[%s2103 + $0x40] sm:$0xf]
      %v2571 = vld [vmem:[%s2103 + $0x44] sm:$0x1]
      %v2572 = vld [vmem:[%s2103 + $0x48] sm:$0xf]
      %v2573 = vld [vmem:[%s2103 + $0x4c] sm:$0xf]
      %v2574 = vld [vmem:[%s2103 + $0x50] sm:$0x1]
      %v2575 = vld [vmem:[%s2103 + $0x54] sm:$0xf]
      %v2576 = vld [vmem:[%s2103 + $0x58] sm:$0xf]
      %v2577 = vld [vmem:[%s2103 + $0x5c] sm:$0x1]
      %v2578 = vld [vmem:[%s2103 + $0x60] sm:$0xf]
      %v2579 = vld [vmem:[%s2103 + $0x64] sm:$0xf]
      %v2580 = vld [vmem:[%s2103 + $0x68] sm:$0x1]
      %v2581 = vld [vmem:[%s2103 + $0x6c] sm:$0xf]
      %v2582 = vld [vmem:[%s2103 + $0x70] sm:$0xf]
      %v2583 = vld [vmem:[%s2103 + $0x74] sm:$0x1]
      %v2584 = vld [vmem:[%s2103 + $0x78] sm:$0xf]
      %v2585 = vld [vmem:[%s2103 + $0x7c] sm:$0xf]
      %v2586 = vld [vmem:[%s2103 + $0x80] sm:$0x1]
      %v2587 = vld [vmem:[%s2103 + $0x84] sm:$0xf]
      %v2588 = vld [vmem:[%s2103 + $0x88] sm:$0xf]
      %v2589 = vld [vmem:[%s2103 + $0x8c] sm:$0x1]
      %v2590 = vld [vmem:[%s2103 + $0x90] sm:$0xf]
      %v2591 = vld [vmem:[%s2103 + $0x94] sm:$0xf]
      %v2592 = vld [vmem:[%s2103 + $0x98] sm:$0x1]
      %v2593 = vld [vmem:[%s2103 + $0x9c] sm:$0xf]
      %v2594 = vld [vmem:[%s2103 + $0xa0] sm:$0xf]
      %v2595 = vld [vmem:[%s2103 + $0xa4] sm:$0x1]
      %v2596 = vld [vmem:[%s2103 + $0xa8] sm:$0xf]
      %v2597 = vld [vmem:[%s2103 + $0xac] sm:$0xf]
      %v2598 = vld [vmem:[%s2103 + $0xb0] sm:$0x1]
      %v2599 = vld [vmem:[%s2103 + $0xb4] sm:$0xf]
      %v2600 = vld [vmem:[%s2103 + $0xb8] sm:$0xf]
      %v2601 = vld [vmem:[%s2103 + $0xbc] sm:$0x1]
      %v2602 = vld [vmem:[#allocation2] sm:$0xff]
      %v2603 = vld [vmem:[#allocation2 + $0x8] sm:$0xff]
      %v2604 = vld [vmem:[#allocation2 + $0x10] sm:$0xff]
      %v2605 = vld [vmem:[#allocation2 + $0x18] sm:$0xff]
      %v2606 = vld [vmem:[#allocation2 + $0x20] sm:$0xff]
      %v2607 = vld [vmem:[#allocation2 + $0x28] sm:$0xff]
      %v2608 = vld [vmem:[#allocation2 + $0x30] sm:$0xff]
      %v2609 = vld [vmem:[#allocation2 + $0x38] sm:$0xff]
      %v2610 = vld [vmem:[#allocation2 + $0x40] sm:$0xff]
      %v2611 = vld [vmem:[#allocation2 + $0x48] sm:$0xff]
      %v2612 = vld [vmem:[#allocation2 + $0x50] sm:$0xff]
      %v2613 = vld [vmem:[#allocation2 + $0x58] sm:$0xff]
      %v2614 = vld [vmem:[#allocation2 + $0x60] sm:$0xff]
      %v2615 = vld [vmem:[#allocation2 + $0x68] sm:$0xff]
      %v2616 = vld [vmem:[#allocation2 + $0x70] sm:$0xff]
      %v2617 = vld [vmem:[#allocation2 + $0x78] sm:$0xff]
      %v2618 = vld [vmem:[#allocation2 + $0x80] sm:$0xff]
      %v2619 = vld [vmem:[#allocation2 + $0x88] sm:$0xff]
      %v2620 = vld [vmem:[#allocation2 + $0x90] sm:$0xff]
      %v2621 = vld [vmem:[#allocation2 + $0x98] sm:$0xff]
      %v2622 = vld [vmem:[#allocation2 + $0xa0] sm:$0xff]
      %v2623 = vld [vmem:[#allocation2 + $0xa8] sm:$0xff]
      %v2624 = vld [vmem:[#allocation2 + $0xb0] sm:$0xff]
      %v2625 = vld [vmem:[#allocation2 + $0xb8] sm:$0xff]
      %v2626 = vld [vmem:[#allocation2 + $0xc0] sm:$0xff]
      %v2627 = vld [vmem:[#allocation2 + $0xc8] sm:$0xff]
      %v2628 = vld [vmem:[#allocation2 + $0xd0] sm:$0xff]
      %v2629 = vld [vmem:[#allocation2 + $0xd8] sm:$0xff]
      %v2630 = vld [vmem:[#allocation2 + $0xe0] sm:$0xff]
      %v2631 = vld [vmem:[#allocation2 + $0xe8] sm:$0xff]
      %v2632 = vld [vmem:[#allocation2 + $0xf0] sm:$0xff]
      %v2633 = vld [vmem:[#allocation2 + $0xf8] sm:$0xff]
      %v2635 = vshrl.u32 %v2554, 16
      %v2637 = vrot.slane %v2635, 4
      %v2638 = vshll.u32 %v2554, 16
      %v2640 = vrot.slane %v2638, 5
      %v2641 = vor.u32 %v2637, %v2640
      %v2642 = vrot.slane %v2641, 4
      %v2644 = vshll.u32 %v2555, 16
      %v2646 = vrot.slane %v2644, 5
      %v2647 = vsel %vm767, %v2642, %v2646
      %v2648 = vshrl.u32 %v2555, 16
      %v2650 = vrot.slane %v2648, 4
      %v2651 = vor.u32 %v2650, %v2646
      %v2652 = vrot.slane %v2651, 4
      %v2654 = vshll.u32 %v2556, 16
      %v2656 = vrot.slane %v2654, 5
      %v2657 = vsel %vm767, %v2652, %v2656
      %v2659 = vshrl.u32 %v2557, 16
      %v2661 = vrot.slane %v2659, 4
      %v2662 = vshll.u32 %v2557, 16
      %v2664 = vrot.slane %v2662, 5
      %v2665 = vor.u32 %v2661, %v2664
      %v2666 = vrot.slane %v2665, 4
      %v2668 = vshll.u32 %v2558, 16
      %v2670 = vrot.slane %v2668, 5
      %v2671 = vsel %vm767, %v2666, %v2670
      %v2672 = vshrl.u32 %v2558, 16
      %v2674 = vrot.slane %v2672, 4
      %v2675 = vor.u32 %v2674, %v2670
      %v2676 = vrot.slane %v2675, 4
      %v2678 = vshll.u32 %v2559, 16
      %v2680 = vrot.slane %v2678, 5
      %v2681 = vsel %vm767, %v2676, %v2680
      %v2683 = vshrl.u32 %v2560, 16
      %v2685 = vrot.slane %v2683, 4
      %v2686 = vshll.u32 %v2560, 16
      %v2688 = vrot.slane %v2686, 5
      %v2689 = vor.u32 %v2685, %v2688
      %v2690 = vrot.slane %v2689, 4
      %v2692 = vshll.u32 %v2561, 16
      %v2694 = vrot.slane %v2692, 5
      %v2695 = vsel %vm767, %v2690, %v2694
      %v2696 = vshrl.u32 %v2561, 16
      %v2698 = vrot.slane %v2696, 4
      %v2699 = vor.u32 %v2698, %v2694
      %v2700 = vrot.slane %v2699, 4
      %v2702 = vshll.u32 %v2562, 16
      %v2704 = vrot.slane %v2702, 5
      %v2705 = vsel %vm767, %v2700, %v2704
      %v2707 = vshrl.u32 %v2563, 16
      %v2709 = vrot.slane %v2707, 4
      %v2710 = vshll.u32 %v2563, 16
      %v2712 = vrot.slane %v2710, 5
      %v2713 = vor.u32 %v2709, %v2712
      %v2714 = vrot.slane %v2713, 4
      %v2716 = vshll.u32 %v2564, 16
      %v2718 = vrot.slane %v2716, 5
      %v2719 = vsel %vm767, %v2714, %v2718
      %v2720 = vshrl.u32 %v2564, 16
      %v2722 = vrot.slane %v2720, 4
      %v2723 = vor.u32 %v2722, %v2718
      %v2724 = vrot.slane %v2723, 4
      %v2726 = vshll.u32 %v2565, 16
      %v2728 = vrot.slane %v2726, 5
      %v2729 = vsel %vm767, %v2724, %v2728
      %v2731 = vshrl.u32 %v2566, 16
      %v2733 = vrot.slane %v2731, 4
      %v2734 = vshll.u32 %v2566, 16
      %v2736 = vrot.slane %v2734, 5
      %v2737 = vor.u32 %v2733, %v2736
      %v2738 = vrot.slane %v2737, 4
      %v2740 = vshll.u32 %v2567, 16
      %v2742 = vrot.slane %v2740, 5
      %v2743 = vsel %vm767, %v2738, %v2742
      %v2744 = vshrl.u32 %v2567, 16
      %v2746 = vrot.slane %v2744, 4
      %v2747 = vor.u32 %v2746, %v2742
      %v2748 = vrot.slane %v2747, 4
      %v2750 = vshll.u32 %v2568, 16
      %v2752 = vrot.slane %v2750, 5
      %v2753 = vsel %vm767, %v2748, %v2752
      %v2755 = vshrl.u32 %v2569, 16
      %v2757 = vrot.slane %v2755, 4
      %v2758 = vshll.u32 %v2569, 16
      %v2760 = vrot.slane %v2758, 5
      %v2761 = vor.u32 %v2757, %v2760
      %v2762 = vrot.slane %v2761, 4
      %v2764 = vshll.u32 %v2570, 16
      %v2766 = vrot.slane %v2764, 5
      %v2767 = vsel %vm767, %v2762, %v2766
      %v2768 = vshrl.u32 %v2570, 16
      %v2770 = vrot.slane %v2768, 4
      %v2771 = vor.u32 %v2770, %v2766
      %v2772 = vrot.slane %v2771, 4
      %v2774 = vshll.u32 %v2571, 16
      %v2776 = vrot.slane %v2774, 5
      %v2777 = vsel %vm767, %v2772, %v2776
      %v2779 = vshrl.u32 %v2572, 16
      %v2781 = vrot.slane %v2779, 4
      %v2782 = vshll.u32 %v2572, 16
      %v2784 = vrot.slane %v2782, 5
      %v2785 = vor.u32 %v2781, %v2784
      %v2786 = vrot.slane %v2785, 4
      %v2788 = vshll.u32 %v2573, 16
      %v2790 = vrot.slane %v2788, 5
      %v2791 = vsel %vm767, %v2786, %v2790
      %v2792 = vshrl.u32 %v2573, 16
      %v2794 = vrot.slane %v2792, 4
      %v2795 = vor.u32 %v2794, %v2790
      %v2796 = vrot.slane %v2795, 4
      %v2798 = vshll.u32 %v2574, 16
      %v2800 = vrot.slane %v2798, 5
      %v2801 = vsel %vm767, %v2796, %v2800
      %v2803 = vshrl.u32 %v2575, 16
      %v2805 = vrot.slane %v2803, 4
      %v2806 = vshll.u32 %v2575, 16
      %v2808 = vrot.slane %v2806, 5
      %v2809 = vor.u32 %v2805, %v2808
      %v2810 = vrot.slane %v2809, 4
      %v2812 = vshll.u32 %v2576, 16
      %v2814 = vrot.slane %v2812, 5
      %v2815 = vsel %vm767, %v2810, %v2814
      %v2816 = vshrl.u32 %v2576, 16
      %v2818 = vrot.slane %v2816, 4
      %v2819 = vor.u32 %v2818, %v2814
      %v2820 = vrot.slane %v2819, 4
      %v2822 = vshll.u32 %v2577, 16
      %v2824 = vrot.slane %v2822, 5
      %v2825 = vsel %vm767, %v2820, %v2824
      %v2827 = vshrl.u32 %v2578, 16
      %v2829 = vrot.slane %v2827, 4
      %v2830 = vshll.u32 %v2578, 16
      %v2832 = vrot.slane %v2830, 5
      %v2833 = vor.u32 %v2829, %v2832
      %v2834 = vrot.slane %v2833, 4
      %v2836 = vshll.u32 %v2579, 16
      %v2838 = vrot.slane %v2836, 5
      %v2839 = vsel %vm767, %v2834, %v2838
      %v2840 = vshrl.u32 %v2579, 16
      %v2842 = vrot.slane %v2840, 4
      %v2843 = vor.u32 %v2842, %v2838
      %v2844 = vrot.slane %v2843, 4
      %v2846 = vshll.u32 %v2580, 16
      %v2848 = vrot.slane %v2846, 5
      %v2849 = vsel %vm767, %v2844, %v2848
      %v2851 = vshrl.u32 %v2581, 16
      %v2853 = vrot.slane %v2851, 4
      %v2854 = vshll.u32 %v2581, 16
      %v2856 = vrot.slane %v2854, 5
      %v2857 = vor.u32 %v2853, %v2856
      %v2858 = vrot.slane %v2857, 4
      %v2860 = vshll.u32 %v2582, 16
      %v2862 = vrot.slane %v2860, 5
      %v2863 = vsel %vm767, %v2858, %v2862
      %v2864 = vshrl.u32 %v2582, 16
      %v2866 = vrot.slane %v2864, 4
      %v2867 = vor.u32 %v2866, %v2862
      %v2868 = vrot.slane %v2867, 4
      %v2870 = vshll.u32 %v2583, 16
      %v2872 = vrot.slane %v2870, 5
      %v2873 = vsel %vm767, %v2868, %v2872
      %v2875 = vshrl.u32 %v2584, 16
      %v2877 = vrot.slane %v2875, 4
      %v2878 = vshll.u32 %v2584, 16
      %v2880 = vrot.slane %v2878, 5
      %v2881 = vor.u32 %v2877, %v2880
      %v2882 = vrot.slane %v2881, 4
      %v2884 = vshll.u32 %v2585, 16
      %v2886 = vrot.slane %v2884, 5
      %v2887 = vsel %vm767, %v2882, %v2886
      %v2888 = vshrl.u32 %v2585, 16
      %v2890 = vrot.slane %v2888, 4
      %v2891 = vor.u32 %v2890, %v2886
      %v2892 = vrot.slane %v2891, 4
      %v2894 = vshll.u32 %v2586, 16
      %v2896 = vrot.slane %v2894, 5
      %v2897 = vsel %vm767, %v2892, %v2896
      %v2899 = vshrl.u32 %v2587, 16
      %v2901 = vrot.slane %v2899, 4
      %v2902 = vshll.u32 %v2587, 16
      %v2904 = vrot.slane %v2902, 5
      %v2905 = vor.u32 %v2901, %v2904
      %v2906 = vrot.slane %v2905, 4
      %v2908 = vshll.u32 %v2588, 16
      %v2910 = vrot.slane %v2908, 5
      %v2911 = vsel %vm767, %v2906, %v2910
      %v2912 = vshrl.u32 %v2588, 16
      %v2914 = vrot.slane %v2912, 4
      %v2915 = vor.u32 %v2914, %v2910
      %v2916 = vrot.slane %v2915, 4
      %v2918 = vshll.u32 %v2589, 16
      %v2920 = vrot.slane %v2918, 5
      %v2921 = vsel %vm767, %v2916, %v2920
      %v2923 = vshrl.u32 %v2590, 16
      %v2925 = vrot.slane %v2923, 4
      %v2926 = vshll.u32 %v2590, 16
      %v2928 = vrot.slane %v2926, 5
      %v2929 = vor.u32 %v2925, %v2928
      %v2930 = vrot.slane %v2929, 4
      %v2932 = vshll.u32 %v2591, 16
      %v2934 = vrot.slane %v2932, 5
      %v2935 = vsel %vm767, %v2930, %v2934
      %v2936 = vshrl.u32 %v2591, 16
      %v2938 = vrot.slane %v2936, 4
      %v2939 = vor.u32 %v2938, %v2934
      %v2940 = vrot.slane %v2939, 4
      %v2942 = vshll.u32 %v2592, 16
      %v2944 = vrot.slane %v2942, 5
      %v2945 = vsel %vm767, %v2940, %v2944
      %v2947 = vshrl.u32 %v2593, 16
      %v2949 = vrot.slane %v2947, 4
      %v2950 = vshll.u32 %v2593, 16
      %v2952 = vrot.slane %v2950, 5
      %v2953 = vor.u32 %v2949, %v2952
      %v2954 = vrot.slane %v2953, 4
      %v2956 = vshll.u32 %v2594, 16
      %v2958 = vrot.slane %v2956, 5
      %v2959 = vsel %vm767, %v2954, %v2958
      %v2960 = vshrl.u32 %v2594, 16
      %v2962 = vrot.slane %v2960, 4
      %v2963 = vor.u32 %v2962, %v2958
      %v2964 = vrot.slane %v2963, 4
      %v2966 = vshll.u32 %v2595, 16
      %v2968 = vrot.slane %v2966, 5
      %v2969 = vsel %vm767, %v2964, %v2968
      %v2971 = vshrl.u32 %v2596, 16
      %v2973 = vrot.slane %v2971, 4
      %v2974 = vshll.u32 %v2596, 16
      %v2976 = vrot.slane %v2974, 5
      %v2977 = vor.u32 %v2973, %v2976
      %v2978 = vrot.slane %v2977, 4
      %v2980 = vshll.u32 %v2597, 16
      %v2982 = vrot.slane %v2980, 5
      %v2983 = vsel %vm767, %v2978, %v2982
      %v2984 = vshrl.u32 %v2597, 16
      %v2986 = vrot.slane %v2984, 4
      %v2987 = vor.u32 %v2986, %v2982
      %v2988 = vrot.slane %v2987, 4
      %v2990 = vshll.u32 %v2598, 16
      %v2992 = vrot.slane %v2990, 5
      %v2993 = vsel %vm767, %v2988, %v2992
      %v2995 = vshrl.u32 %v2599, 16
      %v2997 = vrot.slane %v2995, 4
      %v2998 = vshll.u32 %v2599, 16
      %v3000 = vrot.slane %v2998, 5
      %v3001 = vor.u32 %v2997, %v3000
      %v3002 = vrot.slane %v3001, 4
      %v3004 = vshll.u32 %v2600, 16
      %v3006 = vrot.slane %v3004, 5
      %v3007 = vsel %vm767, %v3002, %v3006
      %v3008 = vshrl.u32 %v2600, 16
      %v3010 = vrot.slane %v3008, 4
      %v3011 = vor.u32 %v3010, %v3006
      %v3012 = vrot.slane %v3011, 4
      %v3014 = vshll.u32 %v2601, 16
      %v3016 = vrot.slane %v3014, 5
      %v3017 = vsel %vm767, %v3012, %v3016
      %s3018 = scalar_lea.vmem %s1, 256
      %v3019 = vld [vmem:[%s3018] sm:$0xf]
      %v3020 = vld [vmem:[%s3018 + $0x4] sm:$0xf]
      %v3021 = vld [vmem:[%s3018 + $0x8] sm:$0xf]
      %v3022 = vld [vmem:[%s3018 + $0xc] sm:$0xf]
      %v3023 = vld [vmem:[%s3018 + $0x10] sm:$0xf]
      %v3024 = vld [vmem:[%s3018 + $0x14] sm:$0xf]
      %v3025 = vld [vmem:[%s3018 + $0x18] sm:$0xf]
      %v3026 = vld [vmem:[%s3018 + $0x1c] sm:$0xf]
      %v3027 = vld [vmem:[%s3018 + $0x20] sm:$0xf]
      %v3028 = vld [vmem:[%s3018 + $0x24] sm:$0xf]
      %v3029 = vld [vmem:[%s3018 + $0x28] sm:$0xf]
      %v3030 = vld [vmem:[%s3018 + $0x2c] sm:$0xf]
      %v3031 = vld [vmem:[%s3018 + $0x30] sm:$0xf]
      %v3032 = vld [vmem:[%s3018 + $0x34] sm:$0xf]
      %v3033 = vld [vmem:[%s3018 + $0x38] sm:$0xf]
      %v3034 = vld [vmem:[%s3018 + $0x3c] sm:$0xf]
      %v3035 = vunpack.c.l.b16 %v2647
      %v3036 = vunpack.c.l.b16 %v2657
      %v3037 = vunpack.c.l.b16 %v2671
      %v3038 = vunpack.c.l.b16 %v2681
      %v3039 = vunpack.c.l.b16 %v2695
      %v3040 = vunpack.c.l.b16 %v2705
      %v3041 = vunpack.c.l.b16 %v2719
      %v3042 = vunpack.c.l.b16 %v2729
      %v3043 = vunpack.c.l.b16 %v2743
      %v3044 = vunpack.c.l.b16 %v2753
      %v3045 = vunpack.c.l.b16 %v2767
      %v3046 = vunpack.c.l.b16 %v2777
      %v3047 = vunpack.c.l.b16 %v2791
      %v3048 = vunpack.c.l.b16 %v2801
      %v3049 = vunpack.c.l.b16 %v2815
      %v3050 = vunpack.c.l.b16 %v2825
      %v3051 = vunpack.c.l.b16 %v2839
      %v3052 = vunpack.c.l.b16 %v2849
      %v3053 = vunpack.c.l.b16 %v2863
      %v3054 = vunpack.c.l.b16 %v2873
      %v3055 = vunpack.c.l.b16 %v2887
      %v3056 = vunpack.c.l.b16 %v2897
      %v3057 = vunpack.c.l.b16 %v2911
      %v3058 = vunpack.c.l.b16 %v2921
      %v3059 = vunpack.c.l.b16 %v2935
      %v3060 = vunpack.c.l.b16 %v2945
      %v3061 = vunpack.c.l.b16 %v2959
      %v3062 = vunpack.c.l.b16 %v2969
      %v3063 = vunpack.c.l.b16 %v2983
      %v3064 = vunpack.c.l.b16 %v2993
      %v3065 = vunpack.c.l.b16 %v3007
      %v3066 = vunpack.c.l.b16 %v3017
      %v3067 = vpack.c.b16 %v3036, %v3035
      %v3068 = vpack.c.b16 %v3038, %v3037
      %v3069 = vpack.c.b16 %v3040, %v3039
      %v3070 = vpack.c.b16 %v3042, %v3041
      %v3071 = vpack.c.b16 %v3044, %v3043
      %v3072 = vpack.c.b16 %v3046, %v3045
      %v3073 = vpack.c.b16 %v3048, %v3047
      %v3074 = vpack.c.b16 %v3050, %v3049
      %v3075 = vpack.c.b16 %v3052, %v3051
      %v3076 = vpack.c.b16 %v3054, %v3053
      %v3077 = vpack.c.b16 %v3056, %v3055
      %v3078 = vpack.c.b16 %v3058, %v3057
      %v3079 = vpack.c.b16 %v3060, %v3059
      %v3080 = vpack.c.b16 %v3062, %v3061
      %v3081 = vpack.c.b16 %v3064, %v3063
      %v3082 = vpack.c.b16 %v3066, %v3065
      %v3115 = vunpack.c.l.b16 %v3019
      %v3116 = vunpack.c.l.b16 %v3020
      %v3117 = vunpack.c.l.b16 %v3021
      %v3118 = vunpack.c.l.b16 %v3022
      %v3119 = vunpack.c.l.b16 %v3023
      %v3120 = vunpack.c.l.b16 %v3024
      %v3121 = vunpack.c.l.b16 %v3025
      %v3122 = vunpack.c.l.b16 %v3026
      %v3123 = vunpack.c.l.b16 %v3027
      %v3124 = vunpack.c.l.b16 %v3028
      %v3125 = vunpack.c.l.b16 %v3029
      %v3126 = vunpack.c.l.b16 %v3030
      %v3127 = vunpack.c.l.b16 %v3031
      %v3128 = vunpack.c.l.b16 %v3032
      %v3129 = vunpack.c.l.b16 %v3033
      %v3130 = vunpack.c.l.b16 %v3034
      %v3131 = vpack.c.b16 %v3116, %v3115
      %v3132 = vpack.c.b16 %v3118, %v3117
      %v3133 = vpack.c.b16 %v3120, %v3119
      %v3134 = vpack.c.b16 %v3122, %v3121
      %v3135 = vpack.c.b16 %v3124, %v3123
      %v3136 = vpack.c.b16 %v3126, %v3125
      %v3137 = vpack.c.b16 %v3128, %v3127
      %v3138 = vpack.c.b16 %v3130, %v3129
      %3147 = vmatprep.subr.bf16.mxu0 0
      %3148 = vmatpush1.bf16.msra.mxu0 %v3138
      %3149 = vmatprep.subr.bf16.mxu0 0
      %3150 = vmatpush1.bf16.msra.mxu0 %v3137
      %3151 = vmatprep.subr.bf16.mxu0 0
      %3152 = vmatpush1.bf16.msra.mxu0 %v3136
      %3153 = vmatprep.subr.bf16.mxu0 0
      %3154 = vmatpush1.bf16.msra.mxu0 %v3135
      %3155 = vmatprep.subr.bf16.mxu0 0
      %3156 = vmatpush1.bf16.msra.mxu0 %v3134
      %3157 = vmatprep.subr.bf16.mxu0 0
      %3158 = vmatpush1.bf16.msra.mxu0 %v3133
      %3159 = vmatprep.subr.bf16.mxu0 0
      %3160 = vmatpush1.bf16.msra.mxu0 %v3132
      %3161 = vmatprep.subr.bf16.mxu0 0
      %3162 = vmatpush1.bf16.msra.mxu0 %v3131
      %3163 = vmatprep.subr.bf16.mxu0 0
      %3164 = vmatpush2.bf16.msra.mxu0 0
      %3165 = vmatprep.subr.bf16.mxu0 0
      %3166 = vmatpush2.bf16.msra.mxu0 0
      %3167 = vmatprep.subr.bf16.mxu0 0
      %3168 = vmatpush2.bf16.msra.mxu0 0
      %3169 = vmatprep.subr.bf16.mxu0 0
      %3170 = vmatpush2.bf16.msra.mxu0 0
      %3171 = vmatprep.subr.bf16.mxu0 0
      %3172 = vmatpush2.bf16.msra.mxu0 0
      %3173 = vmatprep.subr.bf16.mxu0 0
      %3174 = vmatpush2.bf16.msra.mxu0 0
      %3175 = vmatprep.subr.bf16.mxu0 0
      %3176 = vmatpush2.bf16.msra.mxu0 0
      %3177 = vmatprep.subr.bf16.mxu0 0
      %3178 = vmatpush2.bf16.msra.mxu0 0
      %3179 = vmatprep.mubr.bf16.mxu0 0
      %3180 = vmatmul.mubr.bf16.gmra.mxu0 %v3067
      %v3181 = vpop.f32.mrf.mxu0
      %v3182 = vadd.f32 0.0, %v3181
      %v3183 = vpop.f32.mrf.mxu0
      %v3184 = vpop.f32.mrf.mxu0
      %v3185 = vadd.f32 0.0, %v3184
      %v3186 = vpop.f32.mrf.mxu0
      %3187 = vmatprep.mubr.bf16.mxu0 0
      %3188 = vmatmul.mubr.bf16.gmra.mxu0 %v3068
      %v3189 = vpop.f32.mrf.mxu0
      %v3190 = vadd.f32 0.0, %v3189
      %v3191 = vpop.f32.mrf.mxu0
      %v3192 = vpop.f32.mrf.mxu0
      %v3193 = vadd.f32 0.0, %v3192
      %v3194 = vpop.f32.mrf.mxu0
      %3195 = vmatprep.mubr.bf16.mxu0 0
      %3196 = vmatmul.mubr.bf16.gmra.mxu0 %v3069
      %v3197 = vpop.f32.mrf.mxu0
      %v3198 = vadd.f32 0.0, %v3197
      %v3199 = vpop.f32.mrf.mxu0
      %v3200 = vpop.f32.mrf.mxu0
      %v3201 = vadd.f32 0.0, %v3200
      %v3202 = vpop.f32.mrf.mxu0
      %3203 = vmatprep.mubr.bf16.mxu0 0
      %3204 = vmatmul.mubr.bf16.gmra.mxu0 %v3070
      %v3205 = vpop.f32.mrf.mxu0
      %v3206 = vadd.f32 0.0, %v3205
      %v3207 = vpop.f32.mrf.mxu0
      %v3208 = vpop.f32.mrf.mxu0
      %v3209 = vadd.f32 0.0, %v3208
      %v3210 = vpop.f32.mrf.mxu0
      %3211 = vmatprep.mubr.bf16.mxu0 0
      %3212 = vmatmul.mubr.bf16.gmra.mxu0 %v3071
      %v3213 = vpop.f32.mrf.mxu0
      %v3214 = vadd.f32 0.0, %v3213
      %v3215 = vpop.f32.mrf.mxu0
      %v3216 = vpop.f32.mrf.mxu0
      %v3217 = vadd.f32 0.0, %v3216
      %v3218 = vpop.f32.mrf.mxu0
      %3219 = vmatprep.mubr.bf16.mxu0 0
      %3220 = vmatmul.mubr.bf16.gmra.mxu0 %v3072
      %v3221 = vpop.f32.mrf.mxu0
      %v3222 = vadd.f32 0.0, %v3221
      %v3223 = vpop.f32.mrf.mxu0
      %v3224 = vpop.f32.mrf.mxu0
      %v3225 = vadd.f32 0.0, %v3224
      %v3226 = vpop.f32.mrf.mxu0
      %3227 = vmatprep.mubr.bf16.mxu0 0
      %3228 = vmatmul.mubr.bf16.gmra.mxu0 %v3073
      %v3229 = vpop.f32.mrf.mxu0
      %v3230 = vadd.f32 0.0, %v3229
      %v3231 = vpop.f32.mrf.mxu0
      %v3232 = vpop.f32.mrf.mxu0
      %v3233 = vadd.f32 0.0, %v3232
      %v3234 = vpop.f32.mrf.mxu0
      %3235 = vmatprep.mubr.bf16.mxu0 0
      %3236 = vmatmul.mubr.bf16.gmra.mxu0 %v3074
      %v3237 = vpop.f32.mrf.mxu0
      %v3238 = vadd.f32 0.0, %v3237
      %v3239 = vpop.f32.mrf.mxu0
      %v3240 = vpop.f32.mrf.mxu0
      %v3241 = vadd.f32 0.0, %v3240
      %v3242 = vpop.f32.mrf.mxu0
      %3243 = vmatprep.mubr.bf16.mxu0 0
      %3244 = vmatmul.mubr.bf16.gmra.mxu0 %v3075
      %v3245 = vpop.f32.mrf.mxu0
      %v3246 = vadd.f32 0.0, %v3245
      %v3247 = vpop.f32.mrf.mxu0
      %v3248 = vpop.f32.mrf.mxu0
      %v3249 = vadd.f32 0.0, %v3248
      %v3250 = vpop.f32.mrf.mxu0
      %3251 = vmatprep.mubr.bf16.mxu0 0
      %3252 = vmatmul.mubr.bf16.gmra.mxu0 %v3076
      %v3253 = vpop.f32.mrf.mxu0
      %v3254 = vadd.f32 0.0, %v3253
      %v3255 = vpop.f32.mrf.mxu0
      %v3256 = vpop.f32.mrf.mxu0
      %v3257 = vadd.f32 0.0, %v3256
      %v3258 = vpop.f32.mrf.mxu0
      %3259 = vmatprep.mubr.bf16.mxu0 0
      %3260 = vmatmul.mubr.bf16.gmra.mxu0 %v3077
      %v3261 = vpop.f32.mrf.mxu0
      %v3262 = vadd.f32 0.0, %v3261
      %v3263 = vpop.f32.mrf.mxu0
      %v3264 = vpop.f32.mrf.mxu0
      %v3265 = vadd.f32 0.0, %v3264
      %v3266 = vpop.f32.mrf.mxu0
      %3267 = vmatprep.mubr.bf16.mxu0 0
      %3268 = vmatmul.mubr.bf16.gmra.mxu0 %v3078
      %v3269 = vpop.f32.mrf.mxu0
      %v3270 = vadd.f32 0.0, %v3269
      %v3271 = vpop.f32.mrf.mxu0
      %v3272 = vpop.f32.mrf.mxu0
      %v3273 = vadd.f32 0.0, %v3272
      %v3274 = vpop.f32.mrf.mxu0
      %3275 = vmatprep.mubr.bf16.mxu0 0
      %3276 = vmatmul.mubr.bf16.gmra.mxu0 %v3079
      %v3277 = vpop.f32.mrf.mxu0
      %v3278 = vadd.f32 0.0, %v3277
      %v3279 = vpop.f32.mrf.mxu0
      %v3280 = vpop.f32.mrf.mxu0
      %v3281 = vadd.f32 0.0, %v3280
      %v3282 = vpop.f32.mrf.mxu0
      %3283 = vmatprep.mubr.bf16.mxu0 0
      %3284 = vmatmul.mubr.bf16.gmra.mxu0 %v3080
      %v3285 = vpop.f32.mrf.mxu0
      %v3286 = vadd.f32 0.0, %v3285
      %v3287 = vpop.f32.mrf.mxu0
      %v3288 = vpop.f32.mrf.mxu0
      %v3289 = vadd.f32 0.0, %v3288
      %v3290 = vpop.f32.mrf.mxu0
      %3291 = vmatprep.mubr.bf16.mxu0 0
      %3292 = vmatmul.mubr.bf16.gmra.mxu0 %v3081
      %v3293 = vpop.f32.mrf.mxu0
      %v3294 = vadd.f32 0.0, %v3293
      %v3295 = vpop.f32.mrf.mxu0
      %v3296 = vpop.f32.mrf.mxu0
      %v3297 = vadd.f32 0.0, %v3296
      %v3298 = vpop.f32.mrf.mxu0
      %3299 = vmatprep.mubr.bf16.mxu0 0
      %3300 = vmatmul.mubr.bf16.gmra.mxu0 %v3082
      %v3301 = vpop.f32.mrf.mxu0
      %v3302 = vadd.f32 0.0, %v3301
      %v3303 = vpop.f32.mrf.mxu0
      %v3304 = vpop.f32.mrf.mxu0
      %v3305 = vadd.f32 0.0, %v3304
      %v3306 = vpop.f32.mrf.mxu0
      %3307 = vdwg.mxu0
      %v3308 = vadd.f32 %v2602, %v3182
      %v3309 = vadd.f32 %v2603, %v3185
      %v3310 = vadd.f32 %v2604, %v3190
      %v3311 = vadd.f32 %v2605, %v3193
      %v3312 = vadd.f32 %v2606, %v3198
      %v3313 = vadd.f32 %v2607, %v3201
      %v3314 = vadd.f32 %v2608, %v3206
      %v3315 = vadd.f32 %v2609, %v3209
      %v3316 = vadd.f32 %v2610, %v3214
      %v3317 = vadd.f32 %v2611, %v3217
      %v3318 = vadd.f32 %v2612, %v3222
      %v3319 = vadd.f32 %v2613, %v3225
      %v3320 = vadd.f32 %v2614, %v3230
      %v3321 = vadd.f32 %v2615, %v3233
      %v3322 = vadd.f32 %v2616, %v3238
      %v3323 = vadd.f32 %v2617, %v3241
      %v3324 = vadd.f32 %v2618, %v3246
      %v3325 = vadd.f32 %v2619, %v3249
      %v3326 = vadd.f32 %v2620, %v3254
      %v3327 = vadd.f32 %v2621, %v3257
      %v3328 = vadd.f32 %v2622, %v3262
      %v3329 = vadd.f32 %v2623, %v3265
      %v3330 = vadd.f32 %v2624, %v3270
      %v3331 = vadd.f32 %v2625, %v3273
      %v3332 = vadd.f32 %v2626, %v3278
      %v3333 = vadd.f32 %v2627, %v3281
      %v3334 = vadd.f32 %v2628, %v3286
      %v3335 = vadd.f32 %v2629, %v3289
      %v3336 = vadd.f32 %v2630, %v3294
      %v3337 = vadd.f32 %v2631, %v3297
      %v3338 = vadd.f32 %v2632, %v3302
      %v3339 = vadd.f32 %v2633, %v3305
      %3340 = vst [vmem:[#allocation2] sm:$0xff] %v3308
      %3341 = vst [vmem:[#allocation2 + $0x8] sm:$0xff] %v3309
      %3342 = vst [vmem:[#allocation2 + $0x10] sm:$0xff] %v3310
      %3343 = vst [vmem:[#allocation2 + $0x18] sm:$0xff] %v3311
      %3344 = vst [vmem:[#allocation2 + $0x20] sm:$0xff] %v3312
      %3345 = vst [vmem:[#allocation2 + $0x28] sm:$0xff] %v3313
      %3346 = vst [vmem:[#allocation2 + $0x30] sm:$0xff] %v3314
      %3347 = vst [vmem:[#allocation2 + $0x38] sm:$0xff] %v3315
      %3348 = vst [vmem:[#allocation2 + $0x40] sm:$0xff] %v3316
      %3349 = vst [vmem:[#allocation2 + $0x48] sm:$0xff] %v3317
      %3350 = vst [vmem:[#allocation2 + $0x50] sm:$0xff] %v3318
      %3351 = vst [vmem:[#allocation2 + $0x58] sm:$0xff] %v3319
      %3352 = vst [vmem:[#allocation2 + $0x60] sm:$0xff] %v3320
      %3353 = vst [vmem:[#allocation2 + $0x68] sm:$0xff] %v3321
      %3354 = vst [vmem:[#allocation2 + $0x70] sm:$0xff] %v3322
      %3355 = vst [vmem:[#allocation2 + $0x78] sm:$0xff] %v3323
      %3356 = vst [vmem:[#allocation2 + $0x80] sm:$0xff] %v3324
      %3357 = vst [vmem:[#allocation2 + $0x88] sm:$0xff] %v3325
      %3358 = vst [vmem:[#allocation2 + $0x90] sm:$0xff] %v3326
      %3359 = vst [vmem:[#allocation2 + $0x98] sm:$0xff] %v3327
      %3360 = vst [vmem:[#allocation2 + $0xa0] sm:$0xff] %v3328
      %3361 = vst [vmem:[#allocation2 + $0xa8] sm:$0xff] %v3329
      %3362 = vst [vmem:[#allocation2 + $0xb0] sm:$0xff] %v3330
      %3363 = vst [vmem:[#allocation2 + $0xb8] sm:$0xff] %v3331
      %3364 = vst [vmem:[#allocation2 + $0xc0] sm:$0xff] %v3332
      %3365 = vst [vmem:[#allocation2 + $0xc8] sm:$0xff] %v3333
      %3366 = vst [vmem:[#allocation2 + $0xd0] sm:$0xff] %v3334
      %3367 = vst [vmem:[#allocation2 + $0xd8] sm:$0xff] %v3335
      %3368 = vst [vmem:[#allocation2 + $0xe0] sm:$0xff] %v3336
      %3369 = vst [vmem:[#allocation2 + $0xe8] sm:$0xff] %v3337
      %3370 = vst [vmem:[#allocation2 + $0xf0] sm:$0xff] %v3338
      %3371 = vst [vmem:[#allocation2 + $0xf8] sm:$0xff] %v3339
      %v3372 = vld [vmem:[%s2103] sm:$0xe]
      %v3373 = vld [vmem:[%s2103 + $0x4] sm:$0xf]
      %v3374 = vld [vmem:[%s2103 + $0x8] sm:$0x1]
      %v3375 = vld [vmem:[%s2103 + $0xc] sm:$0xe]
      %v3376 = vld [vmem:[%s2103 + $0x10] sm:$0xf]
      %v3377 = vld [vmem:[%s2103 + $0x14] sm:$0x1]
      %v3378 = vld [vmem:[%s2103 + $0x18] sm:$0xe]
      %v3379 = vld [vmem:[%s2103 + $0x1c] sm:$0xf]
      %v3380 = vld [vmem:[%s2103 + $0x20] sm:$0x1]
      %v3381 = vld [vmem:[%s2103 + $0x24] sm:$0xe]
      %v3382 = vld [vmem:[%s2103 + $0x28] sm:$0xf]
      %v3383 = vld [vmem:[%s2103 + $0x2c] sm:$0x1]
      %v3384 = vld [vmem:[%s2103 + $0x30] sm:$0xe]
      %v3385 = vld [vmem:[%s2103 + $0x34] sm:$0xf]
      %v3386 = vld [vmem:[%s2103 + $0x38] sm:$0x1]
      %v3387 = vld [vmem:[%s2103 + $0x3c] sm:$0xe]
      %v3388 = vld [vmem:[%s2103 + $0x40] sm:$0xf]
      %v3389 = vld [vmem:[%s2103 + $0x44] sm:$0x1]
      %v3390 = vld [vmem:[%s2103 + $0x48] sm:$0xe]
      %v3391 = vld [vmem:[%s2103 + $0x4c] sm:$0xf]
      %v3392 = vld [vmem:[%s2103 + $0x50] sm:$0x1]
      %v3393 = vld [vmem:[%s2103 + $0x54] sm:$0xe]
      %v3394 = vld [vmem:[%s2103 + $0x58] sm:$0xf]
      %v3395 = vld [vmem:[%s2103 + $0x5c] sm:$0x1]
      %v3396 = vld [vmem:[%s2103 + $0x60] sm:$0xe]
      %v3397 = vld [vmem:[%s2103 + $0x64] sm:$0xf]
      %v3398 = vld [vmem:[%s2103 + $0x68] sm:$0x1]
      %v3399 = vld [vmem:[%s2103 + $0x6c] sm:$0xe]
      %v3400 = vld [vmem:[%s2103 + $0x70] sm:$0xf]
      %v3401 = vld [vmem:[%s2103 + $0x74] sm:$0x1]
      %v3402 = vld [vmem:[%s2103 + $0x78] sm:$0xe]
      %v3403 = vld [vmem:[%s2103 + $0x7c] sm:$0xf]
      %v3404 = vld [vmem:[%s2103 + $0x80] sm:$0x1]
      %v3405 = vld [vmem:[%s2103 + $0x84] sm:$0xe]
      %v3406 = vld [vmem:[%s2103 + $0x88] sm:$0xf]
      %v3407 = vld [vmem:[%s2103 + $0x8c] sm:$0x1]
      %v3408 = vld [vmem:[%s2103 + $0x90] sm:$0xe]
      %v3409 = vld [vmem:[%s2103 + $0x94] sm:$0xf]
      %v3410 = vld [vmem:[%s2103 + $0x98] sm:$0x1]
      %v3411 = vld [vmem:[%s2103 + $0x9c] sm:$0xe]
      %v3412 = vld [vmem:[%s2103 + $0xa0] sm:$0xf]
      %v3413 = vld [vmem:[%s2103 + $0xa4] sm:$0x1]
      %v3414 = vld [vmem:[%s2103 + $0xa8] sm:$0xe]
      %v3415 = vld [vmem:[%s2103 + $0xac] sm:$0xf]
      %v3416 = vld [vmem:[%s2103 + $0xb0] sm:$0x1]
      %v3417 = vld [vmem:[%s2103 + $0xb4] sm:$0xe]
      %v3418 = vld [vmem:[%s2103 + $0xb8] sm:$0xf]
      %v3419 = vld [vmem:[%s2103 + $0xbc] sm:$0x1]
      %v3420 = vld [vmem:[#allocation2] sm:$0xff]
      %v3421 = vld [vmem:[#allocation2 + $0x8] sm:$0xff]
      %v3422 = vld [vmem:[#allocation2 + $0x10] sm:$0xff]
      %v3423 = vld [vmem:[#allocation2 + $0x18] sm:$0xff]
      %v3424 = vld [vmem:[#allocation2 + $0x20] sm:$0xff]
      %v3425 = vld [vmem:[#allocation2 + $0x28] sm:$0xff]
      %v3426 = vld [vmem:[#allocation2 + $0x30] sm:$0xff]
      %v3427 = vld [vmem:[#allocation2 + $0x38] sm:$0xff]
      %v3428 = vld [vmem:[#allocation2 + $0x40] sm:$0xff]
      %v3429 = vld [vmem:[#allocation2 + $0x48] sm:$0xff]
      %v3430 = vld [vmem:[#allocation2 + $0x50] sm:$0xff]
      %v3431 = vld [vmem:[#allocation2 + $0x58] sm:$0xff]
      %v3432 = vld [vmem:[#allocation2 + $0x60] sm:$0xff]
      %v3433 = vld [vmem:[#allocation2 + $0x68] sm:$0xff]
      %v3434 = vld [vmem:[#allocation2 + $0x70] sm:$0xff]
      %v3435 = vld [vmem:[#allocation2 + $0x78] sm:$0xff]
      %v3436 = vld [vmem:[#allocation2 + $0x80] sm:$0xff]
      %v3437 = vld [vmem:[#allocation2 + $0x88] sm:$0xff]
      %v3438 = vld [vmem:[#allocation2 + $0x90] sm:$0xff]
      %v3439 = vld [vmem:[#allocation2 + $0x98] sm:$0xff]
      %v3440 = vld [vmem:[#allocation2 + $0xa0] sm:$0xff]
      %v3441 = vld [vmem:[#allocation2 + $0xa8] sm:$0xff]
      %v3442 = vld [vmem:[#allocation2 + $0xb0] sm:$0xff]
      %v3443 = vld [vmem:[#allocation2 + $0xb8] sm:$0xff]
      %v3444 = vld [vmem:[#allocation2 + $0xc0] sm:$0xff]
      %v3445 = vld [vmem:[#allocation2 + $0xc8] sm:$0xff]
      %v3446 = vld [vmem:[#allocation2 + $0xd0] sm:$0xff]
      %v3447 = vld [vmem:[#allocation2 + $0xd8] sm:$0xff]
      %v3448 = vld [vmem:[#allocation2 + $0xe0] sm:$0xff]
      %v3449 = vld [vmem:[#allocation2 + $0xe8] sm:$0xff]
      %v3450 = vld [vmem:[#allocation2 + $0xf0] sm:$0xff]
      %v3451 = vld [vmem:[#allocation2 + $0xf8] sm:$0xff]
      %v3500 = vrot.slane %v3372, 5
      %v3501 = vrot.slane %v3500, 4
      %v3502 = vrot.slane %v3373, 5
      %v3503 = vsel %vm1636, %v3501, %v3502
      %v3504 = vrot.slane %v3502, 4
      %v3505 = vrot.slane %v3374, 5
      %v3506 = vsel %vm1636, %v3504, %v3505
      %v3507 = vrot.slane %v3375, 5
      %v3508 = vrot.slane %v3507, 4
      %v3509 = vrot.slane %v3376, 5
      %v3510 = vsel %vm1636, %v3508, %v3509
      %v3511 = vrot.slane %v3509, 4
      %v3512 = vrot.slane %v3377, 5
      %v3513 = vsel %vm1636, %v3511, %v3512
      %v3514 = vrot.slane %v3378, 5
      %v3515 = vrot.slane %v3514, 4
      %v3516 = vrot.slane %v3379, 5
      %v3517 = vsel %vm1636, %v3515, %v3516
      %v3518 = vrot.slane %v3516, 4
      %v3519 = vrot.slane %v3380, 5
      %v3520 = vsel %vm1636, %v3518, %v3519
      %v3521 = vrot.slane %v3381, 5
      %v3522 = vrot.slane %v3521, 4
      %v3523 = vrot.slane %v3382, 5
      %v3524 = vsel %vm1636, %v3522, %v3523
      %v3525 = vrot.slane %v3523, 4
      %v3526 = vrot.slane %v3383, 5
      %v3527 = vsel %vm1636, %v3525, %v3526
      %v3528 = vrot.slane %v3384, 5
      %v3529 = vrot.slane %v3528, 4
      %v3530 = vrot.slane %v3385, 5
      %v3531 = vsel %vm1636, %v3529, %v3530
      %v3532 = vrot.slane %v3530, 4
      %v3533 = vrot.slane %v3386, 5
      %v3534 = vsel %vm1636, %v3532, %v3533
      %v3535 = vrot.slane %v3387, 5
      %v3536 = vrot.slane %v3535, 4
      %v3537 = vrot.slane %v3388, 5
      %v3538 = vsel %vm1636, %v3536, %v3537
      %v3539 = vrot.slane %v3537, 4
      %v3540 = vrot.slane %v3389, 5
      %v3541 = vsel %vm1636, %v3539, %v3540
      %v3542 = vrot.slane %v3390, 5
      %v3543 = vrot.slane %v3542, 4
      %v3544 = vrot.slane %v3391, 5
      %v3545 = vsel %vm1636, %v3543, %v3544
      %v3546 = vrot.slane %v3544, 4
      %v3547 = vrot.slane %v3392, 5
      %v3548 = vsel %vm1636, %v3546, %v3547
      %v3549 = vrot.slane %v3393, 5
      %v3550 = vrot.slane %v3549, 4
      %v3551 = vrot.slane %v3394, 5
      %v3552 = vsel %vm1636, %v3550, %v3551
      %v3553 = vrot.slane %v3551, 4
      %v3554 = vrot.slane %v3395, 5
      %v3555 = vsel %vm1636, %v3553, %v3554
      %v3556 = vrot.slane %v3396, 5
      %v3557 = vrot.slane %v3556, 4
      %v3558 = vrot.slane %v3397, 5
      %v3559 = vsel %vm1636, %v3557, %v3558
      %v3560 = vrot.slane %v3558, 4
      %v3561 = vrot.slane %v3398, 5
      %v3562 = vsel %vm1636, %v3560, %v3561
      %v3563 = vrot.slane %v3399, 5
      %v3564 = vrot.slane %v3563, 4
      %v3565 = vrot.slane %v3400, 5
      %v3566 = vsel %vm1636, %v3564, %v3565
      %v3567 = vrot.slane %v3565, 4
      %v3568 = vrot.slane %v3401, 5
      %v3569 = vsel %vm1636, %v3567, %v3568
      %v3570 = vrot.slane %v3402, 5
      %v3571 = vrot.slane %v3570, 4
      %v3572 = vrot.slane %v3403, 5
      %v3573 = vsel %vm1636, %v3571, %v3572
      %v3574 = vrot.slane %v3572, 4
      %v3575 = vrot.slane %v3404, 5
      %v3576 = vsel %vm1636, %v3574, %v3575
      %v3577 = vrot.slane %v3405, 5
      %v3578 = vrot.slane %v3577, 4
      %v3579 = vrot.slane %v3406, 5
      %v3580 = vsel %vm1636, %v3578, %v3579
      %v3581 = vrot.slane %v3579, 4
      %v3582 = vrot.slane %v3407, 5
      %v3583 = vsel %vm1636, %v3581, %v3582
      %v3584 = vrot.slane %v3408, 5
      %v3585 = vrot.slane %v3584, 4
      %v3586 = vrot.slane %v3409, 5
      %v3587 = vsel %vm1636, %v3585, %v3586
      %v3588 = vrot.slane %v3586, 4
      %v3589 = vrot.slane %v3410, 5
      %v3590 = vsel %vm1636, %v3588, %v3589
      %v3591 = vrot.slane %v3411, 5
      %v3592 = vrot.slane %v3591, 4
      %v3593 = vrot.slane %v3412, 5
      %v3594 = vsel %vm1636, %v3592, %v3593
      %v3595 = vrot.slane %v3593, 4
      %v3596 = vrot.slane %v3413, 5
      %v3597 = vsel %vm1636, %v3595, %v3596
      %v3598 = vrot.slane %v3414, 5
      %v3599 = vrot.slane %v3598, 4
      %v3600 = vrot.slane %v3415, 5
      %v3601 = vsel %vm1636, %v3599, %v3600
      %v3602 = vrot.slane %v3600, 4
      %v3603 = vrot.slane %v3416, 5
      %v3604 = vsel %vm1636, %v3602, %v3603
      %v3605 = vrot.slane %v3417, 5
      %v3606 = vrot.slane %v3605, 4
      %v3607 = vrot.slane %v3418, 5
      %v3608 = vsel %vm1636, %v3606, %v3607
      %v3609 = vrot.slane %v3607, 4
      %v3610 = vrot.slane %v3419, 5
      %v3611 = vsel %vm1636, %v3609, %v3610
      %s3612 = scalar_lea.vmem %s1, 320
      %v3613 = vld [vmem:[%s3612] sm:$0xf]
      %v3614 = vld [vmem:[%s3612 + $0x4] sm:$0xf]
      %v3615 = vld [vmem:[%s3612 + $0x8] sm:$0xf]
      %v3616 = vld [vmem:[%s3612 + $0xc] sm:$0xf]
      %v3617 = vld [vmem:[%s3612 + $0x10] sm:$0xf]
      %v3618 = vld [vmem:[%s3612 + $0x14] sm:$0xf]
      %v3619 = vld [vmem:[%s3612 + $0x18] sm:$0xf]
      %v3620 = vld [vmem:[%s3612 + $0x1c] sm:$0xf]
      %v3621 = vld [vmem:[%s3612 + $0x20] sm:$0xf]
      %v3622 = vld [vmem:[%s3612 + $0x24] sm:$0xf]
      %v3623 = vld [vmem:[%s3612 + $0x28] sm:$0xf]
      %v3624 = vld [vmem:[%s3612 + $0x2c] sm:$0xf]
      %v3625 = vld [vmem:[%s3612 + $0x30] sm:$0xf]
      %v3626 = vld [vmem:[%s3612 + $0x34] sm:$0xf]
      %v3627 = vld [vmem:[%s3612 + $0x38] sm:$0xf]
      %v3628 = vld [vmem:[%s3612 + $0x3c] sm:$0xf]
      %v3629 = vunpack.c.l.b16 %v3503
      %v3630 = vunpack.c.l.b16 %v3506
      %v3631 = vunpack.c.l.b16 %v3510
      %v3632 = vunpack.c.l.b16 %v3513
      %v3633 = vunpack.c.l.b16 %v3517
      %v3634 = vunpack.c.l.b16 %v3520
      %v3635 = vunpack.c.l.b16 %v3524
      %v3636 = vunpack.c.l.b16 %v3527
      %v3637 = vunpack.c.l.b16 %v3531
      %v3638 = vunpack.c.l.b16 %v3534
      %v3639 = vunpack.c.l.b16 %v3538
      %v3640 = vunpack.c.l.b16 %v3541
      %v3641 = vunpack.c.l.b16 %v3545
      %v3642 = vunpack.c.l.b16 %v3548
      %v3643 = vunpack.c.l.b16 %v3552
      %v3644 = vunpack.c.l.b16 %v3555
      %v3645 = vunpack.c.l.b16 %v3559
      %v3646 = vunpack.c.l.b16 %v3562
      %v3647 = vunpack.c.l.b16 %v3566
      %v3648 = vunpack.c.l.b16 %v3569
      %v3649 = vunpack.c.l.b16 %v3573
      %v3650 = vunpack.c.l.b16 %v3576
      %v3651 = vunpack.c.l.b16 %v3580
      %v3652 = vunpack.c.l.b16 %v3583
      %v3653 = vunpack.c.l.b16 %v3587
      %v3654 = vunpack.c.l.b16 %v3590
      %v3655 = vunpack.c.l.b16 %v3594
      %v3656 = vunpack.c.l.b16 %v3597
      %v3657 = vunpack.c.l.b16 %v3601
      %v3658 = vunpack.c.l.b16 %v3604
      %v3659 = vunpack.c.l.b16 %v3608
      %v3660 = vunpack.c.l.b16 %v3611
      %v3661 = vpack.c.b16 %v3630, %v3629
      %v3662 = vpack.c.b16 %v3632, %v3631
      %v3663 = vpack.c.b16 %v3634, %v3633
      %v3664 = vpack.c.b16 %v3636, %v3635
      %v3665 = vpack.c.b16 %v3638, %v3637
      %v3666 = vpack.c.b16 %v3640, %v3639
      %v3667 = vpack.c.b16 %v3642, %v3641
      %v3668 = vpack.c.b16 %v3644, %v3643
      %v3669 = vpack.c.b16 %v3646, %v3645
      %v3670 = vpack.c.b16 %v3648, %v3647
      %v3671 = vpack.c.b16 %v3650, %v3649
      %v3672 = vpack.c.b16 %v3652, %v3651
      %v3673 = vpack.c.b16 %v3654, %v3653
      %v3674 = vpack.c.b16 %v3656, %v3655
      %v3675 = vpack.c.b16 %v3658, %v3657
      %v3676 = vpack.c.b16 %v3660, %v3659
      %v3709 = vunpack.c.l.b16 %v3613
      %v3710 = vunpack.c.l.b16 %v3614
      %v3711 = vunpack.c.l.b16 %v3615
      %v3712 = vunpack.c.l.b16 %v3616
      %v3713 = vunpack.c.l.b16 %v3617
      %v3714 = vunpack.c.l.b16 %v3618
      %v3715 = vunpack.c.l.b16 %v3619
      %v3716 = vunpack.c.l.b16 %v3620
      %v3717 = vunpack.c.l.b16 %v3621
      %v3718 = vunpack.c.l.b16 %v3622
      %v3719 = vunpack.c.l.b16 %v3623
      %v3720 = vunpack.c.l.b16 %v3624
      %v3721 = vunpack.c.l.b16 %v3625
      %v3722 = vunpack.c.l.b16 %v3626
      %v3723 = vunpack.c.l.b16 %v3627
      %v3724 = vunpack.c.l.b16 %v3628
      %v3725 = vpack.c.b16 %v3710, %v3709
      %v3726 = vpack.c.b16 %v3712, %v3711
      %v3727 = vpack.c.b16 %v3714, %v3713
      %v3728 = vpack.c.b16 %v3716, %v3715
      %v3729 = vpack.c.b16 %v3718, %v3717
      %v3730 = vpack.c.b16 %v3720, %v3719
      %v3731 = vpack.c.b16 %v3722, %v3721
      %v3732 = vpack.c.b16 %v3724, %v3723
      %3741 = vmatprep.subr.bf16.mxu0 0
      %3742 = vmatpush1.bf16.msra.mxu0 %v3732
      %3743 = vmatprep.subr.bf16.mxu0 0
      %3744 = vmatpush1.bf16.msra.mxu0 %v3731
      %3745 = vmatprep.subr.bf16.mxu0 0
      %3746 = vmatpush1.bf16.msra.mxu0 %v3730
      %3747 = vmatprep.subr.bf16.mxu0 0
      %3748 = vmatpush1.bf16.msra.mxu0 %v3729
      %3749 = vmatprep.subr.bf16.mxu0 0
      %3750 = vmatpush1.bf16.msra.mxu0 %v3728
      %3751 = vmatprep.subr.bf16.mxu0 0
      %3752 = vmatpush1.bf16.msra.mxu0 %v3727
      %3753 = vmatprep.subr.bf16.mxu0 0
      %3754 = vmatpush1.bf16.msra.mxu0 %v3726
      %3755 = vmatprep.subr.bf16.mxu0 0
      %3756 = vmatpush1.bf16.msra.mxu0 %v3725
      %3757 = vmatprep.subr.bf16.mxu0 0
      %3758 = vmatpush2.bf16.msra.mxu0 0
      %3759 = vmatprep.subr.bf16.mxu0 0
      %3760 = vmatpush2.bf16.msra.mxu0 0
      %3761 = vmatprep.subr.bf16.mxu0 0
      %3762 = vmatpush2.bf16.msra.mxu0 0
      %3763 = vmatprep.subr.bf16.mxu0 0
      %3764 = vmatpush2.bf16.msra.mxu0 0
      %3765 = vmatprep.subr.bf16.mxu0 0
      %3766 = vmatpush2.bf16.msra.mxu0 0
      %3767 = vmatprep.subr.bf16.mxu0 0
      %3768 = vmatpush2.bf16.msra.mxu0 0
      %3769 = vmatprep.subr.bf16.mxu0 0
      %3770 = vmatpush2.bf16.msra.mxu0 0
      %3771 = vmatprep.subr.bf16.mxu0 0
      %3772 = vmatpush2.bf16.msra.mxu0 0
      %3773 = vmatprep.mubr.bf16.mxu0 0
      %3774 = vmatmul.mubr.bf16.gmra.mxu0 %v3661
      %v3775 = vpop.f32.mrf.mxu0
      %v3776 = vadd.f32 0.0, %v3775
      %v3777 = vpop.f32.mrf.mxu0
      %v3778 = vpop.f32.mrf.mxu0
      %v3779 = vadd.f32 0.0, %v3778
      %v3780 = vpop.f32.mrf.mxu0
      %3781 = vmatprep.mubr.bf16.mxu0 0
      %3782 = vmatmul.mubr.bf16.gmra.mxu0 %v3662
      %v3783 = vpop.f32.mrf.mxu0
      %v3784 = vadd.f32 0.0, %v3783
      %v3785 = vpop.f32.mrf.mxu0
      %v3786 = vpop.f32.mrf.mxu0
      %v3787 = vadd.f32 0.0, %v3786
      %v3788 = vpop.f32.mrf.mxu0
      %3789 = vmatprep.mubr.bf16.mxu0 0
      %3790 = vmatmul.mubr.bf16.gmra.mxu0 %v3663
      %v3791 = vpop.f32.mrf.mxu0
      %v3792 = vadd.f32 0.0, %v3791
      %v3793 = vpop.f32.mrf.mxu0
      %v3794 = vpop.f32.mrf.mxu0
      %v3795 = vadd.f32 0.0, %v3794
      %v3796 = vpop.f32.mrf.mxu0
      %3797 = vmatprep.mubr.bf16.mxu0 0
      %3798 = vmatmul.mubr.bf16.gmra.mxu0 %v3664
      %v3799 = vpop.f32.mrf.mxu0
      %v3800 = vadd.f32 0.0, %v3799
      %v3801 = vpop.f32.mrf.mxu0
      %v3802 = vpop.f32.mrf.mxu0
      %v3803 = vadd.f32 0.0, %v3802
      %v3804 = vpop.f32.mrf.mxu0
      %3805 = vmatprep.mubr.bf16.mxu0 0
      %3806 = vmatmul.mubr.bf16.gmra.mxu0 %v3665
      %v3807 = vpop.f32.mrf.mxu0
      %v3808 = vadd.f32 0.0, %v3807
      %v3809 = vpop.f32.mrf.mxu0
      %v3810 = vpop.f32.mrf.mxu0
      %v3811 = vadd.f32 0.0, %v3810
      %v3812 = vpop.f32.mrf.mxu0
      %3813 = vmatprep.mubr.bf16.mxu0 0
      %3814 = vmatmul.mubr.bf16.gmra.mxu0 %v3666
      %v3815 = vpop.f32.mrf.mxu0
      %v3816 = vadd.f32 0.0, %v3815
      %v3817 = vpop.f32.mrf.mxu0
      %v3818 = vpop.f32.mrf.mxu0
      %v3819 = vadd.f32 0.0, %v3818
      %v3820 = vpop.f32.mrf.mxu0
      %3821 = vmatprep.mubr.bf16.mxu0 0
      %3822 = vmatmul.mubr.bf16.gmra.mxu0 %v3667
      %v3823 = vpop.f32.mrf.mxu0
      %v3824 = vadd.f32 0.0, %v3823
      %v3825 = vpop.f32.mrf.mxu0
      %v3826 = vpop.f32.mrf.mxu0
      %v3827 = vadd.f32 0.0, %v3826
      %v3828 = vpop.f32.mrf.mxu0
      %3829 = vmatprep.mubr.bf16.mxu0 0
      %3830 = vmatmul.mubr.bf16.gmra.mxu0 %v3668
      %v3831 = vpop.f32.mrf.mxu0
      %v3832 = vadd.f32 0.0, %v3831
      %v3833 = vpop.f32.mrf.mxu0
      %v3834 = vpop.f32.mrf.mxu0
      %v3835 = vadd.f32 0.0, %v3834
      %v3836 = vpop.f32.mrf.mxu0
      %3837 = vmatprep.mubr.bf16.mxu0 0
      %3838 = vmatmul.mubr.bf16.gmra.mxu0 %v3669
      %v3839 = vpop.f32.mrf.mxu0
      %v3840 = vadd.f32 0.0, %v3839
      %v3841 = vpop.f32.mrf.mxu0
      %v3842 = vpop.f32.mrf.mxu0
      %v3843 = vadd.f32 0.0, %v3842
      %v3844 = vpop.f32.mrf.mxu0
      %3845 = vmatprep.mubr.bf16.mxu0 0
      %3846 = vmatmul.mubr.bf16.gmra.mxu0 %v3670
      %v3847 = vpop.f32.mrf.mxu0
      %v3848 = vadd.f32 0.0, %v3847
      %v3849 = vpop.f32.mrf.mxu0
      %v3850 = vpop.f32.mrf.mxu0
      %v3851 = vadd.f32 0.0, %v3850
      %v3852 = vpop.f32.mrf.mxu0
      %3853 = vmatprep.mubr.bf16.mxu0 0
      %3854 = vmatmul.mubr.bf16.gmra.mxu0 %v3671
      %v3855 = vpop.f32.mrf.mxu0
      %v3856 = vadd.f32 0.0, %v3855
      %v3857 = vpop.f32.mrf.mxu0
      %v3858 = vpop.f32.mrf.mxu0
      %v3859 = vadd.f32 0.0, %v3858
      %v3860 = vpop.f32.mrf.mxu0
      %3861 = vmatprep.mubr.bf16.mxu0 0
      %3862 = vmatmul.mubr.bf16.gmra.mxu0 %v3672
      %v3863 = vpop.f32.mrf.mxu0
      %v3864 = vadd.f32 0.0, %v3863
      %v3865 = vpop.f32.mrf.mxu0
      %v3866 = vpop.f32.mrf.mxu0
      %v3867 = vadd.f32 0.0, %v3866
      %v3868 = vpop.f32.mrf.mxu0
      %3869 = vmatprep.mubr.bf16.mxu0 0
      %3870 = vmatmul.mubr.bf16.gmra.mxu0 %v3673
      %v3871 = vpop.f32.mrf.mxu0
      %v3872 = vadd.f32 0.0, %v3871
      %v3873 = vpop.f32.mrf.mxu0
      %v3874 = vpop.f32.mrf.mxu0
      %v3875 = vadd.f32 0.0, %v3874
      %v3876 = vpop.f32.mrf.mxu0
      %3877 = vmatprep.mubr.bf16.mxu0 0
      %3878 = vmatmul.mubr.bf16.gmra.mxu0 %v3674
      %v3879 = vpop.f32.mrf.mxu0
      %v3880 = vadd.f32 0.0, %v3879
      %v3881 = vpop.f32.mrf.mxu0
      %v3882 = vpop.f32.mrf.mxu0
      %v3883 = vadd.f32 0.0, %v3882
      %v3884 = vpop.f32.mrf.mxu0
      %3885 = vmatprep.mubr.bf16.mxu0 0
      %3886 = vmatmul.mubr.bf16.gmra.mxu0 %v3675
      %v3887 = vpop.f32.mrf.mxu0
      %v3888 = vadd.f32 0.0, %v3887
      %v3889 = vpop.f32.mrf.mxu0
      %v3890 = vpop.f32.mrf.mxu0
      %v3891 = vadd.f32 0.0, %v3890
      %v3892 = vpop.f32.mrf.mxu0
      %3893 = vmatprep.mubr.bf16.mxu0 0
      %3894 = vmatmul.mubr.bf16.gmra.mxu0 %v3676
      %v3895 = vpop.f32.mrf.mxu0
      %v3896 = vadd.f32 0.0, %v3895
      %v3897 = vpop.f32.mrf.mxu0
      %v3898 = vpop.f32.mrf.mxu0
      %v3899 = vadd.f32 0.0, %v3898
      %v3900 = vpop.f32.mrf.mxu0
      %3901 = vdwg.mxu0
      %v3902 = vadd.f32 %v3420, %v3776
      %v3903 = vadd.f32 %v3421, %v3779
      %v3904 = vadd.f32 %v3422, %v3784
      %v3905 = vadd.f32 %v3423, %v3787
      %v3906 = vadd.f32 %v3424, %v3792
      %v3907 = vadd.f32 %v3425, %v3795
      %v3908 = vadd.f32 %v3426, %v3800
      %v3909 = vadd.f32 %v3427, %v3803
      %v3910 = vadd.f32 %v3428, %v3808
      %v3911 = vadd.f32 %v3429, %v3811
      %v3912 = vadd.f32 %v3430, %v3816
      %v3913 = vadd.f32 %v3431, %v3819
      %v3914 = vadd.f32 %v3432, %v3824
      %v3915 = vadd.f32 %v3433, %v3827
      %v3916 = vadd.f32 %v3434, %v3832
      %v3917 = vadd.f32 %v3435, %v3835
      %v3918 = vadd.f32 %v3436, %v3840
      %v3919 = vadd.f32 %v3437, %v3843
      %v3920 = vadd.f32 %v3438, %v3848
      %v3921 = vadd.f32 %v3439, %v3851
      %v3922 = vadd.f32 %v3440, %v3856
      %v3923 = vadd.f32 %v3441, %v3859
      %v3924 = vadd.f32 %v3442, %v3864
      %v3925 = vadd.f32 %v3443, %v3867
      %v3926 = vadd.f32 %v3444, %v3872
      %v3927 = vadd.f32 %v3445, %v3875
      %v3928 = vadd.f32 %v3446, %v3880
      %v3929 = vadd.f32 %v3447, %v3883
      %v3930 = vadd.f32 %v3448, %v3888
      %v3931 = vadd.f32 %v3449, %v3891
      %v3932 = vadd.f32 %v3450, %v3896
      %v3933 = vadd.f32 %v3451, %v3899
      %3934 = vst [vmem:[#allocation2] sm:$0xff] %v3902
      %3935 = vst [vmem:[#allocation2 + $0x8] sm:$0xff] %v3903
      %3936 = vst [vmem:[#allocation2 + $0x10] sm:$0xff] %v3904
      %3937 = vst [vmem:[#allocation2 + $0x18] sm:$0xff] %v3905
      %3938 = vst [vmem:[#allocation2 + $0x20] sm:$0xff] %v3906
      %3939 = vst [vmem:[#allocation2 + $0x28] sm:$0xff] %v3907
      %3940 = vst [vmem:[#allocation2 + $0x30] sm:$0xff] %v3908
      %3941 = vst [vmem:[#allocation2 + $0x38] sm:$0xff] %v3909
      %3942 = vst [vmem:[#allocation2 + $0x40] sm:$0xff] %v3910
      %3943 = vst [vmem:[#allocation2 + $0x48] sm:$0xff] %v3911
      %3944 = vst [vmem:[#allocation2 + $0x50] sm:$0xff] %v3912
      %3945 = vst [vmem:[#allocation2 + $0x58] sm:$0xff] %v3913
      %3946 = vst [vmem:[#allocation2 + $0x60] sm:$0xff] %v3914
      %3947 = vst [vmem:[#allocation2 + $0x68] sm:$0xff] %v3915
      %3948 = vst [vmem:[#allocation2 + $0x70] sm:$0xff] %v3916
      %3949 = vst [vmem:[#allocation2 + $0x78] sm:$0xff] %v3917
      %3950 = vst [vmem:[#allocation2 + $0x80] sm:$0xff] %v3918
      %3951 = vst [vmem:[#allocation2 + $0x88] sm:$0xff] %v3919
      %3952 = vst [vmem:[#allocation2 + $0x90] sm:$0xff] %v3920
      %3953 = vst [vmem:[#allocation2 + $0x98] sm:$0xff] %v3921
      %3954 = vst [vmem:[#allocation2 + $0xa0] sm:$0xff] %v3922
      %3955 = vst [vmem:[#allocation2 + $0xa8] sm:$0xff] %v3923
      %3956 = vst [vmem:[#allocation2 + $0xb0] sm:$0xff] %v3924
      %3957 = vst [vmem:[#allocation2 + $0xb8] sm:$0xff] %v3925
      %3958 = vst [vmem:[#allocation2 + $0xc0] sm:$0xff] %v3926
      %3959 = vst [vmem:[#allocation2 + $0xc8] sm:$0xff] %v3927
      %3960 = vst [vmem:[#allocation2 + $0xd0] sm:$0xff] %v3928
      %3961 = vst [vmem:[#allocation2 + $0xd8] sm:$0xff] %v3929
      %3962 = vst [vmem:[#allocation2 + $0xe0] sm:$0xff] %v3930
      %3963 = vst [vmem:[#allocation2 + $0xe8] sm:$0xff] %v3931
      %3964 = vst [vmem:[#allocation2 + $0xf0] sm:$0xff] %v3932
      %3965 = vst [vmem:[#allocation2 + $0xf8] sm:$0xff] %v3933
      %s3966 = scalar_lea.vmem %s190, 24
      %v3967 = vld [vmem:[%s3966] sm:$0xf]
      %v3968 = vld [vmem:[%s3966 + $0x4] sm:$0xf]
      %v3969 = vld [vmem:[%s3966 + $0xc] sm:$0xf]
      %v3970 = vld [vmem:[%s3966 + $0x10] sm:$0xf]
      %v3971 = vld [vmem:[%s3966 + $0x18] sm:$0xf]
      %v3972 = vld [vmem:[%s3966 + $0x1c] sm:$0xf]
      %v3973 = vld [vmem:[%s3966 + $0x24] sm:$0xf]
      %v3974 = vld [vmem:[%s3966 + $0x28] sm:$0xf]
      %v3975 = vld [vmem:[%s3966 + $0x30] sm:$0xf]
      %v3976 = vld [vmem:[%s3966 + $0x34] sm:$0xf]
      %v3977 = vld [vmem:[%s3966 + $0x3c] sm:$0xf]
      %v3978 = vld [vmem:[%s3966 + $0x40] sm:$0xf]
      %v3979 = vld [vmem:[%s3966 + $0x48] sm:$0xf]
      %v3980 = vld [vmem:[%s3966 + $0x4c] sm:$0xf]
      %v3981 = vld [vmem:[%s3966 + $0x54] sm:$0xf]
      %v3982 = vld [vmem:[%s3966 + $0x58] sm:$0xf]
      %v3983 = vld [vmem:[%s3966 + $0x60] sm:$0xf]
      %v3984 = vld [vmem:[%s3966 + $0x64] sm:$0xf]
      %v3985 = vld [vmem:[%s3966 + $0x6c] sm:$0xf]
      %v3986 = vld [vmem:[%s3966 + $0x70] sm:$0xf]
      %v3987 = vld [vmem:[%s3966 + $0x78] sm:$0xf]
      %v3988 = vld [vmem:[%s3966 + $0x7c] sm:$0xf]
      %v3989 = vld [vmem:[%s3966 + $0x84] sm:$0xf]
      %v3990 = vld [vmem:[%s3966 + $0x88] sm:$0xf]
      %v3991 = vld [vmem:[%s3966 + $0x90] sm:$0xf]
      %v3992 = vld [vmem:[%s3966 + $0x94] sm:$0xf]
      %v3993 = vld [vmem:[%s3966 + $0x9c] sm:$0xf]
      %v3994 = vld [vmem:[%s3966 + $0xa0] sm:$0xf]
      %v3995 = vld [vmem:[%s3966 + $0xa8] sm:$0xf]
      %v3996 = vld [vmem:[%s3966 + $0xac] sm:$0xf]
      %v3997 = vld [vmem:[%s3966 + $0xb4] sm:$0xf]
      %v3998 = vld [vmem:[%s3966 + $0xb8] sm:$0xf]
      %v3999 = vld [vmem:[#allocation2] sm:$0xff]
      %v4000 = vld [vmem:[#allocation2 + $0x8] sm:$0xff]
      %v4001 = vld [vmem:[#allocation2 + $0x10] sm:$0xff]
      %v4002 = vld [vmem:[#allocation2 + $0x18] sm:$0xff]
      %v4003 = vld [vmem:[#allocation2 + $0x20] sm:$0xff]
      %v4004 = vld [vmem:[#allocation2 + $0x28] sm:$0xff]
      %v4005 = vld [vmem:[#allocation2 + $0x30] sm:$0xff]
      %v4006 = vld [vmem:[#allocation2 + $0x38] sm:$0xff]
      %v4007 = vld [vmem:[#allocation2 + $0x40] sm:$0xff]
      %v4008 = vld [vmem:[#allocation2 + $0x48] sm:$0xff]
      %v4009 = vld [vmem:[#allocation2 + $0x50] sm:$0xff]
      %v4010 = vld [vmem:[#allocation2 + $0x58] sm:$0xff]
      %v4011 = vld [vmem:[#allocation2 + $0x60] sm:$0xff]
      %v4012 = vld [vmem:[#allocation2 + $0x68] sm:$0xff]
      %v4013 = vld [vmem:[#allocation2 + $0x70] sm:$0xff]
      %v4014 = vld [vmem:[#allocation2 + $0x78] sm:$0xff]
      %v4015 = vld [vmem:[#allocation2 + $0x80] sm:$0xff]
      %v4016 = vld [vmem:[#allocation2 + $0x88] sm:$0xff]
      %v4017 = vld [vmem:[#allocation2 + $0x90] sm:$0xff]
      %v4018 = vld [vmem:[#allocation2 + $0x98] sm:$0xff]
      %v4019 = vld [vmem:[#allocation2 + $0xa0] sm:$0xff]
      %v4020 = vld [vmem:[#allocation2 + $0xa8] sm:$0xff]
      %v4021 = vld [vmem:[#allocation2 + $0xb0] sm:$0xff]
      %v4022 = vld [vmem:[#allocation2 + $0xb8] sm:$0xff]
      %v4023 = vld [vmem:[#allocation2 + $0xc0] sm:$0xff]
      %v4024 = vld [vmem:[#allocation2 + $0xc8] sm:$0xff]
      %v4025 = vld [vmem:[#allocation2 + $0xd0] sm:$0xff]
      %v4026 = vld [vmem:[#allocation2 + $0xd8] sm:$0xff]
      %v4027 = vld [vmem:[#allocation2 + $0xe0] sm:$0xff]
      %v4028 = vld [vmem:[#allocation2 + $0xe8] sm:$0xff]
      %v4029 = vld [vmem:[#allocation2 + $0xf0] sm:$0xff]
      %v4030 = vld [vmem:[#allocation2 + $0xf8] sm:$0xff]
      %s4031 = scalar_lea.vmem %s1, 384
      %v4032 = vld [vmem:[%s4031] sm:$0xf]
      %v4033 = vld [vmem:[%s4031 + $0x4] sm:$0xf]
      %v4034 = vld [vmem:[%s4031 + $0x8] sm:$0xf]
      %v4035 = vld [vmem:[%s4031 + $0xc] sm:$0xf]
      %v4036 = vld [vmem:[%s4031 + $0x10] sm:$0xf]
      %v4037 = vld [vmem:[%s4031 + $0x14] sm:$0xf]
      %v4038 = vld [vmem:[%s4031 + $0x18] sm:$0xf]
      %v4039 = vld [vmem:[%s4031 + $0x1c] sm:$0xf]
      %v4040 = vld [vmem:[%s4031 + $0x20] sm:$0xf]
      %v4041 = vld [vmem:[%s4031 + $0x24] sm:$0xf]
      %v4042 = vld [vmem:[%s4031 + $0x28] sm:$0xf]
      %v4043 = vld [vmem:[%s4031 + $0x2c] sm:$0xf]
      %v4044 = vld [vmem:[%s4031 + $0x30] sm:$0xf]
      %v4045 = vld [vmem:[%s4031 + $0x34] sm:$0xf]
      %v4046 = vld [vmem:[%s4031 + $0x38] sm:$0xf]
      %v4047 = vld [vmem:[%s4031 + $0x3c] sm:$0xf]
      %v4080 = vunpack.c.l.b16 %v3967
      %v4081 = vunpack.c.l.b16 %v3968
      %v4082 = vunpack.c.l.b16 %v3969
      %v4083 = vunpack.c.l.b16 %v3970
      %v4084 = vunpack.c.l.b16 %v3971
      %v4085 = vunpack.c.l.b16 %v3972
      %v4086 = vunpack.c.l.b16 %v3973
      %v4087 = vunpack.c.l.b16 %v3974
      %v4088 = vunpack.c.l.b16 %v3975
      %v4089 = vunpack.c.l.b16 %v3976
      %v4090 = vunpack.c.l.b16 %v3977
      %v4091 = vunpack.c.l.b16 %v3978
      %v4092 = vunpack.c.l.b16 %v3979
      %v4093 = vunpack.c.l.b16 %v3980
      %v4094 = vunpack.c.l.b16 %v3981
      %v4095 = vunpack.c.l.b16 %v3982
      %v4096 = vunpack.c.l.b16 %v3983
      %v4097 = vunpack.c.l.b16 %v3984
      %v4098 = vunpack.c.l.b16 %v3985
      %v4099 = vunpack.c.l.b16 %v3986
      %v4100 = vunpack.c.l.b16 %v3987
      %v4101 = vunpack.c.l.b16 %v3988
      %v4102 = vunpack.c.l.b16 %v3989
      %v4103 = vunpack.c.l.b16 %v3990
      %v4104 = vunpack.c.l.b16 %v3991
      %v4105 = vunpack.c.l.b16 %v3992
      %v4106 = vunpack.c.l.b16 %v3993
      %v4107 = vunpack.c.l.b16 %v3994
      %v4108 = vunpack.c.l.b16 %v3995
      %v4109 = vunpack.c.l.b16 %v3996
      %v4110 = vunpack.c.l.b16 %v3997
      %v4111 = vunpack.c.l.b16 %v3998
      %v4112 = vpack.c.b16 %v4081, %v4080
      %v4113 = vpack.c.b16 %v4083, %v4082
      %v4114 = vpack.c.b16 %v4085, %v4084
      %v4115 = vpack.c.b16 %v4087, %v4086
      %v4116 = vpack.c.b16 %v4089, %v4088
      %v4117 = vpack.c.b16 %v4091, %v4090
      %v4118 = vpack.c.b16 %v4093, %v4092
      %v4119 = vpack.c.b16 %v4095, %v4094
      %v4120 = vpack.c.b16 %v4097, %v4096
      %v4121 = vpack.c.b16 %v4099, %v4098
      %v4122 = vpack.c.b16 %v4101, %v4100
      %v4123 = vpack.c.b16 %v4103, %v4102
      %v4124 = vpack.c.b16 %v4105, %v4104
      %v4125 = vpack.c.b16 %v4107, %v4106
      %v4126 = vpack.c.b16 %v4109, %v4108
      %v4127 = vpack.c.b16 %v4111, %v4110
      %v4160 = vunpack.c.l.b16 %v4032
      %v4161 = vunpack.c.l.b16 %v4033
      %v4162 = vunpack.c.l.b16 %v4034
      %v4163 = vunpack.c.l.b16 %v4035
      %v4164 = vunpack.c.l.b16 %v4036
      %v4165 = vunpack.c.l.b16 %v4037
      %v4166 = vunpack.c.l.b16 %v4038
      %v4167 = vunpack.c.l.b16 %v4039
      %v4168 = vunpack.c.l.b16 %v4040
      %v4169 = vunpack.c.l.b16 %v4041
      %v4170 = vunpack.c.l.b16 %v4042
      %v4171 = vunpack.c.l.b16 %v4043
      %v4172 = vunpack.c.l.b16 %v4044
      %v4173 = vunpack.c.l.b16 %v4045
      %v4174 = vunpack.c.l.b16 %v4046
      %v4175 = vunpack.c.l.b16 %v4047
      %v4176 = vpack.c.b16 %v4161, %v4160
      %v4177 = vpack.c.b16 %v4163, %v4162
      %v4178 = vpack.c.b16 %v4165, %v4164
      %v4179 = vpack.c.b16 %v4167, %v4166
      %v4180 = vpack.c.b16 %v4169, %v4168
      %v4181 = vpack.c.b16 %v4171, %v4170
      %v4182 = vpack.c.b16 %v4173, %v4172
      %v4183 = vpack.c.b16 %v4175, %v4174
      %4192 = vmatprep.subr.bf16.mxu0 0
      %4193 = vmatpush1.bf16.msra.mxu0 %v4183
      %4194 = vmatprep.subr.bf16.mxu0 0
      %4195 = vmatpush1.bf16.msra.mxu0 %v4182
      %4196 = vmatprep.subr.bf16.mxu0 0
      %4197 = vmatpush1.bf16.msra.mxu0 %v4181
      %4198 = vmatprep.subr.bf16.mxu0 0
      %4199 = vmatpush1.bf16.msra.mxu0 %v4180
      %4200 = vmatprep.subr.bf16.mxu0 0
      %4201 = vmatpush1.bf16.msra.mxu0 %v4179
      %4202 = vmatprep.subr.bf16.mxu0 0
      %4203 = vmatpush1.bf16.msra.mxu0 %v4178
      %4204 = vmatprep.subr.bf16.mxu0 0
      %4205 = vmatpush1.bf16.msra.mxu0 %v4177
      %4206 = vmatprep.subr.bf16.mxu0 0
      %4207 = vmatpush1.bf16.msra.mxu0 %v4176
      %4208 = vmatprep.subr.bf16.mxu0 0
      %4209 = vmatpush2.bf16.msra.mxu0 0
      %4210 = vmatprep.subr.bf16.mxu0 0
      %4211 = vmatpush2.bf16.msra.mxu0 0
      %4212 = vmatprep.subr.bf16.mxu0 0
      %4213 = vmatpush2.bf16.msra.mxu0 0
      %4214 = vmatprep.subr.bf16.mxu0 0
      %4215 = vmatpush2.bf16.msra.mxu0 0
      %4216 = vmatprep.subr.bf16.mxu0 0
      %4217 = vmatpush2.bf16.msra.mxu0 0
      %4218 = vmatprep.subr.bf16.mxu0 0
      %4219 = vmatpush2.bf16.msra.mxu0 0
      %4220 = vmatprep.subr.bf16.mxu0 0
      %4221 = vmatpush2.bf16.msra.mxu0 0
      %4222 = vmatprep.subr.bf16.mxu0 0
      %4223 = vmatpush2.bf16.msra.mxu0 0
      %4224 = vmatprep.mubr.bf16.mxu0 0
      %4225 = vmatmul.mubr.bf16.gmra.mxu0 %v4112
      %v4226 = vpop.f32.mrf.mxu0
      %v4227 = vadd.f32 0.0, %v4226
      %v4228 = vpop.f32.mrf.mxu0
      %v4229 = vpop.f32.mrf.mxu0
      %v4230 = vadd.f32 0.0, %v4229
      %v4231 = vpop.f32.mrf.mxu0
      %4232 = vmatprep.mubr.bf16.mxu0 0
      %4233 = vmatmul.mubr.bf16.gmra.mxu0 %v4113
      %v4234 = vpop.f32.mrf.mxu0
      %v4235 = vadd.f32 0.0, %v4234
      %v4236 = vpop.f32.mrf.mxu0
      %v4237 = vpop.f32.mrf.mxu0
      %v4238 = vadd.f32 0.0, %v4237
      %v4239 = vpop.f32.mrf.mxu0
      %4240 = vmatprep.mubr.bf16.mxu0 0
      %4241 = vmatmul.mubr.bf16.gmra.mxu0 %v4114
      %v4242 = vpop.f32.mrf.mxu0
      %v4243 = vadd.f32 0.0, %v4242
      %v4244 = vpop.f32.mrf.mxu0
      %v4245 = vpop.f32.mrf.mxu0
      %v4246 = vadd.f32 0.0, %v4245
      %v4247 = vpop.f32.mrf.mxu0
      %4248 = vmatprep.mubr.bf16.mxu0 0
      %4249 = vmatmul.mubr.bf16.gmra.mxu0 %v4115
      %v4250 = vpop.f32.mrf.mxu0
      %v4251 = vadd.f32 0.0, %v4250
      %v4252 = vpop.f32.mrf.mxu0
      %v4253 = vpop.f32.mrf.mxu0
      %v4254 = vadd.f32 0.0, %v4253
      %v4255 = vpop.f32.mrf.mxu0
      %4256 = vmatprep.mubr.bf16.mxu0 0
      %4257 = vmatmul.mubr.bf16.gmra.mxu0 %v4116
      %v4258 = vpop.f32.mrf.mxu0
      %v4259 = vadd.f32 0.0, %v4258
      %v4260 = vpop.f32.mrf.mxu0
      %v4261 = vpop.f32.mrf.mxu0
      %v4262 = vadd.f32 0.0, %v4261
      %v4263 = vpop.f32.mrf.mxu0
      %4264 = vmatprep.mubr.bf16.mxu0 0
      %4265 = vmatmul.mubr.bf16.gmra.mxu0 %v4117
      %v4266 = vpop.f32.mrf.mxu0
      %v4267 = vadd.f32 0.0, %v4266
      %v4268 = vpop.f32.mrf.mxu0
      %v4269 = vpop.f32.mrf.mxu0
      %v4270 = vadd.f32 0.0, %v4269
      %v4271 = vpop.f32.mrf.mxu0
      %4272 = vmatprep.mubr.bf16.mxu0 0
      %4273 = vmatmul.mubr.bf16.gmra.mxu0 %v4118
      %v4274 = vpop.f32.mrf.mxu0
      %v4275 = vadd.f32 0.0, %v4274
      %v4276 = vpop.f32.mrf.mxu0
      %v4277 = vpop.f32.mrf.mxu0
      %v4278 = vadd.f32 0.0, %v4277
      %v4279 = vpop.f32.mrf.mxu0
      %4280 = vmatprep.mubr.bf16.mxu0 0
      %4281 = vmatmul.mubr.bf16.gmra.mxu0 %v4119
      %v4282 = vpop.f32.mrf.mxu0
      %v4283 = vadd.f32 0.0, %v4282
      %v4284 = vpop.f32.mrf.mxu0
      %v4285 = vpop.f32.mrf.mxu0
      %v4286 = vadd.f32 0.0, %v4285
      %v4287 = vpop.f32.mrf.mxu0
      %4288 = vmatprep.mubr.bf16.mxu0 0
      %4289 = vmatmul.mubr.bf16.gmra.mxu0 %v4120
      %v4290 = vpop.f32.mrf.mxu0
      %v4291 = vadd.f32 0.0, %v4290
      %v4292 = vpop.f32.mrf.mxu0
      %v4293 = vpop.f32.mrf.mxu0
      %v4294 = vadd.f32 0.0, %v4293
      %v4295 = vpop.f32.mrf.mxu0
      %4296 = vmatprep.mubr.bf16.mxu0 0
      %4297 = vmatmul.mubr.bf16.gmra.mxu0 %v4121
      %v4298 = vpop.f32.mrf.mxu0
      %v4299 = vadd.f32 0.0, %v4298
      %v4300 = vpop.f32.mrf.mxu0
      %v4301 = vpop.f32.mrf.mxu0
      %v4302 = vadd.f32 0.0, %v4301
      %v4303 = vpop.f32.mrf.mxu0
      %4304 = vmatprep.mubr.bf16.mxu0 0
      %4305 = vmatmul.mubr.bf16.gmra.mxu0 %v4122
      %v4306 = vpop.f32.mrf.mxu0
      %v4307 = vadd.f32 0.0, %v4306
      %v4308 = vpop.f32.mrf.mxu0
      %v4309 = vpop.f32.mrf.mxu0
      %v4310 = vadd.f32 0.0, %v4309
      %v4311 = vpop.f32.mrf.mxu0
      %4312 = vmatprep.mubr.bf16.mxu0 0
      %4313 = vmatmul.mubr.bf16.gmra.mxu0 %v4123
      %v4314 = vpop.f32.mrf.mxu0
      %v4315 = vadd.f32 0.0, %v4314
      %v4316 = vpop.f32.mrf.mxu0
      %v4317 = vpop.f32.mrf.mxu0
      %v4318 = vadd.f32 0.0, %v4317
      %v4319 = vpop.f32.mrf.mxu0
      %4320 = vmatprep.mubr.bf16.mxu0 0
      %4321 = vmatmul.mubr.bf16.gmra.mxu0 %v4124
      %v4322 = vpop.f32.mrf.mxu0
      %v4323 = vadd.f32 0.0, %v4322
      %v4324 = vpop.f32.mrf.mxu0
      %v4325 = vpop.f32.mrf.mxu0
      %v4326 = vadd.f32 0.0, %v4325
      %v4327 = vpop.f32.mrf.mxu0
      %4328 = vmatprep.mubr.bf16.mxu0 0
      %4329 = vmatmul.mubr.bf16.gmra.mxu0 %v4125
      %v4330 = vpop.f32.mrf.mxu0
      %v4331 = vadd.f32 0.0, %v4330
      %v4332 = vpop.f32.mrf.mxu0
      %v4333 = vpop.f32.mrf.mxu0
      %v4334 = vadd.f32 0.0, %v4333
      %v4335 = vpop.f32.mrf.mxu0
      %4336 = vmatprep.mubr.bf16.mxu0 0
      %4337 = vmatmul.mubr.bf16.gmra.mxu0 %v4126
      %v4338 = vpop.f32.mrf.mxu0
      %v4339 = vadd.f32 0.0, %v4338
      %v4340 = vpop.f32.mrf.mxu0
      %v4341 = vpop.f32.mrf.mxu0
      %v4342 = vadd.f32 0.0, %v4341
      %v4343 = vpop.f32.mrf.mxu0
      %4344 = vmatprep.mubr.bf16.mxu0 0
      %4345 = vmatmul.mubr.bf16.gmra.mxu0 %v4127
      %v4346 = vpop.f32.mrf.mxu0
      %v4347 = vadd.f32 0.0, %v4346
      %v4348 = vpop.f32.mrf.mxu0
      %v4349 = vpop.f32.mrf.mxu0
      %v4350 = vadd.f32 0.0, %v4349
      %v4351 = vpop.f32.mrf.mxu0
      %4352 = vdwg.mxu0
      %v4353 = vadd.f32 %v3999, %v4227
      %v4354 = vadd.f32 %v4000, %v4230
      %v4355 = vadd.f32 %v4001, %v4235
      %v4356 = vadd.f32 %v4002, %v4238
      %v4357 = vadd.f32 %v4003, %v4243
      %v4358 = vadd.f32 %v4004, %v4246
      %v4359 = vadd.f32 %v4005, %v4251
      %v4360 = vadd.f32 %v4006, %v4254
      %v4361 = vadd.f32 %v4007, %v4259
      %v4362 = vadd.f32 %v4008, %v4262
      %v4363 = vadd.f32 %v4009, %v4267
      %v4364 = vadd.f32 %v4010, %v4270
      %v4365 = vadd.f32 %v4011, %v4275
      %v4366 = vadd.f32 %v4012, %v4278
      %v4367 = vadd.f32 %v4013, %v4283
      %v4368 = vadd.f32 %v4014, %v4286
      %v4369 = vadd.f32 %v4015, %v4291
      %v4370 = vadd.f32 %v4016, %v4294
      %v4371 = vadd.f32 %v4017, %v4299
      %v4372 = vadd.f32 %v4018, %v4302
      %v4373 = vadd.f32 %v4019, %v4307
      %v4374 = vadd.f32 %v4020, %v4310
      %v4375 = vadd.f32 %v4021, %v4315
      %v4376 = vadd.f32 %v4022, %v4318
      %v4377 = vadd.f32 %v4023, %v4323
      %v4378 = vadd.f32 %v4024, %v4326
      %v4379 = vadd.f32 %v4025, %v4331
      %v4380 = vadd.f32 %v4026, %v4334
      %v4381 = vadd.f32 %v4027, %v4339
      %v4382 = vadd.f32 %v4028, %v4342
      %v4383 = vadd.f32 %v4029, %v4347
      %v4384 = vadd.f32 %v4030, %v4350
      %4385 = vst [vmem:[#allocation2] sm:$0xff] %v4353
      %4386 = vst [vmem:[#allocation2 + $0x8] sm:$0xff] %v4354
      %4387 = vst [vmem:[#allocation2 + $0x10] sm:$0xff] %v4355
      %4388 = vst [vmem:[#allocation2 + $0x18] sm:$0xff] %v4356
      %4389 = vst [vmem:[#allocation2 + $0x20] sm:$0xff] %v4357
      %4390 = vst [vmem:[#allocation2 + $0x28] sm:$0xff] %v4358
      %4391 = vst [vmem:[#allocation2 + $0x30] sm:$0xff] %v4359
      %4392 = vst [vmem:[#allocation2 + $0x38] sm:$0xff] %v4360
      %4393 = vst [vmem:[#allocation2 + $0x40] sm:$0xff] %v4361
      %4394 = vst [vmem:[#allocation2 + $0x48] sm:$0xff] %v4362
      %4395 = vst [vmem:[#allocation2 + $0x50] sm:$0xff] %v4363
      %4396 = vst [vmem:[#allocation2 + $0x58] sm:$0xff] %v4364
      %4397 = vst [vmem:[#allocation2 + $0x60] sm:$0xff] %v4365
      %4398 = vst [vmem:[#allocation2 + $0x68] sm:$0xff] %v4366
      %4399 = vst [vmem:[#allocation2 + $0x70] sm:$0xff] %v4367
      %4400 = vst [vmem:[#allocation2 + $0x78] sm:$0xff] %v4368
      %4401 = vst [vmem:[#allocation2 + $0x80] sm:$0xff] %v4369
      %4402 = vst [vmem:[#allocation2 + $0x88] sm:$0xff] %v4370
      %4403 = vst [vmem:[#allocation2 + $0x90] sm:$0xff] %v4371
      %4404 = vst [vmem:[#allocation2 + $0x98] sm:$0xff] %v4372
      %4405 = vst [vmem:[#allocation2 + $0xa0] sm:$0xff] %v4373
      %4406 = vst [vmem:[#allocation2 + $0xa8] sm:$0xff] %v4374
      %4407 = vst [vmem:[#allocation2 + $0xb0] sm:$0xff] %v4375
      %4408 = vst [vmem:[#allocation2 + $0xb8] sm:$0xff] %v4376
      %4409 = vst [vmem:[#allocation2 + $0xc0] sm:$0xff] %v4377
      %4410 = vst [vmem:[#allocation2 + $0xc8] sm:$0xff] %v4378
      %4411 = vst [vmem:[#allocation2 + $0xd0] sm:$0xff] %v4379
      %4412 = vst [vmem:[#allocation2 + $0xd8] sm:$0xff] %v4380
      %4413 = vst [vmem:[#allocation2 + $0xe0] sm:$0xff] %v4381
      %4414 = vst [vmem:[#allocation2 + $0xe8] sm:$0xff] %v4382
      %4415 = vst [vmem:[#allocation2 + $0xf0] sm:$0xff] %v4383
      %4416 = vst [vmem:[#allocation2 + $0xf8] sm:$0xff] %v4384
      %v4417 = vld [vmem:[%s3966] sm:$0xf]
      %v4418 = vld [vmem:[%s3966 + $0x4] sm:$0xf]
      %v4419 = vld [vmem:[%s3966 + $0x8] sm:$0x1]
      %v4420 = vld [vmem:[%s3966 + $0xc] sm:$0xf]
      %v4421 = vld [vmem:[%s3966 + $0x10] sm:$0xf]
      %v4422 = vld [vmem:[%s3966 + $0x14] sm:$0x1]
      %v4423 = vld [vmem:[%s3966 + $0x18] sm:$0xf]
      %v4424 = vld [vmem:[%s3966 + $0x1c] sm:$0xf]
      %v4425 = vld [vmem:[%s3966 + $0x20] sm:$0x1]
      %v4426 = vld [vmem:[%s3966 + $0x24] sm:$0xf]
      %v4427 = vld [vmem:[%s3966 + $0x28] sm:$0xf]
      %v4428 = vld [vmem:[%s3966 + $0x2c] sm:$0x1]
      %v4429 = vld [vmem:[%s3966 + $0x30] sm:$0xf]
      %v4430 = vld [vmem:[%s3966 + $0x34] sm:$0xf]
      %v4431 = vld [vmem:[%s3966 + $0x38] sm:$0x1]
      %v4432 = vld [vmem:[%s3966 + $0x3c] sm:$0xf]
      %v4433 = vld [vmem:[%s3966 + $0x40] sm:$0xf]
      %v4434 = vld [vmem:[%s3966 + $0x44] sm:$0x1]
      %v4435 = vld [vmem:[%s3966 + $0x48] sm:$0xf]
      %v4436 = vld [vmem:[%s3966 + $0x4c] sm:$0xf]
      %v4437 = vld [vmem:[%s3966 + $0x50] sm:$0x1]
      %v4438 = vld [vmem:[%s3966 + $0x54] sm:$0xf]
      %v4439 = vld [vmem:[%s3966 + $0x58] sm:$0xf]
      %v4440 = vld [vmem:[%s3966 + $0x5c] sm:$0x1]
      %v4441 = vld [vmem:[%s3966 + $0x60] sm:$0xf]
      %v4442 = vld [vmem:[%s3966 + $0x64] sm:$0xf]
      %v4443 = vld [vmem:[%s3966 + $0x68] sm:$0x1]
      %v4444 = vld [vmem:[%s3966 + $0x6c] sm:$0xf]
      %v4445 = vld [vmem:[%s3966 + $0x70] sm:$0xf]
      %v4446 = vld [vmem:[%s3966 + $0x74] sm:$0x1]
      %v4447 = vld [vmem:[%s3966 + $0x78] sm:$0xf]
      %v4448 = vld [vmem:[%s3966 + $0x7c] sm:$0xf]
      %v4449 = vld [vmem:[%s3966 + $0x80] sm:$0x1]
      %v4450 = vld [vmem:[%s3966 + $0x84] sm:$0xf]
      %v4451 = vld [vmem:[%s3966 + $0x88] sm:$0xf]
      %v4452 = vld [vmem:[%s3966 + $0x8c] sm:$0x1]
      %v4453 = vld [vmem:[%s3966 + $0x90] sm:$0xf]
      %v4454 = vld [vmem:[%s3966 + $0x94] sm:$0xf]
      %v4455 = vld [vmem:[%s3966 + $0x98] sm:$0x1]
      %v4456 = vld [vmem:[%s3966 + $0x9c] sm:$0xf]
      %v4457 = vld [vmem:[%s3966 + $0xa0] sm:$0xf]
      %v4458 = vld [vmem:[%s3966 + $0xa4] sm:$0x1]
      %v4459 = vld [vmem:[%s3966 + $0xa8] sm:$0xf]
      %v4460 = vld [vmem:[%s3966 + $0xac] sm:$0xf]
      %v4461 = vld [vmem:[%s3966 + $0xb0] sm:$0x1]
      %v4462 = vld [vmem:[%s3966 + $0xb4] sm:$0xf]
      %v4463 = vld [vmem:[%s3966 + $0xb8] sm:$0xf]
      %v4464 = vld [vmem:[%s3966 + $0xbc] sm:$0x1]
      %v4465 = vld [vmem:[#allocation2] sm:$0xff]
      %v4466 = vld [vmem:[#allocation2 + $0x8] sm:$0xff]
      %v4467 = vld [vmem:[#allocation2 + $0x10] sm:$0xff]
      %v4468 = vld [vmem:[#allocation2 + $0x18] sm:$0xff]
      %v4469 = vld [vmem:[#allocation2 + $0x20] sm:$0xff]
      %v4470 = vld [vmem:[#allocation2 + $0x28] sm:$0xff]
      %v4471 = vld [vmem:[#allocation2 + $0x30] sm:$0xff]
      %v4472 = vld [vmem:[#allocation2 + $0x38] sm:$0xff]
      %v4473 = vld [vmem:[#allocation2 + $0x40] sm:$0xff]
      %v4474 = vld [vmem:[#allocation2 + $0x48] sm:$0xff]
      %v4475 = vld [vmem:[#allocation2 + $0x50] sm:$0xff]
      %v4476 = vld [vmem:[#allocation2 + $0x58] sm:$0xff]
      %v4477 = vld [vmem:[#allocation2 + $0x60] sm:$0xff]
      %v4478 = vld [vmem:[#allocation2 + $0x68] sm:$0xff]
      %v4479 = vld [vmem:[#allocation2 + $0x70] sm:$0xff]
      %v4480 = vld [vmem:[#allocation2 + $0x78] sm:$0xff]
      %v4481 = vld [vmem:[#allocation2 + $0x80] sm:$0xff]
      %v4482 = vld [vmem:[#allocation2 + $0x88] sm:$0xff]
      %v4483 = vld [vmem:[#allocation2 + $0x90] sm:$0xff]
      %v4484 = vld [vmem:[#allocation2 + $0x98] sm:$0xff]
      %v4485 = vld [vmem:[#allocation2 + $0xa0] sm:$0xff]
      %v4486 = vld [vmem:[#allocation2 + $0xa8] sm:$0xff]
      %v4487 = vld [vmem:[#allocation2 + $0xb0] sm:$0xff]
      %v4488 = vld [vmem:[#allocation2 + $0xb8] sm:$0xff]
      %v4489 = vld [vmem:[#allocation2 + $0xc0] sm:$0xff]
      %v4490 = vld [vmem:[#allocation2 + $0xc8] sm:$0xff]
      %v4491 = vld [vmem:[#allocation2 + $0xd0] sm:$0xff]
      %v4492 = vld [vmem:[#allocation2 + $0xd8] sm:$0xff]
      %v4493 = vld [vmem:[#allocation2 + $0xe0] sm:$0xff]
      %v4494 = vld [vmem:[#allocation2 + $0xe8] sm:$0xff]
      %v4495 = vld [vmem:[#allocation2 + $0xf0] sm:$0xff]
      %v4496 = vld [vmem:[#allocation2 + $0xf8] sm:$0xff]
      %v4498 = vshrl.u32 %v4417, 16
      %v4500 = vrot.slane %v4498, 4
      %v4501 = vshll.u32 %v4417, 16
      %v4503 = vrot.slane %v4501, 5
      %v4504 = vor.u32 %v4500, %v4503
      %v4505 = vrot.slane %v4504, 4
      %v4507 = vshll.u32 %v4418, 16
      %v4509 = vrot.slane %v4507, 5
      %v4510 = vsel %vm767, %v4505, %v4509
      %v4511 = vshrl.u32 %v4418, 16
      %v4513 = vrot.slane %v4511, 4
      %v4514 = vor.u32 %v4513, %v4509
      %v4515 = vrot.slane %v4514, 4
      %v4517 = vshll.u32 %v4419, 16
      %v4519 = vrot.slane %v4517, 5
      %v4520 = vsel %vm767, %v4515, %v4519
      %v4522 = vshrl.u32 %v4420, 16
      %v4524 = vrot.slane %v4522, 4
      %v4525 = vshll.u32 %v4420, 16
      %v4527 = vrot.slane %v4525, 5
      %v4528 = vor.u32 %v4524, %v4527
      %v4529 = vrot.slane %v4528, 4
      %v4531 = vshll.u32 %v4421, 16
      %v4533 = vrot.slane %v4531, 5
      %v4534 = vsel %vm767, %v4529, %v4533
      %v4535 = vshrl.u32 %v4421, 16
      %v4537 = vrot.slane %v4535, 4
      %v4538 = vor.u32 %v4537, %v4533
      %v4539 = vrot.slane %v4538, 4
      %v4541 = vshll.u32 %v4422, 16
      %v4543 = vrot.slane %v4541, 5
      %v4544 = vsel %vm767, %v4539, %v4543
      %v4546 = vshrl.u32 %v4423, 16
      %v4548 = vrot.slane %v4546, 4
      %v4549 = vshll.u32 %v4423, 16
      %v4551 = vrot.slane %v4549, 5
      %v4552 = vor.u32 %v4548, %v4551
      %v4553 = vrot.slane %v4552, 4
      %v4555 = vshll.u32 %v4424, 16
      %v4557 = vrot.slane %v4555, 5
      %v4558 = vsel %vm767, %v4553, %v4557
      %v4559 = vshrl.u32 %v4424, 16
      %v4561 = vrot.slane %v4559, 4
      %v4562 = vor.u32 %v4561, %v4557
      %v4563 = vrot.slane %v4562, 4
      %v4565 = vshll.u32 %v4425, 16
      %v4567 = vrot.slane %v4565, 5
      %v4568 = vsel %vm767, %v4563, %v4567
      %v4570 = vshrl.u32 %v4426, 16
      %v4572 = vrot.slane %v4570, 4
      %v4573 = vshll.u32 %v4426, 16
      %v4575 = vrot.slane %v4573, 5
      %v4576 = vor.u32 %v4572, %v4575
      %v4577 = vrot.slane %v4576, 4
      %v4579 = vshll.u32 %v4427, 16
      %v4581 = vrot.slane %v4579, 5
      %v4582 = vsel %vm767, %v4577, %v4581
      %v4583 = vshrl.u32 %v4427, 16
      %v4585 = vrot.slane %v4583, 4
      %v4586 = vor.u32 %v4585, %v4581
      %v4587 = vrot.slane %v4586, 4
      %v4589 = vshll.u32 %v4428, 16
      %v4591 = vrot.slane %v4589, 5
      %v4592 = vsel %vm767, %v4587, %v4591
      %v4594 = vshrl.u32 %v4429, 16
      %v4596 = vrot.slane %v4594, 4
      %v4597 = vshll.u32 %v4429, 16
      %v4599 = vrot.slane %v4597, 5
      %v4600 = vor.u32 %v4596, %v4599
      %v4601 = vrot.slane %v4600, 4
      %v4603 = vshll.u32 %v4430, 16
      %v4605 = vrot.slane %v4603, 5
      %v4606 = vsel %vm767, %v4601, %v4605
      %v4607 = vshrl.u32 %v4430, 16
      %v4609 = vrot.slane %v4607, 4
      %v4610 = vor.u32 %v4609, %v4605
      %v4611 = vrot.slane %v4610, 4
      %v4613 = vshll.u32 %v4431, 16
      %v4615 = vrot.slane %v4613, 5
      %v4616 = vsel %vm767, %v4611, %v4615
      %v4618 = vshrl.u32 %v4432, 16
      %v4620 = vrot.slane %v4618, 4
      %v4621 = vshll.u32 %v4432, 16
      %v4623 = vrot.slane %v4621, 5
      %v4624 = vor.u32 %v4620, %v4623
      %v4625 = vrot.slane %v4624, 4
      %v4627 = vshll.u32 %v4433, 16
      %v4629 = vrot.slane %v4627, 5
      %v4630 = vsel %vm767, %v4625, %v4629
      %v4631 = vshrl.u32 %v4433, 16
      %v4633 = vrot.slane %v4631, 4
      %v4634 = vor.u32 %v4633, %v4629
      %v4635 = vrot.slane %v4634, 4
      %v4637 = vshll.u32 %v4434, 16
      %v4639 = vrot.slane %v4637, 5
      %v4640 = vsel %vm767, %v4635, %v4639
      %v4642 = vshrl.u32 %v4435, 16
      %v4644 = vrot.slane %v4642, 4
      %v4645 = vshll.u32 %v4435, 16
      %v4647 = vrot.slane %v4645, 5
      %v4648 = vor.u32 %v4644, %v4647
      %v4649 = vrot.slane %v4648, 4
      %v4651 = vshll.u32 %v4436, 16
      %v4653 = vrot.slane %v4651, 5
      %v4654 = vsel %vm767, %v4649, %v4653
      %v4655 = vshrl.u32 %v4436, 16
      %v4657 = vrot.slane %v4655, 4
      %v4658 = vor.u32 %v4657, %v4653
      %v4659 = vrot.slane %v4658, 4
      %v4661 = vshll.u32 %v4437, 16
      %v4663 = vrot.slane %v4661, 5
      %v4664 = vsel %vm767, %v4659, %v4663
      %v4666 = vshrl.u32 %v4438, 16
      %v4668 = vrot.slane %v4666, 4
      %v4669 = vshll.u32 %v4438, 16
      %v4671 = vrot.slane %v4669, 5
      %v4672 = vor.u32 %v4668, %v4671
      %v4673 = vrot.slane %v4672, 4
      %v4675 = vshll.u32 %v4439, 16
      %v4677 = vrot.slane %v4675, 5
      %v4678 = vsel %vm767, %v4673, %v4677
      %v4679 = vshrl.u32 %v4439, 16
      %v4681 = vrot.slane %v4679, 4
      %v4682 = vor.u32 %v4681, %v4677
      %v4683 = vrot.slane %v4682, 4
      %v4685 = vshll.u32 %v4440, 16
      %v4687 = vrot.slane %v4685, 5
      %v4688 = vsel %vm767, %v4683, %v4687
      %v4690 = vshrl.u32 %v4441, 16
      %v4692 = vrot.slane %v4690, 4
      %v4693 = vshll.u32 %v4441, 16
      %v4695 = vrot.slane %v4693, 5
      %v4696 = vor.u32 %v4692, %v4695
      %v4697 = vrot.slane %v4696, 4
      %v4699 = vshll.u32 %v4442, 16
      %v4701 = vrot.slane %v4699, 5
      %v4702 = vsel %vm767, %v4697, %v4701
      %v4703 = vshrl.u32 %v4442, 16
      %v4705 = vrot.slane %v4703, 4
      %v4706 = vor.u32 %v4705, %v4701
      %v4707 = vrot.slane %v4706, 4
      %v4709 = vshll.u32 %v4443, 16
      %v4711 = vrot.slane %v4709, 5
      %v4712 = vsel %vm767, %v4707, %v4711
      %v4714 = vshrl.u32 %v4444, 16
      %v4716 = vrot.slane %v4714, 4
      %v4717 = vshll.u32 %v4444, 16
      %v4719 = vrot.slane %v4717, 5
      %v4720 = vor.u32 %v4716, %v4719
      %v4721 = vrot.slane %v4720, 4
      %v4723 = vshll.u32 %v4445, 16
      %v4725 = vrot.slane %v4723, 5
      %v4726 = vsel %vm767, %v4721, %v4725
      %v4727 = vshrl.u32 %v4445, 16
      %v4729 = vrot.slane %v4727, 4
      %v4730 = vor.u32 %v4729, %v4725
      %v4731 = vrot.slane %v4730, 4
      %v4733 = vshll.u32 %v4446, 16
      %v4735 = vrot.slane %v4733, 5
      %v4736 = vsel %vm767, %v4731, %v4735
      %v4738 = vshrl.u32 %v4447, 16
      %v4740 = vrot.slane %v4738, 4
      %v4741 = vshll.u32 %v4447, 16
      %v4743 = vrot.slane %v4741, 5
      %v4744 = vor.u32 %v4740, %v4743
      %v4745 = vrot.slane %v4744, 4
      %v4747 = vshll.u32 %v4448, 16
      %v4749 = vrot.slane %v4747, 5
      %v4750 = vsel %vm767, %v4745, %v4749
      %v4751 = vshrl.u32 %v4448, 16
      %v4753 = vrot.slane %v4751, 4
      %v4754 = vor.u32 %v4753, %v4749
      %v4755 = vrot.slane %v4754, 4
      %v4757 = vshll.u32 %v4449, 16
      %v4759 = vrot.slane %v4757, 5
      %v4760 = vsel %vm767, %v4755, %v4759
      %v4762 = vshrl.u32 %v4450, 16
      %v4764 = vrot.slane %v4762, 4
      %v4765 = vshll.u32 %v4450, 16
      %v4767 = vrot.slane %v4765, 5
      %v4768 = vor.u32 %v4764, %v4767
      %v4769 = vrot.slane %v4768, 4
      %v4771 = vshll.u32 %v4451, 16
      %v4773 = vrot.slane %v4771, 5
      %v4774 = vsel %vm767, %v4769, %v4773
      %v4775 = vshrl.u32 %v4451, 16
      %v4777 = vrot.slane %v4775, 4
      %v4778 = vor.u32 %v4777, %v4773
      %v4779 = vrot.slane %v4778, 4
      %v4781 = vshll.u32 %v4452, 16
      %v4783 = vrot.slane %v4781, 5
      %v4784 = vsel %vm767, %v4779, %v4783
      %v4786 = vshrl.u32 %v4453, 16
      %v4788 = vrot.slane %v4786, 4
      %v4789 = vshll.u32 %v4453, 16
      %v4791 = vrot.slane %v4789, 5
      %v4792 = vor.u32 %v4788, %v4791
      %v4793 = vrot.slane %v4792, 4
      %v4795 = vshll.u32 %v4454, 16
      %v4797 = vrot.slane %v4795, 5
      %v4798 = vsel %vm767, %v4793, %v4797
      %v4799 = vshrl.u32 %v4454, 16
      %v4801 = vrot.slane %v4799, 4
      %v4802 = vor.u32 %v4801, %v4797
      %v4803 = vrot.slane %v4802, 4
      %v4805 = vshll.u32 %v4455, 16
      %v4807 = vrot.slane %v4805, 5
      %v4808 = vsel %vm767, %v4803, %v4807
      %v4810 = vshrl.u32 %v4456, 16
      %v4812 = vrot.slane %v4810, 4
      %v4813 = vshll.u32 %v4456, 16
      %v4815 = vrot.slane %v4813, 5
      %v4816 = vor.u32 %v4812, %v4815
      %v4817 = vrot.slane %v4816, 4
      %v4819 = vshll.u32 %v4457, 16
      %v4821 = vrot.slane %v4819, 5
      %v4822 = vsel %vm767, %v4817, %v4821
      %v4823 = vshrl.u32 %v4457, 16
      %v4825 = vrot.slane %v4823, 4
      %v4826 = vor.u32 %v4825, %v4821
      %v4827 = vrot.slane %v4826, 4
      %v4829 = vshll.u32 %v4458, 16
      %v4831 = vrot.slane %v4829, 5
      %v4832 = vsel %vm767, %v4827, %v4831
      %v4834 = vshrl.u32 %v4459, 16
      %v4836 = vrot.slane %v4834, 4
      %v4837 = vshll.u32 %v4459, 16
      %v4839 = vrot.slane %v4837, 5
      %v4840 = vor.u32 %v4836, %v4839
      %v4841 = vrot.slane %v4840, 4
      %v4843 = vshll.u32 %v4460, 16
      %v4845 = vrot.slane %v4843, 5
      %v4846 = vsel %vm767, %v4841, %v4845
      %v4847 = vshrl.u32 %v4460, 16
      %v4849 = vrot.slane %v4847, 4
      %v4850 = vor.u32 %v4849, %v4845
      %v4851 = vrot.slane %v4850, 4
      %v4853 = vshll.u32 %v4461, 16
      %v4855 = vrot.slane %v4853, 5
      %v4856 = vsel %vm767, %v4851, %v4855
      %v4858 = vshrl.u32 %v4462, 16
      %v4860 = vrot.slane %v4858, 4
      %v4861 = vshll.u32 %v4462, 16
      %v4863 = vrot.slane %v4861, 5
      %v4864 = vor.u32 %v4860, %v4863
      %v4865 = vrot.slane %v4864, 4
      %v4867 = vshll.u32 %v4463, 16
      %v4869 = vrot.slane %v4867, 5
      %v4870 = vsel %vm767, %v4865, %v4869
      %v4871 = vshrl.u32 %v4463, 16
      %v4873 = vrot.slane %v4871, 4
      %v4874 = vor.u32 %v4873, %v4869
      %v4875 = vrot.slane %v4874, 4
      %v4877 = vshll.u32 %v4464, 16
      %v4879 = vrot.slane %v4877, 5
      %v4880 = vsel %vm767, %v4875, %v4879
      %s4881 = scalar_lea.vmem %s1, 448
      %v4882 = vld [vmem:[%s4881] sm:$0xf]
      %v4883 = vld [vmem:[%s4881 + $0x4] sm:$0xf]
      %v4884 = vld [vmem:[%s4881 + $0x8] sm:$0xf]
      %v4885 = vld [vmem:[%s4881 + $0xc] sm:$0xf]
      %v4886 = vld [vmem:[%s4881 + $0x10] sm:$0xf]
      %v4887 = vld [vmem:[%s4881 + $0x14] sm:$0xf]
      %v4888 = vld [vmem:[%s4881 + $0x18] sm:$0xf]
      %v4889 = vld [vmem:[%s4881 + $0x1c] sm:$0xf]
      %v4890 = vld [vmem:[%s4881 + $0x20] sm:$0xf]
      %v4891 = vld [vmem:[%s4881 + $0x24] sm:$0xf]
      %v4892 = vld [vmem:[%s4881 + $0x28] sm:$0xf]
      %v4893 = vld [vmem:[%s4881 + $0x2c] sm:$0xf]
      %v4894 = vld [vmem:[%s4881 + $0x30] sm:$0xf]
      %v4895 = vld [vmem:[%s4881 + $0x34] sm:$0xf]
      %v4896 = vld [vmem:[%s4881 + $0x38] sm:$0xf]
      %v4897 = vld [vmem:[%s4881 + $0x3c] sm:$0xf]
      %v4898 = vunpack.c.l.b16 %v4510
      %v4899 = vunpack.c.l.b16 %v4520
      %v4900 = vunpack.c.l.b16 %v4534
      %v4901 = vunpack.c.l.b16 %v4544
      %v4902 = vunpack.c.l.b16 %v4558
      %v4903 = vunpack.c.l.b16 %v4568
      %v4904 = vunpack.c.l.b16 %v4582
      %v4905 = vunpack.c.l.b16 %v4592
      %v4906 = vunpack.c.l.b16 %v4606
      %v4907 = vunpack.c.l.b16 %v4616
      %v4908 = vunpack.c.l.b16 %v4630
      %v4909 = vunpack.c.l.b16 %v4640
      %v4910 = vunpack.c.l.b16 %v4654
      %v4911 = vunpack.c.l.b16 %v4664
      %v4912 = vunpack.c.l.b16 %v4678
      %v4913 = vunpack.c.l.b16 %v4688
      %v4914 = vunpack.c.l.b16 %v4702
      %v4915 = vunpack.c.l.b16 %v4712
      %v4916 = vunpack.c.l.b16 %v4726
      %v4917 = vunpack.c.l.b16 %v4736
      %v4918 = vunpack.c.l.b16 %v4750
      %v4919 = vunpack.c.l.b16 %v4760
      %v4920 = vunpack.c.l.b16 %v4774
      %v4921 = vunpack.c.l.b16 %v4784
      %v4922 = vunpack.c.l.b16 %v4798
      %v4923 = vunpack.c.l.b16 %v4808
      %v4924 = vunpack.c.l.b16 %v4822
      %v4925 = vunpack.c.l.b16 %v4832
      %v4926 = vunpack.c.l.b16 %v4846
      %v4927 = vunpack.c.l.b16 %v4856
      %v4928 = vunpack.c.l.b16 %v4870
      %v4929 = vunpack.c.l.b16 %v4880
      %v4930 = vpack.c.b16 %v4899, %v4898
      %v4931 = vpack.c.b16 %v4901, %v4900
      %v4932 = vpack.c.b16 %v4903, %v4902
      %v4933 = vpack.c.b16 %v4905, %v4904
      %v4934 = vpack.c.b16 %v4907, %v4906
      %v4935 = vpack.c.b16 %v4909, %v4908
      %v4936 = vpack.c.b16 %v4911, %v4910
      %v4937 = vpack.c.b16 %v4913, %v4912
      %v4938 = vpack.c.b16 %v4915, %v4914
      %v4939 = vpack.c.b16 %v4917, %v4916
      %v4940 = vpack.c.b16 %v4919, %v4918
      %v4941 = vpack.c.b16 %v4921, %v4920
      %v4942 = vpack.c.b16 %v4923, %v4922
      %v4943 = vpack.c.b16 %v4925, %v4924
      %v4944 = vpack.c.b16 %v4927, %v4926
      %v4945 = vpack.c.b16 %v4929, %v4928
      %v4978 = vunpack.c.l.b16 %v4882
      %v4979 = vunpack.c.l.b16 %v4883
      %v4980 = vunpack.c.l.b16 %v4884
      %v4981 = vunpack.c.l.b16 %v4885
      %v4982 = vunpack.c.l.b16 %v4886
      %v4983 = vunpack.c.l.b16 %v4887
      %v4984 = vunpack.c.l.b16 %v4888
      %v4985 = vunpack.c.l.b16 %v4889
      %v4986 = vunpack.c.l.b16 %v4890
      %v4987 = vunpack.c.l.b16 %v4891
      %v4988 = vunpack.c.l.b16 %v4892
      %v4989 = vunpack.c.l.b16 %v4893
      %v4990 = vunpack.c.l.b16 %v4894
      %v4991 = vunpack.c.l.b16 %v4895
      %v4992 = vunpack.c.l.b16 %v4896
      %v4993 = vunpack.c.l.b16 %v4897
      %v4994 = vpack.c.b16 %v4979, %v4978
      %v4995 = vpack.c.b16 %v4981, %v4980
      %v4996 = vpack.c.b16 %v4983, %v4982
      %v4997 = vpack.c.b16 %v4985, %v4984
      %v4998 = vpack.c.b16 %v4987, %v4986
      %v4999 = vpack.c.b16 %v4989, %v4988
      %v5000 = vpack.c.b16 %v4991, %v4990
      %v5001 = vpack.c.b16 %v4993, %v4992
      %5010 = vmatprep.subr.bf16.mxu0 0
      %5011 = vmatpush1.bf16.msra.mxu0 %v5001
      %5012 = vmatprep.subr.bf16.mxu0 0
      %5013 = vmatpush1.bf16.msra.mxu0 %v5000
      %5014 = vmatprep.subr.bf16.mxu0 0
      %5015 = vmatpush1.bf16.msra.mxu0 %v4999
      %5016 = vmatprep.subr.bf16.mxu0 0
      %5017 = vmatpush1.bf16.msra.mxu0 %v4998
      %5018 = vmatprep.subr.bf16.mxu0 0
      %5019 = vmatpush1.bf16.msra.mxu0 %v4997
      %5020 = vmatprep.subr.bf16.mxu0 0
      %5021 = vmatpush1.bf16.msra.mxu0 %v4996
      %5022 = vmatprep.subr.bf16.mxu0 0
      %5023 = vmatpush1.bf16.msra.mxu0 %v4995
      %5024 = vmatprep.subr.bf16.mxu0 0
      %5025 = vmatpush1.bf16.msra.mxu0 %v4994
      %5026 = vmatprep.subr.bf16.mxu0 0
      %5027 = vmatpush2.bf16.msra.mxu0 0
      %5028 = vmatprep.subr.bf16.mxu0 0
      %5029 = vmatpush2.bf16.msra.mxu0 0
      %5030 = vmatprep.subr.bf16.mxu0 0
      %5031 = vmatpush2.bf16.msra.mxu0 0
      %5032 = vmatprep.subr.bf16.mxu0 0
      %5033 = vmatpush2.bf16.msra.mxu0 0
      %5034 = vmatprep.subr.bf16.mxu0 0
      %5035 = vmatpush2.bf16.msra.mxu0 0
      %5036 = vmatprep.subr.bf16.mxu0 0
      %5037 = vmatpush2.bf16.msra.mxu0 0
      %5038 = vmatprep.subr.bf16.mxu0 0
      %5039 = vmatpush2.bf16.msra.mxu0 0
      %5040 = vmatprep.subr.bf16.mxu0 0
      %5041 = vmatpush2.bf16.msra.mxu0 0
      %5042 = vmatprep.mubr.bf16.mxu0 0
      %5043 = vmatmul.mubr.bf16.gmra.mxu0 %v4930
      %v5044 = vpop.f32.mrf.mxu0
      %v5045 = vadd.f32 0.0, %v5044
      %v5046 = vpop.f32.mrf.mxu0
      %v5047 = vpop.f32.mrf.mxu0
      %v5048 = vadd.f32 0.0, %v5047
      %v5049 = vpop.f32.mrf.mxu0
      %5050 = vmatprep.mubr.bf16.mxu0 0
      %5051 = vmatmul.mubr.bf16.gmra.mxu0 %v4931
      %v5052 = vpop.f32.mrf.mxu0
      %v5053 = vadd.f32 0.0, %v5052
      %v5054 = vpop.f32.mrf.mxu0
      %v5055 = vpop.f32.mrf.mxu0
      %v5056 = vadd.f32 0.0, %v5055
      %v5057 = vpop.f32.mrf.mxu0
      %5058 = vmatprep.mubr.bf16.mxu0 0
      %5059 = vmatmul.mubr.bf16.gmra.mxu0 %v4932
      %v5060 = vpop.f32.mrf.mxu0
      %v5061 = vadd.f32 0.0, %v5060
      %v5062 = vpop.f32.mrf.mxu0
      %v5063 = vpop.f32.mrf.mxu0
      %v5064 = vadd.f32 0.0, %v5063
      %v5065 = vpop.f32.mrf.mxu0
      %5066 = vmatprep.mubr.bf16.mxu0 0
      %5067 = vmatmul.mubr.bf16.gmra.mxu0 %v4933
      %v5068 = vpop.f32.mrf.mxu0
      %v5069 = vadd.f32 0.0, %v5068
      %v5070 = vpop.f32.mrf.mxu0
      %v5071 = vpop.f32.mrf.mxu0
      %v5072 = vadd.f32 0.0, %v5071
      %v5073 = vpop.f32.mrf.mxu0
      %5074 = vmatprep.mubr.bf16.mxu0 0
      %5075 = vmatmul.mubr.bf16.gmra.mxu0 %v4934
      %v5076 = vpop.f32.mrf.mxu0
      %v5077 = vadd.f32 0.0, %v5076
      %v5078 = vpop.f32.mrf.mxu0
      %v5079 = vpop.f32.mrf.mxu0
      %v5080 = vadd.f32 0.0, %v5079
      %v5081 = vpop.f32.mrf.mxu0
      %5082 = vmatprep.mubr.bf16.mxu0 0
      %5083 = vmatmul.mubr.bf16.gmra.mxu0 %v4935
      %v5084 = vpop.f32.mrf.mxu0
      %v5085 = vadd.f32 0.0, %v5084
      %v5086 = vpop.f32.mrf.mxu0
      %v5087 = vpop.f32.mrf.mxu0
      %v5088 = vadd.f32 0.0, %v5087
      %v5089 = vpop.f32.mrf.mxu0
      %5090 = vmatprep.mubr.bf16.mxu0 0
      %5091 = vmatmul.mubr.bf16.gmra.mxu0 %v4936
      %v5092 = vpop.f32.mrf.mxu0
      %v5093 = vadd.f32 0.0, %v5092
      %v5094 = vpop.f32.mrf.mxu0
      %v5095 = vpop.f32.mrf.mxu0
      %v5096 = vadd.f32 0.0, %v5095
      %v5097 = vpop.f32.mrf.mxu0
      %5098 = vmatprep.mubr.bf16.mxu0 0
      %5099 = vmatmul.mubr.bf16.gmra.mxu0 %v4937
      %v5100 = vpop.f32.mrf.mxu0
      %v5101 = vadd.f32 0.0, %v5100
      %v5102 = vpop.f32.mrf.mxu0
      %v5103 = vpop.f32.mrf.mxu0
      %v5104 = vadd.f32 0.0, %v5103
      %v5105 = vpop.f32.mrf.mxu0
      %5106 = vmatprep.mubr.bf16.mxu0 0
      %5107 = vmatmul.mubr.bf16.gmra.mxu0 %v4938
      %v5108 = vpop.f32.mrf.mxu0
      %v5109 = vadd.f32 0.0, %v5108
      %v5110 = vpop.f32.mrf.mxu0
      %v5111 = vpop.f32.mrf.mxu0
      %v5112 = vadd.f32 0.0, %v5111
      %v5113 = vpop.f32.mrf.mxu0
      %5114 = vmatprep.mubr.bf16.mxu0 0
      %5115 = vmatmul.mubr.bf16.gmra.mxu0 %v4939
      %v5116 = vpop.f32.mrf.mxu0
      %v5117 = vadd.f32 0.0, %v5116
      %v5118 = vpop.f32.mrf.mxu0
      %v5119 = vpop.f32.mrf.mxu0
      %v5120 = vadd.f32 0.0, %v5119
      %v5121 = vpop.f32.mrf.mxu0
      %5122 = vmatprep.mubr.bf16.mxu0 0
      %5123 = vmatmul.mubr.bf16.gmra.mxu0 %v4940
      %v5124 = vpop.f32.mrf.mxu0
      %v5125 = vadd.f32 0.0, %v5124
      %v5126 = vpop.f32.mrf.mxu0
      %v5127 = vpop.f32.mrf.mxu0
      %v5128 = vadd.f32 0.0, %v5127
      %v5129 = vpop.f32.mrf.mxu0
      %5130 = vmatprep.mubr.bf16.mxu0 0
      %5131 = vmatmul.mubr.bf16.gmra.mxu0 %v4941
      %v5132 = vpop.f32.mrf.mxu0
      %v5133 = vadd.f32 0.0, %v5132
      %v5134 = vpop.f32.mrf.mxu0
      %v5135 = vpop.f32.mrf.mxu0
      %v5136 = vadd.f32 0.0, %v5135
      %v5137 = vpop.f32.mrf.mxu0
      %5138 = vmatprep.mubr.bf16.mxu0 0
      %5139 = vmatmul.mubr.bf16.gmra.mxu0 %v4942
      %v5140 = vpop.f32.mrf.mxu0
      %v5141 = vadd.f32 0.0, %v5140
      %v5142 = vpop.f32.mrf.mxu0
      %v5143 = vpop.f32.mrf.mxu0
      %v5144 = vadd.f32 0.0, %v5143
      %v5145 = vpop.f32.mrf.mxu0
      %5146 = vmatprep.mubr.bf16.mxu0 0
      %5147 = vmatmul.mubr.bf16.gmra.mxu0 %v4943
      %v5148 = vpop.f32.mrf.mxu0
      %v5149 = vadd.f32 0.0, %v5148
      %v5150 = vpop.f32.mrf.mxu0
      %v5151 = vpop.f32.mrf.mxu0
      %v5152 = vadd.f32 0.0, %v5151
      %v5153 = vpop.f32.mrf.mxu0
      %5154 = vmatprep.mubr.bf16.mxu0 0
      %5155 = vmatmul.mubr.bf16.gmra.mxu0 %v4944
      %v5156 = vpop.f32.mrf.mxu0
      %v5157 = vadd.f32 0.0, %v5156
      %v5158 = vpop.f32.mrf.mxu0
      %v5159 = vpop.f32.mrf.mxu0
      %v5160 = vadd.f32 0.0, %v5159
      %v5161 = vpop.f32.mrf.mxu0
      %5162 = vmatprep.mubr.bf16.mxu0 0
      %5163 = vmatmul.mubr.bf16.gmra.mxu0 %v4945
      %v5164 = vpop.f32.mrf.mxu0
      %v5165 = vadd.f32 0.0, %v5164
      %v5166 = vpop.f32.mrf.mxu0
      %v5167 = vpop.f32.mrf.mxu0
      %v5168 = vadd.f32 0.0, %v5167
      %v5169 = vpop.f32.mrf.mxu0
      %5170 = vdwg.mxu0
      %v5171 = vadd.f32 %v4465, %v5045
      %v5172 = vadd.f32 %v4466, %v5048
      %v5173 = vadd.f32 %v4467, %v5053
      %v5174 = vadd.f32 %v4468, %v5056
      %v5175 = vadd.f32 %v4469, %v5061
      %v5176 = vadd.f32 %v4470, %v5064
      %v5177 = vadd.f32 %v4471, %v5069
      %v5178 = vadd.f32 %v4472, %v5072
      %v5179 = vadd.f32 %v4473, %v5077
      %v5180 = vadd.f32 %v4474, %v5080
      %v5181 = vadd.f32 %v4475, %v5085
      %v5182 = vadd.f32 %v4476, %v5088
      %v5183 = vadd.f32 %v4477, %v5093
      %v5184 = vadd.f32 %v4478, %v5096
      %v5185 = vadd.f32 %v4479, %v5101
      %v5186 = vadd.f32 %v4480, %v5104
      %v5187 = vadd.f32 %v4481, %v5109
      %v5188 = vadd.f32 %v4482, %v5112
      %v5189 = vadd.f32 %v4483, %v5117
      %v5190 = vadd.f32 %v4484, %v5120
      %v5191 = vadd.f32 %v4485, %v5125
      %v5192 = vadd.f32 %v4486, %v5128
      %v5193 = vadd.f32 %v4487, %v5133
      %v5194 = vadd.f32 %v4488, %v5136
      %v5195 = vadd.f32 %v4489, %v5141
      %v5196 = vadd.f32 %v4490, %v5144
      %v5197 = vadd.f32 %v4491, %v5149
      %v5198 = vadd.f32 %v4492, %v5152
      %v5199 = vadd.f32 %v4493, %v5157
      %v5200 = vadd.f32 %v4494, %v5160
      %v5201 = vadd.f32 %v4495, %v5165
      %v5202 = vadd.f32 %v4496, %v5168
      %5203 = vst [vmem:[#allocation2] sm:$0xff] %v5171
      %5204 = vst [vmem:[#allocation2 + $0x8] sm:$0xff] %v5172
      %5205 = vst [vmem:[#allocation2 + $0x10] sm:$0xff] %v5173
      %5206 = vst [vmem:[#allocation2 + $0x18] sm:$0xff] %v5174
      %5207 = vst [vmem:[#allocation2 + $0x20] sm:$0xff] %v5175
      %5208 = vst [vmem:[#allocation2 + $0x28] sm:$0xff] %v5176
      %5209 = vst [vmem:[#allocation2 + $0x30] sm:$0xff] %v5177
      %5210 = vst [vmem:[#allocation2 + $0x38] sm:$0xff] %v5178
      %5211 = vst [vmem:[#allocation2 + $0x40] sm:$0xff] %v5179
      %5212 = vst [vmem:[#allocation2 + $0x48] sm:$0xff] %v5180
      %5213 = vst [vmem:[#allocation2 + $0x50] sm:$0xff] %v5181
      %5214 = vst [vmem:[#allocation2 + $0x58] sm:$0xff] %v5182
      %5215 = vst [vmem:[#allocation2 + $0x60] sm:$0xff] %v5183
      %5216 = vst [vmem:[#allocation2 + $0x68] sm:$0xff] %v5184
      %5217 = vst [vmem:[#allocation2 + $0x70] sm:$0xff] %v5185
      %5218 = vst [vmem:[#allocation2 + $0x78] sm:$0xff] %v5186
      %5219 = vst [vmem:[#allocation2 + $0x80] sm:$0xff] %v5187
      %5220 = vst [vmem:[#allocation2 + $0x88] sm:$0xff] %v5188
      %5221 = vst [vmem:[#allocation2 + $0x90] sm:$0xff] %v5189
      %5222 = vst [vmem:[#allocation2 + $0x98] sm:$0xff] %v5190
      %5223 = vst [vmem:[#allocation2 + $0xa0] sm:$0xff] %v5191
      %5224 = vst [vmem:[#allocation2 + $0xa8] sm:$0xff] %v5192
      %5225 = vst [vmem:[#allocation2 + $0xb0] sm:$0xff] %v5193
      %5226 = vst [vmem:[#allocation2 + $0xb8] sm:$0xff] %v5194
      %5227 = vst [vmem:[#allocation2 + $0xc0] sm:$0xff] %v5195
      %5228 = vst [vmem:[#allocation2 + $0xc8] sm:$0xff] %v5196
      %5229 = vst [vmem:[#allocation2 + $0xd0] sm:$0xff] %v5197
      %5230 = vst [vmem:[#allocation2 + $0xd8] sm:$0xff] %v5198
      %5231 = vst [vmem:[#allocation2 + $0xe0] sm:$0xff] %v5199
      %5232 = vst [vmem:[#allocation2 + $0xe8] sm:$0xff] %v5200
      %5233 = vst [vmem:[#allocation2 + $0xf0] sm:$0xff] %v5201
      %5234 = vst [vmem:[#allocation2 + $0xf8] sm:$0xff] %v5202
      %v5235 = vld [vmem:[%s3966] sm:$0xe]
      %v5236 = vld [vmem:[%s3966 + $0x4] sm:$0xf]
      %v5237 = vld [vmem:[%s3966 + $0x8] sm:$0x1]
      %v5238 = vld [vmem:[%s3966 + $0xc] sm:$0xe]
      %v5239 = vld [vmem:[%s3966 + $0x10] sm:$0xf]
      %v5240 = vld [vmem:[%s3966 + $0x14] sm:$0x1]
      %v5241 = vld [vmem:[%s3966 + $0x18] sm:$0xe]
      %v5242 = vld [vmem:[%s3966 + $0x1c] sm:$0xf]
      %v5243 = vld [vmem:[%s3966 + $0x20] sm:$0x1]
      %v5244 = vld [vmem:[%s3966 + $0x24] sm:$0xe]
      %v5245 = vld [vmem:[%s3966 + $0x28] sm:$0xf]
      %v5246 = vld [vmem:[%s3966 + $0x2c] sm:$0x1]
      %v5247 = vld [vmem:[%s3966 + $0x30] sm:$0xe]
      %v5248 = vld [vmem:[%s3966 + $0x34] sm:$0xf]
      %v5249 = vld [vmem:[%s3966 + $0x38] sm:$0x1]
      %v5250 = vld [vmem:[%s3966 + $0x3c] sm:$0xe]
      %v5251 = vld [vmem:[%s3966 + $0x40] sm:$0xf]
      %v5252 = vld [vmem:[%s3966 + $0x44] sm:$0x1]
      %v5253 = vld [vmem:[%s3966 + $0x48] sm:$0xe]
      %v5254 = vld [vmem:[%s3966 + $0x4c] sm:$0xf]
      %v5255 = vld [vmem:[%s3966 + $0x50] sm:$0x1]
      %v5256 = vld [vmem:[%s3966 + $0x54] sm:$0xe]
      %v5257 = vld [vmem:[%s3966 + $0x58] sm:$0xf]
      %v5258 = vld [vmem:[%s3966 + $0x5c] sm:$0x1]
      %v5259 = vld [vmem:[%s3966 + $0x60] sm:$0xe]
      %v5260 = vld [vmem:[%s3966 + $0x64] sm:$0xf]
      %v5261 = vld [vmem:[%s3966 + $0x68] sm:$0x1]
      %v5262 = vld [vmem:[%s3966 + $0x6c] sm:$0xe]
      %v5263 = vld [vmem:[%s3966 + $0x70] sm:$0xf]
      %v5264 = vld [vmem:[%s3966 + $0x74] sm:$0x1]
      %v5265 = vld [vmem:[%s3966 + $0x78] sm:$0xe]
      %v5266 = vld [vmem:[%s3966 + $0x7c] sm:$0xf]
      %v5267 = vld [vmem:[%s3966 + $0x80] sm:$0x1]
      %v5268 = vld [vmem:[%s3966 + $0x84] sm:$0xe]
      %v5269 = vld [vmem:[%s3966 + $0x88] sm:$0xf]
      %v5270 = vld [vmem:[%s3966 + $0x8c] sm:$0x1]
      %v5271 = vld [vmem:[%s3966 + $0x90] sm:$0xe]
      %v5272 = vld [vmem:[%s3966 + $0x94] sm:$0xf]
      %v5273 = vld [vmem:[%s3966 + $0x98] sm:$0x1]
      %v5274 = vld [vmem:[%s3966 + $0x9c] sm:$0xe]
      %v5275 = vld [vmem:[%s3966 + $0xa0] sm:$0xf]
      %v5276 = vld [vmem:[%s3966 + $0xa4] sm:$0x1]
      %v5277 = vld [vmem:[%s3966 + $0xa8] sm:$0xe]
      %v5278 = vld [vmem:[%s3966 + $0xac] sm:$0xf]
      %v5279 = vld [vmem:[%s3966 + $0xb0] sm:$0x1]
      %v5280 = vld [vmem:[%s3966 + $0xb4] sm:$0xe]
      %v5281 = vld [vmem:[%s3966 + $0xb8] sm:$0xf]
      %v5282 = vld [vmem:[%s3966 + $0xbc] sm:$0x1]
      %v5283 = vld [vmem:[#allocation2] sm:$0xff]
      %v5284 = vld [vmem:[#allocation2 + $0x8] sm:$0xff]
      %v5285 = vld [vmem:[#allocation2 + $0x10] sm:$0xff]
      %v5286 = vld [vmem:[#allocation2 + $0x18] sm:$0xff]
      %v5287 = vld [vmem:[#allocation2 + $0x20] sm:$0xff]
      %v5288 = vld [vmem:[#allocation2 + $0x28] sm:$0xff]
      %v5289 = vld [vmem:[#allocation2 + $0x30] sm:$0xff]
      %v5290 = vld [vmem:[#allocation2 + $0x38] sm:$0xff]
      %v5291 = vld [vmem:[#allocation2 + $0x40] sm:$0xff]
      %v5292 = vld [vmem:[#allocation2 + $0x48] sm:$0xff]
      %v5293 = vld [vmem:[#allocation2 + $0x50] sm:$0xff]
      %v5294 = vld [vmem:[#allocation2 + $0x58] sm:$0xff]
      %v5295 = vld [vmem:[#allocation2 + $0x60] sm:$0xff]
      %v5296 = vld [vmem:[#allocation2 + $0x68] sm:$0xff]
      %v5297 = vld [vmem:[#allocation2 + $0x70] sm:$0xff]
      %v5298 = vld [vmem:[#allocation2 + $0x78] sm:$0xff]
      %v5299 = vld [vmem:[#allocation2 + $0x80] sm:$0xff]
      %v5300 = vld [vmem:[#allocation2 + $0x88] sm:$0xff]
      %v5301 = vld [vmem:[#allocation2 + $0x90] sm:$0xff]
      %v5302 = vld [vmem:[#allocation2 + $0x98] sm:$0xff]
      %v5303 = vld [vmem:[#allocation2 + $0xa0] sm:$0xff]
      %v5304 = vld [vmem:[#allocation2 + $0xa8] sm:$0xff]
      %v5305 = vld [vmem:[#allocation2 + $0xb0] sm:$0xff]
      %v5306 = vld [vmem:[#allocation2 + $0xb8] sm:$0xff]
      %v5307 = vld [vmem:[#allocation2 + $0xc0] sm:$0xff]
      %v5308 = vld [vmem:[#allocation2 + $0xc8] sm:$0xff]
      %v5309 = vld [vmem:[#allocation2 + $0xd0] sm:$0xff]
      %v5310 = vld [vmem:[#allocation2 + $0xd8] sm:$0xff]
      %v5311 = vld [vmem:[#allocation2 + $0xe0] sm:$0xff]
      %v5312 = vld [vmem:[#allocation2 + $0xe8] sm:$0xff]
      %v5313 = vld [vmem:[#allocation2 + $0xf0] sm:$0xff]
      %v5314 = vld [vmem:[#allocation2 + $0xf8] sm:$0xff]
      %v5363 = vrot.slane %v5235, 5
      %v5364 = vrot.slane %v5363, 4
      %v5365 = vrot.slane %v5236, 5
      %v5366 = vsel %vm1636, %v5364, %v5365
      %v5367 = vrot.slane %v5365, 4
      %v5368 = vrot.slane %v5237, 5
      %v5369 = vsel %vm1636, %v5367, %v5368
      %v5370 = vrot.slane %v5238, 5
      %v5371 = vrot.slane %v5370, 4
      %v5372 = vrot.slane %v5239, 5
      %v5373 = vsel %vm1636, %v5371, %v5372
      %v5374 = vrot.slane %v5372, 4
      %v5375 = vrot.slane %v5240, 5
      %v5376 = vsel %vm1636, %v5374, %v5375
      %v5377 = vrot.slane %v5241, 5
      %v5378 = vrot.slane %v5377, 4
      %v5379 = vrot.slane %v5242, 5
      %v5380 = vsel %vm1636, %v5378, %v5379
      %v5381 = vrot.slane %v5379, 4
      %v5382 = vrot.slane %v5243, 5
      %v5383 = vsel %vm1636, %v5381, %v5382
      %v5384 = vrot.slane %v5244, 5
      %v5385 = vrot.slane %v5384, 4
      %v5386 = vrot.slane %v5245, 5
      %v5387 = vsel %vm1636, %v5385, %v5386
      %v5388 = vrot.slane %v5386, 4
      %v5389 = vrot.slane %v5246, 5
      %v5390 = vsel %vm1636, %v5388, %v5389
      %v5391 = vrot.slane %v5247, 5
      %v5392 = vrot.slane %v5391, 4
      %v5393 = vrot.slane %v5248, 5
      %v5394 = vsel %vm1636, %v5392, %v5393
      %v5395 = vrot.slane %v5393, 4
      %v5396 = vrot.slane %v5249, 5
      %v5397 = vsel %vm1636, %v5395, %v5396
      %v5398 = vrot.slane %v5250, 5
      %v5399 = vrot.slane %v5398, 4
      %v5400 = vrot.slane %v5251, 5
      %v5401 = vsel %vm1636, %v5399, %v5400
      %v5402 = vrot.slane %v5400, 4
      %v5403 = vrot.slane %v5252, 5
      %v5404 = vsel %vm1636, %v5402, %v5403
      %v5405 = vrot.slane %v5253, 5
      %v5406 = vrot.slane %v5405, 4
      %v5407 = vrot.slane %v5254, 5
      %v5408 = vsel %vm1636, %v5406, %v5407
      %v5409 = vrot.slane %v5407, 4
      %v5410 = vrot.slane %v5255, 5
      %v5411 = vsel %vm1636, %v5409, %v5410
      %v5412 = vrot.slane %v5256, 5
      %v5413 = vrot.slane %v5412, 4
      %v5414 = vrot.slane %v5257, 5
      %v5415 = vsel %vm1636, %v5413, %v5414
      %v5416 = vrot.slane %v5414, 4
      %v5417 = vrot.slane %v5258, 5
      %v5418 = vsel %vm1636, %v5416, %v5417
      %v5419 = vrot.slane %v5259, 5
      %v5420 = vrot.slane %v5419, 4
      %v5421 = vrot.slane %v5260, 5
      %v5422 = vsel %vm1636, %v5420, %v5421
      %v5423 = vrot.slane %v5421, 4
      %v5424 = vrot.slane %v5261, 5
      %v5425 = vsel %vm1636, %v5423, %v5424
      %v5426 = vrot.slane %v5262, 5
      %v5427 = vrot.slane %v5426, 4
      %v5428 = vrot.slane %v5263, 5
      %v5429 = vsel %vm1636, %v5427, %v5428
      %v5430 = vrot.slane %v5428, 4
      %v5431 = vrot.slane %v5264, 5
      %v5432 = vsel %vm1636, %v5430, %v5431
      %v5433 = vrot.slane %v5265, 5
      %v5434 = vrot.slane %v5433, 4
      %v5435 = vrot.slane %v5266, 5
      %v5436 = vsel %vm1636, %v5434, %v5435
      %v5437 = vrot.slane %v5435, 4
      %v5438 = vrot.slane %v5267, 5
      %v5439 = vsel %vm1636, %v5437, %v5438
      %v5440 = vrot.slane %v5268, 5
      %v5441 = vrot.slane %v5440, 4
      %v5442 = vrot.slane %v5269, 5
      %v5443 = vsel %vm1636, %v5441, %v5442
      %v5444 = vrot.slane %v5442, 4
      %v5445 = vrot.slane %v5270, 5
      %v5446 = vsel %vm1636, %v5444, %v5445
      %v5447 = vrot.slane %v5271, 5
      %v5448 = vrot.slane %v5447, 4
      %v5449 = vrot.slane %v5272, 5
      %v5450 = vsel %vm1636, %v5448, %v5449
      %v5451 = vrot.slane %v5449, 4
      %v5452 = vrot.slane %v5273, 5
      %v5453 = vsel %vm1636, %v5451, %v5452
      %v5454 = vrot.slane %v5274, 5
      %v5455 = vrot.slane %v5454, 4
      %v5456 = vrot.slane %v5275, 5
      %v5457 = vsel %vm1636, %v5455, %v5456
      %v5458 = vrot.slane %v5456, 4
      %v5459 = vrot.slane %v5276, 5
      %v5460 = vsel %vm1636, %v5458, %v5459
      %v5461 = vrot.slane %v5277, 5
      %v5462 = vrot.slane %v5461, 4
      %v5463 = vrot.slane %v5278, 5
      %v5464 = vsel %vm1636, %v5462, %v5463
      %v5465 = vrot.slane %v5463, 4
      %v5466 = vrot.slane %v5279, 5
      %v5467 = vsel %vm1636, %v5465, %v5466
      %v5468 = vrot.slane %v5280, 5
      %v5469 = vrot.slane %v5468, 4
      %v5470 = vrot.slane %v5281, 5
      %v5471 = vsel %vm1636, %v5469, %v5470
      %v5472 = vrot.slane %v5470, 4
      %v5473 = vrot.slane %v5282, 5
      %v5474 = vsel %vm1636, %v5472, %v5473
      %s5475 = scalar_lea.vmem %s1, 512
      %v5476 = vld [vmem:[%s5475] sm:$0xf]
      %v5477 = vld [vmem:[%s5475 + $0x4] sm:$0xf]
      %v5478 = vld [vmem:[%s5475 + $0x8] sm:$0xf]
      %v5479 = vld [vmem:[%s5475 + $0xc] sm:$0xf]
      %v5480 = vld [vmem:[%s5475 + $0x10] sm:$0xf]
      %v5481 = vld [vmem:[%s5475 + $0x14] sm:$0xf]
      %v5482 = vld [vmem:[%s5475 + $0x18] sm:$0xf]
      %v5483 = vld [vmem:[%s5475 + $0x1c] sm:$0xf]
      %v5484 = vld [vmem:[%s5475 + $0x20] sm:$0xf]
      %v5485 = vld [vmem:[%s5475 + $0x24] sm:$0xf]
      %v5486 = vld [vmem:[%s5475 + $0x28] sm:$0xf]
      %v5487 = vld [vmem:[%s5475 + $0x2c] sm:$0xf]
      %v5488 = vld [vmem:[%s5475 + $0x30] sm:$0xf]
      %v5489 = vld [vmem:[%s5475 + $0x34] sm:$0xf]
      %v5490 = vld [vmem:[%s5475 + $0x38] sm:$0xf]
      %v5491 = vld [vmem:[%s5475 + $0x3c] sm:$0xf]
      %v5492 = vunpack.c.l.b16 %v5366
      %v5493 = vunpack.c.l.b16 %v5369
      %v5494 = vunpack.c.l.b16 %v5373
      %v5495 = vunpack.c.l.b16 %v5376
      %v5496 = vunpack.c.l.b16 %v5380
      %v5497 = vunpack.c.l.b16 %v5383
      %v5498 = vunpack.c.l.b16 %v5387
      %v5499 = vunpack.c.l.b16 %v5390
      %v5500 = vunpack.c.l.b16 %v5394
      %v5501 = vunpack.c.l.b16 %v5397
      %v5502 = vunpack.c.l.b16 %v5401
      %v5503 = vunpack.c.l.b16 %v5404
      %v5504 = vunpack.c.l.b16 %v5408
      %v5505 = vunpack.c.l.b16 %v5411
      %v5506 = vunpack.c.l.b16 %v5415
      %v5507 = vunpack.c.l.b16 %v5418
      %v5508 = vunpack.c.l.b16 %v5422
      %v5509 = vunpack.c.l.b16 %v5425
      %v5510 = vunpack.c.l.b16 %v5429
      %v5511 = vunpack.c.l.b16 %v5432
      %v5512 = vunpack.c.l.b16 %v5436
      %v5513 = vunpack.c.l.b16 %v5439
      %v5514 = vunpack.c.l.b16 %v5443
      %v5515 = vunpack.c.l.b16 %v5446
      %v5516 = vunpack.c.l.b16 %v5450
      %v5517 = vunpack.c.l.b16 %v5453
      %v5518 = vunpack.c.l.b16 %v5457
      %v5519 = vunpack.c.l.b16 %v5460
      %v5520 = vunpack.c.l.b16 %v5464
      %v5521 = vunpack.c.l.b16 %v5467
      %v5522 = vunpack.c.l.b16 %v5471
      %v5523 = vunpack.c.l.b16 %v5474
      %v5524 = vpack.c.b16 %v5493, %v5492
      %v5525 = vpack.c.b16 %v5495, %v5494
      %v5526 = vpack.c.b16 %v5497, %v5496
      %v5527 = vpack.c.b16 %v5499, %v5498
      %v5528 = vpack.c.b16 %v5501, %v5500
      %v5529 = vpack.c.b16 %v5503, %v5502
      %v5530 = vpack.c.b16 %v5505, %v5504
      %v5531 = vpack.c.b16 %v5507, %v5506
      %v5532 = vpack.c.b16 %v5509, %v5508
      %v5533 = vpack.c.b16 %v5511, %v5510
      %v5534 = vpack.c.b16 %v5513, %v5512
      %v5535 = vpack.c.b16 %v5515, %v5514
      %v5536 = vpack.c.b16 %v5517, %v5516
      %v5537 = vpack.c.b16 %v5519, %v5518
      %v5538 = vpack.c.b16 %v5521, %v5520
      %v5539 = vpack.c.b16 %v5523, %v5522
      %v5572 = vunpack.c.l.b16 %v5476
      %v5573 = vunpack.c.l.b16 %v5477
      %v5574 = vunpack.c.l.b16 %v5478
      %v5575 = vunpack.c.l.b16 %v5479
      %v5576 = vunpack.c.l.b16 %v5480
      %v5577 = vunpack.c.l.b16 %v5481
      %v5578 = vunpack.c.l.b16 %v5482
      %v5579 = vunpack.c.l.b16 %v5483
      %v5580 = vunpack.c.l.b16 %v5484
      %v5581 = vunpack.c.l.b16 %v5485
      %v5582 = vunpack.c.l.b16 %v5486
      %v5583 = vunpack.c.l.b16 %v5487
      %v5584 = vunpack.c.l.b16 %v5488
      %v5585 = vunpack.c.l.b16 %v5489
      %v5586 = vunpack.c.l.b16 %v5490
      %v5587 = vunpack.c.l.b16 %v5491
      %v5588 = vpack.c.b16 %v5573, %v5572
      %v5589 = vpack.c.b16 %v5575, %v5574
      %v5590 = vpack.c.b16 %v5577, %v5576
      %v5591 = vpack.c.b16 %v5579, %v5578
      %v5592 = vpack.c.b16 %v5581, %v5580
      %v5593 = vpack.c.b16 %v5583, %v5582
      %v5594 = vpack.c.b16 %v5585, %v5584
      %v5595 = vpack.c.b16 %v5587, %v5586
      %5604 = vmatprep.subr.bf16.mxu0 0
      %5605 = vmatpush1.bf16.msra.mxu0 %v5595
      %5606 = vmatprep.subr.bf16.mxu0 0
      %5607 = vmatpush1.bf16.msra.mxu0 %v5594
      %5608 = vmatprep.subr.bf16.mxu0 0
      %5609 = vmatpush1.bf16.msra.mxu0 %v5593
      %5610 = vmatprep.subr.bf16.mxu0 0
      %5611 = vmatpush1.bf16.msra.mxu0 %v5592
      %5612 = vmatprep.subr.bf16.mxu0 0
      %5613 = vmatpush1.bf16.msra.mxu0 %v5591
      %5614 = vmatprep.subr.bf16.mxu0 0
      %5615 = vmatpush1.bf16.msra.mxu0 %v5590
      %5616 = vmatprep.subr.bf16.mxu0 0
      %5617 = vmatpush1.bf16.msra.mxu0 %v5589
      %5618 = vmatprep.subr.bf16.mxu0 0
      %5619 = vmatpush1.bf16.msra.mxu0 %v5588
      %5620 = vmatprep.subr.bf16.mxu0 0
      %5621 = vmatpush2.bf16.msra.mxu0 0
      %5622 = vmatprep.subr.bf16.mxu0 0
      %5623 = vmatpush2.bf16.msra.mxu0 0
      %5624 = vmatprep.subr.bf16.mxu0 0
      %5625 = vmatpush2.bf16.msra.mxu0 0
      %5626 = vmatprep.subr.bf16.mxu0 0
      %5627 = vmatpush2.bf16.msra.mxu0 0
      %5628 = vmatprep.subr.bf16.mxu0 0
      %5629 = vmatpush2.bf16.msra.mxu0 0
      %5630 = vmatprep.subr.bf16.mxu0 0
      %5631 = vmatpush2.bf16.msra.mxu0 0
      %5632 = vmatprep.subr.bf16.mxu0 0
      %5633 = vmatpush2.bf16.msra.mxu0 0
      %5634 = vmatprep.subr.bf16.mxu0 0
      %5635 = vmatpush2.bf16.msra.mxu0 0
      %5636 = vmatprep.mubr.bf16.mxu0 0
      %5637 = vmatmul.mubr.bf16.gmra.mxu0 %v5524
      %v5638 = vpop.f32.mrf.mxu0
      %v5639 = vadd.f32 0.0, %v5638
      %v5640 = vpop.f32.mrf.mxu0
      %v5641 = vpop.f32.mrf.mxu0
      %v5642 = vadd.f32 0.0, %v5641
      %v5643 = vpop.f32.mrf.mxu0
      %5644 = vmatprep.mubr.bf16.mxu0 0
      %5645 = vmatmul.mubr.bf16.gmra.mxu0 %v5525
      %v5646 = vpop.f32.mrf.mxu0
      %v5647 = vadd.f32 0.0, %v5646
      %v5648 = vpop.f32.mrf.mxu0
      %v5649 = vpop.f32.mrf.mxu0
      %v5650 = vadd.f32 0.0, %v5649
      %v5651 = vpop.f32.mrf.mxu0
      %5652 = vmatprep.mubr.bf16.mxu0 0
      %5653 = vmatmul.mubr.bf16.gmra.mxu0 %v5526
      %v5654 = vpop.f32.mrf.mxu0
      %v5655 = vadd.f32 0.0, %v5654
      %v5656 = vpop.f32.mrf.mxu0
      %v5657 = vpop.f32.mrf.mxu0
      %v5658 = vadd.f32 0.0, %v5657
      %v5659 = vpop.f32.mrf.mxu0
      %5660 = vmatprep.mubr.bf16.mxu0 0
      %5661 = vmatmul.mubr.bf16.gmra.mxu0 %v5527
      %v5662 = vpop.f32.mrf.mxu0
      %v5663 = vadd.f32 0.0, %v5662
      %v5664 = vpop.f32.mrf.mxu0
      %v5665 = vpop.f32.mrf.mxu0
      %v5666 = vadd.f32 0.0, %v5665
      %v5667 = vpop.f32.mrf.mxu0
      %5668 = vmatprep.mubr.bf16.mxu0 0
      %5669 = vmatmul.mubr.bf16.gmra.mxu0 %v5528
      %v5670 = vpop.f32.mrf.mxu0
      %v5671 = vadd.f32 0.0, %v5670
      %v5672 = vpop.f32.mrf.mxu0
      %v5673 = vpop.f32.mrf.mxu0
      %v5674 = vadd.f32 0.0, %v5673
      %v5675 = vpop.f32.mrf.mxu0
      %5676 = vmatprep.mubr.bf16.mxu0 0
      %5677 = vmatmul.mubr.bf16.gmra.mxu0 %v5529
      %v5678 = vpop.f32.mrf.mxu0
      %v5679 = vadd.f32 0.0, %v5678
      %v5680 = vpop.f32.mrf.mxu0
      %v5681 = vpop.f32.mrf.mxu0
      %v5682 = vadd.f32 0.0, %v5681
      %v5683 = vpop.f32.mrf.mxu0
      %5684 = vmatprep.mubr.bf16.mxu0 0
      %5685 = vmatmul.mubr.bf16.gmra.mxu0 %v5530
      %v5686 = vpop.f32.mrf.mxu0
      %v5687 = vadd.f32 0.0, %v5686
      %v5688 = vpop.f32.mrf.mxu0
      %v5689 = vpop.f32.mrf.mxu0
      %v5690 = vadd.f32 0.0, %v5689
      %v5691 = vpop.f32.mrf.mxu0
      %5692 = vmatprep.mubr.bf16.mxu0 0
      %5693 = vmatmul.mubr.bf16.gmra.mxu0 %v5531
      %v5694 = vpop.f32.mrf.mxu0
      %v5695 = vadd.f32 0.0, %v5694
      %v5696 = vpop.f32.mrf.mxu0
      %v5697 = vpop.f32.mrf.mxu0
      %v5698 = vadd.f32 0.0, %v5697
      %v5699 = vpop.f32.mrf.mxu0
      %5700 = vmatprep.mubr.bf16.mxu0 0
      %5701 = vmatmul.mubr.bf16.gmra.mxu0 %v5532
      %v5702 = vpop.f32.mrf.mxu0
      %v5703 = vadd.f32 0.0, %v5702
      %v5704 = vpop.f32.mrf.mxu0
      %v5705 = vpop.f32.mrf.mxu0
      %v5706 = vadd.f32 0.0, %v5705
      %v5707 = vpop.f32.mrf.mxu0
      %5708 = vmatprep.mubr.bf16.mxu0 0
      %5709 = vmatmul.mubr.bf16.gmra.mxu0 %v5533
      %v5710 = vpop.f32.mrf.mxu0
      %v5711 = vadd.f32 0.0, %v5710
      %v5712 = vpop.f32.mrf.mxu0
      %v5713 = vpop.f32.mrf.mxu0
      %v5714 = vadd.f32 0.0, %v5713
      %v5715 = vpop.f32.mrf.mxu0
      %5716 = vmatprep.mubr.bf16.mxu0 0
      %5717 = vmatmul.mubr.bf16.gmra.mxu0 %v5534
      %v5718 = vpop.f32.mrf.mxu0
      %v5719 = vadd.f32 0.0, %v5718
      %v5720 = vpop.f32.mrf.mxu0
      %v5721 = vpop.f32.mrf.mxu0
      %v5722 = vadd.f32 0.0, %v5721
      %v5723 = vpop.f32.mrf.mxu0
      %5724 = vmatprep.mubr.bf16.mxu0 0
      %5725 = vmatmul.mubr.bf16.gmra.mxu0 %v5535
      %v5726 = vpop.f32.mrf.mxu0
      %v5727 = vadd.f32 0.0, %v5726
      %v5728 = vpop.f32.mrf.mxu0
      %v5729 = vpop.f32.mrf.mxu0
      %v5730 = vadd.f32 0.0, %v5729
      %v5731 = vpop.f32.mrf.mxu0
      %5732 = vmatprep.mubr.bf16.mxu0 0
      %5733 = vmatmul.mubr.bf16.gmra.mxu0 %v5536
      %v5734 = vpop.f32.mrf.mxu0
      %v5735 = vadd.f32 0.0, %v5734
      %v5736 = vpop.f32.mrf.mxu0
      %v5737 = vpop.f32.mrf.mxu0
      %v5738 = vadd.f32 0.0, %v5737
      %v5739 = vpop.f32.mrf.mxu0
      %5740 = vmatprep.mubr.bf16.mxu0 0
      %5741 = vmatmul.mubr.bf16.gmra.mxu0 %v5537
      %v5742 = vpop.f32.mrf.mxu0
      %v5743 = vadd.f32 0.0, %v5742
      %v5744 = vpop.f32.mrf.mxu0
      %v5745 = vpop.f32.mrf.mxu0
      %v5746 = vadd.f32 0.0, %v5745
      %v5747 = vpop.f32.mrf.mxu0
      %5748 = vmatprep.mubr.bf16.mxu0 0
      %5749 = vmatmul.mubr.bf16.gmra.mxu0 %v5538
      %v5750 = vpop.f32.mrf.mxu0
      %v5751 = vadd.f32 0.0, %v5750
      %v5752 = vpop.f32.mrf.mxu0
      %v5753 = vpop.f32.mrf.mxu0
      %v5754 = vadd.f32 0.0, %v5753
      %v5755 = vpop.f32.mrf.mxu0
      %5756 = vmatprep.mubr.bf16.mxu0 0
      %5757 = vmatmul.mubr.bf16.gmra.mxu0 %v5539
      %v5758 = vpop.f32.mrf.mxu0
      %v5759 = vadd.f32 0.0, %v5758
      %v5760 = vpop.f32.mrf.mxu0
      %v5761 = vpop.f32.mrf.mxu0
      %v5762 = vadd.f32 0.0, %v5761
      %v5763 = vpop.f32.mrf.mxu0
      %5764 = vdwg.mxu0
      %v5765 = vadd.f32 %v5283, %v5639
      %v5766 = vadd.f32 %v5284, %v5642
      %v5767 = vadd.f32 %v5285, %v5647
      %v5768 = vadd.f32 %v5286, %v5650
      %v5769 = vadd.f32 %v5287, %v5655
      %v5770 = vadd.f32 %v5288, %v5658
      %v5771 = vadd.f32 %v5289, %v5663
      %v5772 = vadd.f32 %v5290, %v5666
      %v5773 = vadd.f32 %v5291, %v5671
      %v5774 = vadd.f32 %v5292, %v5674
      %v5775 = vadd.f32 %v5293, %v5679
      %v5776 = vadd.f32 %v5294, %v5682
      %v5777 = vadd.f32 %v5295, %v5687
      %v5778 = vadd.f32 %v5296, %v5690
      %v5779 = vadd.f32 %v5297, %v5695
      %v5780 = vadd.f32 %v5298, %v5698
      %v5781 = vadd.f32 %v5299, %v5703
      %v5782 = vadd.f32 %v5300, %v5706
      %v5783 = vadd.f32 %v5301, %v5711
      %v5784 = vadd.f32 %v5302, %v5714
      %v5785 = vadd.f32 %v5303, %v5719
      %v5786 = vadd.f32 %v5304, %v5722
      %v5787 = vadd.f32 %v5305, %v5727
      %v5788 = vadd.f32 %v5306, %v5730
      %v5789 = vadd.f32 %v5307, %v5735
      %v5790 = vadd.f32 %v5308, %v5738
      %v5791 = vadd.f32 %v5309, %v5743
      %v5792 = vadd.f32 %v5310, %v5746
      %v5793 = vadd.f32 %v5311, %v5751
      %v5794 = vadd.f32 %v5312, %v5754
      %v5795 = vadd.f32 %v5313, %v5759
      %v5796 = vadd.f32 %v5314, %v5762
      %5797 = vst [vmem:[#allocation2] sm:$0xff] %v5765
      %5798 = vst [vmem:[#allocation2 + $0x8] sm:$0xff] %v5766
      %5799 = vst [vmem:[#allocation2 + $0x10] sm:$0xff] %v5767
      %5800 = vst [vmem:[#allocation2 + $0x18] sm:$0xff] %v5768
      %5801 = vst [vmem:[#allocation2 + $0x20] sm:$0xff] %v5769
      %5802 = vst [vmem:[#allocation2 + $0x28] sm:$0xff] %v5770
      %5803 = vst [vmem:[#allocation2 + $0x30] sm:$0xff] %v5771
      %5804 = vst [vmem:[#allocation2 + $0x38] sm:$0xff] %v5772
      %5805 = vst [vmem:[#allocation2 + $0x40] sm:$0xff] %v5773
      %5806 = vst [vmem:[#allocation2 + $0x48] sm:$0xff] %v5774
      %5807 = vst [vmem:[#allocation2 + $0x50] sm:$0xff] %v5775
      %5808 = vst [vmem:[#allocation2 + $0x58] sm:$0xff] %v5776
      %5809 = vst [vmem:[#allocation2 + $0x60] sm:$0xff] %v5777
      %5810 = vst [vmem:[#allocation2 + $0x68] sm:$0xff] %v5778
      %5811 = vst [vmem:[#allocation2 + $0x70] sm:$0xff] %v5779
      %5812 = vst [vmem:[#allocation2 + $0x78] sm:$0xff] %v5780
      %5813 = vst [vmem:[#allocation2 + $0x80] sm:$0xff] %v5781
      %5814 = vst [vmem:[#allocation2 + $0x88] sm:$0xff] %v5782
      %5815 = vst [vmem:[#allocation2 + $0x90] sm:$0xff] %v5783
      %5816 = vst [vmem:[#allocation2 + $0x98] sm:$0xff] %v5784
      %5817 = vst [vmem:[#allocation2 + $0xa0] sm:$0xff] %v5785
      %5818 = vst [vmem:[#allocation2 + $0xa8] sm:$0xff] %v5786
      %5819 = vst [vmem:[#allocation2 + $0xb0] sm:$0xff] %v5787
      %5820 = vst [vmem:[#allocation2 + $0xb8] sm:$0xff] %v5788
      %5821 = vst [vmem:[#allocation2 + $0xc0] sm:$0xff] %v5789
      %5822 = vst [vmem:[#allocation2 + $0xc8] sm:$0xff] %v5790
      %5823 = vst [vmem:[#allocation2 + $0xd0] sm:$0xff] %v5791
      %5824 = vst [vmem:[#allocation2 + $0xd8] sm:$0xff] %v5792
      %5825 = vst [vmem:[#allocation2 + $0xe0] sm:$0xff] %v5793
      %5826 = vst [vmem:[#allocation2 + $0xe8] sm:$0xff] %v5794
      %5827 = vst [vmem:[#allocation2 + $0xf0] sm:$0xff] %v5795
      %5828 = vst [vmem:[#allocation2 + $0xf8] sm:$0xff] %v5796
      %v5829 = vld [vmem:[#allocation2] sm:$0xff]
      %v5830 = vld [vmem:[#allocation2 + $0x8] sm:$0xff]
      %v5831 = vld [vmem:[#allocation2 + $0x10] sm:$0xff]
      %v5832 = vld [vmem:[#allocation2 + $0x18] sm:$0xff]
      %v5833 = vld [vmem:[#allocation2 + $0x20] sm:$0xff]
      %v5834 = vld [vmem:[#allocation2 + $0x28] sm:$0xff]
      %v5835 = vld [vmem:[#allocation2 + $0x30] sm:$0xff]
      %v5836 = vld [vmem:[#allocation2 + $0x38] sm:$0xff]
      %v5837 = vld [vmem:[#allocation2 + $0x40] sm:$0xff]
      %v5838 = vld [vmem:[#allocation2 + $0x48] sm:$0xff]
      %v5839 = vld [vmem:[#allocation2 + $0x50] sm:$0xff]
      %v5840 = vld [vmem:[#allocation2 + $0x58] sm:$0xff]
      %v5841 = vld [vmem:[#allocation2 + $0x60] sm:$0xff]
      %v5842 = vld [vmem:[#allocation2 + $0x68] sm:$0xff]
      %v5843 = vld [vmem:[#allocation2 + $0x70] sm:$0xff]
      %v5844 = vld [vmem:[#allocation2 + $0x78] sm:$0xff]
      %v5845 = vld [vmem:[#allocation2 + $0x80] sm:$0xff]
      %v5846 = vld [vmem:[#allocation2 + $0x88] sm:$0xff]
      %v5847 = vld [vmem:[#allocation2 + $0x90] sm:$0xff]
      %v5848 = vld [vmem:[#allocation2 + $0x98] sm:$0xff]
      %v5849 = vld [vmem:[#allocation2 + $0xa0] sm:$0xff]
      %v5850 = vld [vmem:[#allocation2 + $0xa8] sm:$0xff]
      %v5851 = vld [vmem:[#allocation2 + $0xb0] sm:$0xff]
      %v5852 = vld [vmem:[#allocation2 + $0xb8] sm:$0xff]
      %v5853 = vld [vmem:[#allocation2 + $0xc0] sm:$0xff]
      %v5854 = vld [vmem:[#allocation2 + $0xc8] sm:$0xff]
      %v5855 = vld [vmem:[#allocation2 + $0xd0] sm:$0xff]
      %v5856 = vld [vmem:[#allocation2 + $0xd8] sm:$0xff]
      %v5857 = vld [vmem:[#allocation2 + $0xe0] sm:$0xff]
      %v5858 = vld [vmem:[#allocation2 + $0xe8] sm:$0xff]
      %v5859 = vld [vmem:[#allocation2 + $0xf0] sm:$0xff]
      %v5860 = vld [vmem:[#allocation2 + $0xf8] sm:$0xff]
      %v5861 = vld [vmem:[%s2] sm:$0x1]
      %v5863 = vlaneseq
      %v5864 = vshrl.u32 %v5863, 7
      %v5865 = vsub.s32 0, %v5864
      %v5866 = vrot.slane %v5861, %v5865
      %v5868 = vadd.f32 %v5829, %v5866
      %v5869 = vadd.f32 %v5830, %v5866
      %v5870 = vadd.f32 %v5831, %v5866
      %v5871 = vadd.f32 %v5832, %v5866
      %v5872 = vadd.f32 %v5833, %v5866
      %v5873 = vadd.f32 %v5834, %v5866
      %v5874 = vadd.f32 %v5835, %v5866
      %v5875 = vadd.f32 %v5836, %v5866
      %v5876 = vadd.f32 %v5837, %v5866
      %v5877 = vadd.f32 %v5838, %v5866
      %v5878 = vadd.f32 %v5839, %v5866
      %v5879 = vadd.f32 %v5840, %v5866
      %v5880 = vadd.f32 %v5841, %v5866
      %v5881 = vadd.f32 %v5842, %v5866
      %v5882 = vadd.f32 %v5843, %v5866
      %v5883 = vadd.f32 %v5844, %v5866
      %v5884 = vadd.f32 %v5845, %v5866
      %v5885 = vadd.f32 %v5846, %v5866
      %v5886 = vadd.f32 %v5847, %v5866
      %v5887 = vadd.f32 %v5848, %v5866
      %v5888 = vadd.f32 %v5849, %v5866
      %v5889 = vadd.f32 %v5850, %v5866
      %v5890 = vadd.f32 %v5851, %v5866
      %v5891 = vadd.f32 %v5852, %v5866
      %v5892 = vadd.f32 %v5853, %v5866
      %v5893 = vadd.f32 %v5854, %v5866
      %v5894 = vadd.f32 %v5855, %v5866
      %v5895 = vadd.f32 %v5856, %v5866
      %v5896 = vadd.f32 %v5857, %v5866
      %v5897 = vadd.f32 %v5858, %v5866
      %v5898 = vadd.f32 %v5859, %v5866
      %v5899 = vadd.f32 %v5860, %v5866
      %v5900 = vmax.f32 %v5868, 0.0
      %v5901 = vmax.f32 %v5869, 0.0
      %v5902 = vmax.f32 %v5870, 0.0
      %v5903 = vmax.f32 %v5871, 0.0
      %v5904 = vmax.f32 %v5872, 0.0
      %v5905 = vmax.f32 %v5873, 0.0
      %v5906 = vmax.f32 %v5874, 0.0
      %v5907 = vmax.f32 %v5875, 0.0
      %v5908 = vmax.f32 %v5876, 0.0
      %v5909 = vmax.f32 %v5877, 0.0
      %v5910 = vmax.f32 %v5878, 0.0
      %v5911 = vmax.f32 %v5879, 0.0
      %v5912 = vmax.f32 %v5880, 0.0
      %v5913 = vmax.f32 %v5881, 0.0
      %v5914 = vmax.f32 %v5882, 0.0
      %v5915 = vmax.f32 %v5883, 0.0
      %v5916 = vmax.f32 %v5884, 0.0
      %v5917 = vmax.f32 %v5885, 0.0
      %v5918 = vmax.f32 %v5886, 0.0
      %v5919 = vmax.f32 %v5887, 0.0
      %v5920 = vmax.f32 %v5888, 0.0
      %v5921 = vmax.f32 %v5889, 0.0
      %v5922 = vmax.f32 %v5890, 0.0
      %v5923 = vmax.f32 %v5891, 0.0
      %v5924 = vmax.f32 %v5892, 0.0
      %v5925 = vmax.f32 %v5893, 0.0
      %v5926 = vmax.f32 %v5894, 0.0
      %v5927 = vmax.f32 %v5895, 0.0
      %v5928 = vmax.f32 %v5896, 0.0
      %v5929 = vmax.f32 %v5897, 0.0
      %v5930 = vmax.f32 %v5898, 0.0
      %v5931 = vmax.f32 %v5899, 0.0
      %v5932 = vpack.c.bf16 %v5901, %v5900
      %v5933 = vpack.c.bf16 %v5903, %v5902
      %v5934 = vpack.c.bf16 %v5905, %v5904
      %v5935 = vpack.c.bf16 %v5907, %v5906
      %v5936 = vpack.c.bf16 %v5909, %v5908
      %v5937 = vpack.c.bf16 %v5911, %v5910
      %v5938 = vpack.c.bf16 %v5913, %v5912
      %v5939 = vpack.c.bf16 %v5915, %v5914
      %v5940 = vpack.c.bf16 %v5917, %v5916
      %v5941 = vpack.c.bf16 %v5919, %v5918
      %v5942 = vpack.c.bf16 %v5921, %v5920
      %v5943 = vpack.c.bf16 %v5923, %v5922
      %v5944 = vpack.c.bf16 %v5925, %v5924
      %v5945 = vpack.c.bf16 %v5927, %v5926
      %v5946 = vpack.c.bf16 %v5929, %v5928
      %v5947 = vpack.c.bf16 %v5931, %v5930
      %v5964 = vunpack.c.l.b16 %v5932
      %v5965 = vunpack.c.h.b16 %v5932
      %v5966 = vunpack.c.l.b16 %v5933
      %v5967 = vunpack.c.h.b16 %v5933
      %v5968 = vunpack.c.l.b16 %v5934
      %v5969 = vunpack.c.h.b16 %v5934
      %v5970 = vunpack.c.l.b16 %v5935
      %v5971 = vunpack.c.h.b16 %v5935
      %v5972 = vunpack.c.l.b16 %v5936
      %v5973 = vunpack.c.h.b16 %v5936
      %v5974 = vunpack.c.l.b16 %v5937
      %v5975 = vunpack.c.h.b16 %v5937
      %v5976 = vunpack.c.l.b16 %v5938
      %v5977 = vunpack.c.h.b16 %v5938
      %v5978 = vunpack.c.l.b16 %v5939
      %v5979 = vunpack.c.h.b16 %v5939
      %v5980 = vunpack.c.l.b16 %v5940
      %v5981 = vunpack.c.h.b16 %v5940
      %v5982 = vunpack.c.l.b16 %v5941
      %v5983 = vunpack.c.h.b16 %v5941
      %v5984 = vunpack.c.l.b16 %v5942
      %v5985 = vunpack.c.h.b16 %v5942
      %v5986 = vunpack.c.l.b16 %v5943
      %v5987 = vunpack.c.h.b16 %v5943
      %v5988 = vunpack.c.l.b16 %v5944
      %v5989 = vunpack.c.h.b16 %v5944
      %v5990 = vunpack.c.l.b16 %v5945
      %v5991 = vunpack.c.h.b16 %v5945
      %v5992 = vunpack.c.l.b16 %v5946
      %v5993 = vunpack.c.h.b16 %v5946
      %v5994 = vunpack.c.l.b16 %v5947
      %v5995 = vunpack.c.h.b16 %v5947
      %v5996 = vpack.c.b16 %v5964, %v5964
      %v5997 = vpack.c.b16 %v5965, %v5965
      %v5998 = vpack.c.b16 %v5966, %v5966
      %v5999 = vpack.c.b16 %v5967, %v5967
      %v6000 = vpack.c.b16 %v5968, %v5968
      %v6001 = vpack.c.b16 %v5969, %v5969
      %v6002 = vpack.c.b16 %v5970, %v5970
      %v6003 = vpack.c.b16 %v5971, %v5971
      %v6004 = vpack.c.b16 %v5972, %v5972
      %v6005 = vpack.c.b16 %v5973, %v5973
      %v6006 = vpack.c.b16 %v5974, %v5974
      %v6007 = vpack.c.b16 %v5975, %v5975
      %v6008 = vpack.c.b16 %v5976, %v5976
      %v6009 = vpack.c.b16 %v5977, %v5977
      %v6010 = vpack.c.b16 %v5978, %v5978
      %v6011 = vpack.c.b16 %v5979, %v5979
      %v6012 = vpack.c.b16 %v5980, %v5980
      %v6013 = vpack.c.b16 %v5981, %v5981
      %v6014 = vpack.c.b16 %v5982, %v5982
      %v6015 = vpack.c.b16 %v5983, %v5983
      %v6016 = vpack.c.b16 %v5984, %v5984
      %v6017 = vpack.c.b16 %v5985, %v5985
      %v6018 = vpack.c.b16 %v5986, %v5986
      %v6019 = vpack.c.b16 %v5987, %v5987
      %v6020 = vpack.c.b16 %v5988, %v5988
      %v6021 = vpack.c.b16 %v5989, %v5989
      %v6022 = vpack.c.b16 %v5990, %v5990
      %v6023 = vpack.c.b16 %v5991, %v5991
      %v6024 = vpack.c.b16 %v5992, %v5992
      %v6025 = vpack.c.b16 %v5993, %v5993
      %v6026 = vpack.c.b16 %v5994, %v5994
      %v6027 = vpack.c.b16 %v5995, %v5995
      %6060 = vst [vmem:[%s201] sm:$0xf] %v5996
      %6061 = vst [vmem:[%s201 + $0x4] sm:$0xf] %v5997
      %6062 = vst [vmem:[%s201 + $0x8] sm:$0xf] %v5998
      %6063 = vst [vmem:[%s201 + $0xc] sm:$0xf] %v5999
      %6064 = vst [vmem:[%s201 + $0x10] sm:$0xf] %v6000
      %6065 = vst [vmem:[%s201 + $0x14] sm:$0xf] %v6001
      %6066 = vst [vmem:[%s201 + $0x18] sm:$0xf] %v6002
      %6067 = vst [vmem:[%s201 + $0x1c] sm:$0xf] %v6003
      %6068 = vst [vmem:[%s201 + $0x20] sm:$0xf] %v6004
      %6069 = vst [vmem:[%s201 + $0x24] sm:$0xf] %v6005
      %6070 = vst [vmem:[%s201 + $0x28] sm:$0xf] %v6006
      %6071 = vst [vmem:[%s201 + $0x2c] sm:$0xf] %v6007
      %6072 = vst [vmem:[%s201 + $0x30] sm:$0xf] %v6008
      %6073 = vst [vmem:[%s201 + $0x34] sm:$0xf] %v6009
      %6074 = vst [vmem:[%s201 + $0x38] sm:$0xf] %v6010
      %6075 = vst [vmem:[%s201 + $0x3c] sm:$0xf] %v6011
      %6076 = vst [vmem:[%s201 + $0x40] sm:$0xf] %v6012
      %6077 = vst [vmem:[%s201 + $0x44] sm:$0xf] %v6013
      %6078 = vst [vmem:[%s201 + $0x48] sm:$0xf] %v6014
      %6079 = vst [vmem:[%s201 + $0x4c] sm:$0xf] %v6015
      %6080 = vst [vmem:[%s201 + $0x50] sm:$0xf] %v6016
      %6081 = vst [vmem:[%s201 + $0x54] sm:$0xf] %v6017
      %6082 = vst [vmem:[%s201 + $0x58] sm:$0xf] %v6018
      %6083 = vst [vmem:[%s201 + $0x5c] sm:$0xf] %v6019
      %6084 = vst [vmem:[%s201 + $0x60] sm:$0xf] %v6020
      %6085 = vst [vmem:[%s201 + $0x64] sm:$0xf] %v6021
      %6086 = vst [vmem:[%s201 + $0x68] sm:$0xf] %v6022
      %6087 = vst [vmem:[%s201 + $0x6c] sm:$0xf] %v6023
      %6088 = vst [vmem:[%s201 + $0x70] sm:$0xf] %v6024
      %6089 = vst [vmem:[%s201 + $0x74] sm:$0xf] %v6025
      %6090 = vst [vmem:[%s201 + $0x78] sm:$0xf] %v6026
      %6091 = vst [vmem:[%s201 + $0x7c] sm:$0xf] %v6027
      %s6092 = smul.u32 16, %s19
      %p6093 = scmp.lt.s32.totalorder %s18, 1
      %s6094 = scalar_select %p6093, %s18, 1
      %p6095 = scmp.lt.s32.totalorder %s6092, 15
      %s6096 = scalar_select %p6095, %s6092, 15
      %s6097 = smul.addr %s6096, 2
      %s6098 = smul.addr %s6094, 32
      %s6099 = sadd.s32 %s6097, %s6098
      %s6100 = smul.addr %s6099, 4
      %s6101 = scalar_lea.vmem %s3, %s6100
      // Predicated region
      $region33: #{resnet_forward.7} parent=31 // pred_check
        %p6102 = pneg %p116
      $region34: #{resnet_forward.7} parent=31 // pred_check_branch
        %6104 = sbr.rel (%p6102) target = $region36
      $region35: #{resnet_forward.7} parent=31 // pred_region
        %s6105 = smul.u32 16, %s19
      $region36: #{resnet_forward.7} parent=31 // pred_fallthru
        _
    $region32: #{resnet_forward.7} parent=5 // pred_fallthru
      _
    %p6106 = scmp.le.s32.totalorder 2, %s9
    // Predicated region
    $region37: #{resnet_forward.7} parent=5 // pred_check
      %p6107 = pneg %p6106
    $region38: #{resnet_forward.7} parent=5 // pred_check_branch
      %6109 = sbr.rel (%p6107) target = $region40
    $region39: #{resnet_forward.7} parent=5 // pred_region
      %s6110 = ssub.s32 %s9, 2
      // Predicated region
      $region41: #{resnet_forward.7} parent=39 // pred_check
        %p6111 = pneg %p122
      $region42: #{resnet_forward.7} parent=39 // pred_check_branch
        %6113 = sbr.rel (%p6111) target = $region44
      $region43: #{resnet_forward.7} parent=39 // pred_region
        %s6114 = smul.u32 16, %s21
        %p6115 = scmp.lt.s32.totalorder %s20, 1
        %s6116 = scalar_select %p6115, %s20, 1
        %p6117 = scmp.lt.s32.totalorder %s6114, 15
        %s6118 = scalar_select %p6117, %s6114, 15
        %s6119 = smul.addr %s6118, 2
        %s6120 = smul.addr %s6116, 32
        %s6121 = sadd.s32 %s6119, %s6120
        %s6122 = smul.addr %s6121, 4
        %s6123 = scalar_lea.vmem %s3, %s6122
      $region44: #{resnet_forward.7} parent=39 // pred_fallthru
        _
    $region40: #{resnet_forward.7} parent=5 // pred_fallthru
      _
  $region6: #{resnet_forward.7} parent=0 // loop_footer
    %s13 = sadd.s32 1, %s9
  $region7: #{resnet_forward.7} parent=0 // loop_footer_branch
    %8 = sbr.rel target = $region3
  $region8: #{resnet_forward.7} parent=0 // loop_exit
    _

</llo_original>
